<compile_context>
chip_gen: v6e
topology: v6e:2x2x1
jax: 0.10.0
libtpu: 0.0.40
codegen_flags: <defaults>
</compile_context>

<pallas_src>
import jax
import jax.numpy as jnp
import numpy as np
from jax.experimental import pallas as pl
from jax.experimental.pallas import tpu as pltpu


def _res_blocks_kernel(x_ref, w_ref, bn_ref, o_ref, pad_ref, col_ref):
    """One grid step = one ResBlock applied to the VMEM-resident activation.

    x_ref  : (N, H, W, C)   f32  input image (read only at step 0)
    w_ref  : (1, 2, 9*C, C) f32  this block's folded conv weights [conv1, conv2]
    bn_ref : (1, 4, C)      f32  this block's BN affine params [g1, b1, g2, b2]
    o_ref  : (N, H, W, C)   f32  VMEM-resident activation / final output
    pad_ref: (N, H+2, W+2, C) f32 scratch (zero halo, interior overwritten)
    col_ref: (N*H*W, 9*C)   f32 scratch (im2col matrix)
    """
    N, H, W, C = x_ref.shape
    M = N * H * W
    eps = 1e-5
    r = pl.program_id(0)

    @pl.when(r == 0)
    def _init():
        # Zero the halo border once; the interior is fully overwritten before
        # every use and the border stays zero across all grid steps (scratch
        # persists across the grid).
        pad_ref[...] = jnp.zeros(pad_ref.shape, pad_ref.dtype)
        # Residual state lives in the (VMEM-resident) output block.
        o_ref[...] = x_ref[...]

    def conv3x3(inp4d, w2d):
        # im2col: 9 shifted taps laid out along the contraction axis, then a
        # single MXU matmul with K = 9*C instead of 9 tiny K=C matmuls.
        pad_ref[:, 1:H + 1, 1:W + 1, :] = inp4d
        for dh in range(3):
            for dw in range(3):
                t = dh * 3 + dw
                tap = pad_ref[:, dh:dh + H, dw:dw + W, :].reshape(M, C)
                col_ref[:, t * C:(t + 1) * C] = tap
        return jnp.dot(col_ref[...], w2d,
                       preferred_element_type=jnp.float32)       # (M, C)

    def batchnorm(y2d, g, b):
        # Single-pass training-mode BatchNorm2d (biased variance over N*H*W),
        # applied as one fused multiply-add.
        s = jnp.sum(y2d, axis=0, keepdims=True)
        ss = jnp.sum(y2d * y2d, axis=0, keepdims=True)
        mean = s * (1.0 / M)
        var = ss * (1.0 / M) - mean * mean
        scale = g * jax.lax.rsqrt(var + eps)
        shift = b - mean * scale
        return y2d * scale + shift

    def mish(y):
        # y * tanh(softplus(y)); softplus(y) = max(y, 0) + log1p(exp(-|y|))
        sp = jnp.maximum(y, 0.0) + jnp.log1p(jnp.exp(-jnp.abs(y)))
        return y * jnp.tanh(sp)

    bn = bn_ref[0]                       # (4, C)
    g1, b1 = bn[0:1, :], bn[1:2, :]
    g2, b2 = bn[2:3, :], bn[3:4, :]

    x = o_ref[...]                       # current activation (N, H, W, C)

    y = conv3x3(x, w_ref[0, 0])          # (M, C)
    y = mish(batchnorm(y, g1, b1))
    y = conv3x3(y.reshape(N, H, W, C), w_ref[0, 1])
    y = batchnorm(y, g2, b2)

    o_ref[...] = x + y.reshape(N, H, W, C)


def _res_blocks_pallas(x_nhwc, w_fold, bn_params):
    """x_nhwc: (N,H,W,C) f32; w_fold: (n_res,2,9C,C); bn_params: (n_res,4,C)."""
    N, H, W, C = x_nhwc.shape
    n_res = w_fold.shape[0]
    M = N * H * W

    grid_spec = pltpu.PrefetchScalarGridSpec(
        num_scalar_prefetch=0,
        grid=(n_res,),
        in_specs=[
            # activation: fetched once (constant block index)
            pl.BlockSpec((N, H, W, C), lambda r: (0, 0, 0, 0)),
            # per-block conv weights: pipelined per grid step
            pl.BlockSpec((1, 2, 9 * C, C), lambda r: (r, 0, 0, 0)),
            # per-block BN affine params
            pl.BlockSpec((1, 4, C), lambda r: (r, 0, 0)),
        ],
        # constant block index -> output stays resident in VMEM across blocks,
        # written back to HBM only once at the end.
        out_specs=pl.BlockSpec((N, H, W, C), lambda r: (0, 0, 0, 0)),
        scratch_shapes=[
            pltpu.VMEM((N, H + 2, W + 2, C), jnp.float32),  # padded halo buffer
            pltpu.VMEM((M, 9 * C), jnp.float32),            # im2col matrix
        ],
    )

    return pl.pallas_call(
        _res_blocks_kernel,
        out_shape=jax.ShapeDtypeStruct((N, H, W, C), jnp.float32),
        grid_spec=grid_spec,
        compiler_params=pltpu.CompilerParams(
            dimension_semantics=("arbitrary",),   # blocks are sequential
            vmem_limit_bytes=32 * 1024 * 1024,
        ),
    )(x_nhwc, w_fold, bn_params)


def res_blocks_forward(x_nchw, params):
    """ResBlocks forward. x_nchw: (N, C, H, W) float32 (PyTorch layout)."""
    C = x_nchw.shape[1]
    # Pack all blocks' weights so the whole ResBlocks stack is one pallas_call.
    w_fold = jnp.stack([jnp.stack([p["w1"].reshape(9 * C, C),
                                   p["w2"].reshape(9 * C, C)]) for p in params])
    bn = jnp.stack([jnp.stack([p["g1"], p["b1"], p["g2"], p["b2"]])
                    for p in params])
    x = jnp.transpose(x_nchw, (0, 2, 3, 1))     # NCHW -> NHWC (once per forward)
    y = _res_blocks_pallas(x, w_fold, bn)
    return jnp.transpose(y, (0, 3, 1, 2))       # NHWC -> NCHW


# ----------------------------- pure-JAX reference -----------------------------
def _ref_resblock(x, p):
    def conv(x, w):
        return jax.lax.conv_general_dilated(
            x, w, window_strides=(1, 1), padding="SAME",
            dimension_numbers=("NHWC", "HWIO", "NHWC"),
            precision=jax.lax.Precision.HIGHEST)

    def bn(y, g, b):
        m = jnp.mean(y, axis=(0, 1, 2), keepdims=True)
        v = jnp.mean((y - m) ** 2, axis=(0, 1, 2), keepdims=True)
        return ((y - m) / jnp.sqrt(v + 1e-5) * g.reshape(1, 1, 1, -1)
                + b.reshape(1, 1, 1, -1))

    def mish(y):
        return y * jnp.tanh(jax.nn.softplus(y))

    y = conv(x, p["w1"])
    y = bn(y, p["g1"], p["b1"])
    y = mish(y)
    y = conv(y, p["w2"])
    y = bn(y, p["g2"], p["b2"])
    return x + y


def _ref_forward(x_nchw, params):
    x = jnp.transpose(x_nchw, (0, 2, 3, 1))
    for p in params:
        x = _ref_resblock(x, p)
    return jnp.transpose(x, (0, 3, 1, 2))


# ----------------------------- parameter init ---------------------------------
def init_params(key, nc, n_res):
    params = []
    scale = 1.0 / np.sqrt(nc * 9)
    for _ in range(n_res):
        key, k1, k2, k3, k4, k5, k6 = jax.random.split(key, 7)
        params.append({
            # conv weights stored directly in HWIO (3, 3, C_in, C_out)
            "w1": jax.random.normal(k1, (3, 3, nc, nc), jnp.float32) * scale,
            "w2": jax.random.normal(k2, (3, 3, nc, nc), jnp.float32) * scale,
            # BatchNorm affine params (independent keys for gamma/beta)
            "g1": 1.0 + 0.1 * jax.random.normal(k3, (nc,), jnp.float32),
            "b1": 0.1 * jax.random.normal(k4, (nc,), jnp.float32),
            "g2": 1.0 + 0.1 * jax.random.normal(k5, (nc,), jnp.float32),
            "b2": 0.1 * jax.random.normal(k6, (nc,), jnp.float32),
        })
    return params


if __name__ == "__main__":
    N, C, H, W = 2, 8, 16, 16
    n_res = 2

    key = jax.random.PRNGKey(0)
    key, kx = jax.random.split(key)
    x = jax.random.normal(kx, (N, C, H, W), jnp.float32)   # NCHW, like PyTorch
    params = init_params(key, C, n_res)

    out = jax.block_until_ready(res_blocks_forward(x, params))
    ref = jax.block_until_ready(_ref_forward(x, params))

    assert out.shape == (N, C, H, W), out.shape
    np.testing.assert_allclose(np.asarray(out), np.asarray(ref),
                               rtol=1e-4, atol=1e-4)
    print("KERNEL_OK")
</pallas_src>

<mosaic_0001>
module attributes {stable_mosaic.version = 11 : i64} {
  func.func @_res_blocks_kernel(%arg0: i32, %arg1: memref<2x16x16x8xf32, #tpu.memory_space<vmem>>, %arg2: memref<1x2x72x8xf32, #tpu.memory_space<vmem>>, %arg3: memref<1x4x8xf32, #tpu.memory_space<vmem>>, %arg4: memref<2x16x16x8xf32, #tpu.memory_space<vmem>>, %arg5: memref<2x18x18x8xf32, #tpu.memory_space<vmem>>, %arg6: memref<512x72xf32, #tpu.memory_space<vmem>>) attributes {dimension_semantics = [#tpu.dimension_semantics<arbitrary>], iteration_bounds = array<i64: 2>, scalar_prefetch = 0 : i64, scratch_operands = 2 : i64, tpu.core_type = #tpu.core_type<tc>, window_params = [{pipeline_mode = #tpu.pipeline_mode<synchronous>, transform_indices = @transform_0, window_bounds = array<i64: 2, 16, 16, 8>}, {transform_indices = @transform_1, window_bounds = array<i64: 1, 2, 72, 8>}, {transform_indices = @transform_2, window_bounds = array<i64: 1, 4, 8>}, {pipeline_mode = #tpu.pipeline_mode<synchronous>, transform_indices = @transform_3, window_bounds = array<i64: 2, 16, 16, 8>}]} {
    %c0_i32 = arith.constant 0 : i32
    %0 = arith.cmpi eq, %arg0, %c0_i32 : i32
    %1 = arith.extui %0 : i1 to i32
    %c0_i32_0 = arith.constant 0 : i32
    %2 = arith.cmpi ne, %1, %c0_i32_0 : i32
    scf.if %2 {
      %cst_142 = arith.constant 0.000000e+00 : f32
      %130 = vector.broadcast %cst_142 : f32 to vector<2x18x18x8xf32>
      %c0_143 = arith.constant 0 : index
      %c0_144 = arith.constant 0 : index
      %c0_145 = arith.constant 0 : index
      %c0_146 = arith.constant 0 : index
      %131 = vector.load %arg5[%c0_143, %c0_144, %c0_145, %c0_146] : memref<2x18x18x8xf32, #tpu.memory_space<vmem>>, vector<2x18x18x8xf32>
      tpu.vector_store %arg5[%c0_143, %c0_144, %c0_145, %c0_146], %130 {strides = array<i32>} : memref<2x18x18x8xf32, #tpu.memory_space<vmem>>, vector<2x18x18x8xf32>,
      %c0_147 = arith.constant 0 : index
      %c0_148 = arith.constant 0 : index
      %c0_149 = arith.constant 0 : index
      %c0_150 = arith.constant 0 : index
      %132 = vector.load %arg1[%c0_147, %c0_148, %c0_149, %c0_150] : memref<2x16x16x8xf32, #tpu.memory_space<vmem>>, vector<2x16x16x8xf32>
      %c0_151 = arith.constant 0 : index
      %c0_152 = arith.constant 0 : index
      %c0_153 = arith.constant 0 : index
      %c0_154 = arith.constant 0 : index
      %133 = vector.load %arg4[%c0_151, %c0_152, %c0_153, %c0_154] : memref<2x16x16x8xf32, #tpu.memory_space<vmem>>, vector<2x16x16x8xf32>
      tpu.vector_store %arg4[%c0_151, %c0_152, %c0_153, %c0_154], %132 {strides = array<i32>} : memref<2x16x16x8xf32, #tpu.memory_space<vmem>>, vector<2x16x16x8xf32>,
    } else {
    }
    %c0 = arith.constant 0 : index
    %c0_1 = arith.constant 0 : index
    %c0_2 = arith.constant 0 : index
    %3 = vector.load %arg3[%c0, %c0_1, %c0_2] : memref<1x4x8xf32, #tpu.memory_space<vmem>>, vector<1x4x8xf32>
    %4 = vector.shape_cast %3 : vector<1x4x8xf32> to vector<4x8xf32>
    %5 = vector.extract_strided_slice %4 {offsets = [0, 0], sizes = [1, 8], strides = [1, 1]} : vector<4x8xf32> to vector<1x8xf32>
    %6 = vector.extract_strided_slice %4 {offsets = [1, 0], sizes = [1, 8], strides = [1, 1]} : vector<4x8xf32> to vector<1x8xf32>
    %7 = vector.extract_strided_slice %4 {offsets = [2, 0], sizes = [1, 8], strides = [1, 1]} : vector<4x8xf32> to vector<1x8xf32>
    %8 = vector.extract_strided_slice %4 {offsets = [3, 0], sizes = [1, 8], strides = [1, 1]} : vector<4x8xf32> to vector<1x8xf32>
    %c0_3 = arith.constant 0 : index
    %c0_4 = arith.constant 0 : index
    %c0_5 = arith.constant 0 : index
    %c0_6 = arith.constant 0 : index
    %9 = vector.load %arg4[%c0_3, %c0_4, %c0_5, %c0_6] : memref<2x16x16x8xf32, #tpu.memory_space<vmem>>, vector<2x16x16x8xf32>
    %c0_7 = arith.constant 0 : index
    %c0_8 = arith.constant 0 : index
    %c0_9 = arith.constant 0 : index
    %c0_10 = arith.constant 0 : index
    %10 = vector.load %arg2[%c0_7, %c0_8, %c0_9, %c0_10] : memref<1x2x72x8xf32, #tpu.memory_space<vmem>>, vector<1x1x72x8xf32>
    %11 = vector.shape_cast %10 : vector<1x1x72x8xf32> to vector<72x8xf32>
    %c0_11 = arith.constant 0 : index
    %c1 = arith.constant 1 : index
    %c1_12 = arith.constant 1 : index
    %c0_13 = arith.constant 0 : index
    %12 = vector.load %arg5[%c0_11, %c1, %c1_12, %c0_13] : memref<2x18x18x8xf32, #tpu.memory_space<vmem>>, vector<2x16x16x8xf32>
    tpu.vector_store %arg5[%c0_11, %c1, %c1_12, %c0_13], %9 {strides = array<i32>} : memref<2x18x18x8xf32, #tpu.memory_space<vmem>>, vector<2x16x16x8xf32>,
    %c0_14 = arith.constant 0 : index
    %c0_15 = arith.constant 0 : index
    %c0_16 = arith.constant 0 : index
    %c0_17 = arith.constant 0 : index
    %13 = vector.load %arg5[%c0_14, %c0_15, %c0_16, %c0_17] : memref<2x18x18x8xf32, #tpu.memory_space<vmem>>, vector<2x16x16x8xf32>
    %14 = vector.shape_cast %13 : vector<2x16x16x8xf32> to vector<512x8xf32>
    %c0_18 = arith.constant 0 : index
    %c0_19 = arith.constant 0 : index
    %15 = vector.load %arg6[%c0_18, %c0_19] : memref<512x72xf32, #tpu.memory_space<vmem>>, vector<512x8xf32>
    tpu.vector_store %arg6[%c0_18, %c0_19], %14 {strides = array<i32>} : memref<512x72xf32, #tpu.memory_space<vmem>>, vector<512x8xf32>,
    %c0_20 = arith.constant 0 : index
    %c0_21 = arith.constant 0 : index
    %c1_22 = arith.constant 1 : index
    %c0_23 = arith.constant 0 : index
    %16 = vector.load %arg5[%c0_20, %c0_21, %c1_22, %c0_23] : memref<2x18x18x8xf32, #tpu.memory_space<vmem>>, vector<2x16x16x8xf32>
    %17 = vector.shape_cast %16 : vector<2x16x16x8xf32> to vector<512x8xf32>
    %c0_24 = arith.constant 0 : index
    %c8 = arith.constant 8 : index
    %18 = vector.load %arg6[%c0_24, %c8] : memref<512x72xf32, #tpu.memory_space<vmem>>, vector<512x8xf32>
    tpu.vector_store %arg6[%c0_24, %c8], %17 {strides = array<i32>} : memref<512x72xf32, #tpu.memory_space<vmem>>, vector<512x8xf32>,
    %c0_25 = arith.constant 0 : index
    %c0_26 = arith.constant 0 : index
    %c2 = arith.constant 2 : index
    %c0_27 = arith.constant 0 : index
    %19 = vector.load %arg5[%c0_25, %c0_26, %c2, %c0_27] : memref<2x18x18x8xf32, #tpu.memory_space<vmem>>, vector<2x16x16x8xf32>
    %20 = vector.shape_cast %19 : vector<2x16x16x8xf32> to vector<512x8xf32>
    %c0_28 = arith.constant 0 : index
    %c16 = arith.constant 16 : index
    %21 = vector.load %arg6[%c0_28, %c16] : memref<512x72xf32, #tpu.memory_space<vmem>>, vector<512x8xf32>
    tpu.vector_store %arg6[%c0_28, %c16], %20 {strides = array<i32>} : memref<512x72xf32, #tpu.memory_space<vmem>>, vector<512x8xf32>,
    %c0_29 = arith.constant 0 : index
    %c1_30 = arith.constant 1 : index
    %c0_31 = arith.constant 0 : index
    %c0_32 = arith.constant 0 : index
    %22 = vector.load %arg5[%c0_29, %c1_30, %c0_31, %c0_32] : memref<2x18x18x8xf32, #tpu.memory_space<vmem>>, vector<2x16x16x8xf32>
    %23 = vector.shape_cast %22 : vector<2x16x16x8xf32> to vector<512x8xf32>
    %c0_33 = arith.constant 0 : index
    %c24 = arith.constant 24 : index
    %24 = vector.load %arg6[%c0_33, %c24] : memref<512x72xf32, #tpu.memory_space<vmem>>, vector<512x8xf32>
    tpu.vector_store %arg6[%c0_33, %c24], %23 {strides = array<i32>} : memref<512x72xf32, #tpu.memory_space<vmem>>, vector<512x8xf32>,
    %c0_34 = arith.constant 0 : index
    %c1_35 = arith.constant 1 : index
    %c1_36 = arith.constant 1 : index
    %c0_37 = arith.constant 0 : index
    %25 = vector.load %arg5[%c0_34, %c1_35, %c1_36, %c0_37] : memref<2x18x18x8xf32, #tpu.memory_space<vmem>>, vector<2x16x16x8xf32>
    %26 = vector.shape_cast %25 : vector<2x16x16x8xf32> to vector<512x8xf32>
    %c0_38 = arith.constant 0 : index
    %c32 = arith.constant 32 : index
    %27 = vector.load %arg6[%c0_38, %c32] : memref<512x72xf32, #tpu.memory_space<vmem>>, vector<512x8xf32>
    tpu.vector_store %arg6[%c0_38, %c32], %26 {strides = array<i32>} : memref<512x72xf32, #tpu.memory_space<vmem>>, vector<512x8xf32>,
    %c0_39 = arith.constant 0 : index
    %c1_40 = arith.constant 1 : index
    %c2_41 = arith.constant 2 : index
    %c0_42 = arith.constant 0 : index
    %28 = vector.load %arg5[%c0_39, %c1_40, %c2_41, %c0_42] : memref<2x18x18x8xf32, #tpu.memory_space<vmem>>, vector<2x16x16x8xf32>
    %29 = vector.shape_cast %28 : vector<2x16x16x8xf32> to vector<512x8xf32>
    %c0_43 = arith.constant 0 : index
    %c40 = arith.constant 40 : index
    %30 = vector.load %arg6[%c0_43, %c40] : memref<512x72xf32, #tpu.memory_space<vmem>>, vector<512x8xf32>
    tpu.vector_store %arg6[%c0_43, %c40], %29 {strides = array<i32>} : memref<512x72xf32, #tpu.memory_space<vmem>>, vector<512x8xf32>,
    %c0_44 = arith.constant 0 : index
    %c2_45 = arith.constant 2 : index
    %c0_46 = arith.constant 0 : index
    %c0_47 = arith.constant 0 : index
    %31 = vector.load %arg5[%c0_44, %c2_45, %c0_46, %c0_47] : memref<2x18x18x8xf32, #tpu.memory_space<vmem>>, vector<2x16x16x8xf32>
    %32 = vector.shape_cast %31 : vector<2x16x16x8xf32> to vector<512x8xf32>
    %c0_48 = arith.constant 0 : index
    %c48 = arith.constant 48 : index
    %33 = vector.load %arg6[%c0_48, %c48] : memref<512x72xf32, #tpu.memory_space<vmem>>, vector<512x8xf32>
    tpu.vector_store %arg6[%c0_48, %c48], %32 {strides = array<i32>} : memref<512x72xf32, #tpu.memory_space<vmem>>, vector<512x8xf32>,
    %c0_49 = arith.constant 0 : index
    %c2_50 = arith.constant 2 : index
    %c1_51 = arith.constant 1 : index
    %c0_52 = arith.constant 0 : index
    %34 = vector.load %arg5[%c0_49, %c2_50, %c1_51, %c0_52] : memref<2x18x18x8xf32, #tpu.memory_space<vmem>>, vector<2x16x16x8xf32>
    %35 = vector.shape_cast %34 : vector<2x16x16x8xf32> to vector<512x8xf32>
    %c0_53 = arith.constant 0 : index
    %c56 = arith.constant 56 : index
    %36 = vector.load %arg6[%c0_53, %c56] : memref<512x72xf32, #tpu.memory_space<vmem>>, vector<512x8xf32>
    tpu.vector_store %arg6[%c0_53, %c56], %35 {strides = array<i32>} : memref<512x72xf32, #tpu.memory_space<vmem>>, vector<512x8xf32>,
    %c0_54 = arith.constant 0 : index
    %c2_55 = arith.constant 2 : index
    %c2_56 = arith.constant 2 : index
    %c0_57 = arith.constant 0 : index
    %37 = vector.load %arg5[%c0_54, %c2_55, %c2_56, %c0_57] : memref<2x18x18x8xf32, #tpu.memory_space<vmem>>, vector<2x16x16x8xf32>
    %38 = vector.shape_cast %37 : vector<2x16x16x8xf32> to vector<512x8xf32>
    %c0_58 = arith.constant 0 : index
    %c64 = arith.constant 64 : index
    %39 = vector.load %arg6[%c0_58, %c64] : memref<512x72xf32, #tpu.memory_space<vmem>>, vector<512x8xf32>
    tpu.vector_store %arg6[%c0_58, %c64], %38 {strides = array<i32>} : memref<512x72xf32, #tpu.memory_space<vmem>>, vector<512x8xf32>,
    %c0_59 = arith.constant 0 : index
    %c0_60 = arith.constant 0 : index
    %40 = vector.load %arg6[%c0_59, %c0_60] : memref<512x72xf32, #tpu.memory_space<vmem>>, vector<512x72xf32>
    %cst = arith.constant dense<0.000000e+00> : vector<512x8xf32>
    %41 = tpu.matmul %40, %11, %cst {dimension_numbers = #tpu.dot_dimension_numbers<[1], [0], [0], [1], [0, 0, 1, 1], [], []>} : vector<512x72xf32>, vector<72x8xf32>, vector<512x8xf32> -> vector<512x8xf32>
    %cst_61 = arith.constant dense<0.000000e+00> : vector<8xf32>
    %42 = vector.multi_reduction <add>, %41, %cst_61 [0] : vector<512x8xf32> to vector<8xf32>
    %43 = vector.shape_cast %42 : vector<8xf32> to vector<1x8xf32>
    %44 = arith.mulf %41, %41 : vector<512x8xf32>
    %cst_62 = arith.constant dense<0.000000e+00> : vector<8xf32>
    %45 = vector.multi_reduction <add>, %44, %cst_62 [0] : vector<512x8xf32> to vector<8xf32>
    %46 = vector.shape_cast %45 : vector<8xf32> to vector<1x8xf32>
    %cst_63 = arith.constant 0.001953125 : f32
    %47 = vector.broadcast %cst_63 : f32 to vector<1x8xf32>
    %48 = arith.mulf %43, %47 : vector<1x8xf32>
    %cst_64 = arith.constant 0.001953125 : f32
    %49 = vector.broadcast %cst_64 : f32 to vector<1x8xf32>
    %50 = arith.mulf %46, %49 : vector<1x8xf32>
    %51 = arith.mulf %48, %48 : vector<1x8xf32>
    %52 = arith.subf %50, %51 : vector<1x8xf32>
    %cst_65 = arith.constant 9.99999974E-6 : f32
    %53 = vector.broadcast %cst_65 : f32 to vector<1x8xf32>
    %54 = arith.addf %52, %53 : vector<1x8xf32>
    %55 = math.rsqrt %54 : vector<1x8xf32>
    %56 = arith.mulf %5, %55 : vector<1x8xf32>
    %57 = arith.mulf %48, %56 : vector<1x8xf32>
    %58 = arith.subf %6, %57 : vector<1x8xf32>
    %59 = vector.broadcast %56 : vector<1x8xf32> to vector<512x8xf32>
    %60 = arith.mulf %41, %59 : vector<512x8xf32>
    %61 = vector.broadcast %58 : vector<1x8xf32> to vector<512x8xf32>
    %62 = arith.addf %60, %61 : vector<512x8xf32>
    %cst_66 = arith.constant 0.000000e+00 : f32
    %63 = vector.broadcast %cst_66 : f32 to vector<512x8xf32>
    %64 = arith.maximumf %62, %63 : vector<512x8xf32>
    %65 = math.absf %62 : vector<512x8xf32>
    %cst_67 = arith.constant 0.000000e+00 : f32
    %66 = vector.broadcast %cst_67 : f32 to vector<512x8xf32>
    %67 = arith.subf %66, %65 : vector<512x8xf32>
    %68 = math.exp %67 : vector<512x8xf32>
    %69 = math.log1p %68 : vector<512x8xf32>
    %70 = arith.addf %64, %69 : vector<512x8xf32>
    %71 = math.tanh %70 : vector<512x8xf32>
    %72 = arith.mulf %62, %71 : vector<512x8xf32>
    %73 = vector.shape_cast %72 : vector<512x8xf32> to vector<2x16x16x8xf32>
    %c0_68 = arith.constant 0 : index
    %c1_69 = arith.constant 1 : index
    %c0_70 = arith.constant 0 : index
    %c0_71 = arith.constant 0 : index
    %74 = vector.load %arg2[%c0_68, %c1_69, %c0_70, %c0_71] : memref<1x2x72x8xf32, #tpu.memory_space<vmem>>, vector<1x1x72x8xf32>
    %75 = vector.shape_cast %74 : vector<1x1x72x8xf32> to vector<72x8xf32>
    %c0_72 = arith.constant 0 : index
    %c1_73 = arith.constant 1 : index
    %c1_74 = arith.constant 1 : index
    %c0_75 = arith.constant 0 : index
    %76 = vector.load %arg5[%c0_72, %c1_73, %c1_74, %c0_75] : memref<2x18x18x8xf32, #tpu.memory_space<vmem>>, vector<2x16x16x8xf32>
    tpu.vector_store %arg5[%c0_72, %c1_73, %c1_74, %c0_75], %73 {strides = array<i32>} : memref<2x18x18x8xf32, #tpu.memory_space<vmem>>, vector<2x16x16x8xf32>,
    %c0_76 = arith.constant 0 : index
    %c0_77 = arith.constant 0 : index
    %c0_78 = arith.constant 0 : index
    %c0_79 = arith.constant 0 : index
    %77 = vector.load %arg5[%c0_76, %c0_77, %c0_78, %c0_79] : memref<2x18x18x8xf32, #tpu.memory_space<vmem>>, vector<2x16x16x8xf32>
    %78 = vector.shape_cast %77 : vector<2x16x16x8xf32> to vector<512x8xf32>
    %c0_80 = arith.constant 0 : index
    %c0_81 = arith.constant 0 : index
    %79 = vector.load %arg6[%c0_80, %c0_81] : memref<512x72xf32, #tpu.memory_space<vmem>>, vector<512x8xf32>
    tpu.vector_store %arg6[%c0_80, %c0_81], %78 {strides = array<i32>} : memref<512x72xf32, #tpu.memory_space<vmem>>, vector<512x8xf32>,
    %c0_82 = arith.constant 0 : index
    %c0_83 = arith.constant 0 : index
    %c1_84 = arith.constant 1 : index
    %c0_85 = arith.constant 0 : index
    %80 = vector.load %arg5[%c0_82, %c0_83, %c1_84, %c0_85] : memref<2x18x18x8xf32, #tpu.memory_space<vmem>>, vector<2x16x16x8xf32>
    %81 = vector.shape_cast %80 : vector<2x16x16x8xf32> to vector<512x8xf32>
    %c0_86 = arith.constant 0 : index
    %c8_87 = arith.constant 8 : index
    %82 = vector.load %arg6[%c0_86, %c8_87] : memref<512x72xf32, #tpu.memory_space<vmem>>, vector<512x8xf32>
    tpu.vector_store %arg6[%c0_86, %c8_87], %81 {strides = array<i32>} : memref<512x72xf32, #tpu.memory_space<vmem>>, vector<512x8xf32>,
    %c0_88 = arith.constant 0 : index
    %c0_89 = arith.constant 0 : index
    %c2_90 = arith.constant 2 : index
    %c0_91 = arith.constant 0 : index
    %83 = vector.load %arg5[%c0_88, %c0_89, %c2_90, %c0_91] : memref<2x18x18x8xf32, #tpu.memory_space<vmem>>, vector<2x16x16x8xf32>
    %84 = vector.shape_cast %83 : vector<2x16x16x8xf32> to vector<512x8xf32>
    %c0_92 = arith.constant 0 : index
    %c16_93 = arith.constant 16 : index
    %85 = vector.load %arg6[%c0_92, %c16_93] : memref<512x72xf32, #tpu.memory_space<vmem>>, vector<512x8xf32>
    tpu.vector_store %arg6[%c0_92, %c16_93], %84 {strides = array<i32>} : memref<512x72xf32, #tpu.memory_space<vmem>>, vector<512x8xf32>,
    %c0_94 = arith.constant 0 : index
    %c1_95 = arith.constant 1 : index
    %c0_96 = arith.constant 0 : index
    %c0_97 = arith.constant 0 : index
    %86 = vector.load %arg5[%c0_94, %c1_95, %c0_96, %c0_97] : memref<2x18x18x8xf32, #tpu.memory_space<vmem>>, vector<2x16x16x8xf32>
    %87 = vector.shape_cast %86 : vector<2x16x16x8xf32> to vector<512x8xf32>
    %c0_98 = arith.constant 0 : index
    %c24_99 = arith.constant 24 : index
    %88 = vector.load %arg6[%c0_98, %c24_99] : memref<512x72xf32, #tpu.memory_space<vmem>>, vector<512x8xf32>
    tpu.vector_store %arg6[%c0_98, %c24_99], %87 {strides = array<i32>} : memref<512x72xf32, #tpu.memory_space<vmem>>, vector<512x8xf32>,
    %c0_100 = arith.constant 0 : index
    %c1_101 = arith.constant 1 : index
    %c1_102 = arith.constant 1 : index
    %c0_103 = arith.constant 0 : index
    %89 = vector.load %arg5[%c0_100, %c1_101, %c1_102, %c0_103] : memref<2x18x18x8xf32, #tpu.memory_space<vmem>>, vector<2x16x16x8xf32>
    %90 = vector.shape_cast %89 : vector<2x16x16x8xf32> to vector<512x8xf32>
    %c0_104 = arith.constant 0 : index
    %c32_105 = arith.constant 32 : index
    %91 = vector.load %arg6[%c0_104, %c32_105] : memref<512x72xf32, #tpu.memory_space<vmem>>, vector<512x8xf32>
    tpu.vector_store %arg6[%c0_104, %c32_105], %90 {strides = array<i32>} : memref<512x72xf32, #tpu.memory_space<vmem>>, vector<512x8xf32>,
    %c0_106 = arith.constant 0 : index
    %c1_107 = arith.constant 1 : index
    %c2_108 = arith.constant 2 : index
    %c0_109 = arith.constant 0 : index
    %92 = vector.load %arg5[%c0_106, %c1_107, %c2_108, %c0_109] : memref<2x18x18x8xf32, #tpu.memory_space<vmem>>, vector<2x16x16x8xf32>
    %93 = vector.shape_cast %92 : vector<2x16x16x8xf32> to vector<512x8xf32>
    %c0_110 = arith.constant 0 : index
    %c40_111 = arith.constant 40 : index
    %94 = vector.load %arg6[%c0_110, %c40_111] : memref<512x72xf32, #tpu.memory_space<vmem>>, vector<512x8xf32>
    tpu.vector_store %arg6[%c0_110, %c40_111], %93 {strides = array<i32>} : memref<512x72xf32, #tpu.memory_space<vmem>>, vector<512x8xf32>,
    %c0_112 = arith.constant 0 : index
    %c2_113 = arith.constant 2 : index
    %c0_114 = arith.constant 0 : index
    %c0_115 = arith.constant 0 : index
    %95 = vector.load %arg5[%c0_112, %c2_113, %c0_114, %c0_115] : memref<2x18x18x8xf32, #tpu.memory_space<vmem>>, vector<2x16x16x8xf32>
    %96 = vector.shape_cast %95 : vector<2x16x16x8xf32> to vector<512x8xf32>
    %c0_116 = arith.constant 0 : index
    %c48_117 = arith.constant 48 : index
    %97 = vector.load %arg6[%c0_116, %c48_117] : memref<512x72xf32, #tpu.memory_space<vmem>>, vector<512x8xf32>
    tpu.vector_store %arg6[%c0_116, %c48_117], %96 {strides = array<i32>} : memref<512x72xf32, #tpu.memory_space<vmem>>, vector<512x8xf32>,
    %c0_118 = arith.constant 0 : index
    %c2_119 = arith.constant 2 : index
    %c1_120 = arith.constant 1 : index
    %c0_121 = arith.constant 0 : index
    %98 = vector.load %arg5[%c0_118, %c2_119, %c1_120, %c0_121] : memref<2x18x18x8xf32, #tpu.memory_space<vmem>>, vector<2x16x16x8xf32>
    %99 = vector.shape_cast %98 : vector<2x16x16x8xf32> to vector<512x8xf32>
    %c0_122 = arith.constant 0 : index
    %c56_123 = arith.constant 56 : index
    %100 = vector.load %arg6[%c0_122, %c56_123] : memref<512x72xf32, #tpu.memory_space<vmem>>, vector<512x8xf32>
    tpu.vector_store %arg6[%c0_122, %c56_123], %99 {strides = array<i32>} : memref<512x72xf32, #tpu.memory_space<vmem>>, vector<512x8xf32>,
    %c0_124 = arith.constant 0 : index
    %c2_125 = arith.constant 2 : index
    %c2_126 = arith.constant 2 : index
    %c0_127 = arith.constant 0 : index
    %101 = vector.load %arg5[%c0_124, %c2_125, %c2_126, %c0_127] : memref<2x18x18x8xf32, #tpu.memory_space<vmem>>, vector<2x16x16x8xf32>
    %102 = vector.shape_cast %101 : vector<2x16x16x8xf32> to vector<512x8xf32>
    %c0_128 = arith.constant 0 : index
    %c64_129 = arith.constant 64 : index
    %103 = vector.load %arg6[%c0_128, %c64_129] : memref<512x72xf32, #tpu.memory_space<vmem>>, vector<512x8xf32>
    tpu.vector_store %arg6[%c0_128, %c64_129], %102 {strides = array<i32>} : memref<512x72xf32, #tpu.memory_space<vmem>>, vector<512x8xf32>,
    %c0_130 = arith.constant 0 : index
    %c0_131 = arith.constant 0 : index
    %104 = vector.load %arg6[%c0_130, %c0_131] : memref<512x72xf32, #tpu.memory_space<vmem>>, vector<512x72xf32>
    %cst_132 = arith.constant dense<0.000000e+00> : vector<512x8xf32>
    %105 = tpu.matmul %104, %75, %cst_132 {dimension_numbers = #tpu.dot_dimension_numbers<[1], [0], [0], [1], [0, 0, 1, 1], [], []>} : vector<512x72xf32>, vector<72x8xf32>, vector<512x8xf32> -> vector<512x8xf32>
    %cst_133 = arith.constant dense<0.000000e+00> : vector<8xf32>
    %106 = vector.multi_reduction <add>, %105, %cst_133 [0] : vector<512x8xf32> to vector<8xf32>
    %107 = vector.shape_cast %106 : vector<8xf32> to vector<1x8xf32>
    %108 = arith.mulf %105, %105 : vector<512x8xf32>
    %cst_134 = arith.constant dense<0.000000e+00> : vector<8xf32>
    %109 = vector.multi_reduction <add>, %108, %cst_134 [0] : vector<512x8xf32> to vector<8xf32>
    %110 = vector.shape_cast %109 : vector<8xf32> to vector<1x8xf32>
    %cst_135 = arith.constant 0.001953125 : f32
    %111 = vector.broadcast %cst_135 : f32 to vector<1x8xf32>
    %112 = arith.mulf %107, %111 : vector<1x8xf32>
    %cst_136 = arith.constant 0.001953125 : f32
    %113 = vector.broadcast %cst_136 : f32 to vector<1x8xf32>
    %114 = arith.mulf %110, %113 : vector<1x8xf32>
    %115 = arith.mulf %112, %112 : vector<1x8xf32>
    %116 = arith.subf %114, %115 : vector<1x8xf32>
    %cst_137 = arith.constant 9.99999974E-6 : f32
    %117 = vector.broadcast %cst_137 : f32 to vector<1x8xf32>
    %118 = arith.addf %116, %117 : vector<1x8xf32>
    %119 = math.rsqrt %118 : vector<1x8xf32>
    %120 = arith.mulf %7, %119 : vector<1x8xf32>
    %121 = arith.mulf %112, %120 : vector<1x8xf32>
    %122 = arith.subf %8, %121 : vector<1x8xf32>
    %123 = vector.broadcast %120 : vector<1x8xf32> to vector<512x8xf32>
    %124 = arith.mulf %105, %123 : vector<512x8xf32>
    %125 = vector.broadcast %122 : vector<1x8xf32> to vector<512x8xf32>
    %126 = arith.addf %124, %125 : vector<512x8xf32>
    %127 = vector.shape_cast %126 : vector<512x8xf32> to vector<2x16x16x8xf32>
    %128 = arith.addf %9, %127 : vector<2x16x16x8xf32>
    %c0_138 = arith.constant 0 : index
    %c0_139 = arith.constant 0 : index
    %c0_140 = arith.constant 0 : index
    %c0_141 = arith.constant 0 : index
    %129 = vector.load %arg4[%c0_138, %c0_139, %c0_140, %c0_141] : memref<2x16x16x8xf32, #tpu.memory_space<vmem>>, vector<2x16x16x8xf32>
    tpu.vector_store %arg4[%c0_138, %c0_139, %c0_140, %c0_141], %128 {strides = array<i32>} : memref<2x16x16x8xf32, #tpu.memory_space<vmem>>, vector<2x16x16x8xf32>,
    return
  }
  func.func @transform_0(%arg0: i32) -> (i32, i32, i32, i32) {
    %c0_i32 = arith.constant 0 : i32
    %c0_i32_0 = arith.constant 0 : i32
    %c0_i32_1 = arith.constant 0 : i32
    %c0_i32_2 = arith.constant 0 : i32
    %c0_i32_3 = arith.constant 0 : i32
    return %c0_i32, %c0_i32_0, %c0_i32_1, %c0_i32_2 : i32, i32, i32, i32
  }
  func.func @transform_1(%arg0: i32) -> (i32, i32, i32, i32) {
    %c0_i32 = arith.constant 0 : i32
    %c0_i32_0 = arith.constant 0 : i32
    %c0_i32_1 = arith.constant 0 : i32
    %c0_i32_2 = arith.constant 0 : i32
    return %arg0, %c0_i32, %c0_i32_0, %c0_i32_1 : i32, i32, i32, i32
  }
  func.func @transform_2(%arg0: i32) -> (i32, i32, i32) {
    %c0_i32 = arith.constant 0 : i32
    %c0_i32_0 = arith.constant 0 : i32
    %c0_i32_1 = arith.constant 0 : i32
    return %arg0, %c0_i32, %c0_i32_0 : i32, i32, i32
  }
  func.func @transform_3(%arg0: i32) -> (i32, i32, i32, i32) {
    %c0_i32 = arith.constant 0 : i32
    %c0_i32_0 = arith.constant 0 : i32
    %c0_i32_1 = arith.constant 0 : i32
    %c0_i32_2 = arith.constant 0 : i32
    %c0_i32_3 = arith.constant 0 : i32
    return %c0_i32, %c0_i32_0, %c0_i32_1, %c0_i32_2 : i32, i32, i32, i32
  }
}

</mosaic_0001>

<llo_original>
// kernel: tpu_custom_call.1
$region0: #{tpu_custom_call.1}
  #allocation0 [shape = 'u32[]', space=smem, size = 0x4, offset = 0x4, fixed_abs, tag = 'smem constant byte address 0x4 - core index']
  #allocation1 [shape = 'u32[144,128]{1,0:T(1,128)}', space=vmem, size = 0x12000, scoped, tag = 'internal scratch']
  #allocation2 [shape = 'f32[2,18,18,8]{3,2,1,0:T(8,128)}', space=vmem, size = 0x6c000, scoped, tag = 'scratch operand']
  #allocation3 [shape = 'f32[512,72]{1,0:T(8,128)}', space=vmem, size = 0x40000, scoped, tag = 'scratch operand']
  %s0 = inlined_call_operand.vmem [shape: f32[2,16,16,8], index: 0, kind: input, shape index: {}]
  %s1 = inlined_call_operand.vmem [shape: f32[2,2,72,8], index: 1, kind: input, shape index: {}]
  %s2 = inlined_call_operand.vmem [shape: f32[2,4,8], index: 2, kind: input, shape index: {}]
  %s3 = inlined_call_operand.vmem [shape: f32[2,16,16,8], index: 3, kind: output, shape index: {}]
  %s4 = sld [smem:[#allocation0]]
  $region49: #{tpu_custom_call.1} parent=0
    _
  %s6 = ssub.s32 1, %s4
  %s7 = scalar_select 0, %s6, %s4
  loop: start=0, step=1, limit=4
  $region2: #{tpu_custom_call.1} parent=0 // loop_pre_header
    _
  $region3: #{tpu_custom_call.1} parent=0 // loop_header
    %s9 = sphi 0, %s13
    %p10 = scmp.ge.s32.totalorder %s9, 4
    %s17 = sphi 0, %s17
    %s19 = sphi 0, %s17
    %s20 = sphi 0, %s19
    %s34 = sphi 0, %s20
    %s40 = sphi 0, %s42
    %s43 = sphi 0, %s40
    %s44 = sphi 0, %s43
    %s60 = sphi 0, %s44
    %s66 = sphi 0, %s68
    %s69 = sphi 0, %s66
    %s70 = sphi 0, %s69
    %s86 = sphi 0, %s70
    %s90 = sphi 0, %s90
    %s92 = sphi 0, %s90
    %s93 = sphi 0, %s92
    %s107 = sphi 0, %s93
  $region4: #{tpu_custom_call.1} parent=0 // loop_header_branch
    %12 = sbr.rel (%p10) target = $region8
  $region5: #{tpu_custom_call.1} parent=0 // loop_body
    %s14 = ssub.s32 %s9, 1
    %s15 = ssub.s32 %s9, 2
    %s16 = sadd.s32 %s9, 1
    %s18 = sadd.s32 %s17, 1
    %p21 = scmp.eq.s32.totalorder %s9, 1
    %p22 = scmp.ne.s32.totalorder %s17, %s19
    %p23 = scmp.eq.s32.totalorder %s9, 0
    %p24 = por %p22, %p23
    %p25 = scmp.ne.s32.totalorder %s17, %s19
    %p26 = scmp.eq.s32.totalorder %s14, 1
    %p27 = por %p25, %p26
    %p28 = scmp.ne.s32.totalorder %s19, %s20
    %p29 = scmp.eq.s32.totalorder %s14, 0
    %p30 = por %p28, %p29
    %p31 = scmp.ne.s32.totalorder %s19, %s20
    %p32 = scmp.eq.s32.totalorder %s15, 1
    %p33 = por %p31, %p32
    %p35 = scmp.ne.s32.totalorder %s20, %s34
    %p36 = scmp.eq.s32.totalorder %s15, 0
    %p37 = por %p35, %p36
    %s38 = ssub.s32 %s9, %s16
    %p39 = scmp.eq.s32.totalorder %s38, 0
    %s41 = sadd.s32 %s40, 1
    %s42 = scalar_select %p39, %s40, %s41
    %p45 = pneg %p39
    %p46 = scmp.eq.s32.totalorder %s9, 1
    %p47 = por %p45, %p46
    %p48 = scmp.ne.s32.totalorder %s40, %s43
    %p49 = scmp.eq.s32.totalorder %s9, 0
    %p50 = por %p48, %p49
    %p51 = scmp.ne.s32.totalorder %s40, %s43
    %p52 = scmp.eq.s32.totalorder %s14, 1
    %p53 = por %p51, %p52
    %p54 = scmp.ne.s32.totalorder %s43, %s44
    %p55 = scmp.eq.s32.totalorder %s14, 0
    %p56 = por %p54, %p55
    %p57 = scmp.ne.s32.totalorder %s43, %s44
    %p58 = scmp.eq.s32.totalorder %s15, 1
    %p59 = por %p57, %p58
    %p61 = scmp.ne.s32.totalorder %s44, %s60
    %p62 = scmp.eq.s32.totalorder %s15, 0
    %p63 = por %p61, %p62
    %s64 = ssub.s32 %s9, %s16
    %p65 = scmp.eq.s32.totalorder %s64, 0
    %s67 = sadd.s32 %s66, 1
    %s68 = scalar_select %p65, %s66, %s67
    %p71 = pneg %p65
    %p72 = scmp.eq.s32.totalorder %s9, 1
    %p73 = por %p71, %p72
    %p74 = scmp.ne.s32.totalorder %s66, %s69
    %p75 = scmp.eq.s32.totalorder %s9, 0
    %p76 = por %p74, %p75
    %p77 = scmp.ne.s32.totalorder %s66, %s69
    %p78 = scmp.eq.s32.totalorder %s14, 1
    %p79 = por %p77, %p78
    %p80 = scmp.ne.s32.totalorder %s69, %s70
    %p81 = scmp.eq.s32.totalorder %s14, 0
    %p82 = por %p80, %p81
    %p83 = scmp.ne.s32.totalorder %s69, %s70
    %p84 = scmp.eq.s32.totalorder %s15, 1
    %p85 = por %p83, %p84
    %p87 = scmp.ne.s32.totalorder %s70, %s86
    %p88 = scmp.eq.s32.totalorder %s15, 0
    %p89 = por %p87, %p88
    %s91 = sadd.s32 %s90, 1
    %p94 = scmp.eq.s32.totalorder %s9, 1
    %p95 = scmp.ne.s32.totalorder %s90, %s92
    %p96 = scmp.eq.s32.totalorder %s9, 0
    %p97 = por %p95, %p96
    %p98 = scmp.ne.s32.totalorder %s90, %s92
    %p99 = scmp.eq.s32.totalorder %s14, 1
    %p100 = por %p98, %p99
    %p101 = scmp.ne.s32.totalorder %s92, %s93
    %p102 = scmp.eq.s32.totalorder %s14, 0
    %p103 = por %p101, %p102
    %p104 = scmp.ne.s32.totalorder %s92, %s93
    %p105 = scmp.eq.s32.totalorder %s15, 1
    %p106 = por %p104, %p105
    %p108 = scmp.ne.s32.totalorder %s93, %s107
    %p109 = scmp.eq.s32.totalorder %s15, 0
    %p110 = por %p108, %p109
    %p111 = scmp.le.s32.totalorder 1, %s9
    %p112 = scmp.lt.s32.totalorder %s9, 3
    %p113 = pnand %p111, %p112
    %p114 = pneg %p113
    // Predicated region
    $region9: #{tpu_custom_call.1} parent=5 // pred_check
      _
    $region10: #{tpu_custom_call.1} parent=5 // pred_check_branch
      %116 = sbr.rel (%p113) target = $region12
    $region11: #{tpu_custom_call.1} parent=5 // pred_region
      %s117 = ssub.s32 %s9, 1
      // Predicated region
      $region13: #{tpu_custom_call.1} parent=11 // pred_check
        %p118 = pneg %p30
      $region14: #{tpu_custom_call.1} parent=11 // pred_check_branch
        %120 = sbr.rel (%p118) target = $region16
      $region15: #{tpu_custom_call.1} parent=11 // pred_region
        _
      $region16: #{tpu_custom_call.1} parent=11 // pred_fallthru
        _
    $region12: #{tpu_custom_call.1} parent=5 // pred_fallthru
      _
    %p121 = scmp.lt.s32.totalorder %s9, 2
    // Predicated region
    $region17: #{tpu_custom_call.1} parent=5 // pred_check
      %p122 = pneg %p121
    $region18: #{tpu_custom_call.1} parent=5 // pred_check_branch
      %124 = sbr.rel (%p122) target = $region20
    $region19: #{tpu_custom_call.1} parent=5 // pred_region
      // Predicated region
      $region21: #{tpu_custom_call.1} parent=19 // pred_check
        %p125 = pneg %p50
      $region22: #{tpu_custom_call.1} parent=19 // pred_check_branch
        %127 = sbr.rel (%p125) target = $region24
      $region23: #{tpu_custom_call.1} parent=19 // pred_region
        %p128 = scmp.lt.s32.totalorder %s9, 1
        %s129 = scalar_select %p128, %s9, 1
        %s130 = smul.addr %s129, 18
        %s131 = smul.addr %s130, 8
        %s132 = scalar_lea.vmem %s1, %s131
      $region24: #{tpu_custom_call.1} parent=19 // pred_fallthru
        _
      // Predicated region
      $region25: #{tpu_custom_call.1} parent=19 // pred_check
        %p133 = pneg %p76
      $region26: #{tpu_custom_call.1} parent=19 // pred_check_branch
        %135 = sbr.rel (%p133) target = $region28
      $region27: #{tpu_custom_call.1} parent=19 // pred_region
        %p136 = scmp.lt.s32.totalorder %s9, 1
        %s137 = scalar_select %p136, %s9, 1
        %s138 = smul.addr %s137, 4
        %s139 = scalar_lea.vmem %s2, %s138
      $region28: #{tpu_custom_call.1} parent=19 // pred_fallthru
        _
    $region20: #{tpu_custom_call.1} parent=5 // pred_fallthru
      _
    %p140 = scmp.le.s32.totalorder 1, %s9
    %p141 = scmp.lt.s32.totalorder %s9, 3
    %p142 = pnand %p140, %p141
    %p143 = pneg %p142
    // Predicated region
    $region29: #{tpu_custom_call.1} parent=5 // pred_check
      _
    $region30: #{tpu_custom_call.1} parent=5 // pred_check_branch
      %145 = sbr.rel (%p142) target = $region32
    $region31: #{tpu_custom_call.1} parent=5 // pred_region
      %s146 = ssub.s32 %s9, 1
      %p147 = pneg %p30
      %p148 = pneg %p27
      %p149 = scmp.lt.s32.totalorder %s14, 1
      %s150 = scalar_select %p149, %s14, 1
      %s151 = smul.addr %s150, 18
      %s152 = smul.addr %s151, 8
      %s153 = scalar_lea.vmem %s1, %s152
      %p154 = pneg %p56
      %p155 = pneg %p53
      %p156 = scmp.lt.s32.totalorder %s14, 1
      %s157 = scalar_select %p156, %s14, 1
      %s158 = smul.addr %s157, 4
      %s159 = scalar_lea.vmem %s2, %s158
      %p160 = pneg %p82
      %p161 = pneg %p79
      %p162 = pneg %p103
      %p163 = pneg %p100
      %p164 = scmp.lt.s32.totalorder %s14, 1
      %s165 = scalar_select %p164, %s14, 1
      %s166 = smul.addr %s165, 18
      %s167 = smul.addr %s166, 8
      %s168 = scalar_lea.vmem %s1, %s167
      %p169 = scmp.lt.s32.totalorder %s14, 1
      %s170 = scalar_select %p169, %s14, 1
      %s171 = smul.addr %s170, 4
      %s172 = scalar_lea.vmem %s2, %s171
      %p173 = scmp.eq.s32.totalorder %s14, 0
      // Predicated region
      $region33: #{tpu_custom_call.1} parent=31 // pred_check
        %p174 = pneg %p173
      $region34: #{tpu_custom_call.1} parent=31 // pred_check_branch
        %176 = sbr.rel (%p174) target = $region36
      $region35: #{tpu_custom_call.1} parent=31 // pred_region
        %vm177 = vcmask 64512
        %178 = vst.msk [vmem:[#allocation2] sm:$0xff] %vm177, 0.0
        %179 = vst.msk [vmem:[#allocation2 + $0x8] sm:$0xff] %vm177, 0.0
        %vm180 = vcmask 58368
        %181 = vst.msk [vmem:[#allocation2 + $0x10] sm:$0x3] %vm180, 0.0
        %182 = vst.msk [vmem:[#allocation2 + $0x18] sm:$0xff] %vm177, 0.0
        %183 = vst.msk [vmem:[#allocation2 + $0x20] sm:$0xff] %vm177, 0.0
        %184 = vst.msk [vmem:[#allocation2 + $0x28] sm:$0x3] %vm180, 0.0
        %185 = vst.msk [vmem:[#allocation2 + $0x30] sm:$0xff] %vm177, 0.0
        %186 = vst.msk [vmem:[#allocation2 + $0x38] sm:$0xff] %vm177, 0.0
        %187 = vst.msk [vmem:[#allocation2 + $0x40] sm:$0x3] %vm180, 0.0
        %188 = vst.msk [vmem:[#allocation2 + $0x48] sm:$0xff] %vm177, 0.0
        %189 = vst.msk [vmem:[#allocation2 + $0x50] sm:$0xff] %vm177, 0.0
        %190 = vst.msk [vmem:[#allocation2 + $0x58] sm:$0x3] %vm180, 0.0
        %191 = vst.msk [vmem:[#allocation2 + $0x60] sm:$0xff] %vm177, 0.0
        %192 = vst.msk [vmem:[#allocation2 + $0x68] sm:$0xff] %vm177, 0.0
        %193 = vst.msk [vmem:[#allocation2 + $0x70] sm:$0x3] %vm180, 0.0
        %194 = vst.msk [vmem:[#allocation2 + $0x78] sm:$0xff] %vm177, 0.0
        %195 = vst.msk [vmem:[#allocation2 + $0x80] sm:$0xff] %vm177, 0.0
        %196 = vst.msk [vmem:[#allocation2 + $0x88] sm:$0x3] %vm180, 0.0
        %197 = vst.msk [vmem:[#allocation2 + $0x90] sm:$0xff] %vm177, 0.0
        %198 = vst.msk [vmem:[#allocation2 + $0x98] sm:$0xff] %vm177, 0.0
        %199 = vst.msk [vmem:[#allocation2 + $0xa0] sm:$0x3] %vm180, 0.0
        %200 = vst.msk [vmem:[#allocation2 + $0xa8] sm:$0xff] %vm177, 0.0
        %201 = vst.msk [vmem:[#allocation2 + $0xb0] sm:$0xff] %vm177, 0.0
        %202 = vst.msk [vmem:[#allocation2 + $0xb8] sm:$0x3] %vm180, 0.0
        %203 = vst.msk [vmem:[#allocation2 + $0xc0] sm:$0xff] %vm177, 0.0
        %204 = vst.msk [vmem:[#allocation2 + $0xc8] sm:$0xff] %vm177, 0.0
        %205 = vst.msk [vmem:[#allocation2 + $0xd0] sm:$0x3] %vm180, 0.0
        %206 = vst.msk [vmem:[#allocation2 + $0xd8] sm:$0xff] %vm177, 0.0
        %207 = vst.msk [vmem:[#allocation2 + $0xe0] sm:$0xff] %vm177, 0.0
        %208 = vst.msk [vmem:[#allocation2 + $0xe8] sm:$0x3] %vm180, 0.0
        %209 = vst.msk [vmem:[#allocation2 + $0xf0] sm:$0xff] %vm177, 0.0
        %210 = vst.msk [vmem:[#allocation2 + $0xf8] sm:$0xff] %vm177, 0.0
        %211 = vst.msk [vmem:[#allocation2 + $0x100] sm:$0x3] %vm180, 0.0
        %212 = vst.msk [vmem:[#allocation2 + $0x108] sm:$0xff] %vm177, 0.0
        %213 = vst.msk [vmem:[#allocation2 + $0x110] sm:$0xff] %vm177, 0.0
        %214 = vst.msk [vmem:[#allocation2 + $0x118] sm:$0x3] %vm180, 0.0
        %215 = vst.msk [vmem:[#allocation2 + $0x120] sm:$0xff] %vm177, 0.0
        %216 = vst.msk [vmem:[#allocation2 + $0x128] sm:$0xff] %vm177, 0.0
        %217 = vst.msk [vmem:[#allocation2 + $0x130] sm:$0x3] %vm180, 0.0
        %218 = vst.msk [vmem:[#allocation2 + $0x138] sm:$0xff] %vm177, 0.0
        %219 = vst.msk [vmem:[#allocation2 + $0x140] sm:$0xff] %vm177, 0.0
        %220 = vst.msk [vmem:[#allocation2 + $0x148] sm:$0x3] %vm180, 0.0
        %221 = vst.msk [vmem:[#allocation2 + $0x150] sm:$0xff] %vm177, 0.0
        %222 = vst.msk [vmem:[#allocation2 + $0x158] sm:$0xff] %vm177, 0.0
        %223 = vst.msk [vmem:[#allocation2 + $0x160] sm:$0x3] %vm180, 0.0
        %224 = vst.msk [vmem:[#allocation2 + $0x168] sm:$0xff] %vm177, 0.0
        %225 = vst.msk [vmem:[#allocation2 + $0x170] sm:$0xff] %vm177, 0.0
        %226 = vst.msk [vmem:[#allocation2 + $0x178] sm:$0x3] %vm180, 0.0
        %227 = vst.msk [vmem:[#allocation2 + $0x180] sm:$0xff] %vm177, 0.0
        %228 = vst.msk [vmem:[#allocation2 + $0x188] sm:$0xff] %vm177, 0.0
        %229 = vst.msk [vmem:[#allocation2 + $0x190] sm:$0x3] %vm180, 0.0
        %230 = vst.msk [vmem:[#allocation2 + $0x198] sm:$0xff] %vm177, 0.0
        %231 = vst.msk [vmem:[#allocation2 + $0x1a0] sm:$0xff] %vm177, 0.0
        %232 = vst.msk [vmem:[#allocation2 + $0x1a8] sm:$0x3] %vm180, 0.0
        %233 = vst.msk [vmem:[#allocation2 + $0x1b0] sm:$0xff] %vm177, 0.0
        %234 = vst.msk [vmem:[#allocation2 + $0x1b8] sm:$0xff] %vm177, 0.0
        %235 = vst.msk [vmem:[#allocation2 + $0x1c0] sm:$0x3] %vm180, 0.0
        %236 = vst.msk [vmem:[#allocation2 + $0x1c8] sm:$0xff] %vm177, 0.0
        %237 = vst.msk [vmem:[#allocation2 + $0x1d0] sm:$0xff] %vm177, 0.0
        %238 = vst.msk [vmem:[#allocation2 + $0x1d8] sm:$0x3] %vm180, 0.0
        %239 = vst.msk [vmem:[#allocation2 + $0x1e0] sm:$0xff] %vm177, 0.0
        %240 = vst.msk [vmem:[#allocation2 + $0x1e8] sm:$0xff] %vm177, 0.0
        %241 = vst.msk [vmem:[#allocation2 + $0x1f0] sm:$0x3] %vm180, 0.0
        %242 = vst.msk [vmem:[#allocation2 + $0x1f8] sm:$0xff] %vm177, 0.0
        %243 = vst.msk [vmem:[#allocation2 + $0x200] sm:$0xff] %vm177, 0.0
        %244 = vst.msk [vmem:[#allocation2 + $0x208] sm:$0x3] %vm180, 0.0
        %245 = vst.msk [vmem:[#allocation2 + $0x210] sm:$0xff] %vm177, 0.0
        %246 = vst.msk [vmem:[#allocation2 + $0x218] sm:$0xff] %vm177, 0.0
        %247 = vst.msk [vmem:[#allocation2 + $0x220] sm:$0x3] %vm180, 0.0
        %248 = vst.msk [vmem:[#allocation2 + $0x228] sm:$0xff] %vm177, 0.0
        %249 = vst.msk [vmem:[#allocation2 + $0x230] sm:$0xff] %vm177, 0.0
        %250 = vst.msk [vmem:[#allocation2 + $0x238] sm:$0x3] %vm180, 0.0
        %251 = vst.msk [vmem:[#allocation2 + $0x240] sm:$0xff] %vm177, 0.0
        %252 = vst.msk [vmem:[#allocation2 + $0x248] sm:$0xff] %vm177, 0.0
        %253 = vst.msk [vmem:[#allocation2 + $0x250] sm:$0x3] %vm180, 0.0
        %254 = vst.msk [vmem:[#allocation2 + $0x258] sm:$0xff] %vm177, 0.0
        %255 = vst.msk [vmem:[#allocation2 + $0x260] sm:$0xff] %vm177, 0.0
        %256 = vst.msk [vmem:[#allocation2 + $0x268] sm:$0x3] %vm180, 0.0
        %257 = vst.msk [vmem:[#allocation2 + $0x270] sm:$0xff] %vm177, 0.0
        %258 = vst.msk [vmem:[#allocation2 + $0x278] sm:$0xff] %vm177, 0.0
        %259 = vst.msk [vmem:[#allocation2 + $0x280] sm:$0x3] %vm180, 0.0
        %260 = vst.msk [vmem:[#allocation2 + $0x288] sm:$0xff] %vm177, 0.0
        %261 = vst.msk [vmem:[#allocation2 + $0x290] sm:$0xff] %vm177, 0.0
        %262 = vst.msk [vmem:[#allocation2 + $0x298] sm:$0x3] %vm180, 0.0
        %263 = vst.msk [vmem:[#allocation2 + $0x2a0] sm:$0xff] %vm177, 0.0
        %264 = vst.msk [vmem:[#allocation2 + $0x2a8] sm:$0xff] %vm177, 0.0
        %265 = vst.msk [vmem:[#allocation2 + $0x2b0] sm:$0x3] %vm180, 0.0
        %266 = vst.msk [vmem:[#allocation2 + $0x2b8] sm:$0xff] %vm177, 0.0
        %267 = vst.msk [vmem:[#allocation2 + $0x2c0] sm:$0xff] %vm177, 0.0
        %268 = vst.msk [vmem:[#allocation2 + $0x2c8] sm:$0x3] %vm180, 0.0
        %269 = vst.msk [vmem:[#allocation2 + $0x2d0] sm:$0xff] %vm177, 0.0
        %270 = vst.msk [vmem:[#allocation2 + $0x2d8] sm:$0xff] %vm177, 0.0
        %271 = vst.msk [vmem:[#allocation2 + $0x2e0] sm:$0x3] %vm180, 0.0
        %272 = vst.msk [vmem:[#allocation2 + $0x2e8] sm:$0xff] %vm177, 0.0
        %273 = vst.msk [vmem:[#allocation2 + $0x2f0] sm:$0xff] %vm177, 0.0
        %274 = vst.msk [vmem:[#allocation2 + $0x2f8] sm:$0x3] %vm180, 0.0
        %275 = vst.msk [vmem:[#allocation2 + $0x300] sm:$0xff] %vm177, 0.0
        %276 = vst.msk [vmem:[#allocation2 + $0x308] sm:$0xff] %vm177, 0.0
        %277 = vst.msk [vmem:[#allocation2 + $0x310] sm:$0x3] %vm180, 0.0
        %278 = vst.msk [vmem:[#allocation2 + $0x318] sm:$0xff] %vm177, 0.0
        %279 = vst.msk [vmem:[#allocation2 + $0x320] sm:$0xff] %vm177, 0.0
        %280 = vst.msk [vmem:[#allocation2 + $0x328] sm:$0x3] %vm180, 0.0
        %281 = vst.msk [vmem:[#allocation2 + $0x330] sm:$0xff] %vm177, 0.0
        %282 = vst.msk [vmem:[#allocation2 + $0x338] sm:$0xff] %vm177, 0.0
        %283 = vst.msk [vmem:[#allocation2 + $0x340] sm:$0x3] %vm180, 0.0
        %284 = vst.msk [vmem:[#allocation2 + $0x348] sm:$0xff] %vm177, 0.0
        %285 = vst.msk [vmem:[#allocation2 + $0x350] sm:$0xff] %vm177, 0.0
        %286 = vst.msk [vmem:[#allocation2 + $0x358] sm:$0x3] %vm180, 0.0
        %v287 = vld [vmem:[%s0] sm:$0xff]
        %v288 = vld [vmem:[%s0 + $0x8] sm:$0xff]
        %v289 = vld [vmem:[%s0 + $0x10] sm:$0xff]
        %v290 = vld [vmem:[%s0 + $0x18] sm:$0xff]
        %v291 = vld [vmem:[%s0 + $0x20] sm:$0xff]
        %v292 = vld [vmem:[%s0 + $0x28] sm:$0xff]
        %v293 = vld [vmem:[%s0 + $0x30] sm:$0xff]
        %v294 = vld [vmem:[%s0 + $0x38] sm:$0xff]
        %v295 = vld [vmem:[%s0 + $0x40] sm:$0xff]
        %v296 = vld [vmem:[%s0 + $0x48] sm:$0xff]
        %v297 = vld [vmem:[%s0 + $0x50] sm:$0xff]
        %v298 = vld [vmem:[%s0 + $0x58] sm:$0xff]
        %v299 = vld [vmem:[%s0 + $0x60] sm:$0xff]
        %v300 = vld [vmem:[%s0 + $0x68] sm:$0xff]
        %v301 = vld [vmem:[%s0 + $0x70] sm:$0xff]
        %v302 = vld [vmem:[%s0 + $0x78] sm:$0xff]
        %v303 = vld [vmem:[%s0 + $0x80] sm:$0xff]
        %v304 = vld [vmem:[%s0 + $0x88] sm:$0xff]
        %v305 = vld [vmem:[%s0 + $0x90] sm:$0xff]
        %v306 = vld [vmem:[%s0 + $0x98] sm:$0xff]
        %v307 = vld [vmem:[%s0 + $0xa0] sm:$0xff]
        %v308 = vld [vmem:[%s0 + $0xa8] sm:$0xff]
        %v309 = vld [vmem:[%s0 + $0xb0] sm:$0xff]
        %v310 = vld [vmem:[%s0 + $0xb8] sm:$0xff]
        %v311 = vld [vmem:[%s0 + $0xc0] sm:$0xff]
        %v312 = vld [vmem:[%s0 + $0xc8] sm:$0xff]
        %v313 = vld [vmem:[%s0 + $0xd0] sm:$0xff]
        %v314 = vld [vmem:[%s0 + $0xd8] sm:$0xff]
        %v315 = vld [vmem:[%s0 + $0xe0] sm:$0xff]
        %v316 = vld [vmem:[%s0 + $0xe8] sm:$0xff]
        %v317 = vld [vmem:[%s0 + $0xf0] sm:$0xff]
        %v318 = vld [vmem:[%s0 + $0xf8] sm:$0xff]
        %v319 = vld [vmem:[%s0 + $0x100] sm:$0xff]
        %v320 = vld [vmem:[%s0 + $0x108] sm:$0xff]
        %v321 = vld [vmem:[%s0 + $0x110] sm:$0xff]
        %v322 = vld [vmem:[%s0 + $0x118] sm:$0xff]
        %v323 = vld [vmem:[%s0 + $0x120] sm:$0xff]
        %v324 = vld [vmem:[%s0 + $0x128] sm:$0xff]
        %v325 = vld [vmem:[%s0 + $0x130] sm:$0xff]
        %v326 = vld [vmem:[%s0 + $0x138] sm:$0xff]
        %v327 = vld [vmem:[%s0 + $0x140] sm:$0xff]
        %v328 = vld [vmem:[%s0 + $0x148] sm:$0xff]
        %v329 = vld [vmem:[%s0 + $0x150] sm:$0xff]
        %v330 = vld [vmem:[%s0 + $0x158] sm:$0xff]
        %v331 = vld [vmem:[%s0 + $0x160] sm:$0xff]
        %v332 = vld [vmem:[%s0 + $0x168] sm:$0xff]
        %v333 = vld [vmem:[%s0 + $0x170] sm:$0xff]
        %v334 = vld [vmem:[%s0 + $0x178] sm:$0xff]
        %v335 = vld [vmem:[%s0 + $0x180] sm:$0xff]
        %v336 = vld [vmem:[%s0 + $0x188] sm:$0xff]
        %v337 = vld [vmem:[%s0 + $0x190] sm:$0xff]
        %v338 = vld [vmem:[%s0 + $0x198] sm:$0xff]
        %v339 = vld [vmem:[%s0 + $0x1a0] sm:$0xff]
        %v340 = vld [vmem:[%s0 + $0x1a8] sm:$0xff]
        %v341 = vld [vmem:[%s0 + $0x1b0] sm:$0xff]
        %v342 = vld [vmem:[%s0 + $0x1b8] sm:$0xff]
        %v343 = vld [vmem:[%s0 + $0x1c0] sm:$0xff]
        %v344 = vld [vmem:[%s0 + $0x1c8] sm:$0xff]
        %v345 = vld [vmem:[%s0 + $0x1d0] sm:$0xff]
        %v346 = vld [vmem:[%s0 + $0x1d8] sm:$0xff]
        %v347 = vld [vmem:[%s0 + $0x1e0] sm:$0xff]
        %v348 = vld [vmem:[%s0 + $0x1e8] sm:$0xff]
        %v349 = vld [vmem:[%s0 + $0x1f0] sm:$0xff]
        %v350 = vld [vmem:[%s0 + $0x1f8] sm:$0xff]
        %351 = vst.msk [vmem:[%s3] sm:$0xff] %vm177, %v287
        %352 = vst.msk [vmem:[%s3 + $0x8] sm:$0xff] %vm177, %v288
        %353 = vst.msk [vmem:[%s3 + $0x10] sm:$0xff] %vm177, %v289
        %354 = vst.msk [vmem:[%s3 + $0x18] sm:$0xff] %vm177, %v290
        %355 = vst.msk [vmem:[%s3 + $0x20] sm:$0xff] %vm177, %v291
        %356 = vst.msk [vmem:[%s3 + $0x28] sm:$0xff] %vm177, %v292
        %357 = vst.msk [vmem:[%s3 + $0x30] sm:$0xff] %vm177, %v293
        %358 = vst.msk [vmem:[%s3 + $0x38] sm:$0xff] %vm177, %v294
        %359 = vst.msk [vmem:[%s3 + $0x40] sm:$0xff] %vm177, %v295
        %360 = vst.msk [vmem:[%s3 + $0x48] sm:$0xff] %vm177, %v296
        %361 = vst.msk [vmem:[%s3 + $0x50] sm:$0xff] %vm177, %v297
        %362 = vst.msk [vmem:[%s3 + $0x58] sm:$0xff] %vm177, %v298
        %363 = vst.msk [vmem:[%s3 + $0x60] sm:$0xff] %vm177, %v299
        %364 = vst.msk [vmem:[%s3 + $0x68] sm:$0xff] %vm177, %v300
        %365 = vst.msk [vmem:[%s3 + $0x70] sm:$0xff] %vm177, %v301
        %366 = vst.msk [vmem:[%s3 + $0x78] sm:$0xff] %vm177, %v302
        %367 = vst.msk [vmem:[%s3 + $0x80] sm:$0xff] %vm177, %v303
        %368 = vst.msk [vmem:[%s3 + $0x88] sm:$0xff] %vm177, %v304
        %369 = vst.msk [vmem:[%s3 + $0x90] sm:$0xff] %vm177, %v305
        %370 = vst.msk [vmem:[%s3 + $0x98] sm:$0xff] %vm177, %v306
        %371 = vst.msk [vmem:[%s3 + $0xa0] sm:$0xff] %vm177, %v307
        %372 = vst.msk [vmem:[%s3 + $0xa8] sm:$0xff] %vm177, %v308
        %373 = vst.msk [vmem:[%s3 + $0xb0] sm:$0xff] %vm177, %v309
        %374 = vst.msk [vmem:[%s3 + $0xb8] sm:$0xff] %vm177, %v310
        %375 = vst.msk [vmem:[%s3 + $0xc0] sm:$0xff] %vm177, %v311
        %376 = vst.msk [vmem:[%s3 + $0xc8] sm:$0xff] %vm177, %v312
        %377 = vst.msk [vmem:[%s3 + $0xd0] sm:$0xff] %vm177, %v313
        %378 = vst.msk [vmem:[%s3 + $0xd8] sm:$0xff] %vm177, %v314
        %379 = vst.msk [vmem:[%s3 + $0xe0] sm:$0xff] %vm177, %v315
        %380 = vst.msk [vmem:[%s3 + $0xe8] sm:$0xff] %vm177, %v316
        %381 = vst.msk [vmem:[%s3 + $0xf0] sm:$0xff] %vm177, %v317
        %382 = vst.msk [vmem:[%s3 + $0xf8] sm:$0xff] %vm177, %v318
        %383 = vst.msk [vmem:[%s3 + $0x100] sm:$0xff] %vm177, %v319
        %384 = vst.msk [vmem:[%s3 + $0x108] sm:$0xff] %vm177, %v320
        %385 = vst.msk [vmem:[%s3 + $0x110] sm:$0xff] %vm177, %v321
        %386 = vst.msk [vmem:[%s3 + $0x118] sm:$0xff] %vm177, %v322
        %387 = vst.msk [vmem:[%s3 + $0x120] sm:$0xff] %vm177, %v323
        %388 = vst.msk [vmem:[%s3 + $0x128] sm:$0xff] %vm177, %v324
        %389 = vst.msk [vmem:[%s3 + $0x130] sm:$0xff] %vm177, %v325
        %390 = vst.msk [vmem:[%s3 + $0x138] sm:$0xff] %vm177, %v326
        %391 = vst.msk [vmem:[%s3 + $0x140] sm:$0xff] %vm177, %v327
        %392 = vst.msk [vmem:[%s3 + $0x148] sm:$0xff] %vm177, %v328
        %393 = vst.msk [vmem:[%s3 + $0x150] sm:$0xff] %vm177, %v329
        %394 = vst.msk [vmem:[%s3 + $0x158] sm:$0xff] %vm177, %v330
        %395 = vst.msk [vmem:[%s3 + $0x160] sm:$0xff] %vm177, %v331
        %396 = vst.msk [vmem:[%s3 + $0x168] sm:$0xff] %vm177, %v332
        %397 = vst.msk [vmem:[%s3 + $0x170] sm:$0xff] %vm177, %v333
        %398 = vst.msk [vmem:[%s3 + $0x178] sm:$0xff] %vm177, %v334
        %399 = vst.msk [vmem:[%s3 + $0x180] sm:$0xff] %vm177, %v335
        %400 = vst.msk [vmem:[%s3 + $0x188] sm:$0xff] %vm177, %v336
        %401 = vst.msk [vmem:[%s3 + $0x190] sm:$0xff] %vm177, %v337
        %402 = vst.msk [vmem:[%s3 + $0x198] sm:$0xff] %vm177, %v338
        %403 = vst.msk [vmem:[%s3 + $0x1a0] sm:$0xff] %vm177, %v339
        %404 = vst.msk [vmem:[%s3 + $0x1a8] sm:$0xff] %vm177, %v340
        %405 = vst.msk [vmem:[%s3 + $0x1b0] sm:$0xff] %vm177, %v341
        %406 = vst.msk [vmem:[%s3 + $0x1b8] sm:$0xff] %vm177, %v342
        %407 = vst.msk [vmem:[%s3 + $0x1c0] sm:$0xff] %vm177, %v343
        %408 = vst.msk [vmem:[%s3 + $0x1c8] sm:$0xff] %vm177, %v344
        %409 = vst.msk [vmem:[%s3 + $0x1d0] sm:$0xff] %vm177, %v345
        %410 = vst.msk [vmem:[%s3 + $0x1d8] sm:$0xff] %vm177, %v346
        %411 = vst.msk [vmem:[%s3 + $0x1e0] sm:$0xff] %vm177, %v347
        %412 = vst.msk [vmem:[%s3 + $0x1e8] sm:$0xff] %vm177, %v348
        %413 = vst.msk [vmem:[%s3 + $0x1f0] sm:$0xff] %vm177, %v349
        %414 = vst.msk [vmem:[%s3 + $0x1f8] sm:$0xff] %vm177, %v350
      $region36: #{tpu_custom_call.1} parent=31 // pred_fallthru
        _
      %v415 = vld [vmem:[%s172] sm:$0xf]
      %v416 = vld [vmem:[%s3] sm:$0xff]
      %v417 = vld [vmem:[%s3 + $0x8] sm:$0xff]
      %v418 = vld [vmem:[%s3 + $0x10] sm:$0xff]
      %v419 = vld [vmem:[%s3 + $0x18] sm:$0xff]
      %v420 = vld [vmem:[%s3 + $0x20] sm:$0xff]
      %v421 = vld [vmem:[%s3 + $0x28] sm:$0xff]
      %v422 = vld [vmem:[%s3 + $0x30] sm:$0xff]
      %v423 = vld [vmem:[%s3 + $0x38] sm:$0xff]
      %v424 = vld [vmem:[%s3 + $0x40] sm:$0xff]
      %v425 = vld [vmem:[%s3 + $0x48] sm:$0xff]
      %v426 = vld [vmem:[%s3 + $0x50] sm:$0xff]
      %v427 = vld [vmem:[%s3 + $0x58] sm:$0xff]
      %v428 = vld [vmem:[%s3 + $0x60] sm:$0xff]
      %v429 = vld [vmem:[%s3 + $0x68] sm:$0xff]
      %v430 = vld [vmem:[%s3 + $0x70] sm:$0xff]
      %v431 = vld [vmem:[%s3 + $0x78] sm:$0xff]
      %v432 = vld [vmem:[%s3 + $0x80] sm:$0xff]
      %v433 = vld [vmem:[%s3 + $0x88] sm:$0xff]
      %v434 = vld [vmem:[%s3 + $0x90] sm:$0xff]
      %v435 = vld [vmem:[%s3 + $0x98] sm:$0xff]
      %v436 = vld [vmem:[%s3 + $0xa0] sm:$0xff]
      %v437 = vld [vmem:[%s3 + $0xa8] sm:$0xff]
      %v438 = vld [vmem:[%s3 + $0xb0] sm:$0xff]
      %v439 = vld [vmem:[%s3 + $0xb8] sm:$0xff]
      %v440 = vld [vmem:[%s3 + $0xc0] sm:$0xff]
      %v441 = vld [vmem:[%s3 + $0xc8] sm:$0xff]
      %v442 = vld [vmem:[%s3 + $0xd0] sm:$0xff]
      %v443 = vld [vmem:[%s3 + $0xd8] sm:$0xff]
      %v444 = vld [vmem:[%s3 + $0xe0] sm:$0xff]
      %v445 = vld [vmem:[%s3 + $0xe8] sm:$0xff]
      %v446 = vld [vmem:[%s3 + $0xf0] sm:$0xff]
      %v447 = vld [vmem:[%s3 + $0xf8] sm:$0xff]
      %v448 = vld [vmem:[%s3 + $0x100] sm:$0xff]
      %v449 = vld [vmem:[%s3 + $0x108] sm:$0xff]
      %v450 = vld [vmem:[%s3 + $0x110] sm:$0xff]
      %v451 = vld [vmem:[%s3 + $0x118] sm:$0xff]
      %v452 = vld [vmem:[%s3 + $0x120] sm:$0xff]
      %v453 = vld [vmem:[%s3 + $0x128] sm:$0xff]
      %v454 = vld [vmem:[%s3 + $0x130] sm:$0xff]
      %v455 = vld [vmem:[%s3 + $0x138] sm:$0xff]
      %v456 = vld [vmem:[%s3 + $0x140] sm:$0xff]
      %v457 = vld [vmem:[%s3 + $0x148] sm:$0xff]
      %v458 = vld [vmem:[%s3 + $0x150] sm:$0xff]
      %v459 = vld [vmem:[%s3 + $0x158] sm:$0xff]
      %v460 = vld [vmem:[%s3 + $0x160] sm:$0xff]
      %v461 = vld [vmem:[%s3 + $0x168] sm:$0xff]
      %v462 = vld [vmem:[%s3 + $0x170] sm:$0xff]
      %v463 = vld [vmem:[%s3 + $0x178] sm:$0xff]
      %v464 = vld [vmem:[%s3 + $0x180] sm:$0xff]
      %v465 = vld [vmem:[%s3 + $0x188] sm:$0xff]
      %v466 = vld [vmem:[%s3 + $0x190] sm:$0xff]
      %v467 = vld [vmem:[%s3 + $0x198] sm:$0xff]
      %v468 = vld [vmem:[%s3 + $0x1a0] sm:$0xff]
      %v469 = vld [vmem:[%s3 + $0x1a8] sm:$0xff]
      %v470 = vld [vmem:[%s3 + $0x1b0] sm:$0xff]
      %v471 = vld [vmem:[%s3 + $0x1b8] sm:$0xff]
      %v472 = vld [vmem:[%s3 + $0x1c0] sm:$0xff]
      %v473 = vld [vmem:[%s3 + $0x1c8] sm:$0xff]
      %v474 = vld [vmem:[%s3 + $0x1d0] sm:$0xff]
      %v475 = vld [vmem:[%s3 + $0x1d8] sm:$0xff]
      %v476 = vld [vmem:[%s3 + $0x1e0] sm:$0xff]
      %v477 = vld [vmem:[%s3 + $0x1e8] sm:$0xff]
      %v478 = vld [vmem:[%s3 + $0x1f0] sm:$0xff]
      %v479 = vld [vmem:[%s3 + $0x1f8] sm:$0xff]
      %v480 = vld [vmem:[%s168] sm:$0xff]
      %v481 = vld [vmem:[%s168 + $0x8] sm:$0xff]
      %v482 = vld [vmem:[%s168 + $0x10] sm:$0xff]
      %v483 = vld [vmem:[%s168 + $0x18] sm:$0xff]
      %v484 = vld [vmem:[%s168 + $0x20] sm:$0xff]
      %v485 = vld [vmem:[%s168 + $0x28] sm:$0xff]
      %v486 = vld [vmem:[%s168 + $0x30] sm:$0xff]
      %v487 = vld [vmem:[%s168 + $0x38] sm:$0xff]
      %v488 = vld [vmem:[%s168 + $0x40] sm:$0xff]
      %s489 = scalar_lea.vmem [#allocation2], 24
      %vm490 = vcmask 64512
      %491 = vst.msk [vmem:[%s489 + $0x1] sm:$0xff] %vm490, %v416
      %492 = vst.msk [vmem:[%s489 + $0x9] sm:$0xff] %vm490, %v417
      %493 = vst.msk [vmem:[%s489 + $0x19] sm:$0xff] %vm490, %v418
      %494 = vst.msk [vmem:[%s489 + $0x21] sm:$0xff] %vm490, %v419
      %495 = vst.msk [vmem:[%s489 + $0x31] sm:$0xff] %vm490, %v420
      %496 = vst.msk [vmem:[%s489 + $0x39] sm:$0xff] %vm490, %v421
      %497 = vst.msk [vmem:[%s489 + $0x49] sm:$0xff] %vm490, %v422
      %498 = vst.msk [vmem:[%s489 + $0x51] sm:$0xff] %vm490, %v423
      %499 = vst.msk [vmem:[%s489 + $0x61] sm:$0xff] %vm490, %v424
      %500 = vst.msk [vmem:[%s489 + $0x69] sm:$0xff] %vm490, %v425
      %501 = vst.msk [vmem:[%s489 + $0x79] sm:$0xff] %vm490, %v426
      %502 = vst.msk [vmem:[%s489 + $0x81] sm:$0xff] %vm490, %v427
      %503 = vst.msk [vmem:[%s489 + $0x91] sm:$0xff] %vm490, %v428
      %504 = vst.msk [vmem:[%s489 + $0x99] sm:$0xff] %vm490, %v429
      %505 = vst.msk [vmem:[%s489 + $0xa9] sm:$0xff] %vm490, %v430
      %506 = vst.msk [vmem:[%s489 + $0xb1] sm:$0xff] %vm490, %v431
      %507 = vst.msk [vmem:[%s489 + $0xc1] sm:$0xff] %vm490, %v432
      %508 = vst.msk [vmem:[%s489 + $0xc9] sm:$0xff] %vm490, %v433
      %509 = vst.msk [vmem:[%s489 + $0xd9] sm:$0xff] %vm490, %v434
      %510 = vst.msk [vmem:[%s489 + $0xe1] sm:$0xff] %vm490, %v435
      %511 = vst.msk [vmem:[%s489 + $0xf1] sm:$0xff] %vm490, %v436
      %512 = vst.msk [vmem:[%s489 + $0xf9] sm:$0xff] %vm490, %v437
      %513 = vst.msk [vmem:[%s489 + $0x109] sm:$0xff] %vm490, %v438
      %514 = vst.msk [vmem:[%s489 + $0x111] sm:$0xff] %vm490, %v439
      %515 = vst.msk [vmem:[%s489 + $0x121] sm:$0xff] %vm490, %v440
      %516 = vst.msk [vmem:[%s489 + $0x129] sm:$0xff] %vm490, %v441
      %517 = vst.msk [vmem:[%s489 + $0x139] sm:$0xff] %vm490, %v442
      %518 = vst.msk [vmem:[%s489 + $0x141] sm:$0xff] %vm490, %v443
      %519 = vst.msk [vmem:[%s489 + $0x151] sm:$0xff] %vm490, %v444
      %520 = vst.msk [vmem:[%s489 + $0x159] sm:$0xff] %vm490, %v445
      %521 = vst.msk [vmem:[%s489 + $0x169] sm:$0xff] %vm490, %v446
      %522 = vst.msk [vmem:[%s489 + $0x171] sm:$0xff] %vm490, %v447
      %523 = vst.msk [vmem:[%s489 + $0x1b1] sm:$0xff] %vm490, %v448
      %524 = vst.msk [vmem:[%s489 + $0x1b9] sm:$0xff] %vm490, %v449
      %525 = vst.msk [vmem:[%s489 + $0x1c9] sm:$0xff] %vm490, %v450
      %526 = vst.msk [vmem:[%s489 + $0x1d1] sm:$0xff] %vm490, %v451
      %527 = vst.msk [vmem:[%s489 + $0x1e1] sm:$0xff] %vm490, %v452
      %528 = vst.msk [vmem:[%s489 + $0x1e9] sm:$0xff] %vm490, %v453
      %529 = vst.msk [vmem:[%s489 + $0x1f9] sm:$0xff] %vm490, %v454
      %530 = vst.msk [vmem:[%s489 + $0x201] sm:$0xff] %vm490, %v455
      %531 = vst.msk [vmem:[%s489 + $0x211] sm:$0xff] %vm490, %v456
      %532 = vst.msk [vmem:[%s489 + $0x219] sm:$0xff] %vm490, %v457
      %533 = vst.msk [vmem:[%s489 + $0x229] sm:$0xff] %vm490, %v458
      %534 = vst.msk [vmem:[%s489 + $0x231] sm:$0xff] %vm490, %v459
      %535 = vst.msk [vmem:[%s489 + $0x241] sm:$0xff] %vm490, %v460
      %536 = vst.msk [vmem:[%s489 + $0x249] sm:$0xff] %vm490, %v461
      %537 = vst.msk [vmem:[%s489 + $0x259] sm:$0xff] %vm490, %v462
      %538 = vst.msk [vmem:[%s489 + $0x261] sm:$0xff] %vm490, %v463
      %539 = vst.msk [vmem:[%s489 + $0x271] sm:$0xff] %vm490, %v464
      %540 = vst.msk [vmem:[%s489 + $0x279] sm:$0xff] %vm490, %v465
      %541 = vst.msk [vmem:[%s489 + $0x289] sm:$0xff] %vm490, %v466
      %542 = vst.msk [vmem:[%s489 + $0x291] sm:$0xff] %vm490, %v467
      %543 = vst.msk [vmem:[%s489 + $0x2a1] sm:$0xff] %vm490, %v468
      %544 = vst.msk [vmem:[%s489 + $0x2a9] sm:$0xff] %vm490, %v469
      %545 = vst.msk [vmem:[%s489 + $0x2b9] sm:$0xff] %vm490, %v470
      %546 = vst.msk [vmem:[%s489 + $0x2c1] sm:$0xff] %vm490, %v471
      %547 = vst.msk [vmem:[%s489 + $0x2d1] sm:$0xff] %vm490, %v472
      %548 = vst.msk [vmem:[%s489 + $0x2d9] sm:$0xff] %vm490, %v473
      %549 = vst.msk [vmem:[%s489 + $0x2e9] sm:$0xff] %vm490, %v474
      %550 = vst.msk [vmem:[%s489 + $0x2f1] sm:$0xff] %vm490, %v475
      %551 = vst.msk [vmem:[%s489 + $0x301] sm:$0xff] %vm490, %v476
      %552 = vst.msk [vmem:[%s489 + $0x309] sm:$0xff] %vm490, %v477
      %553 = vst.msk [vmem:[%s489 + $0x319] sm:$0xff] %vm490, %v478
      %554 = vst.msk [vmem:[%s489 + $0x321] sm:$0xff] %vm490, %v479
      %v555 = vld [vmem:[#allocation2] sm:$0xff]
      %v556 = vld [vmem:[#allocation2 + $0x8] sm:$0xff]
      %v557 = vld [vmem:[#allocation2 + $0x18] sm:$0xff]
      %v558 = vld [vmem:[#allocation2 + $0x20] sm:$0xff]
      %v559 = vld [vmem:[#allocation2 + $0x30] sm:$0xff]
      %v560 = vld [vmem:[#allocation2 + $0x38] sm:$0xff]
      %v561 = vld [vmem:[#allocation2 + $0x48] sm:$0xff]
      %v562 = vld [vmem:[#allocation2 + $0x50] sm:$0xff]
      %v563 = vld [vmem:[#allocation2 + $0x60] sm:$0xff]
      %v564 = vld [vmem:[#allocation2 + $0x68] sm:$0xff]
      %v565 = vld [vmem:[#allocation2 + $0x78] sm:$0xff]
      %v566 = vld [vmem:[#allocation2 + $0x80] sm:$0xff]
      %v567 = vld [vmem:[#allocation2 + $0x90] sm:$0xff]
      %v568 = vld [vmem:[#allocation2 + $0x98] sm:$0xff]
      %v569 = vld [vmem:[#allocation2 + $0xa8] sm:$0xff]
      %v570 = vld [vmem:[#allocation2 + $0xb0] sm:$0xff]
      %v571 = vld [vmem:[#allocation2 + $0xc0] sm:$0xff]
      %v572 = vld [vmem:[#allocation2 + $0xc8] sm:$0xff]
      %v573 = vld [vmem:[#allocation2 + $0xd8] sm:$0xff]
      %v574 = vld [vmem:[#allocation2 + $0xe0] sm:$0xff]
      %v575 = vld [vmem:[#allocation2 + $0xf0] sm:$0xff]
      %v576 = vld [vmem:[#allocation2 + $0xf8] sm:$0xff]
      %v577 = vld [vmem:[#allocation2 + $0x108] sm:$0xff]
      %v578 = vld [vmem:[#allocation2 + $0x110] sm:$0xff]
      %v579 = vld [vmem:[#allocation2 + $0x120] sm:$0xff]
      %v580 = vld [vmem:[#allocation2 + $0x128] sm:$0xff]
      %v581 = vld [vmem:[#allocation2 + $0x138] sm:$0xff]
      %v582 = vld [vmem:[#allocation2 + $0x140] sm:$0xff]
      %v583 = vld [vmem:[#allocation2 + $0x150] sm:$0xff]
      %v584 = vld [vmem:[#allocation2 + $0x158] sm:$0xff]
      %v585 = vld [vmem:[#allocation2 + $0x168] sm:$0xff]
      %v586 = vld [vmem:[#allocation2 + $0x170] sm:$0xff]
      %v587 = vld [vmem:[#allocation2 + $0x1b0] sm:$0xff]
      %v588 = vld [vmem:[#allocation2 + $0x1b8] sm:$0xff]
      %v589 = vld [vmem:[#allocation2 + $0x1c8] sm:$0xff]
      %v590 = vld [vmem:[#allocation2 + $0x1d0] sm:$0xff]
      %v591 = vld [vmem:[#allocation2 + $0x1e0] sm:$0xff]
      %v592 = vld [vmem:[#allocation2 + $0x1e8] sm:$0xff]
      %v593 = vld [vmem:[#allocation2 + $0x1f8] sm:$0xff]
      %v594 = vld [vmem:[#allocation2 + $0x200] sm:$0xff]
      %v595 = vld [vmem:[#allocation2 + $0x210] sm:$0xff]
      %v596 = vld [vmem:[#allocation2 + $0x218] sm:$0xff]
      %v597 = vld [vmem:[#allocation2 + $0x228] sm:$0xff]
      %v598 = vld [vmem:[#allocation2 + $0x230] sm:$0xff]
      %v599 = vld [vmem:[#allocation2 + $0x240] sm:$0xff]
      %v600 = vld [vmem:[#allocation2 + $0x248] sm:$0xff]
      %v601 = vld [vmem:[#allocation2 + $0x258] sm:$0xff]
      %v602 = vld [vmem:[#allocation2 + $0x260] sm:$0xff]
      %v603 = vld [vmem:[#allocation2 + $0x270] sm:$0xff]
      %v604 = vld [vmem:[#allocation2 + $0x278] sm:$0xff]
      %v605 = vld [vmem:[#allocation2 + $0x288] sm:$0xff]
      %v606 = vld [vmem:[#allocation2 + $0x290] sm:$0xff]
      %v607 = vld [vmem:[#allocation2 + $0x2a0] sm:$0xff]
      %v608 = vld [vmem:[#allocation2 + $0x2a8] sm:$0xff]
      %v609 = vld [vmem:[#allocation2 + $0x2b8] sm:$0xff]
      %v610 = vld [vmem:[#allocation2 + $0x2c0] sm:$0xff]
      %v611 = vld [vmem:[#allocation2 + $0x2d0] sm:$0xff]
      %v612 = vld [vmem:[#allocation2 + $0x2d8] sm:$0xff]
      %v613 = vld [vmem:[#allocation2 + $0x2e8] sm:$0xff]
      %v614 = vld [vmem:[#allocation2 + $0x2f0] sm:$0xff]
      %v615 = vld [vmem:[#allocation2 + $0x300] sm:$0xff]
      %v616 = vld [vmem:[#allocation2 + $0x308] sm:$0xff]
      %v617 = vld [vmem:[#allocation2 + $0x318] sm:$0xff]
      %v618 = vld [vmem:[#allocation2 + $0x320] sm:$0xff]
      %619 = vst.msk [vmem:[#allocation3] sm:$0xff] %vm490, %v555
      %620 = vst.msk [vmem:[#allocation3 + $0x8] sm:$0xff] %vm490, %v556
      %621 = vst.msk [vmem:[#allocation3 + $0x10] sm:$0xff] %vm490, %v557
      %622 = vst.msk [vmem:[#allocation3 + $0x18] sm:$0xff] %vm490, %v558
      %623 = vst.msk [vmem:[#allocation3 + $0x20] sm:$0xff] %vm490, %v559
      %624 = vst.msk [vmem:[#allocation3 + $0x28] sm:$0xff] %vm490, %v560
      %625 = vst.msk [vmem:[#allocation3 + $0x30] sm:$0xff] %vm490, %v561
      %626 = vst.msk [vmem:[#allocation3 + $0x38] sm:$0xff] %vm490, %v562
      %627 = vst.msk [vmem:[#allocation3 + $0x40] sm:$0xff] %vm490, %v563
      %628 = vst.msk [vmem:[#allocation3 + $0x48] sm:$0xff] %vm490, %v564
      %629 = vst.msk [vmem:[#allocation3 + $0x50] sm:$0xff] %vm490, %v565
      %630 = vst.msk [vmem:[#allocation3 + $0x58] sm:$0xff] %vm490, %v566
      %631 = vst.msk [vmem:[#allocation3 + $0x60] sm:$0xff] %vm490, %v567
      %632 = vst.msk [vmem:[#allocation3 + $0x68] sm:$0xff] %vm490, %v568
      %633 = vst.msk [vmem:[#allocation3 + $0x70] sm:$0xff] %vm490, %v569
      %634 = vst.msk [vmem:[#allocation3 + $0x78] sm:$0xff] %vm490, %v570
      %635 = vst.msk [vmem:[#allocation3 + $0x80] sm:$0xff] %vm490, %v571
      %636 = vst.msk [vmem:[#allocation3 + $0x88] sm:$0xff] %vm490, %v572
      %637 = vst.msk [vmem:[#allocation3 + $0x90] sm:$0xff] %vm490, %v573
      %638 = vst.msk [vmem:[#allocation3 + $0x98] sm:$0xff] %vm490, %v574
      %639 = vst.msk [vmem:[#allocation3 + $0xa0] sm:$0xff] %vm490, %v575
      %640 = vst.msk [vmem:[#allocation3 + $0xa8] sm:$0xff] %vm490, %v576
      %641 = vst.msk [vmem:[#allocation3 + $0xb0] sm:$0xff] %vm490, %v577
      %642 = vst.msk [vmem:[#allocation3 + $0xb8] sm:$0xff] %vm490, %v578
      %643 = vst.msk [vmem:[#allocation3 + $0xc0] sm:$0xff] %vm490, %v579
      %644 = vst.msk [vmem:[#allocation3 + $0xc8] sm:$0xff] %vm490, %v580
      %645 = vst.msk [vmem:[#allocation3 + $0xd0] sm:$0xff] %vm490, %v581
      %646 = vst.msk [vmem:[#allocation3 + $0xd8] sm:$0xff] %vm490, %v582
      %647 = vst.msk [vmem:[#allocation3 + $0xe0] sm:$0xff] %vm490, %v583
      %648 = vst.msk [vmem:[#allocation3 + $0xe8] sm:$0xff] %vm490, %v584
      %649 = vst.msk [vmem:[#allocation3 + $0xf0] sm:$0xff] %vm490, %v585
      %650 = vst.msk [vmem:[#allocation3 + $0xf8] sm:$0xff] %vm490, %v586
      %651 = vst.msk [vmem:[#allocation3 + $0x100] sm:$0xff] %vm490, %v587
      %652 = vst.msk [vmem:[#allocation3 + $0x108] sm:$0xff] %vm490, %v588
      %653 = vst.msk [vmem:[#allocation3 + $0x110] sm:$0xff] %vm490, %v589
      %654 = vst.msk [vmem:[#allocation3 + $0x118] sm:$0xff] %vm490, %v590
      %655 = vst.msk [vmem:[#allocation3 + $0x120] sm:$0xff] %vm490, %v591
      %656 = vst.msk [vmem:[#allocation3 + $0x128] sm:$0xff] %vm490, %v592
      %657 = vst.msk [vmem:[#allocation3 + $0x130] sm:$0xff] %vm490, %v593
      %658 = vst.msk [vmem:[#allocation3 + $0x138] sm:$0xff] %vm490, %v594
      %659 = vst.msk [vmem:[#allocation3 + $0x140] sm:$0xff] %vm490, %v595
      %660 = vst.msk [vmem:[#allocation3 + $0x148] sm:$0xff] %vm490, %v596
      %661 = vst.msk [vmem:[#allocation3 + $0x150] sm:$0xff] %vm490, %v597
      %662 = vst.msk [vmem:[#allocation3 + $0x158] sm:$0xff] %vm490, %v598
      %663 = vst.msk [vmem:[#allocation3 + $0x160] sm:$0xff] %vm490, %v599
      %664 = vst.msk [vmem:[#allocation3 + $0x168] sm:$0xff] %vm490, %v600
      %665 = vst.msk [vmem:[#allocation3 + $0x170] sm:$0xff] %vm490, %v601
      %666 = vst.msk [vmem:[#allocation3 + $0x178] sm:$0xff] %vm490, %v602
      %667 = vst.msk [vmem:[#allocation3 + $0x180] sm:$0xff] %vm490, %v603
      %668 = vst.msk [vmem:[#allocation3 + $0x188] sm:$0xff] %vm490, %v604
      %669 = vst.msk [vmem:[#allocation3 + $0x190] sm:$0xff] %vm490, %v605
      %670 = vst.msk [vmem:[#allocation3 + $0x198] sm:$0xff] %vm490, %v606
      %671 = vst.msk [vmem:[#allocation3 + $0x1a0] sm:$0xff] %vm490, %v607
      %672 = vst.msk [vmem:[#allocation3 + $0x1a8] sm:$0xff] %vm490, %v608
      %673 = vst.msk [vmem:[#allocation3 + $0x1b0] sm:$0xff] %vm490, %v609
      %674 = vst.msk [vmem:[#allocation3 + $0x1b8] sm:$0xff] %vm490, %v610
      %675 = vst.msk [vmem:[#allocation3 + $0x1c0] sm:$0xff] %vm490, %v611
      %676 = vst.msk [vmem:[#allocation3 + $0x1c8] sm:$0xff] %vm490, %v612
      %677 = vst.msk [vmem:[#allocation3 + $0x1d0] sm:$0xff] %vm490, %v613
      %678 = vst.msk [vmem:[#allocation3 + $0x1d8] sm:$0xff] %vm490, %v614
      %679 = vst.msk [vmem:[#allocation3 + $0x1e0] sm:$0xff] %vm490, %v615
      %680 = vst.msk [vmem:[#allocation3 + $0x1e8] sm:$0xff] %vm490, %v616
      %681 = vst.msk [vmem:[#allocation3 + $0x1f0] sm:$0xff] %vm490, %v617
      %682 = vst.msk [vmem:[#allocation3 + $0x1f8] sm:$0xff] %vm490, %v618
      %v683 = vld [vmem:[#allocation2 + $0x1] sm:$0xff]
      %v684 = vld [vmem:[#allocation2 + $0x9] sm:$0xff]
      %v685 = vld [vmem:[#allocation2 + $0x19] sm:$0xff]
      %v686 = vld [vmem:[#allocation2 + $0x21] sm:$0xff]
      %v687 = vld [vmem:[#allocation2 + $0x31] sm:$0xff]
      %v688 = vld [vmem:[#allocation2 + $0x39] sm:$0xff]
      %v689 = vld [vmem:[#allocation2 + $0x49] sm:$0xff]
      %v690 = vld [vmem:[#allocation2 + $0x51] sm:$0xff]
      %v691 = vld [vmem:[#allocation2 + $0x61] sm:$0xff]
      %v692 = vld [vmem:[#allocation2 + $0x69] sm:$0xff]
      %v693 = vld [vmem:[#allocation2 + $0x79] sm:$0xff]
      %v694 = vld [vmem:[#allocation2 + $0x81] sm:$0xff]
      %v695 = vld [vmem:[#allocation2 + $0x91] sm:$0xff]
      %v696 = vld [vmem:[#allocation2 + $0x99] sm:$0xff]
      %v697 = vld [vmem:[#allocation2 + $0xa9] sm:$0xff]
      %v698 = vld [vmem:[#allocation2 + $0xb1] sm:$0xff]
      %v699 = vld [vmem:[#allocation2 + $0xc1] sm:$0xff]
      %v700 = vld [vmem:[#allocation2 + $0xc9] sm:$0xff]
      %v701 = vld [vmem:[#allocation2 + $0xd9] sm:$0xff]
      %v702 = vld [vmem:[#allocation2 + $0xe1] sm:$0xff]
      %v703 = vld [vmem:[#allocation2 + $0xf1] sm:$0xff]
      %v704 = vld [vmem:[#allocation2 + $0xf9] sm:$0xff]
      %v705 = vld [vmem:[#allocation2 + $0x109] sm:$0xff]
      %v706 = vld [vmem:[#allocation2 + $0x111] sm:$0xff]
      %v707 = vld [vmem:[#allocation2 + $0x121] sm:$0xff]
      %v708 = vld [vmem:[#allocation2 + $0x129] sm:$0xff]
      %v709 = vld [vmem:[#allocation2 + $0x139] sm:$0xff]
      %v710 = vld [vmem:[#allocation2 + $0x141] sm:$0xff]
      %v711 = vld [vmem:[#allocation2 + $0x151] sm:$0xff]
      %v712 = vld [vmem:[#allocation2 + $0x159] sm:$0xff]
      %v713 = vld [vmem:[#allocation2 + $0x169] sm:$0xff]
      %v714 = vld [vmem:[#allocation2 + $0x171] sm:$0xff]
      %v715 = vld [vmem:[#allocation2 + $0x1b1] sm:$0xff]
      %v716 = vld [vmem:[#allocation2 + $0x1b9] sm:$0xff]
      %v717 = vld [vmem:[#allocation2 + $0x1c9] sm:$0xff]
      %v718 = vld [vmem:[#allocation2 + $0x1d1] sm:$0xff]
      %v719 = vld [vmem:[#allocation2 + $0x1e1] sm:$0xff]
      %v720 = vld [vmem:[#allocation2 + $0x1e9] sm:$0xff]
      %v721 = vld [vmem:[#allocation2 + $0x1f9] sm:$0xff]
      %v722 = vld [vmem:[#allocation2 + $0x201] sm:$0xff]
      %v723 = vld [vmem:[#allocation2 + $0x211] sm:$0xff]
      %v724 = vld [vmem:[#allocation2 + $0x219] sm:$0xff]
      %v725 = vld [vmem:[#allocation2 + $0x229] sm:$0xff]
      %v726 = vld [vmem:[#allocation2 + $0x231] sm:$0xff]
      %v727 = vld [vmem:[#allocation2 + $0x241] sm:$0xff]
      %v728 = vld [vmem:[#allocation2 + $0x249] sm:$0xff]
      %v729 = vld [vmem:[#allocation2 + $0x259] sm:$0xff]
      %v730 = vld [vmem:[#allocation2 + $0x261] sm:$0xff]
      %v731 = vld [vmem:[#allocation2 + $0x271] sm:$0xff]
      %v732 = vld [vmem:[#allocation2 + $0x279] sm:$0xff]
      %v733 = vld [vmem:[#allocation2 + $0x289] sm:$0xff]
      %v734 = vld [vmem:[#allocation2 + $0x291] sm:$0xff]
      %v735 = vld [vmem:[#allocation2 + $0x2a1] sm:$0xff]
      %v736 = vld [vmem:[#allocation2 + $0x2a9] sm:$0xff]
      %v737 = vld [vmem:[#allocation2 + $0x2b9] sm:$0xff]
      %v738 = vld [vmem:[#allocation2 + $0x2c1] sm:$0xff]
      %v739 = vld [vmem:[#allocation2 + $0x2d1] sm:$0xff]
      %v740 = vld [vmem:[#allocation2 + $0x2d9] sm:$0xff]
      %v741 = vld [vmem:[#allocation2 + $0x2e9] sm:$0xff]
      %v742 = vld [vmem:[#allocation2 + $0x2f1] sm:$0xff]
      %v743 = vld [vmem:[#allocation2 + $0x301] sm:$0xff]
      %v744 = vld [vmem:[#allocation2 + $0x309] sm:$0xff]
      %v745 = vld [vmem:[#allocation2 + $0x319] sm:$0xff]
      %v746 = vld [vmem:[#allocation2 + $0x321] sm:$0xff]
      %811 = vrot.lane.b32.xlu0 %v683, 8
      %v812 = vpop.permute.xlu0 %811
      %813 = vrot.lane.b32.xlu0 %v684, 8
      %v814 = vpop.permute.xlu0 %813
      %815 = vrot.lane.b32.xlu0 %v685, 8
      %v816 = vpop.permute.xlu0 %815
      %817 = vrot.lane.b32.xlu0 %v686, 8
      %v818 = vpop.permute.xlu0 %817
      %819 = vrot.lane.b32.xlu0 %v687, 8
      %v820 = vpop.permute.xlu0 %819
      %821 = vrot.lane.b32.xlu0 %v688, 8
      %v822 = vpop.permute.xlu0 %821
      %823 = vrot.lane.b32.xlu0 %v689, 8
      %v824 = vpop.permute.xlu0 %823
      %825 = vrot.lane.b32.xlu0 %v690, 8
      %v826 = vpop.permute.xlu0 %825
      %827 = vrot.lane.b32.xlu0 %v691, 8
      %v828 = vpop.permute.xlu0 %827
      %829 = vrot.lane.b32.xlu0 %v692, 8
      %v830 = vpop.permute.xlu0 %829
      %831 = vrot.lane.b32.xlu0 %v693, 8
      %v832 = vpop.permute.xlu0 %831
      %833 = vrot.lane.b32.xlu0 %v694, 8
      %v834 = vpop.permute.xlu0 %833
      %835 = vrot.lane.b32.xlu0 %v695, 8
      %v836 = vpop.permute.xlu0 %835
      %837 = vrot.lane.b32.xlu0 %v696, 8
      %v838 = vpop.permute.xlu0 %837
      %839 = vrot.lane.b32.xlu0 %v697, 8
      %v840 = vpop.permute.xlu0 %839
      %841 = vrot.lane.b32.xlu0 %v698, 8
      %v842 = vpop.permute.xlu0 %841
      %843 = vrot.lane.b32.xlu0 %v699, 8
      %v844 = vpop.permute.xlu0 %843
      %845 = vrot.lane.b32.xlu0 %v700, 8
      %v846 = vpop.permute.xlu0 %845
      %847 = vrot.lane.b32.xlu0 %v701, 8
      %v848 = vpop.permute.xlu0 %847
      %849 = vrot.lane.b32.xlu0 %v702, 8
      %v850 = vpop.permute.xlu0 %849
      %851 = vrot.lane.b32.xlu0 %v703, 8
      %v852 = vpop.permute.xlu0 %851
      %853 = vrot.lane.b32.xlu0 %v704, 8
      %v854 = vpop.permute.xlu0 %853
      %855 = vrot.lane.b32.xlu0 %v705, 8
      %v856 = vpop.permute.xlu0 %855
      %857 = vrot.lane.b32.xlu0 %v706, 8
      %v858 = vpop.permute.xlu0 %857
      %859 = vrot.lane.b32.xlu0 %v707, 8
      %v860 = vpop.permute.xlu0 %859
      %861 = vrot.lane.b32.xlu0 %v708, 8
      %v862 = vpop.permute.xlu0 %861
      %863 = vrot.lane.b32.xlu0 %v709, 8
      %v864 = vpop.permute.xlu0 %863
      %865 = vrot.lane.b32.xlu0 %v710, 8
      %v866 = vpop.permute.xlu0 %865
      %867 = vrot.lane.b32.xlu0 %v711, 8
      %v868 = vpop.permute.xlu0 %867
      %869 = vrot.lane.b32.xlu0 %v712, 8
      %v870 = vpop.permute.xlu0 %869
      %871 = vrot.lane.b32.xlu0 %v713, 8
      %v872 = vpop.permute.xlu0 %871
      %873 = vrot.lane.b32.xlu0 %v714, 8
      %v874 = vpop.permute.xlu0 %873
      %875 = vrot.lane.b32.xlu0 %v715, 8
      %v876 = vpop.permute.xlu0 %875
      %877 = vrot.lane.b32.xlu0 %v716, 8
      %v878 = vpop.permute.xlu0 %877
      %879 = vrot.lane.b32.xlu0 %v717, 8
      %v880 = vpop.permute.xlu0 %879
      %881 = vrot.lane.b32.xlu0 %v718, 8
      %v882 = vpop.permute.xlu0 %881
      %883 = vrot.lane.b32.xlu0 %v719, 8
      %v884 = vpop.permute.xlu0 %883
      %885 = vrot.lane.b32.xlu0 %v720, 8
      %v886 = vpop.permute.xlu0 %885
      %887 = vrot.lane.b32.xlu0 %v721, 8
      %v888 = vpop.permute.xlu0 %887
      %889 = vrot.lane.b32.xlu0 %v722, 8
      %v890 = vpop.permute.xlu0 %889
      %891 = vrot.lane.b32.xlu0 %v723, 8
      %v892 = vpop.permute.xlu0 %891
      %893 = vrot.lane.b32.xlu0 %v724, 8
      %v894 = vpop.permute.xlu0 %893
      %895 = vrot.lane.b32.xlu0 %v725, 8
      %v896 = vpop.permute.xlu0 %895
      %897 = vrot.lane.b32.xlu0 %v726, 8
      %v898 = vpop.permute.xlu0 %897
      %899 = vrot.lane.b32.xlu0 %v727, 8
      %v900 = vpop.permute.xlu0 %899
      %901 = vrot.lane.b32.xlu0 %v728, 8
      %v902 = vpop.permute.xlu0 %901
      %903 = vrot.lane.b32.xlu0 %v729, 8
      %v904 = vpop.permute.xlu0 %903
      %905 = vrot.lane.b32.xlu0 %v730, 8
      %v906 = vpop.permute.xlu0 %905
      %907 = vrot.lane.b32.xlu0 %v731, 8
      %v908 = vpop.permute.xlu0 %907
      %909 = vrot.lane.b32.xlu0 %v732, 8
      %v910 = vpop.permute.xlu0 %909
      %911 = vrot.lane.b32.xlu0 %v733, 8
      %v912 = vpop.permute.xlu0 %911
      %913 = vrot.lane.b32.xlu0 %v734, 8
      %v914 = vpop.permute.xlu0 %913
      %915 = vrot.lane.b32.xlu0 %v735, 8
      %v916 = vpop.permute.xlu0 %915
      %917 = vrot.lane.b32.xlu0 %v736, 8
      %v918 = vpop.permute.xlu0 %917
      %919 = vrot.lane.b32.xlu0 %v737, 8
      %v920 = vpop.permute.xlu0 %919
      %921 = vrot.lane.b32.xlu0 %v738, 8
      %v922 = vpop.permute.xlu0 %921
      %923 = vrot.lane.b32.xlu0 %v739, 8
      %v924 = vpop.permute.xlu0 %923
      %925 = vrot.lane.b32.xlu0 %v740, 8
      %v926 = vpop.permute.xlu0 %925
      %927 = vrot.lane.b32.xlu0 %v741, 8
      %v928 = vpop.permute.xlu0 %927
      %929 = vrot.lane.b32.xlu0 %v742, 8
      %v930 = vpop.permute.xlu0 %929
      %931 = vrot.lane.b32.xlu0 %v743, 8
      %v932 = vpop.permute.xlu0 %931
      %933 = vrot.lane.b32.xlu0 %v744, 8
      %v934 = vpop.permute.xlu0 %933
      %935 = vrot.lane.b32.xlu0 %v745, 8
      %v936 = vpop.permute.xlu0 %935
      %937 = vrot.lane.b32.xlu0 %v746, 8
      %v938 = vpop.permute.xlu0 %937
      %vm1003 = vcmask 130112
      %1004 = vst.msk [vmem:[#allocation3] sm:$0xff] %vm1003, %v812
      %1005 = vst.msk [vmem:[#allocation3 + $0x8] sm:$0xff] %vm1003, %v814
      %1006 = vst.msk [vmem:[#allocation3 + $0x10] sm:$0xff] %vm1003, %v816
      %1007 = vst.msk [vmem:[#allocation3 + $0x18] sm:$0xff] %vm1003, %v818
      %1008 = vst.msk [vmem:[#allocation3 + $0x20] sm:$0xff] %vm1003, %v820
      %1009 = vst.msk [vmem:[#allocation3 + $0x28] sm:$0xff] %vm1003, %v822
      %1010 = vst.msk [vmem:[#allocation3 + $0x30] sm:$0xff] %vm1003, %v824
      %1011 = vst.msk [vmem:[#allocation3 + $0x38] sm:$0xff] %vm1003, %v826
      %1012 = vst.msk [vmem:[#allocation3 + $0x40] sm:$0xff] %vm1003, %v828
      %1013 = vst.msk [vmem:[#allocation3 + $0x48] sm:$0xff] %vm1003, %v830
      %1014 = vst.msk [vmem:[#allocation3 + $0x50] sm:$0xff] %vm1003, %v832
      %1015 = vst.msk [vmem:[#allocation3 + $0x58] sm:$0xff] %vm1003, %v834
      %1016 = vst.msk [vmem:[#allocation3 + $0x60] sm:$0xff] %vm1003, %v836
      %1017 = vst.msk [vmem:[#allocation3 + $0x68] sm:$0xff] %vm1003, %v838
      %1018 = vst.msk [vmem:[#allocation3 + $0x70] sm:$0xff] %vm1003, %v840
      %1019 = vst.msk [vmem:[#allocation3 + $0x78] sm:$0xff] %vm1003, %v842
      %1020 = vst.msk [vmem:[#allocation3 + $0x80] sm:$0xff] %vm1003, %v844
      %1021 = vst.msk [vmem:[#allocation3 + $0x88] sm:$0xff] %vm1003, %v846
      %1022 = vst.msk [vmem:[#allocation3 + $0x90] sm:$0xff] %vm1003, %v848
      %1023 = vst.msk [vmem:[#allocation3 + $0x98] sm:$0xff] %vm1003, %v850
      %1024 = vst.msk [vmem:[#allocation3 + $0xa0] sm:$0xff] %vm1003, %v852
      %1025 = vst.msk [vmem:[#allocation3 + $0xa8] sm:$0xff] %vm1003, %v854
      %1026 = vst.msk [vmem:[#allocation3 + $0xb0] sm:$0xff] %vm1003, %v856
      %1027 = vst.msk [vmem:[#allocation3 + $0xb8] sm:$0xff] %vm1003, %v858
      %1028 = vst.msk [vmem:[#allocation3 + $0xc0] sm:$0xff] %vm1003, %v860
      %1029 = vst.msk [vmem:[#allocation3 + $0xc8] sm:$0xff] %vm1003, %v862
      %1030 = vst.msk [vmem:[#allocation3 + $0xd0] sm:$0xff] %vm1003, %v864
      %1031 = vst.msk [vmem:[#allocation3 + $0xd8] sm:$0xff] %vm1003, %v866
      %1032 = vst.msk [vmem:[#allocation3 + $0xe0] sm:$0xff] %vm1003, %v868
      %1033 = vst.msk [vmem:[#allocation3 + $0xe8] sm:$0xff] %vm1003, %v870
      %1034 = vst.msk [vmem:[#allocation3 + $0xf0] sm:$0xff] %vm1003, %v872
      %1035 = vst.msk [vmem:[#allocation3 + $0xf8] sm:$0xff] %vm1003, %v874
      %1036 = vst.msk [vmem:[#allocation3 + $0x100] sm:$0xff] %vm1003, %v876
      %1037 = vst.msk [vmem:[#allocation3 + $0x108] sm:$0xff] %vm1003, %v878
      %1038 = vst.msk [vmem:[#allocation3 + $0x110] sm:$0xff] %vm1003, %v880
      %1039 = vst.msk [vmem:[#allocation3 + $0x118] sm:$0xff] %vm1003, %v882
      %1040 = vst.msk [vmem:[#allocation3 + $0x120] sm:$0xff] %vm1003, %v884
      %1041 = vst.msk [vmem:[#allocation3 + $0x128] sm:$0xff] %vm1003, %v886
      %1042 = vst.msk [vmem:[#allocation3 + $0x130] sm:$0xff] %vm1003, %v888
      %1043 = vst.msk [vmem:[#allocation3 + $0x138] sm:$0xff] %vm1003, %v890
      %1044 = vst.msk [vmem:[#allocation3 + $0x140] sm:$0xff] %vm1003, %v892
      %1045 = vst.msk [vmem:[#allocation3 + $0x148] sm:$0xff] %vm1003, %v894
      %1046 = vst.msk [vmem:[#allocation3 + $0x150] sm:$0xff] %vm1003, %v896
      %1047 = vst.msk [vmem:[#allocation3 + $0x158] sm:$0xff] %vm1003, %v898
      %1048 = vst.msk [vmem:[#allocation3 + $0x160] sm:$0xff] %vm1003, %v900
      %1049 = vst.msk [vmem:[#allocation3 + $0x168] sm:$0xff] %vm1003, %v902
      %1050 = vst.msk [vmem:[#allocation3 + $0x170] sm:$0xff] %vm1003, %v904
      %1051 = vst.msk [vmem:[#allocation3 + $0x178] sm:$0xff] %vm1003, %v906
      %1052 = vst.msk [vmem:[#allocation3 + $0x180] sm:$0xff] %vm1003, %v908
      %1053 = vst.msk [vmem:[#allocation3 + $0x188] sm:$0xff] %vm1003, %v910
      %1054 = vst.msk [vmem:[#allocation3 + $0x190] sm:$0xff] %vm1003, %v912
      %1055 = vst.msk [vmem:[#allocation3 + $0x198] sm:$0xff] %vm1003, %v914
      %1056 = vst.msk [vmem:[#allocation3 + $0x1a0] sm:$0xff] %vm1003, %v916
      %1057 = vst.msk [vmem:[#allocation3 + $0x1a8] sm:$0xff] %vm1003, %v918
      %1058 = vst.msk [vmem:[#allocation3 + $0x1b0] sm:$0xff] %vm1003, %v920
      %1059 = vst.msk [vmem:[#allocation3 + $0x1b8] sm:$0xff] %vm1003, %v922
      %1060 = vst.msk [vmem:[#allocation3 + $0x1c0] sm:$0xff] %vm1003, %v924
      %1061 = vst.msk [vmem:[#allocation3 + $0x1c8] sm:$0xff] %vm1003, %v926
      %1062 = vst.msk [vmem:[#allocation3 + $0x1d0] sm:$0xff] %vm1003, %v928
      %1063 = vst.msk [vmem:[#allocation3 + $0x1d8] sm:$0xff] %vm1003, %v930
      %1064 = vst.msk [vmem:[#allocation3 + $0x1e0] sm:$0xff] %vm1003, %v932
      %1065 = vst.msk [vmem:[#allocation3 + $0x1e8] sm:$0xff] %vm1003, %v934
      %1066 = vst.msk [vmem:[#allocation3 + $0x1f0] sm:$0xff] %vm1003, %v936
      %1067 = vst.msk [vmem:[#allocation3 + $0x1f8] sm:$0xff] %vm1003, %v938
      %v1068 = vld [vmem:[#allocation2 + $0x2] sm:$0xff]
      %v1069 = vld [vmem:[#allocation2 + $0xa] sm:$0xff]
      %v1070 = vld [vmem:[#allocation2 + $0x1a] sm:$0xff]
      %v1071 = vld [vmem:[#allocation2 + $0x22] sm:$0xff]
      %v1072 = vld [vmem:[#allocation2 + $0x32] sm:$0xff]
      %v1073 = vld [vmem:[#allocation2 + $0x3a] sm:$0xff]
      %v1074 = vld [vmem:[#allocation2 + $0x4a] sm:$0xff]
      %v1075 = vld [vmem:[#allocation2 + $0x52] sm:$0xff]
      %v1076 = vld [vmem:[#allocation2 + $0x62] sm:$0xff]
      %v1077 = vld [vmem:[#allocation2 + $0x6a] sm:$0xff]
      %v1078 = vld [vmem:[#allocation2 + $0x7a] sm:$0xff]
      %v1079 = vld [vmem:[#allocation2 + $0x82] sm:$0xff]
      %v1080 = vld [vmem:[#allocation2 + $0x92] sm:$0xff]
      %v1081 = vld [vmem:[#allocation2 + $0x9a] sm:$0xff]
      %v1082 = vld [vmem:[#allocation2 + $0xaa] sm:$0xff]
      %v1083 = vld [vmem:[#allocation2 + $0xb2] sm:$0xff]
      %v1084 = vld [vmem:[#allocation2 + $0xc2] sm:$0xff]
      %v1085 = vld [vmem:[#allocation2 + $0xca] sm:$0xff]
      %v1086 = vld [vmem:[#allocation2 + $0xda] sm:$0xff]
      %v1087 = vld [vmem:[#allocation2 + $0xe2] sm:$0xff]
      %v1088 = vld [vmem:[#allocation2 + $0xf2] sm:$0xff]
      %v1089 = vld [vmem:[#allocation2 + $0xfa] sm:$0xff]
      %v1090 = vld [vmem:[#allocation2 + $0x10a] sm:$0xff]
      %v1091 = vld [vmem:[#allocation2 + $0x112] sm:$0xff]
      %v1092 = vld [vmem:[#allocation2 + $0x122] sm:$0xff]
      %v1093 = vld [vmem:[#allocation2 + $0x12a] sm:$0xff]
      %v1094 = vld [vmem:[#allocation2 + $0x13a] sm:$0xff]
      %v1095 = vld [vmem:[#allocation2 + $0x142] sm:$0xff]
      %v1096 = vld [vmem:[#allocation2 + $0x152] sm:$0xff]
      %v1097 = vld [vmem:[#allocation2 + $0x15a] sm:$0xff]
      %v1098 = vld [vmem:[#allocation2 + $0x16a] sm:$0xff]
      %v1099 = vld [vmem:[#allocation2 + $0x172] sm:$0xff]
      %v1100 = vld [vmem:[#allocation2 + $0x1b2] sm:$0xff]
      %v1101 = vld [vmem:[#allocation2 + $0x1ba] sm:$0xff]
      %v1102 = vld [vmem:[#allocation2 + $0x1ca] sm:$0xff]
      %v1103 = vld [vmem:[#allocation2 + $0x1d2] sm:$0xff]
      %v1104 = vld [vmem:[#allocation2 + $0x1e2] sm:$0xff]
      %v1105 = vld [vmem:[#allocation2 + $0x1ea] sm:$0xff]
      %v1106 = vld [vmem:[#allocation2 + $0x1fa] sm:$0xff]
      %v1107 = vld [vmem:[#allocation2 + $0x202] sm:$0xff]
      %v1108 = vld [vmem:[#allocation2 + $0x212] sm:$0xff]
      %v1109 = vld [vmem:[#allocation2 + $0x21a] sm:$0xff]
      %v1110 = vld [vmem:[#allocation2 + $0x22a] sm:$0xff]
      %v1111 = vld [vmem:[#allocation2 + $0x232] sm:$0xff]
      %v1112 = vld [vmem:[#allocation2 + $0x242] sm:$0xff]
      %v1113 = vld [vmem:[#allocation2 + $0x24a] sm:$0xff]
      %v1114 = vld [vmem:[#allocation2 + $0x25a] sm:$0xff]
      %v1115 = vld [vmem:[#allocation2 + $0x262] sm:$0xff]
      %v1116 = vld [vmem:[#allocation2 + $0x272] sm:$0xff]
      %v1117 = vld [vmem:[#allocation2 + $0x27a] sm:$0xff]
      %v1118 = vld [vmem:[#allocation2 + $0x28a] sm:$0xff]
      %v1119 = vld [vmem:[#allocation2 + $0x292] sm:$0xff]
      %v1120 = vld [vmem:[#allocation2 + $0x2a2] sm:$0xff]
      %v1121 = vld [vmem:[#allocation2 + $0x2aa] sm:$0xff]
      %v1122 = vld [vmem:[#allocation2 + $0x2ba] sm:$0xff]
      %v1123 = vld [vmem:[#allocation2 + $0x2c2] sm:$0xff]
      %v1124 = vld [vmem:[#allocation2 + $0x2d2] sm:$0xff]
      %v1125 = vld [vmem:[#allocation2 + $0x2da] sm:$0xff]
      %v1126 = vld [vmem:[#allocation2 + $0x2ea] sm:$0xff]
      %v1127 = vld [vmem:[#allocation2 + $0x2f2] sm:$0xff]
      %v1128 = vld [vmem:[#allocation2 + $0x302] sm:$0xff]
      %v1129 = vld [vmem:[#allocation2 + $0x30a] sm:$0xff]
      %v1130 = vld [vmem:[#allocation2 + $0x31a] sm:$0xff]
      %v1131 = vld [vmem:[#allocation2 + $0x322] sm:$0xff]
      %1196 = vrot.lane.b32.xlu0 %v1068, 16
      %v1197 = vpop.permute.xlu0 %1196
      %1198 = vrot.lane.b32.xlu0 %v1069, 16
      %v1199 = vpop.permute.xlu0 %1198
      %1200 = vrot.lane.b32.xlu0 %v1070, 16
      %v1201 = vpop.permute.xlu0 %1200
      %1202 = vrot.lane.b32.xlu0 %v1071, 16
      %v1203 = vpop.permute.xlu0 %1202
      %1204 = vrot.lane.b32.xlu0 %v1072, 16
      %v1205 = vpop.permute.xlu0 %1204
      %1206 = vrot.lane.b32.xlu0 %v1073, 16
      %v1207 = vpop.permute.xlu0 %1206
      %1208 = vrot.lane.b32.xlu0 %v1074, 16
      %v1209 = vpop.permute.xlu0 %1208
      %1210 = vrot.lane.b32.xlu0 %v1075, 16
      %v1211 = vpop.permute.xlu0 %1210
      %1212 = vrot.lane.b32.xlu0 %v1076, 16
      %v1213 = vpop.permute.xlu0 %1212
      %1214 = vrot.lane.b32.xlu0 %v1077, 16
      %v1215 = vpop.permute.xlu0 %1214
      %1216 = vrot.lane.b32.xlu0 %v1078, 16
      %v1217 = vpop.permute.xlu0 %1216
      %1218 = vrot.lane.b32.xlu0 %v1079, 16
      %v1219 = vpop.permute.xlu0 %1218
      %1220 = vrot.lane.b32.xlu0 %v1080, 16
      %v1221 = vpop.permute.xlu0 %1220
      %1222 = vrot.lane.b32.xlu0 %v1081, 16
      %v1223 = vpop.permute.xlu0 %1222
      %1224 = vrot.lane.b32.xlu0 %v1082, 16
      %v1225 = vpop.permute.xlu0 %1224
      %1226 = vrot.lane.b32.xlu0 %v1083, 16
      %v1227 = vpop.permute.xlu0 %1226
      %1228 = vrot.lane.b32.xlu0 %v1084, 16
      %v1229 = vpop.permute.xlu0 %1228
      %1230 = vrot.lane.b32.xlu0 %v1085, 16
      %v1231 = vpop.permute.xlu0 %1230
      %1232 = vrot.lane.b32.xlu0 %v1086, 16
      %v1233 = vpop.permute.xlu0 %1232
      %1234 = vrot.lane.b32.xlu0 %v1087, 16
      %v1235 = vpop.permute.xlu0 %1234
      %1236 = vrot.lane.b32.xlu0 %v1088, 16
      %v1237 = vpop.permute.xlu0 %1236
      %1238 = vrot.lane.b32.xlu0 %v1089, 16
      %v1239 = vpop.permute.xlu0 %1238
      %1240 = vrot.lane.b32.xlu0 %v1090, 16
      %v1241 = vpop.permute.xlu0 %1240
      %1242 = vrot.lane.b32.xlu0 %v1091, 16
      %v1243 = vpop.permute.xlu0 %1242
      %1244 = vrot.lane.b32.xlu0 %v1092, 16
      %v1245 = vpop.permute.xlu0 %1244
      %1246 = vrot.lane.b32.xlu0 %v1093, 16
      %v1247 = vpop.permute.xlu0 %1246
      %1248 = vrot.lane.b32.xlu0 %v1094, 16
      %v1249 = vpop.permute.xlu0 %1248
      %1250 = vrot.lane.b32.xlu0 %v1095, 16
      %v1251 = vpop.permute.xlu0 %1250
      %1252 = vrot.lane.b32.xlu0 %v1096, 16
      %v1253 = vpop.permute.xlu0 %1252
      %1254 = vrot.lane.b32.xlu0 %v1097, 16
      %v1255 = vpop.permute.xlu0 %1254
      %1256 = vrot.lane.b32.xlu0 %v1098, 16
      %v1257 = vpop.permute.xlu0 %1256
      %1258 = vrot.lane.b32.xlu0 %v1099, 16
      %v1259 = vpop.permute.xlu0 %1258
      %1260 = vrot.lane.b32.xlu0 %v1100, 16
      %v1261 = vpop.permute.xlu0 %1260
      %1262 = vrot.lane.b32.xlu0 %v1101, 16
      %v1263 = vpop.permute.xlu0 %1262
      %1264 = vrot.lane.b32.xlu0 %v1102, 16
      %v1265 = vpop.permute.xlu0 %1264
      %1266 = vrot.lane.b32.xlu0 %v1103, 16
      %v1267 = vpop.permute.xlu0 %1266
      %1268 = vrot.lane.b32.xlu0 %v1104, 16
      %v1269 = vpop.permute.xlu0 %1268
      %1270 = vrot.lane.b32.xlu0 %v1105, 16
      %v1271 = vpop.permute.xlu0 %1270
      %1272 = vrot.lane.b32.xlu0 %v1106, 16
      %v1273 = vpop.permute.xlu0 %1272
      %1274 = vrot.lane.b32.xlu0 %v1107, 16
      %v1275 = vpop.permute.xlu0 %1274
      %1276 = vrot.lane.b32.xlu0 %v1108, 16
      %v1277 = vpop.permute.xlu0 %1276
      %1278 = vrot.lane.b32.xlu0 %v1109, 16
      %v1279 = vpop.permute.xlu0 %1278
      %1280 = vrot.lane.b32.xlu0 %v1110, 16
      %v1281 = vpop.permute.xlu0 %1280
      %1282 = vrot.lane.b32.xlu0 %v1111, 16
      %v1283 = vpop.permute.xlu0 %1282
      %1284 = vrot.lane.b32.xlu0 %v1112, 16
      %v1285 = vpop.permute.xlu0 %1284
      %1286 = vrot.lane.b32.xlu0 %v1113, 16
      %v1287 = vpop.permute.xlu0 %1286
      %1288 = vrot.lane.b32.xlu0 %v1114, 16
      %v1289 = vpop.permute.xlu0 %1288
      %1290 = vrot.lane.b32.xlu0 %v1115, 16
      %v1291 = vpop.permute.xlu0 %1290
      %1292 = vrot.lane.b32.xlu0 %v1116, 16
      %v1293 = vpop.permute.xlu0 %1292
      %1294 = vrot.lane.b32.xlu0 %v1117, 16
      %v1295 = vpop.permute.xlu0 %1294
      %1296 = vrot.lane.b32.xlu0 %v1118, 16
      %v1297 = vpop.permute.xlu0 %1296
      %1298 = vrot.lane.b32.xlu0 %v1119, 16
      %v1299 = vpop.permute.xlu0 %1298
      %1300 = vrot.lane.b32.xlu0 %v1120, 16
      %v1301 = vpop.permute.xlu0 %1300
      %1302 = vrot.lane.b32.xlu0 %v1121, 16
      %v1303 = vpop.permute.xlu0 %1302
      %1304 = vrot.lane.b32.xlu0 %v1122, 16
      %v1305 = vpop.permute.xlu0 %1304
      %1306 = vrot.lane.b32.xlu0 %v1123, 16
      %v1307 = vpop.permute.xlu0 %1306
      %1308 = vrot.lane.b32.xlu0 %v1124, 16
      %v1309 = vpop.permute.xlu0 %1308
      %1310 = vrot.lane.b32.xlu0 %v1125, 16
      %v1311 = vpop.permute.xlu0 %1310
      %1312 = vrot.lane.b32.xlu0 %v1126, 16
      %v1313 = vpop.permute.xlu0 %1312
      %1314 = vrot.lane.b32.xlu0 %v1127, 16
      %v1315 = vpop.permute.xlu0 %1314
      %1316 = vrot.lane.b32.xlu0 %v1128, 16
      %v1317 = vpop.permute.xlu0 %1316
      %1318 = vrot.lane.b32.xlu0 %v1129, 16
      %v1319 = vpop.permute.xlu0 %1318
      %1320 = vrot.lane.b32.xlu0 %v1130, 16
      %v1321 = vpop.permute.xlu0 %1320
      %1322 = vrot.lane.b32.xlu0 %v1131, 16
      %v1323 = vpop.permute.xlu0 %1322
      %vm1388 = vcmask 195712
      %1389 = vst.msk [vmem:[#allocation3] sm:$0xff] %vm1388, %v1197
      %1390 = vst.msk [vmem:[#allocation3 + $0x8] sm:$0xff] %vm1388, %v1199
      %1391 = vst.msk [vmem:[#allocation3 + $0x10] sm:$0xff] %vm1388, %v1201
      %1392 = vst.msk [vmem:[#allocation3 + $0x18] sm:$0xff] %vm1388, %v1203
      %1393 = vst.msk [vmem:[#allocation3 + $0x20] sm:$0xff] %vm1388, %v1205
      %1394 = vst.msk [vmem:[#allocation3 + $0x28] sm:$0xff] %vm1388, %v1207
      %1395 = vst.msk [vmem:[#allocation3 + $0x30] sm:$0xff] %vm1388, %v1209
      %1396 = vst.msk [vmem:[#allocation3 + $0x38] sm:$0xff] %vm1388, %v1211
      %1397 = vst.msk [vmem:[#allocation3 + $0x40] sm:$0xff] %vm1388, %v1213
      %1398 = vst.msk [vmem:[#allocation3 + $0x48] sm:$0xff] %vm1388, %v1215
      %1399 = vst.msk [vmem:[#allocation3 + $0x50] sm:$0xff] %vm1388, %v1217
      %1400 = vst.msk [vmem:[#allocation3 + $0x58] sm:$0xff] %vm1388, %v1219
      %1401 = vst.msk [vmem:[#allocation3 + $0x60] sm:$0xff] %vm1388, %v1221
      %1402 = vst.msk [vmem:[#allocation3 + $0x68] sm:$0xff] %vm1388, %v1223
      %1403 = vst.msk [vmem:[#allocation3 + $0x70] sm:$0xff] %vm1388, %v1225
      %1404 = vst.msk [vmem:[#allocation3 + $0x78] sm:$0xff] %vm1388, %v1227
      %1405 = vst.msk [vmem:[#allocation3 + $0x80] sm:$0xff] %vm1388, %v1229
      %1406 = vst.msk [vmem:[#allocation3 + $0x88] sm:$0xff] %vm1388, %v1231
      %1407 = vst.msk [vmem:[#allocation3 + $0x90] sm:$0xff] %vm1388, %v1233
      %1408 = vst.msk [vmem:[#allocation3 + $0x98] sm:$0xff] %vm1388, %v1235
      %1409 = vst.msk [vmem:[#allocation3 + $0xa0] sm:$0xff] %vm1388, %v1237
      %1410 = vst.msk [vmem:[#allocation3 + $0xa8] sm:$0xff] %vm1388, %v1239
      %1411 = vst.msk [vmem:[#allocation3 + $0xb0] sm:$0xff] %vm1388, %v1241
      %1412 = vst.msk [vmem:[#allocation3 + $0xb8] sm:$0xff] %vm1388, %v1243
      %1413 = vst.msk [vmem:[#allocation3 + $0xc0] sm:$0xff] %vm1388, %v1245
      %1414 = vst.msk [vmem:[#allocation3 + $0xc8] sm:$0xff] %vm1388, %v1247
      %1415 = vst.msk [vmem:[#allocation3 + $0xd0] sm:$0xff] %vm1388, %v1249
      %1416 = vst.msk [vmem:[#allocation3 + $0xd8] sm:$0xff] %vm1388, %v1251
      %1417 = vst.msk [vmem:[#allocation3 + $0xe0] sm:$0xff] %vm1388, %v1253
      %1418 = vst.msk [vmem:[#allocation3 + $0xe8] sm:$0xff] %vm1388, %v1255
      %1419 = vst.msk [vmem:[#allocation3 + $0xf0] sm:$0xff] %vm1388, %v1257
      %1420 = vst.msk [vmem:[#allocation3 + $0xf8] sm:$0xff] %vm1388, %v1259
      %1421 = vst.msk [vmem:[#allocation3 + $0x100] sm:$0xff] %vm1388, %v1261
      %1422 = vst.msk [vmem:[#allocation3 + $0x108] sm:$0xff] %vm1388, %v1263
      %1423 = vst.msk [vmem:[#allocation3 + $0x110] sm:$0xff] %vm1388, %v1265
      %1424 = vst.msk [vmem:[#allocation3 + $0x118] sm:$0xff] %vm1388, %v1267
      %1425 = vst.msk [vmem:[#allocation3 + $0x120] sm:$0xff] %vm1388, %v1269
      %1426 = vst.msk [vmem:[#allocation3 + $0x128] sm:$0xff] %vm1388, %v1271
      %1427 = vst.msk [vmem:[#allocation3 + $0x130] sm:$0xff] %vm1388, %v1273
      %1428 = vst.msk [vmem:[#allocation3 + $0x138] sm:$0xff] %vm1388, %v1275
      %1429 = vst.msk [vmem:[#allocation3 + $0x140] sm:$0xff] %vm1388, %v1277
      %1430 = vst.msk [vmem:[#allocation3 + $0x148] sm:$0xff] %vm1388, %v1279
      %1431 = vst.msk [vmem:[#allocation3 + $0x150] sm:$0xff] %vm1388, %v1281
      %1432 = vst.msk [vmem:[#allocation3 + $0x158] sm:$0xff] %vm1388, %v1283
      %1433 = vst.msk [vmem:[#allocation3 + $0x160] sm:$0xff] %vm1388, %v1285
      %1434 = vst.msk [vmem:[#allocation3 + $0x168] sm:$0xff] %vm1388, %v1287
      %1435 = vst.msk [vmem:[#allocation3 + $0x170] sm:$0xff] %vm1388, %v1289
      %1436 = vst.msk [vmem:[#allocation3 + $0x178] sm:$0xff] %vm1388, %v1291
      %1437 = vst.msk [vmem:[#allocation3 + $0x180] sm:$0xff] %vm1388, %v1293
      %1438 = vst.msk [vmem:[#allocation3 + $0x188] sm:$0xff] %vm1388, %v1295
      %1439 = vst.msk [vmem:[#allocation3 + $0x190] sm:$0xff] %vm1388, %v1297
      %1440 = vst.msk [vmem:[#allocation3 + $0x198] sm:$0xff] %vm1388, %v1299
      %1441 = vst.msk [vmem:[#allocation3 + $0x1a0] sm:$0xff] %vm1388, %v1301
      %1442 = vst.msk [vmem:[#allocation3 + $0x1a8] sm:$0xff] %vm1388, %v1303
      %1443 = vst.msk [vmem:[#allocation3 + $0x1b0] sm:$0xff] %vm1388, %v1305
      %1444 = vst.msk [vmem:[#allocation3 + $0x1b8] sm:$0xff] %vm1388, %v1307
      %1445 = vst.msk [vmem:[#allocation3 + $0x1c0] sm:$0xff] %vm1388, %v1309
      %1446 = vst.msk [vmem:[#allocation3 + $0x1c8] sm:$0xff] %vm1388, %v1311
      %1447 = vst.msk [vmem:[#allocation3 + $0x1d0] sm:$0xff] %vm1388, %v1313
      %1448 = vst.msk [vmem:[#allocation3 + $0x1d8] sm:$0xff] %vm1388, %v1315
      %1449 = vst.msk [vmem:[#allocation3 + $0x1e0] sm:$0xff] %vm1388, %v1317
      %1450 = vst.msk [vmem:[#allocation3 + $0x1e8] sm:$0xff] %vm1388, %v1319
      %1451 = vst.msk [vmem:[#allocation3 + $0x1f0] sm:$0xff] %vm1388, %v1321
      %1452 = vst.msk [vmem:[#allocation3 + $0x1f8] sm:$0xff] %vm1388, %v1323
      %v1453 = vld [vmem:[%s489] sm:$0xff]
      %v1454 = vld [vmem:[%s489 + $0x8] sm:$0xff]
      %v1455 = vld [vmem:[%s489 + $0x18] sm:$0xff]
      %v1456 = vld [vmem:[%s489 + $0x20] sm:$0xff]
      %v1457 = vld [vmem:[%s489 + $0x30] sm:$0xff]
      %v1458 = vld [vmem:[%s489 + $0x38] sm:$0xff]
      %v1459 = vld [vmem:[%s489 + $0x48] sm:$0xff]
      %v1460 = vld [vmem:[%s489 + $0x50] sm:$0xff]
      %v1461 = vld [vmem:[%s489 + $0x60] sm:$0xff]
      %v1462 = vld [vmem:[%s489 + $0x68] sm:$0xff]
      %v1463 = vld [vmem:[%s489 + $0x78] sm:$0xff]
      %v1464 = vld [vmem:[%s489 + $0x80] sm:$0xff]
      %v1465 = vld [vmem:[%s489 + $0x90] sm:$0xff]
      %v1466 = vld [vmem:[%s489 + $0x98] sm:$0xff]
      %v1467 = vld [vmem:[%s489 + $0xa8] sm:$0xff]
      %v1468 = vld [vmem:[%s489 + $0xb0] sm:$0xff]
      %v1469 = vld [vmem:[%s489 + $0xc0] sm:$0xff]
      %v1470 = vld [vmem:[%s489 + $0xc8] sm:$0xff]
      %v1471 = vld [vmem:[%s489 + $0xd8] sm:$0xff]
      %v1472 = vld [vmem:[%s489 + $0xe0] sm:$0xff]
      %v1473 = vld [vmem:[%s489 + $0xf0] sm:$0xff]
      %v1474 = vld [vmem:[%s489 + $0xf8] sm:$0xff]
      %v1475 = vld [vmem:[%s489 + $0x108] sm:$0xff]
      %v1476 = vld [vmem:[%s489 + $0x110] sm:$0xff]
      %v1477 = vld [vmem:[%s489 + $0x120] sm:$0xff]
      %v1478 = vld [vmem:[%s489 + $0x128] sm:$0xff]
      %v1479 = vld [vmem:[%s489 + $0x138] sm:$0xff]
      %v1480 = vld [vmem:[%s489 + $0x140] sm:$0xff]
      %v1481 = vld [vmem:[%s489 + $0x150] sm:$0xff]
      %v1482 = vld [vmem:[%s489 + $0x158] sm:$0xff]
      %v1483 = vld [vmem:[%s489 + $0x168] sm:$0xff]
      %v1484 = vld [vmem:[%s489 + $0x170] sm:$0xff]
      %v1485 = vld [vmem:[%s489 + $0x1b0] sm:$0xff]
      %v1486 = vld [vmem:[%s489 + $0x1b8] sm:$0xff]
      %v1487 = vld [vmem:[%s489 + $0x1c8] sm:$0xff]
      %v1488 = vld [vmem:[%s489 + $0x1d0] sm:$0xff]
      %v1489 = vld [vmem:[%s489 + $0x1e0] sm:$0xff]
      %v1490 = vld [vmem:[%s489 + $0x1e8] sm:$0xff]
      %v1491 = vld [vmem:[%s489 + $0x1f8] sm:$0xff]
      %v1492 = vld [vmem:[%s489 + $0x200] sm:$0xff]
      %v1493 = vld [vmem:[%s489 + $0x210] sm:$0xff]
      %v1494 = vld [vmem:[%s489 + $0x218] sm:$0xff]
      %v1495 = vld [vmem:[%s489 + $0x228] sm:$0xff]
      %v1496 = vld [vmem:[%s489 + $0x230] sm:$0xff]
      %v1497 = vld [vmem:[%s489 + $0x240] sm:$0xff]
      %v1498 = vld [vmem:[%s489 + $0x248] sm:$0xff]
      %v1499 = vld [vmem:[%s489 + $0x258] sm:$0xff]
      %v1500 = vld [vmem:[%s489 + $0x260] sm:$0xff]
      %v1501 = vld [vmem:[%s489 + $0x270] sm:$0xff]
      %v1502 = vld [vmem:[%s489 + $0x278] sm:$0xff]
      %v1503 = vld [vmem:[%s489 + $0x288] sm:$0xff]
      %v1504 = vld [vmem:[%s489 + $0x290] sm:$0xff]
      %v1505 = vld [vmem:[%s489 + $0x2a0] sm:$0xff]
      %v1506 = vld [vmem:[%s489 + $0x2a8] sm:$0xff]
      %v1507 = vld [vmem:[%s489 + $0x2b8] sm:$0xff]
      %v1508 = vld [vmem:[%s489 + $0x2c0] sm:$0xff]
      %v1509 = vld [vmem:[%s489 + $0x2d0] sm:$0xff]
      %v1510 = vld [vmem:[%s489 + $0x2d8] sm:$0xff]
      %v1511 = vld [vmem:[%s489 + $0x2e8] sm:$0xff]
      %v1512 = vld [vmem:[%s489 + $0x2f0] sm:$0xff]
      %v1513 = vld [vmem:[%s489 + $0x300] sm:$0xff]
      %v1514 = vld [vmem:[%s489 + $0x308] sm:$0xff]
      %v1515 = vld [vmem:[%s489 + $0x318] sm:$0xff]
      %v1516 = vld [vmem:[%s489 + $0x320] sm:$0xff]
      %1581 = vrot.lane.b32.xlu0 %v1453, 24
      %v1582 = vpop.permute.xlu0 %1581
      %1583 = vrot.lane.b32.xlu0 %v1454, 24
      %v1584 = vpop.permute.xlu0 %1583
      %1585 = vrot.lane.b32.xlu0 %v1455, 24
      %v1586 = vpop.permute.xlu0 %1585
      %1587 = vrot.lane.b32.xlu0 %v1456, 24
      %v1588 = vpop.permute.xlu0 %1587
      %1589 = vrot.lane.b32.xlu0 %v1457, 24
      %v1590 = vpop.permute.xlu0 %1589
      %1591 = vrot.lane.b32.xlu0 %v1458, 24
      %v1592 = vpop.permute.xlu0 %1591
      %1593 = vrot.lane.b32.xlu0 %v1459, 24
      %v1594 = vpop.permute.xlu0 %1593
      %1595 = vrot.lane.b32.xlu0 %v1460, 24
      %v1596 = vpop.permute.xlu0 %1595
      %1597 = vrot.lane.b32.xlu0 %v1461, 24
      %v1598 = vpop.permute.xlu0 %1597
      %1599 = vrot.lane.b32.xlu0 %v1462, 24
      %v1600 = vpop.permute.xlu0 %1599
      %1601 = vrot.lane.b32.xlu0 %v1463, 24
      %v1602 = vpop.permute.xlu0 %1601
      %1603 = vrot.lane.b32.xlu0 %v1464, 24
      %v1604 = vpop.permute.xlu0 %1603
      %1605 = vrot.lane.b32.xlu0 %v1465, 24
      %v1606 = vpop.permute.xlu0 %1605
      %1607 = vrot.lane.b32.xlu0 %v1466, 24
      %v1608 = vpop.permute.xlu0 %1607
      %1609 = vrot.lane.b32.xlu0 %v1467, 24
      %v1610 = vpop.permute.xlu0 %1609
      %1611 = vrot.lane.b32.xlu0 %v1468, 24
      %v1612 = vpop.permute.xlu0 %1611
      %1613 = vrot.lane.b32.xlu0 %v1469, 24
      %v1614 = vpop.permute.xlu0 %1613
      %1615 = vrot.lane.b32.xlu0 %v1470, 24
      %v1616 = vpop.permute.xlu0 %1615
      %1617 = vrot.lane.b32.xlu0 %v1471, 24
      %v1618 = vpop.permute.xlu0 %1617
      %1619 = vrot.lane.b32.xlu0 %v1472, 24
      %v1620 = vpop.permute.xlu0 %1619
      %1621 = vrot.lane.b32.xlu0 %v1473, 24
      %v1622 = vpop.permute.xlu0 %1621
      %1623 = vrot.lane.b32.xlu0 %v1474, 24
      %v1624 = vpop.permute.xlu0 %1623
      %1625 = vrot.lane.b32.xlu0 %v1475, 24
      %v1626 = vpop.permute.xlu0 %1625
      %1627 = vrot.lane.b32.xlu0 %v1476, 24
      %v1628 = vpop.permute.xlu0 %1627
      %1629 = vrot.lane.b32.xlu0 %v1477, 24
      %v1630 = vpop.permute.xlu0 %1629
      %1631 = vrot.lane.b32.xlu0 %v1478, 24
      %v1632 = vpop.permute.xlu0 %1631
      %1633 = vrot.lane.b32.xlu0 %v1479, 24
      %v1634 = vpop.permute.xlu0 %1633
      %1635 = vrot.lane.b32.xlu0 %v1480, 24
      %v1636 = vpop.permute.xlu0 %1635
      %1637 = vrot.lane.b32.xlu0 %v1481, 24
      %v1638 = vpop.permute.xlu0 %1637
      %1639 = vrot.lane.b32.xlu0 %v1482, 24
      %v1640 = vpop.permute.xlu0 %1639
      %1641 = vrot.lane.b32.xlu0 %v1483, 24
      %v1642 = vpop.permute.xlu0 %1641
      %1643 = vrot.lane.b32.xlu0 %v1484, 24
      %v1644 = vpop.permute.xlu0 %1643
      %1645 = vrot.lane.b32.xlu0 %v1485, 24
      %v1646 = vpop.permute.xlu0 %1645
      %1647 = vrot.lane.b32.xlu0 %v1486, 24
      %v1648 = vpop.permute.xlu0 %1647
      %1649 = vrot.lane.b32.xlu0 %v1487, 24
      %v1650 = vpop.permute.xlu0 %1649
      %1651 = vrot.lane.b32.xlu0 %v1488, 24
      %v1652 = vpop.permute.xlu0 %1651
      %1653 = vrot.lane.b32.xlu0 %v1489, 24
      %v1654 = vpop.permute.xlu0 %1653
      %1655 = vrot.lane.b32.xlu0 %v1490, 24
      %v1656 = vpop.permute.xlu0 %1655
      %1657 = vrot.lane.b32.xlu0 %v1491, 24
      %v1658 = vpop.permute.xlu0 %1657
      %1659 = vrot.lane.b32.xlu0 %v1492, 24
      %v1660 = vpop.permute.xlu0 %1659
      %1661 = vrot.lane.b32.xlu0 %v1493, 24
      %v1662 = vpop.permute.xlu0 %1661
      %1663 = vrot.lane.b32.xlu0 %v1494, 24
      %v1664 = vpop.permute.xlu0 %1663
      %1665 = vrot.lane.b32.xlu0 %v1495, 24
      %v1666 = vpop.permute.xlu0 %1665
      %1667 = vrot.lane.b32.xlu0 %v1496, 24
      %v1668 = vpop.permute.xlu0 %1667
      %1669 = vrot.lane.b32.xlu0 %v1497, 24
      %v1670 = vpop.permute.xlu0 %1669
      %1671 = vrot.lane.b32.xlu0 %v1498, 24
      %v1672 = vpop.permute.xlu0 %1671
      %1673 = vrot.lane.b32.xlu0 %v1499, 24
      %v1674 = vpop.permute.xlu0 %1673
      %1675 = vrot.lane.b32.xlu0 %v1500, 24
      %v1676 = vpop.permute.xlu0 %1675
      %1677 = vrot.lane.b32.xlu0 %v1501, 24
      %v1678 = vpop.permute.xlu0 %1677
      %1679 = vrot.lane.b32.xlu0 %v1502, 24
      %v1680 = vpop.permute.xlu0 %1679
      %1681 = vrot.lane.b32.xlu0 %v1503, 24
      %v1682 = vpop.permute.xlu0 %1681
      %1683 = vrot.lane.b32.xlu0 %v1504, 24
      %v1684 = vpop.permute.xlu0 %1683
      %1685 = vrot.lane.b32.xlu0 %v1505, 24
      %v1686 = vpop.permute.xlu0 %1685
      %1687 = vrot.lane.b32.xlu0 %v1506, 24
      %v1688 = vpop.permute.xlu0 %1687
      %1689 = vrot.lane.b32.xlu0 %v1507, 24
      %v1690 = vpop.permute.xlu0 %1689
      %1691 = vrot.lane.b32.xlu0 %v1508, 24
      %v1692 = vpop.permute.xlu0 %1691
      %1693 = vrot.lane.b32.xlu0 %v1509, 24
      %v1694 = vpop.permute.xlu0 %1693
      %1695 = vrot.lane.b32.xlu0 %v1510, 24
      %v1696 = vpop.permute.xlu0 %1695
      %1697 = vrot.lane.b32.xlu0 %v1511, 24
      %v1698 = vpop.permute.xlu0 %1697
      %1699 = vrot.lane.b32.xlu0 %v1512, 24
      %v1700 = vpop.permute.xlu0 %1699
      %1701 = vrot.lane.b32.xlu0 %v1513, 24
      %v1702 = vpop.permute.xlu0 %1701
      %1703 = vrot.lane.b32.xlu0 %v1514, 24
      %v1704 = vpop.permute.xlu0 %1703
      %1705 = vrot.lane.b32.xlu0 %v1515, 24
      %v1706 = vpop.permute.xlu0 %1705
      %1707 = vrot.lane.b32.xlu0 %v1516, 24
      %v1708 = vpop.permute.xlu0 %1707
      %vm1773 = vcmask 261312
      %1774 = vst.msk [vmem:[#allocation3] sm:$0xff] %vm1773, %v1582
      %1775 = vst.msk [vmem:[#allocation3 + $0x8] sm:$0xff] %vm1773, %v1584
      %1776 = vst.msk [vmem:[#allocation3 + $0x10] sm:$0xff] %vm1773, %v1586
      %1777 = vst.msk [vmem:[#allocation3 + $0x18] sm:$0xff] %vm1773, %v1588
      %1778 = vst.msk [vmem:[#allocation3 + $0x20] sm:$0xff] %vm1773, %v1590
      %1779 = vst.msk [vmem:[#allocation3 + $0x28] sm:$0xff] %vm1773, %v1592
      %1780 = vst.msk [vmem:[#allocation3 + $0x30] sm:$0xff] %vm1773, %v1594
      %1781 = vst.msk [vmem:[#allocation3 + $0x38] sm:$0xff] %vm1773, %v1596
      %1782 = vst.msk [vmem:[#allocation3 + $0x40] sm:$0xff] %vm1773, %v1598
      %1783 = vst.msk [vmem:[#allocation3 + $0x48] sm:$0xff] %vm1773, %v1600
      %1784 = vst.msk [vmem:[#allocation3 + $0x50] sm:$0xff] %vm1773, %v1602
      %1785 = vst.msk [vmem:[#allocation3 + $0x58] sm:$0xff] %vm1773, %v1604
      %1786 = vst.msk [vmem:[#allocation3 + $0x60] sm:$0xff] %vm1773, %v1606
      %1787 = vst.msk [vmem:[#allocation3 + $0x68] sm:$0xff] %vm1773, %v1608
      %1788 = vst.msk [vmem:[#allocation3 + $0x70] sm:$0xff] %vm1773, %v1610
      %1789 = vst.msk [vmem:[#allocation3 + $0x78] sm:$0xff] %vm1773, %v1612
      %1790 = vst.msk [vmem:[#allocation3 + $0x80] sm:$0xff] %vm1773, %v1614
      %1791 = vst.msk [vmem:[#allocation3 + $0x88] sm:$0xff] %vm1773, %v1616
      %1792 = vst.msk [vmem:[#allocation3 + $0x90] sm:$0xff] %vm1773, %v1618
      %1793 = vst.msk [vmem:[#allocation3 + $0x98] sm:$0xff] %vm1773, %v1620
      %1794 = vst.msk [vmem:[#allocation3 + $0xa0] sm:$0xff] %vm1773, %v1622
      %1795 = vst.msk [vmem:[#allocation3 + $0xa8] sm:$0xff] %vm1773, %v1624
      %1796 = vst.msk [vmem:[#allocation3 + $0xb0] sm:$0xff] %vm1773, %v1626
      %1797 = vst.msk [vmem:[#allocation3 + $0xb8] sm:$0xff] %vm1773, %v1628
      %1798 = vst.msk [vmem:[#allocation3 + $0xc0] sm:$0xff] %vm1773, %v1630
      %1799 = vst.msk [vmem:[#allocation3 + $0xc8] sm:$0xff] %vm1773, %v1632
      %1800 = vst.msk [vmem:[#allocation3 + $0xd0] sm:$0xff] %vm1773, %v1634
      %1801 = vst.msk [vmem:[#allocation3 + $0xd8] sm:$0xff] %vm1773, %v1636
      %1802 = vst.msk [vmem:[#allocation3 + $0xe0] sm:$0xff] %vm1773, %v1638
      %1803 = vst.msk [vmem:[#allocation3 + $0xe8] sm:$0xff] %vm1773, %v1640
      %1804 = vst.msk [vmem:[#allocation3 + $0xf0] sm:$0xff] %vm1773, %v1642
      %1805 = vst.msk [vmem:[#allocation3 + $0xf8] sm:$0xff] %vm1773, %v1644
      %1806 = vst.msk [vmem:[#allocation3 + $0x100] sm:$0xff] %vm1773, %v1646
      %1807 = vst.msk [vmem:[#allocation3 + $0x108] sm:$0xff] %vm1773, %v1648
      %1808 = vst.msk [vmem:[#allocation3 + $0x110] sm:$0xff] %vm1773, %v1650
      %1809 = vst.msk [vmem:[#allocation3 + $0x118] sm:$0xff] %vm1773, %v1652
      %1810 = vst.msk [vmem:[#allocation3 + $0x120] sm:$0xff] %vm1773, %v1654
      %1811 = vst.msk [vmem:[#allocation3 + $0x128] sm:$0xff] %vm1773, %v1656
      %1812 = vst.msk [vmem:[#allocation3 + $0x130] sm:$0xff] %vm1773, %v1658
      %1813 = vst.msk [vmem:[#allocation3 + $0x138] sm:$0xff] %vm1773, %v1660
      %1814 = vst.msk [vmem:[#allocation3 + $0x140] sm:$0xff] %vm1773, %v1662
      %1815 = vst.msk [vmem:[#allocation3 + $0x148] sm:$0xff] %vm1773, %v1664
      %1816 = vst.msk [vmem:[#allocation3 + $0x150] sm:$0xff] %vm1773, %v1666
      %1817 = vst.msk [vmem:[#allocation3 + $0x158] sm:$0xff] %vm1773, %v1668
      %1818 = vst.msk [vmem:[#allocation3 + $0x160] sm:$0xff] %vm1773, %v1670
      %1819 = vst.msk [vmem:[#allocation3 + $0x168] sm:$0xff] %vm1773, %v1672
      %1820 = vst.msk [vmem:[#allocation3 + $0x170] sm:$0xff] %vm1773, %v1674
      %1821 = vst.msk [vmem:[#allocation3 + $0x178] sm:$0xff] %vm1773, %v1676
      %1822 = vst.msk [vmem:[#allocation3 + $0x180] sm:$0xff] %vm1773, %v1678
      %1823 = vst.msk [vmem:[#allocation3 + $0x188] sm:$0xff] %vm1773, %v1680
      %1824 = vst.msk [vmem:[#allocation3 + $0x190] sm:$0xff] %vm1773, %v1682
      %1825 = vst.msk [vmem:[#allocation3 + $0x198] sm:$0xff] %vm1773, %v1684
      %1826 = vst.msk [vmem:[#allocation3 + $0x1a0] sm:$0xff] %vm1773, %v1686
      %1827 = vst.msk [vmem:[#allocation3 + $0x1a8] sm:$0xff] %vm1773, %v1688
      %1828 = vst.msk [vmem:[#allocation3 + $0x1b0] sm:$0xff] %vm1773, %v1690
      %1829 = vst.msk [vmem:[#allocation3 + $0x1b8] sm:$0xff] %vm1773, %v1692
      %1830 = vst.msk [vmem:[#allocation3 + $0x1c0] sm:$0xff] %vm1773, %v1694
      %1831 = vst.msk [vmem:[#allocation3 + $0x1c8] sm:$0xff] %vm1773, %v1696
      %1832 = vst.msk [vmem:[#allocation3 + $0x1d0] sm:$0xff] %vm1773, %v1698
      %1833 = vst.msk [vmem:[#allocation3 + $0x1d8] sm:$0xff] %vm1773, %v1700
      %1834 = vst.msk [vmem:[#allocation3 + $0x1e0] sm:$0xff] %vm1773, %v1702
      %1835 = vst.msk [vmem:[#allocation3 + $0x1e8] sm:$0xff] %vm1773, %v1704
      %1836 = vst.msk [vmem:[#allocation3 + $0x1f0] sm:$0xff] %vm1773, %v1706
      %1837 = vst.msk [vmem:[#allocation3 + $0x1f8] sm:$0xff] %vm1773, %v1708
      %v1838 = vld [vmem:[%s489 + $0x1] sm:$0xff]
      %v1839 = vld [vmem:[%s489 + $0x9] sm:$0xff]
      %v1840 = vld [vmem:[%s489 + $0x19] sm:$0xff]
      %v1841 = vld [vmem:[%s489 + $0x21] sm:$0xff]
      %v1842 = vld [vmem:[%s489 + $0x31] sm:$0xff]
      %v1843 = vld [vmem:[%s489 + $0x39] sm:$0xff]
      %v1844 = vld [vmem:[%s489 + $0x49] sm:$0xff]
      %v1845 = vld [vmem:[%s489 + $0x51] sm:$0xff]
      %v1846 = vld [vmem:[%s489 + $0x61] sm:$0xff]
      %v1847 = vld [vmem:[%s489 + $0x69] sm:$0xff]
      %v1848 = vld [vmem:[%s489 + $0x79] sm:$0xff]
      %v1849 = vld [vmem:[%s489 + $0x81] sm:$0xff]
      %v1850 = vld [vmem:[%s489 + $0x91] sm:$0xff]
      %v1851 = vld [vmem:[%s489 + $0x99] sm:$0xff]
      %v1852 = vld [vmem:[%s489 + $0xa9] sm:$0xff]
      %v1853 = vld [vmem:[%s489 + $0xb1] sm:$0xff]
      %v1854 = vld [vmem:[%s489 + $0xc1] sm:$0xff]
      %v1855 = vld [vmem:[%s489 + $0xc9] sm:$0xff]
      %v1856 = vld [vmem:[%s489 + $0xd9] sm:$0xff]
      %v1857 = vld [vmem:[%s489 + $0xe1] sm:$0xff]
      %v1858 = vld [vmem:[%s489 + $0xf1] sm:$0xff]
      %v1859 = vld [vmem:[%s489 + $0xf9] sm:$0xff]
      %v1860 = vld [vmem:[%s489 + $0x109] sm:$0xff]
      %v1861 = vld [vmem:[%s489 + $0x111] sm:$0xff]
      %v1862 = vld [vmem:[%s489 + $0x121] sm:$0xff]
      %v1863 = vld [vmem:[%s489 + $0x129] sm:$0xff]
      %v1864 = vld [vmem:[%s489 + $0x139] sm:$0xff]
      %v1865 = vld [vmem:[%s489 + $0x141] sm:$0xff]
      %v1866 = vld [vmem:[%s489 + $0x151] sm:$0xff]
      %v1867 = vld [vmem:[%s489 + $0x159] sm:$0xff]
      %v1868 = vld [vmem:[%s489 + $0x169] sm:$0xff]
      %v1869 = vld [vmem:[%s489 + $0x171] sm:$0xff]
      %v1870 = vld [vmem:[%s489 + $0x1b1] sm:$0xff]
      %v1871 = vld [vmem:[%s489 + $0x1b9] sm:$0xff]
      %v1872 = vld [vmem:[%s489 + $0x1c9] sm:$0xff]
      %v1873 = vld [vmem:[%s489 + $0x1d1] sm:$0xff]
      %v1874 = vld [vmem:[%s489 + $0x1e1] sm:$0xff]
      %v1875 = vld [vmem:[%s489 + $0x1e9] sm:$0xff]
      %v1876 = vld [vmem:[%s489 + $0x1f9] sm:$0xff]
      %v1877 = vld [vmem:[%s489 + $0x201] sm:$0xff]
      %v1878 = vld [vmem:[%s489 + $0x211] sm:$0xff]
      %v1879 = vld [vmem:[%s489 + $0x219] sm:$0xff]
      %v1880 = vld [vmem:[%s489 + $0x229] sm:$0xff]
      %v1881 = vld [vmem:[%s489 + $0x231] sm:$0xff]
      %v1882 = vld [vmem:[%s489 + $0x241] sm:$0xff]
      %v1883 = vld [vmem:[%s489 + $0x249] sm:$0xff]
      %v1884 = vld [vmem:[%s489 + $0x259] sm:$0xff]
      %v1885 = vld [vmem:[%s489 + $0x261] sm:$0xff]
      %v1886 = vld [vmem:[%s489 + $0x271] sm:$0xff]
      %v1887 = vld [vmem:[%s489 + $0x279] sm:$0xff]
      %v1888 = vld [vmem:[%s489 + $0x289] sm:$0xff]
      %v1889 = vld [vmem:[%s489 + $0x291] sm:$0xff]
      %v1890 = vld [vmem:[%s489 + $0x2a1] sm:$0xff]
      %v1891 = vld [vmem:[%s489 + $0x2a9] sm:$0xff]
      %v1892 = vld [vmem:[%s489 + $0x2b9] sm:$0xff]
      %v1893 = vld [vmem:[%s489 + $0x2c1] sm:$0xff]
      %v1894 = vld [vmem:[%s489 + $0x2d1] sm:$0xff]
      %v1895 = vld [vmem:[%s489 + $0x2d9] sm:$0xff]
      %v1896 = vld [vmem:[%s489 + $0x2e9] sm:$0xff]
      %v1897 = vld [vmem:[%s489 + $0x2f1] sm:$0xff]
      %v1898 = vld [vmem:[%s489 + $0x301] sm:$0xff]
      %v1899 = vld [vmem:[%s489 + $0x309] sm:$0xff]
      %v1900 = vld [vmem:[%s489 + $0x319] sm:$0xff]
      %v1901 = vld [vmem:[%s489 + $0x321] sm:$0xff]
      %1966 = vrot.lane.b32.xlu0 %v1838, 32
      %v1967 = vpop.permute.xlu0 %1966
      %1968 = vrot.lane.b32.xlu0 %v1839, 32
      %v1969 = vpop.permute.xlu0 %1968
      %1970 = vrot.lane.b32.xlu0 %v1840, 32
      %v1971 = vpop.permute.xlu0 %1970
      %1972 = vrot.lane.b32.xlu0 %v1841, 32
      %v1973 = vpop.permute.xlu0 %1972
      %1974 = vrot.lane.b32.xlu0 %v1842, 32
      %v1975 = vpop.permute.xlu0 %1974
      %1976 = vrot.lane.b32.xlu0 %v1843, 32
      %v1977 = vpop.permute.xlu0 %1976
      %1978 = vrot.lane.b32.xlu0 %v1844, 32
      %v1979 = vpop.permute.xlu0 %1978
      %1980 = vrot.lane.b32.xlu0 %v1845, 32
      %v1981 = vpop.permute.xlu0 %1980
      %1982 = vrot.lane.b32.xlu0 %v1846, 32
      %v1983 = vpop.permute.xlu0 %1982
      %1984 = vrot.lane.b32.xlu0 %v1847, 32
      %v1985 = vpop.permute.xlu0 %1984
      %1986 = vrot.lane.b32.xlu0 %v1848, 32
      %v1987 = vpop.permute.xlu0 %1986
      %1988 = vrot.lane.b32.xlu0 %v1849, 32
      %v1989 = vpop.permute.xlu0 %1988
      %1990 = vrot.lane.b32.xlu0 %v1850, 32
      %v1991 = vpop.permute.xlu0 %1990
      %1992 = vrot.lane.b32.xlu0 %v1851, 32
      %v1993 = vpop.permute.xlu0 %1992
      %1994 = vrot.lane.b32.xlu0 %v1852, 32
      %v1995 = vpop.permute.xlu0 %1994
      %1996 = vrot.lane.b32.xlu0 %v1853, 32
      %v1997 = vpop.permute.xlu0 %1996
      %1998 = vrot.lane.b32.xlu0 %v1854, 32
      %v1999 = vpop.permute.xlu0 %1998
      %2000 = vrot.lane.b32.xlu0 %v1855, 32
      %v2001 = vpop.permute.xlu0 %2000
      %2002 = vrot.lane.b32.xlu0 %v1856, 32
      %v2003 = vpop.permute.xlu0 %2002
      %2004 = vrot.lane.b32.xlu0 %v1857, 32
      %v2005 = vpop.permute.xlu0 %2004
      %2006 = vrot.lane.b32.xlu0 %v1858, 32
      %v2007 = vpop.permute.xlu0 %2006
      %2008 = vrot.lane.b32.xlu0 %v1859, 32
      %v2009 = vpop.permute.xlu0 %2008
      %2010 = vrot.lane.b32.xlu0 %v1860, 32
      %v2011 = vpop.permute.xlu0 %2010
      %2012 = vrot.lane.b32.xlu0 %v1861, 32
      %v2013 = vpop.permute.xlu0 %2012
      %2014 = vrot.lane.b32.xlu0 %v1862, 32
      %v2015 = vpop.permute.xlu0 %2014
      %2016 = vrot.lane.b32.xlu0 %v1863, 32
      %v2017 = vpop.permute.xlu0 %2016
      %2018 = vrot.lane.b32.xlu0 %v1864, 32
      %v2019 = vpop.permute.xlu0 %2018
      %2020 = vrot.lane.b32.xlu0 %v1865, 32
      %v2021 = vpop.permute.xlu0 %2020
      %2022 = vrot.lane.b32.xlu0 %v1866, 32
      %v2023 = vpop.permute.xlu0 %2022
      %2024 = vrot.lane.b32.xlu0 %v1867, 32
      %v2025 = vpop.permute.xlu0 %2024
      %2026 = vrot.lane.b32.xlu0 %v1868, 32
      %v2027 = vpop.permute.xlu0 %2026
      %2028 = vrot.lane.b32.xlu0 %v1869, 32
      %v2029 = vpop.permute.xlu0 %2028
      %2030 = vrot.lane.b32.xlu0 %v1870, 32
      %v2031 = vpop.permute.xlu0 %2030
      %2032 = vrot.lane.b32.xlu0 %v1871, 32
      %v2033 = vpop.permute.xlu0 %2032
      %2034 = vrot.lane.b32.xlu0 %v1872, 32
      %v2035 = vpop.permute.xlu0 %2034
      %2036 = vrot.lane.b32.xlu0 %v1873, 32
      %v2037 = vpop.permute.xlu0 %2036
      %2038 = vrot.lane.b32.xlu0 %v1874, 32
      %v2039 = vpop.permute.xlu0 %2038
      %2040 = vrot.lane.b32.xlu0 %v1875, 32
      %v2041 = vpop.permute.xlu0 %2040
      %2042 = vrot.lane.b32.xlu0 %v1876, 32
      %v2043 = vpop.permute.xlu0 %2042
      %2044 = vrot.lane.b32.xlu0 %v1877, 32
      %v2045 = vpop.permute.xlu0 %2044
      %2046 = vrot.lane.b32.xlu0 %v1878, 32
      %v2047 = vpop.permute.xlu0 %2046
      %2048 = vrot.lane.b32.xlu0 %v1879, 32
      %v2049 = vpop.permute.xlu0 %2048
      %2050 = vrot.lane.b32.xlu0 %v1880, 32
      %v2051 = vpop.permute.xlu0 %2050
      %2052 = vrot.lane.b32.xlu0 %v1881, 32
      %v2053 = vpop.permute.xlu0 %2052
      %2054 = vrot.lane.b32.xlu0 %v1882, 32
      %v2055 = vpop.permute.xlu0 %2054
      %2056 = vrot.lane.b32.xlu0 %v1883, 32
      %v2057 = vpop.permute.xlu0 %2056
      %2058 = vrot.lane.b32.xlu0 %v1884, 32
      %v2059 = vpop.permute.xlu0 %2058
      %2060 = vrot.lane.b32.xlu0 %v1885, 32
      %v2061 = vpop.permute.xlu0 %2060
      %2062 = vrot.lane.b32.xlu0 %v1886, 32
      %v2063 = vpop.permute.xlu0 %2062
      %2064 = vrot.lane.b32.xlu0 %v1887, 32
      %v2065 = vpop.permute.xlu0 %2064
      %2066 = vrot.lane.b32.xlu0 %v1888, 32
      %v2067 = vpop.permute.xlu0 %2066
      %2068 = vrot.lane.b32.xlu0 %v1889, 32
      %v2069 = vpop.permute.xlu0 %2068
      %2070 = vrot.lane.b32.xlu0 %v1890, 32
      %v2071 = vpop.permute.xlu0 %2070
      %2072 = vrot.lane.b32.xlu0 %v1891, 32
      %v2073 = vpop.permute.xlu0 %2072
      %2074 = vrot.lane.b32.xlu0 %v1892, 32
      %v2075 = vpop.permute.xlu0 %2074
      %2076 = vrot.lane.b32.xlu0 %v1893, 32
      %v2077 = vpop.permute.xlu0 %2076
      %2078 = vrot.lane.b32.xlu0 %v1894, 32
      %v2079 = vpop.permute.xlu0 %2078
      %2080 = vrot.lane.b32.xlu0 %v1895, 32
      %v2081 = vpop.permute.xlu0 %2080
      %2082 = vrot.lane.b32.xlu0 %v1896, 32
      %v2083 = vpop.permute.xlu0 %2082
      %2084 = vrot.lane.b32.xlu0 %v1897, 32
      %v2085 = vpop.permute.xlu0 %2084
      %2086 = vrot.lane.b32.xlu0 %v1898, 32
      %v2087 = vpop.permute.xlu0 %2086
      %2088 = vrot.lane.b32.xlu0 %v1899, 32
      %v2089 = vpop.permute.xlu0 %2088
      %2090 = vrot.lane.b32.xlu0 %v1900, 32
      %v2091 = vpop.permute.xlu0 %2090
      %2092 = vrot.lane.b32.xlu0 %v1901, 32
      %v2093 = vpop.permute.xlu0 %2092
      %vm2158 = vcmask 326912
      %2159 = vst.msk [vmem:[#allocation3] sm:$0xff] %vm2158, %v1967
      %2160 = vst.msk [vmem:[#allocation3 + $0x8] sm:$0xff] %vm2158, %v1969
      %2161 = vst.msk [vmem:[#allocation3 + $0x10] sm:$0xff] %vm2158, %v1971
      %2162 = vst.msk [vmem:[#allocation3 + $0x18] sm:$0xff] %vm2158, %v1973
      %2163 = vst.msk [vmem:[#allocation3 + $0x20] sm:$0xff] %vm2158, %v1975
      %2164 = vst.msk [vmem:[#allocation3 + $0x28] sm:$0xff] %vm2158, %v1977
      %2165 = vst.msk [vmem:[#allocation3 + $0x30] sm:$0xff] %vm2158, %v1979
      %2166 = vst.msk [vmem:[#allocation3 + $0x38] sm:$0xff] %vm2158, %v1981
      %2167 = vst.msk [vmem:[#allocation3 + $0x40] sm:$0xff] %vm2158, %v1983
      %2168 = vst.msk [vmem:[#allocation3 + $0x48] sm:$0xff] %vm2158, %v1985
      %2169 = vst.msk [vmem:[#allocation3 + $0x50] sm:$0xff] %vm2158, %v1987
      %2170 = vst.msk [vmem:[#allocation3 + $0x58] sm:$0xff] %vm2158, %v1989
      %2171 = vst.msk [vmem:[#allocation3 + $0x60] sm:$0xff] %vm2158, %v1991
      %2172 = vst.msk [vmem:[#allocation3 + $0x68] sm:$0xff] %vm2158, %v1993
      %2173 = vst.msk [vmem:[#allocation3 + $0x70] sm:$0xff] %vm2158, %v1995
      %2174 = vst.msk [vmem:[#allocation3 + $0x78] sm:$0xff] %vm2158, %v1997
      %2175 = vst.msk [vmem:[#allocation3 + $0x80] sm:$0xff] %vm2158, %v1999
      %2176 = vst.msk [vmem:[#allocation3 + $0x88] sm:$0xff] %vm2158, %v2001
      %2177 = vst.msk [vmem:[#allocation3 + $0x90] sm:$0xff] %vm2158, %v2003
      %2178 = vst.msk [vmem:[#allocation3 + $0x98] sm:$0xff] %vm2158, %v2005
      %2179 = vst.msk [vmem:[#allocation3 + $0xa0] sm:$0xff] %vm2158, %v2007
      %2180 = vst.msk [vmem:[#allocation3 + $0xa8] sm:$0xff] %vm2158, %v2009
      %2181 = vst.msk [vmem:[#allocation3 + $0xb0] sm:$0xff] %vm2158, %v2011
      %2182 = vst.msk [vmem:[#allocation3 + $0xb8] sm:$0xff] %vm2158, %v2013
      %2183 = vst.msk [vmem:[#allocation3 + $0xc0] sm:$0xff] %vm2158, %v2015
      %2184 = vst.msk [vmem:[#allocation3 + $0xc8] sm:$0xff] %vm2158, %v2017
      %2185 = vst.msk [vmem:[#allocation3 + $0xd0] sm:$0xff] %vm2158, %v2019
      %2186 = vst.msk [vmem:[#allocation3 + $0xd8] sm:$0xff] %vm2158, %v2021
      %2187 = vst.msk [vmem:[#allocation3 + $0xe0] sm:$0xff] %vm2158, %v2023
      %2188 = vst.msk [vmem:[#allocation3 + $0xe8] sm:$0xff] %vm2158, %v2025
      %2189 = vst.msk [vmem:[#allocation3 + $0xf0] sm:$0xff] %vm2158, %v2027
      %2190 = vst.msk [vmem:[#allocation3 + $0xf8] sm:$0xff] %vm2158, %v2029
      %2191 = vst.msk [vmem:[#allocation3 + $0x100] sm:$0xff] %vm2158, %v2031
      %2192 = vst.msk [vmem:[#allocation3 + $0x108] sm:$0xff] %vm2158, %v2033
      %2193 = vst.msk [vmem:[#allocation3 + $0x110] sm:$0xff] %vm2158, %v2035
      %2194 = vst.msk [vmem:[#allocation3 + $0x118] sm:$0xff] %vm2158, %v2037
      %2195 = vst.msk [vmem:[#allocation3 + $0x120] sm:$0xff] %vm2158, %v2039
      %2196 = vst.msk [vmem:[#allocation3 + $0x128] sm:$0xff] %vm2158, %v2041
      %2197 = vst.msk [vmem:[#allocation3 + $0x130] sm:$0xff] %vm2158, %v2043
      %2198 = vst.msk [vmem:[#allocation3 + $0x138] sm:$0xff] %vm2158, %v2045
      %2199 = vst.msk [vmem:[#allocation3 + $0x140] sm:$0xff] %vm2158, %v2047
      %2200 = vst.msk [vmem:[#allocation3 + $0x148] sm:$0xff] %vm2158, %v2049
      %2201 = vst.msk [vmem:[#allocation3 + $0x150] sm:$0xff] %vm2158, %v2051
      %2202 = vst.msk [vmem:[#allocation3 + $0x158] sm:$0xff] %vm2158, %v2053
      %2203 = vst.msk [vmem:[#allocation3 + $0x160] sm:$0xff] %vm2158, %v2055
      %2204 = vst.msk [vmem:[#allocation3 + $0x168] sm:$0xff] %vm2158, %v2057
      %2205 = vst.msk [vmem:[#allocation3 + $0x170] sm:$0xff] %vm2158, %v2059
      %2206 = vst.msk [vmem:[#allocation3 + $0x178] sm:$0xff] %vm2158, %v2061
      %2207 = vst.msk [vmem:[#allocation3 + $0x180] sm:$0xff] %vm2158, %v2063
      %2208 = vst.msk [vmem:[#allocation3 + $0x188] sm:$0xff] %vm2158, %v2065
      %2209 = vst.msk [vmem:[#allocation3 + $0x190] sm:$0xff] %vm2158, %v2067
      %2210 = vst.msk [vmem:[#allocation3 + $0x198] sm:$0xff] %vm2158, %v2069
      %2211 = vst.msk [vmem:[#allocation3 + $0x1a0] sm:$0xff] %vm2158, %v2071
      %2212 = vst.msk [vmem:[#allocation3 + $0x1a8] sm:$0xff] %vm2158, %v2073
      %2213 = vst.msk [vmem:[#allocation3 + $0x1b0] sm:$0xff] %vm2158, %v2075
      %2214 = vst.msk [vmem:[#allocation3 + $0x1b8] sm:$0xff] %vm2158, %v2077
      %2215 = vst.msk [vmem:[#allocation3 + $0x1c0] sm:$0xff] %vm2158, %v2079
      %2216 = vst.msk [vmem:[#allocation3 + $0x1c8] sm:$0xff] %vm2158, %v2081
      %2217 = vst.msk [vmem:[#allocation3 + $0x1d0] sm:$0xff] %vm2158, %v2083
      %2218 = vst.msk [vmem:[#allocation3 + $0x1d8] sm:$0xff] %vm2158, %v2085
      %2219 = vst.msk [vmem:[#allocation3 + $0x1e0] sm:$0xff] %vm2158, %v2087
      %2220 = vst.msk [vmem:[#allocation3 + $0x1e8] sm:$0xff] %vm2158, %v2089
      %2221 = vst.msk [vmem:[#allocation3 + $0x1f0] sm:$0xff] %vm2158, %v2091
      %2222 = vst.msk [vmem:[#allocation3 + $0x1f8] sm:$0xff] %vm2158, %v2093
      %v2223 = vld [vmem:[%s489 + $0x2] sm:$0xff]
      %v2224 = vld [vmem:[%s489 + $0xa] sm:$0xff]
      %v2225 = vld [vmem:[%s489 + $0x1a] sm:$0xff]
      %v2226 = vld [vmem:[%s489 + $0x22] sm:$0xff]
      %v2227 = vld [vmem:[%s489 + $0x32] sm:$0xff]
      %v2228 = vld [vmem:[%s489 + $0x3a] sm:$0xff]
      %v2229 = vld [vmem:[%s489 + $0x4a] sm:$0xff]
      %v2230 = vld [vmem:[%s489 + $0x52] sm:$0xff]
      %v2231 = vld [vmem:[%s489 + $0x62] sm:$0xff]
      %v2232 = vld [vmem:[%s489 + $0x6a] sm:$0xff]
      %v2233 = vld [vmem:[%s489 + $0x7a] sm:$0xff]
      %v2234 = vld [vmem:[%s489 + $0x82] sm:$0xff]
      %v2235 = vld [vmem:[%s489 + $0x92] sm:$0xff]
      %v2236 = vld [vmem:[%s489 + $0x9a] sm:$0xff]
      %v2237 = vld [vmem:[%s489 + $0xaa] sm:$0xff]
      %v2238 = vld [vmem:[%s489 + $0xb2] sm:$0xff]
      %v2239 = vld [vmem:[%s489 + $0xc2] sm:$0xff]
      %v2240 = vld [vmem:[%s489 + $0xca] sm:$0xff]
      %v2241 = vld [vmem:[%s489 + $0xda] sm:$0xff]
      %v2242 = vld [vmem:[%s489 + $0xe2] sm:$0xff]
      %v2243 = vld [vmem:[%s489 + $0xf2] sm:$0xff]
      %v2244 = vld [vmem:[%s489 + $0xfa] sm:$0xff]
      %v2245 = vld [vmem:[%s489 + $0x10a] sm:$0xff]
      %v2246 = vld [vmem:[%s489 + $0x112] sm:$0xff]
      %v2247 = vld [vmem:[%s489 + $0x122] sm:$0xff]
      %v2248 = vld [vmem:[%s489 + $0x12a] sm:$0xff]
      %v2249 = vld [vmem:[%s489 + $0x13a] sm:$0xff]
      %v2250 = vld [vmem:[%s489 + $0x142] sm:$0xff]
      %v2251 = vld [vmem:[%s489 + $0x152] sm:$0xff]
      %v2252 = vld [vmem:[%s489 + $0x15a] sm:$0xff]
      %v2253 = vld [vmem:[%s489 + $0x16a] sm:$0xff]
      %v2254 = vld [vmem:[%s489 + $0x172] sm:$0xff]
      %v2255 = vld [vmem:[%s489 + $0x1b2] sm:$0xff]
      %v2256 = vld [vmem:[%s489 + $0x1ba] sm:$0xff]
      %v2257 = vld [vmem:[%s489 + $0x1ca] sm:$0xff]
      %v2258 = vld [vmem:[%s489 + $0x1d2] sm:$0xff]
      %v2259 = vld [vmem:[%s489 + $0x1e2] sm:$0xff]
      %v2260 = vld [vmem:[%s489 + $0x1ea] sm:$0xff]
      %v2261 = vld [vmem:[%s489 + $0x1fa] sm:$0xff]
      %v2262 = vld [vmem:[%s489 + $0x202] sm:$0xff]
      %v2263 = vld [vmem:[%s489 + $0x212] sm:$0xff]
      %v2264 = vld [vmem:[%s489 + $0x21a] sm:$0xff]
      %v2265 = vld [vmem:[%s489 + $0x22a] sm:$0xff]
      %v2266 = vld [vmem:[%s489 + $0x232] sm:$0xff]
      %v2267 = vld [vmem:[%s489 + $0x242] sm:$0xff]
      %v2268 = vld [vmem:[%s489 + $0x24a] sm:$0xff]
      %v2269 = vld [vmem:[%s489 + $0x25a] sm:$0xff]
      %v2270 = vld [vmem:[%s489 + $0x262] sm:$0xff]
      %v2271 = vld [vmem:[%s489 + $0x272] sm:$0xff]
      %v2272 = vld [vmem:[%s489 + $0x27a] sm:$0xff]
      %v2273 = vld [vmem:[%s489 + $0x28a] sm:$0xff]
      %v2274 = vld [vmem:[%s489 + $0x292] sm:$0xff]
      %v2275 = vld [vmem:[%s489 + $0x2a2] sm:$0xff]
      %v2276 = vld [vmem:[%s489 + $0x2aa] sm:$0xff]
      %v2277 = vld [vmem:[%s489 + $0x2ba] sm:$0xff]
      %v2278 = vld [vmem:[%s489 + $0x2c2] sm:$0xff]
      %v2279 = vld [vmem:[%s489 + $0x2d2] sm:$0xff]
      %v2280 = vld [vmem:[%s489 + $0x2da] sm:$0xff]
      %v2281 = vld [vmem:[%s489 + $0x2ea] sm:$0xff]
      %v2282 = vld [vmem:[%s489 + $0x2f2] sm:$0xff]
      %v2283 = vld [vmem:[%s489 + $0x302] sm:$0xff]
      %v2284 = vld [vmem:[%s489 + $0x30a] sm:$0xff]
      %v2285 = vld [vmem:[%s489 + $0x31a] sm:$0xff]
      %v2286 = vld [vmem:[%s489 + $0x322] sm:$0xff]
      %2351 = vrot.lane.b32.xlu0 %v2223, 40
      %v2352 = vpop.permute.xlu0 %2351
      %2353 = vrot.lane.b32.xlu0 %v2224, 40
      %v2354 = vpop.permute.xlu0 %2353
      %2355 = vrot.lane.b32.xlu0 %v2225, 40
      %v2356 = vpop.permute.xlu0 %2355
      %2357 = vrot.lane.b32.xlu0 %v2226, 40
      %v2358 = vpop.permute.xlu0 %2357
      %2359 = vrot.lane.b32.xlu0 %v2227, 40
      %v2360 = vpop.permute.xlu0 %2359
      %2361 = vrot.lane.b32.xlu0 %v2228, 40
      %v2362 = vpop.permute.xlu0 %2361
      %2363 = vrot.lane.b32.xlu0 %v2229, 40
      %v2364 = vpop.permute.xlu0 %2363
      %2365 = vrot.lane.b32.xlu0 %v2230, 40
      %v2366 = vpop.permute.xlu0 %2365
      %2367 = vrot.lane.b32.xlu0 %v2231, 40
      %v2368 = vpop.permute.xlu0 %2367
      %2369 = vrot.lane.b32.xlu0 %v2232, 40
      %v2370 = vpop.permute.xlu0 %2369
      %2371 = vrot.lane.b32.xlu0 %v2233, 40
      %v2372 = vpop.permute.xlu0 %2371
      %2373 = vrot.lane.b32.xlu0 %v2234, 40
      %v2374 = vpop.permute.xlu0 %2373
      %2375 = vrot.lane.b32.xlu0 %v2235, 40
      %v2376 = vpop.permute.xlu0 %2375
      %2377 = vrot.lane.b32.xlu0 %v2236, 40
      %v2378 = vpop.permute.xlu0 %2377
      %2379 = vrot.lane.b32.xlu0 %v2237, 40
      %v2380 = vpop.permute.xlu0 %2379
      %2381 = vrot.lane.b32.xlu0 %v2238, 40
      %v2382 = vpop.permute.xlu0 %2381
      %2383 = vrot.lane.b32.xlu0 %v2239, 40
      %v2384 = vpop.permute.xlu0 %2383
      %2385 = vrot.lane.b32.xlu0 %v2240, 40
      %v2386 = vpop.permute.xlu0 %2385
      %2387 = vrot.lane.b32.xlu0 %v2241, 40
      %v2388 = vpop.permute.xlu0 %2387
      %2389 = vrot.lane.b32.xlu0 %v2242, 40
      %v2390 = vpop.permute.xlu0 %2389
      %2391 = vrot.lane.b32.xlu0 %v2243, 40
      %v2392 = vpop.permute.xlu0 %2391
      %2393 = vrot.lane.b32.xlu0 %v2244, 40
      %v2394 = vpop.permute.xlu0 %2393
      %2395 = vrot.lane.b32.xlu0 %v2245, 40
      %v2396 = vpop.permute.xlu0 %2395
      %2397 = vrot.lane.b32.xlu0 %v2246, 40
      %v2398 = vpop.permute.xlu0 %2397
      %2399 = vrot.lane.b32.xlu0 %v2247, 40
      %v2400 = vpop.permute.xlu0 %2399
      %2401 = vrot.lane.b32.xlu0 %v2248, 40
      %v2402 = vpop.permute.xlu0 %2401
      %2403 = vrot.lane.b32.xlu0 %v2249, 40
      %v2404 = vpop.permute.xlu0 %2403
      %2405 = vrot.lane.b32.xlu0 %v2250, 40
      %v2406 = vpop.permute.xlu0 %2405
      %2407 = vrot.lane.b32.xlu0 %v2251, 40
      %v2408 = vpop.permute.xlu0 %2407
      %2409 = vrot.lane.b32.xlu0 %v2252, 40
      %v2410 = vpop.permute.xlu0 %2409
      %2411 = vrot.lane.b32.xlu0 %v2253, 40
      %v2412 = vpop.permute.xlu0 %2411
      %2413 = vrot.lane.b32.xlu0 %v2254, 40
      %v2414 = vpop.permute.xlu0 %2413
      %2415 = vrot.lane.b32.xlu0 %v2255, 40
      %v2416 = vpop.permute.xlu0 %2415
      %2417 = vrot.lane.b32.xlu0 %v2256, 40
      %v2418 = vpop.permute.xlu0 %2417
      %2419 = vrot.lane.b32.xlu0 %v2257, 40
      %v2420 = vpop.permute.xlu0 %2419
      %2421 = vrot.lane.b32.xlu0 %v2258, 40
      %v2422 = vpop.permute.xlu0 %2421
      %2423 = vrot.lane.b32.xlu0 %v2259, 40
      %v2424 = vpop.permute.xlu0 %2423
      %2425 = vrot.lane.b32.xlu0 %v2260, 40
      %v2426 = vpop.permute.xlu0 %2425
      %2427 = vrot.lane.b32.xlu0 %v2261, 40
      %v2428 = vpop.permute.xlu0 %2427
      %2429 = vrot.lane.b32.xlu0 %v2262, 40
      %v2430 = vpop.permute.xlu0 %2429
      %2431 = vrot.lane.b32.xlu0 %v2263, 40
      %v2432 = vpop.permute.xlu0 %2431
      %2433 = vrot.lane.b32.xlu0 %v2264, 40
      %v2434 = vpop.permute.xlu0 %2433
      %2435 = vrot.lane.b32.xlu0 %v2265, 40
      %v2436 = vpop.permute.xlu0 %2435
      %2437 = vrot.lane.b32.xlu0 %v2266, 40
      %v2438 = vpop.permute.xlu0 %2437
      %2439 = vrot.lane.b32.xlu0 %v2267, 40
      %v2440 = vpop.permute.xlu0 %2439
      %2441 = vrot.lane.b32.xlu0 %v2268, 40
      %v2442 = vpop.permute.xlu0 %2441
      %2443 = vrot.lane.b32.xlu0 %v2269, 40
      %v2444 = vpop.permute.xlu0 %2443
      %2445 = vrot.lane.b32.xlu0 %v2270, 40
      %v2446 = vpop.permute.xlu0 %2445
      %2447 = vrot.lane.b32.xlu0 %v2271, 40
      %v2448 = vpop.permute.xlu0 %2447
      %2449 = vrot.lane.b32.xlu0 %v2272, 40
      %v2450 = vpop.permute.xlu0 %2449
      %2451 = vrot.lane.b32.xlu0 %v2273, 40
      %v2452 = vpop.permute.xlu0 %2451
      %2453 = vrot.lane.b32.xlu0 %v2274, 40
      %v2454 = vpop.permute.xlu0 %2453
      %2455 = vrot.lane.b32.xlu0 %v2275, 40
      %v2456 = vpop.permute.xlu0 %2455
      %2457 = vrot.lane.b32.xlu0 %v2276, 40
      %v2458 = vpop.permute.xlu0 %2457
      %2459 = vrot.lane.b32.xlu0 %v2277, 40
      %v2460 = vpop.permute.xlu0 %2459
      %2461 = vrot.lane.b32.xlu0 %v2278, 40
      %v2462 = vpop.permute.xlu0 %2461
      %2463 = vrot.lane.b32.xlu0 %v2279, 40
      %v2464 = vpop.permute.xlu0 %2463
      %2465 = vrot.lane.b32.xlu0 %v2280, 40
      %v2466 = vpop.permute.xlu0 %2465
      %2467 = vrot.lane.b32.xlu0 %v2281, 40
      %v2468 = vpop.permute.xlu0 %2467
      %2469 = vrot.lane.b32.xlu0 %v2282, 40
      %v2470 = vpop.permute.xlu0 %2469
      %2471 = vrot.lane.b32.xlu0 %v2283, 40
      %v2472 = vpop.permute.xlu0 %2471
      %2473 = vrot.lane.b32.xlu0 %v2284, 40
      %v2474 = vpop.permute.xlu0 %2473
      %2475 = vrot.lane.b32.xlu0 %v2285, 40
      %v2476 = vpop.permute.xlu0 %2475
      %2477 = vrot.lane.b32.xlu0 %v2286, 40
      %v2478 = vpop.permute.xlu0 %2477
      %vm2543 = vcmask 392512
      %2544 = vst.msk [vmem:[#allocation3] sm:$0xff] %vm2543, %v2352
      %2545 = vst.msk [vmem:[#allocation3 + $0x8] sm:$0xff] %vm2543, %v2354
      %2546 = vst.msk [vmem:[#allocation3 + $0x10] sm:$0xff] %vm2543, %v2356
      %2547 = vst.msk [vmem:[#allocation3 + $0x18] sm:$0xff] %vm2543, %v2358
      %2548 = vst.msk [vmem:[#allocation3 + $0x20] sm:$0xff] %vm2543, %v2360
      %2549 = vst.msk [vmem:[#allocation3 + $0x28] sm:$0xff] %vm2543, %v2362
      %2550 = vst.msk [vmem:[#allocation3 + $0x30] sm:$0xff] %vm2543, %v2364
      %2551 = vst.msk [vmem:[#allocation3 + $0x38] sm:$0xff] %vm2543, %v2366
      %2552 = vst.msk [vmem:[#allocation3 + $0x40] sm:$0xff] %vm2543, %v2368
      %2553 = vst.msk [vmem:[#allocation3 + $0x48] sm:$0xff] %vm2543, %v2370
      %2554 = vst.msk [vmem:[#allocation3 + $0x50] sm:$0xff] %vm2543, %v2372
      %2555 = vst.msk [vmem:[#allocation3 + $0x58] sm:$0xff] %vm2543, %v2374
      %2556 = vst.msk [vmem:[#allocation3 + $0x60] sm:$0xff] %vm2543, %v2376
      %2557 = vst.msk [vmem:[#allocation3 + $0x68] sm:$0xff] %vm2543, %v2378
      %2558 = vst.msk [vmem:[#allocation3 + $0x70] sm:$0xff] %vm2543, %v2380
      %2559 = vst.msk [vmem:[#allocation3 + $0x78] sm:$0xff] %vm2543, %v2382
      %2560 = vst.msk [vmem:[#allocation3 + $0x80] sm:$0xff] %vm2543, %v2384
      %2561 = vst.msk [vmem:[#allocation3 + $0x88] sm:$0xff] %vm2543, %v2386
      %2562 = vst.msk [vmem:[#allocation3 + $0x90] sm:$0xff] %vm2543, %v2388
      %2563 = vst.msk [vmem:[#allocation3 + $0x98] sm:$0xff] %vm2543, %v2390
      %2564 = vst.msk [vmem:[#allocation3 + $0xa0] sm:$0xff] %vm2543, %v2392
      %2565 = vst.msk [vmem:[#allocation3 + $0xa8] sm:$0xff] %vm2543, %v2394
      %2566 = vst.msk [vmem:[#allocation3 + $0xb0] sm:$0xff] %vm2543, %v2396
      %2567 = vst.msk [vmem:[#allocation3 + $0xb8] sm:$0xff] %vm2543, %v2398
      %2568 = vst.msk [vmem:[#allocation3 + $0xc0] sm:$0xff] %vm2543, %v2400
      %2569 = vst.msk [vmem:[#allocation3 + $0xc8] sm:$0xff] %vm2543, %v2402
      %2570 = vst.msk [vmem:[#allocation3 + $0xd0] sm:$0xff] %vm2543, %v2404
      %2571 = vst.msk [vmem:[#allocation3 + $0xd8] sm:$0xff] %vm2543, %v2406
      %2572 = vst.msk [vmem:[#allocation3 + $0xe0] sm:$0xff] %vm2543, %v2408
      %2573 = vst.msk [vmem:[#allocation3 + $0xe8] sm:$0xff] %vm2543, %v2410
      %2574 = vst.msk [vmem:[#allocation3 + $0xf0] sm:$0xff] %vm2543, %v2412
      %2575 = vst.msk [vmem:[#allocation3 + $0xf8] sm:$0xff] %vm2543, %v2414
      %2576 = vst.msk [vmem:[#allocation3 + $0x100] sm:$0xff] %vm2543, %v2416
      %2577 = vst.msk [vmem:[#allocation3 + $0x108] sm:$0xff] %vm2543, %v2418
      %2578 = vst.msk [vmem:[#allocation3 + $0x110] sm:$0xff] %vm2543, %v2420
      %2579 = vst.msk [vmem:[#allocation3 + $0x118] sm:$0xff] %vm2543, %v2422
      %2580 = vst.msk [vmem:[#allocation3 + $0x120] sm:$0xff] %vm2543, %v2424
      %2581 = vst.msk [vmem:[#allocation3 + $0x128] sm:$0xff] %vm2543, %v2426
      %2582 = vst.msk [vmem:[#allocation3 + $0x130] sm:$0xff] %vm2543, %v2428
      %2583 = vst.msk [vmem:[#allocation3 + $0x138] sm:$0xff] %vm2543, %v2430
      %2584 = vst.msk [vmem:[#allocation3 + $0x140] sm:$0xff] %vm2543, %v2432
      %2585 = vst.msk [vmem:[#allocation3 + $0x148] sm:$0xff] %vm2543, %v2434
      %2586 = vst.msk [vmem:[#allocation3 + $0x150] sm:$0xff] %vm2543, %v2436
      %2587 = vst.msk [vmem:[#allocation3 + $0x158] sm:$0xff] %vm2543, %v2438
      %2588 = vst.msk [vmem:[#allocation3 + $0x160] sm:$0xff] %vm2543, %v2440
      %2589 = vst.msk [vmem:[#allocation3 + $0x168] sm:$0xff] %vm2543, %v2442
      %2590 = vst.msk [vmem:[#allocation3 + $0x170] sm:$0xff] %vm2543, %v2444
      %2591 = vst.msk [vmem:[#allocation3 + $0x178] sm:$0xff] %vm2543, %v2446
      %2592 = vst.msk [vmem:[#allocation3 + $0x180] sm:$0xff] %vm2543, %v2448
      %2593 = vst.msk [vmem:[#allocation3 + $0x188] sm:$0xff] %vm2543, %v2450
      %2594 = vst.msk [vmem:[#allocation3 + $0x190] sm:$0xff] %vm2543, %v2452
      %2595 = vst.msk [vmem:[#allocation3 + $0x198] sm:$0xff] %vm2543, %v2454
      %2596 = vst.msk [vmem:[#allocation3 + $0x1a0] sm:$0xff] %vm2543, %v2456
      %2597 = vst.msk [vmem:[#allocation3 + $0x1a8] sm:$0xff] %vm2543, %v2458
      %2598 = vst.msk [vmem:[#allocation3 + $0x1b0] sm:$0xff] %vm2543, %v2460
      %2599 = vst.msk [vmem:[#allocation3 + $0x1b8] sm:$0xff] %vm2543, %v2462
      %2600 = vst.msk [vmem:[#allocation3 + $0x1c0] sm:$0xff] %vm2543, %v2464
      %2601 = vst.msk [vmem:[#allocation3 + $0x1c8] sm:$0xff] %vm2543, %v2466
      %2602 = vst.msk [vmem:[#allocation3 + $0x1d0] sm:$0xff] %vm2543, %v2468
      %2603 = vst.msk [vmem:[#allocation3 + $0x1d8] sm:$0xff] %vm2543, %v2470
      %2604 = vst.msk [vmem:[#allocation3 + $0x1e0] sm:$0xff] %vm2543, %v2472
      %2605 = vst.msk [vmem:[#allocation3 + $0x1e8] sm:$0xff] %vm2543, %v2474
      %2606 = vst.msk [vmem:[#allocation3 + $0x1f0] sm:$0xff] %vm2543, %v2476
      %2607 = vst.msk [vmem:[#allocation3 + $0x1f8] sm:$0xff] %vm2543, %v2478
      %s2608 = scalar_lea.vmem [#allocation2], 48
      %v2609 = vld [vmem:[%s2608] sm:$0xff]
      %v2610 = vld [vmem:[%s2608 + $0x8] sm:$0xff]
      %v2611 = vld [vmem:[%s2608 + $0x18] sm:$0xff]
      %v2612 = vld [vmem:[%s2608 + $0x20] sm:$0xff]
      %v2613 = vld [vmem:[%s2608 + $0x30] sm:$0xff]
      %v2614 = vld [vmem:[%s2608 + $0x38] sm:$0xff]
      %v2615 = vld [vmem:[%s2608 + $0x48] sm:$0xff]
      %v2616 = vld [vmem:[%s2608 + $0x50] sm:$0xff]
      %v2617 = vld [vmem:[%s2608 + $0x60] sm:$0xff]
      %v2618 = vld [vmem:[%s2608 + $0x68] sm:$0xff]
      %v2619 = vld [vmem:[%s2608 + $0x78] sm:$0xff]
      %v2620 = vld [vmem:[%s2608 + $0x80] sm:$0xff]
      %v2621 = vld [vmem:[%s2608 + $0x90] sm:$0xff]
      %v2622 = vld [vmem:[%s2608 + $0x98] sm:$0xff]
      %v2623 = vld [vmem:[%s2608 + $0xa8] sm:$0xff]
      %v2624 = vld [vmem:[%s2608 + $0xb0] sm:$0xff]
      %v2625 = vld [vmem:[%s2608 + $0xc0] sm:$0xff]
      %v2626 = vld [vmem:[%s2608 + $0xc8] sm:$0xff]
      %v2627 = vld [vmem:[%s2608 + $0xd8] sm:$0xff]
      %v2628 = vld [vmem:[%s2608 + $0xe0] sm:$0xff]
      %v2629 = vld [vmem:[%s2608 + $0xf0] sm:$0xff]
      %v2630 = vld [vmem:[%s2608 + $0xf8] sm:$0xff]
      %v2631 = vld [vmem:[%s2608 + $0x108] sm:$0xff]
      %v2632 = vld [vmem:[%s2608 + $0x110] sm:$0xff]
      %v2633 = vld [vmem:[%s2608 + $0x120] sm:$0xff]
      %v2634 = vld [vmem:[%s2608 + $0x128] sm:$0xff]
      %v2635 = vld [vmem:[%s2608 + $0x138] sm:$0xff]
      %v2636 = vld [vmem:[%s2608 + $0x140] sm:$0xff]
      %v2637 = vld [vmem:[%s2608 + $0x150] sm:$0xff]
      %v2638 = vld [vmem:[%s2608 + $0x158] sm:$0xff]
      %v2639 = vld [vmem:[%s2608 + $0x168] sm:$0xff]
      %v2640 = vld [vmem:[%s2608 + $0x170] sm:$0xff]
      %v2641 = vld [vmem:[%s2608 + $0x1b0] sm:$0xff]
      %v2642 = vld [vmem:[%s2608 + $0x1b8] sm:$0xff]
      %v2643 = vld [vmem:[%s2608 + $0x1c8] sm:$0xff]
      %v2644 = vld [vmem:[%s2608 + $0x1d0] sm:$0xff]
      %v2645 = vld [vmem:[%s2608 + $0x1e0] sm:$0xff]
      %v2646 = vld [vmem:[%s2608 + $0x1e8] sm:$0xff]
      %v2647 = vld [vmem:[%s2608 + $0x1f8] sm:$0xff]
      %v2648 = vld [vmem:[%s2608 + $0x200] sm:$0xff]
      %v2649 = vld [vmem:[%s2608 + $0x210] sm:$0xff]
      %v2650 = vld [vmem:[%s2608 + $0x218] sm:$0xff]
      %v2651 = vld [vmem:[%s2608 + $0x228] sm:$0xff]
      %v2652 = vld [vmem:[%s2608 + $0x230] sm:$0xff]
      %v2653 = vld [vmem:[%s2608 + $0x240] sm:$0xff]
      %v2654 = vld [vmem:[%s2608 + $0x248] sm:$0xff]
      %v2655 = vld [vmem:[%s2608 + $0x258] sm:$0xff]
      %v2656 = vld [vmem:[%s2608 + $0x260] sm:$0xff]
      %v2657 = vld [vmem:[%s2608 + $0x270] sm:$0xff]
      %v2658 = vld [vmem:[%s2608 + $0x278] sm:$0xff]
      %v2659 = vld [vmem:[%s2608 + $0x288] sm:$0xff]
      %v2660 = vld [vmem:[%s2608 + $0x290] sm:$0xff]
      %v2661 = vld [vmem:[%s2608 + $0x2a0] sm:$0xff]
      %v2662 = vld [vmem:[%s2608 + $0x2a8] sm:$0xff]
      %v2663 = vld [vmem:[%s2608 + $0x2b8] sm:$0xff]
      %v2664 = vld [vmem:[%s2608 + $0x2c0] sm:$0xff]
      %v2665 = vld [vmem:[%s2608 + $0x2d0] sm:$0xff]
      %v2666 = vld [vmem:[%s2608 + $0x2d8] sm:$0xff]
      %v2667 = vld [vmem:[%s2608 + $0x2e8] sm:$0xff]
      %v2668 = vld [vmem:[%s2608 + $0x2f0] sm:$0xff]
      %v2669 = vld [vmem:[%s2608 + $0x300] sm:$0xff]
      %v2670 = vld [vmem:[%s2608 + $0x308] sm:$0xff]
      %v2671 = vld [vmem:[%s2608 + $0x318] sm:$0xff]
      %v2672 = vld [vmem:[%s2608 + $0x320] sm:$0xff]
      %2737 = vrot.lane.b32.xlu0 %v2609, 48
      %v2738 = vpop.permute.xlu0 %2737
      %2739 = vrot.lane.b32.xlu0 %v2610, 48
      %v2740 = vpop.permute.xlu0 %2739
      %2741 = vrot.lane.b32.xlu0 %v2611, 48
      %v2742 = vpop.permute.xlu0 %2741
      %2743 = vrot.lane.b32.xlu0 %v2612, 48
      %v2744 = vpop.permute.xlu0 %2743
      %2745 = vrot.lane.b32.xlu0 %v2613, 48
      %v2746 = vpop.permute.xlu0 %2745
      %2747 = vrot.lane.b32.xlu0 %v2614, 48
      %v2748 = vpop.permute.xlu0 %2747
      %2749 = vrot.lane.b32.xlu0 %v2615, 48
      %v2750 = vpop.permute.xlu0 %2749
      %2751 = vrot.lane.b32.xlu0 %v2616, 48
      %v2752 = vpop.permute.xlu0 %2751
      %2753 = vrot.lane.b32.xlu0 %v2617, 48
      %v2754 = vpop.permute.xlu0 %2753
      %2755 = vrot.lane.b32.xlu0 %v2618, 48
      %v2756 = vpop.permute.xlu0 %2755
      %2757 = vrot.lane.b32.xlu0 %v2619, 48
      %v2758 = vpop.permute.xlu0 %2757
      %2759 = vrot.lane.b32.xlu0 %v2620, 48
      %v2760 = vpop.permute.xlu0 %2759
      %2761 = vrot.lane.b32.xlu0 %v2621, 48
      %v2762 = vpop.permute.xlu0 %2761
      %2763 = vrot.lane.b32.xlu0 %v2622, 48
      %v2764 = vpop.permute.xlu0 %2763
      %2765 = vrot.lane.b32.xlu0 %v2623, 48
      %v2766 = vpop.permute.xlu0 %2765
      %2767 = vrot.lane.b32.xlu0 %v2624, 48
      %v2768 = vpop.permute.xlu0 %2767
      %2769 = vrot.lane.b32.xlu0 %v2625, 48
      %v2770 = vpop.permute.xlu0 %2769
      %2771 = vrot.lane.b32.xlu0 %v2626, 48
      %v2772 = vpop.permute.xlu0 %2771
      %2773 = vrot.lane.b32.xlu0 %v2627, 48
      %v2774 = vpop.permute.xlu0 %2773
      %2775 = vrot.lane.b32.xlu0 %v2628, 48
      %v2776 = vpop.permute.xlu0 %2775
      %2777 = vrot.lane.b32.xlu0 %v2629, 48
      %v2778 = vpop.permute.xlu0 %2777
      %2779 = vrot.lane.b32.xlu0 %v2630, 48
      %v2780 = vpop.permute.xlu0 %2779
      %2781 = vrot.lane.b32.xlu0 %v2631, 48
      %v2782 = vpop.permute.xlu0 %2781
      %2783 = vrot.lane.b32.xlu0 %v2632, 48
      %v2784 = vpop.permute.xlu0 %2783
      %2785 = vrot.lane.b32.xlu0 %v2633, 48
      %v2786 = vpop.permute.xlu0 %2785
      %2787 = vrot.lane.b32.xlu0 %v2634, 48
      %v2788 = vpop.permute.xlu0 %2787
      %2789 = vrot.lane.b32.xlu0 %v2635, 48
      %v2790 = vpop.permute.xlu0 %2789
      %2791 = vrot.lane.b32.xlu0 %v2636, 48
      %v2792 = vpop.permute.xlu0 %2791
      %2793 = vrot.lane.b32.xlu0 %v2637, 48
      %v2794 = vpop.permute.xlu0 %2793
      %2795 = vrot.lane.b32.xlu0 %v2638, 48
      %v2796 = vpop.permute.xlu0 %2795
      %2797 = vrot.lane.b32.xlu0 %v2639, 48
      %v2798 = vpop.permute.xlu0 %2797
      %2799 = vrot.lane.b32.xlu0 %v2640, 48
      %v2800 = vpop.permute.xlu0 %2799
      %2801 = vrot.lane.b32.xlu0 %v2641, 48
      %v2802 = vpop.permute.xlu0 %2801
      %2803 = vrot.lane.b32.xlu0 %v2642, 48
      %v2804 = vpop.permute.xlu0 %2803
      %2805 = vrot.lane.b32.xlu0 %v2643, 48
      %v2806 = vpop.permute.xlu0 %2805
      %2807 = vrot.lane.b32.xlu0 %v2644, 48
      %v2808 = vpop.permute.xlu0 %2807
      %2809 = vrot.lane.b32.xlu0 %v2645, 48
      %v2810 = vpop.permute.xlu0 %2809
      %2811 = vrot.lane.b32.xlu0 %v2646, 48
      %v2812 = vpop.permute.xlu0 %2811
      %2813 = vrot.lane.b32.xlu0 %v2647, 48
      %v2814 = vpop.permute.xlu0 %2813
      %2815 = vrot.lane.b32.xlu0 %v2648, 48
      %v2816 = vpop.permute.xlu0 %2815
      %2817 = vrot.lane.b32.xlu0 %v2649, 48
      %v2818 = vpop.permute.xlu0 %2817
      %2819 = vrot.lane.b32.xlu0 %v2650, 48
      %v2820 = vpop.permute.xlu0 %2819
      %2821 = vrot.lane.b32.xlu0 %v2651, 48
      %v2822 = vpop.permute.xlu0 %2821
      %2823 = vrot.lane.b32.xlu0 %v2652, 48
      %v2824 = vpop.permute.xlu0 %2823
      %2825 = vrot.lane.b32.xlu0 %v2653, 48
      %v2826 = vpop.permute.xlu0 %2825
      %2827 = vrot.lane.b32.xlu0 %v2654, 48
      %v2828 = vpop.permute.xlu0 %2827
      %2829 = vrot.lane.b32.xlu0 %v2655, 48
      %v2830 = vpop.permute.xlu0 %2829
      %2831 = vrot.lane.b32.xlu0 %v2656, 48
      %v2832 = vpop.permute.xlu0 %2831
      %2833 = vrot.lane.b32.xlu0 %v2657, 48
      %v2834 = vpop.permute.xlu0 %2833
      %2835 = vrot.lane.b32.xlu0 %v2658, 48
      %v2836 = vpop.permute.xlu0 %2835
      %2837 = vrot.lane.b32.xlu0 %v2659, 48
      %v2838 = vpop.permute.xlu0 %2837
      %2839 = vrot.lane.b32.xlu0 %v2660, 48
      %v2840 = vpop.permute.xlu0 %2839
      %2841 = vrot.lane.b32.xlu0 %v2661, 48
      %v2842 = vpop.permute.xlu0 %2841
      %2843 = vrot.lane.b32.xlu0 %v2662, 48
      %v2844 = vpop.permute.xlu0 %2843
      %2845 = vrot.lane.b32.xlu0 %v2663, 48
      %v2846 = vpop.permute.xlu0 %2845
      %2847 = vrot.lane.b32.xlu0 %v2664, 48
      %v2848 = vpop.permute.xlu0 %2847
      %2849 = vrot.lane.b32.xlu0 %v2665, 48
      %v2850 = vpop.permute.xlu0 %2849
      %2851 = vrot.lane.b32.xlu0 %v2666, 48
      %v2852 = vpop.permute.xlu0 %2851
      %2853 = vrot.lane.b32.xlu0 %v2667, 48
      %v2854 = vpop.permute.xlu0 %2853
      %2855 = vrot.lane.b32.xlu0 %v2668, 48
      %v2856 = vpop.permute.xlu0 %2855
      %2857 = vrot.lane.b32.xlu0 %v2669, 48
      %v2858 = vpop.permute.xlu0 %2857
      %2859 = vrot.lane.b32.xlu0 %v2670, 48
      %v2860 = vpop.permute.xlu0 %2859
      %2861 = vrot.lane.b32.xlu0 %v2671, 48
      %v2862 = vpop.permute.xlu0 %2861
      %2863 = vrot.lane.b32.xlu0 %v2672, 48
      %v2864 = vpop.permute.xlu0 %2863
      %vm2929 = vcmask 458112
      %2930 = vst.msk [vmem:[#allocation3] sm:$0xff] %vm2929, %v2738
      %2931 = vst.msk [vmem:[#allocation3 + $0x8] sm:$0xff] %vm2929, %v2740
      %2932 = vst.msk [vmem:[#allocation3 + $0x10] sm:$0xff] %vm2929, %v2742
      %2933 = vst.msk [vmem:[#allocation3 + $0x18] sm:$0xff] %vm2929, %v2744
      %2934 = vst.msk [vmem:[#allocation3 + $0x20] sm:$0xff] %vm2929, %v2746
      %2935 = vst.msk [vmem:[#allocation3 + $0x28] sm:$0xff] %vm2929, %v2748
      %2936 = vst.msk [vmem:[#allocation3 + $0x30] sm:$0xff] %vm2929, %v2750
      %2937 = vst.msk [vmem:[#allocation3 + $0x38] sm:$0xff] %vm2929, %v2752
      %2938 = vst.msk [vmem:[#allocation3 + $0x40] sm:$0xff] %vm2929, %v2754
      %2939 = vst.msk [vmem:[#allocation3 + $0x48] sm:$0xff] %vm2929, %v2756
      %2940 = vst.msk [vmem:[#allocation3 + $0x50] sm:$0xff] %vm2929, %v2758
      %2941 = vst.msk [vmem:[#allocation3 + $0x58] sm:$0xff] %vm2929, %v2760
      %2942 = vst.msk [vmem:[#allocation3 + $0x60] sm:$0xff] %vm2929, %v2762
      %2943 = vst.msk [vmem:[#allocation3 + $0x68] sm:$0xff] %vm2929, %v2764
      %2944 = vst.msk [vmem:[#allocation3 + $0x70] sm:$0xff] %vm2929, %v2766
      %2945 = vst.msk [vmem:[#allocation3 + $0x78] sm:$0xff] %vm2929, %v2768
      %2946 = vst.msk [vmem:[#allocation3 + $0x80] sm:$0xff] %vm2929, %v2770
      %2947 = vst.msk [vmem:[#allocation3 + $0x88] sm:$0xff] %vm2929, %v2772
      %2948 = vst.msk [vmem:[#allocation3 + $0x90] sm:$0xff] %vm2929, %v2774
      %2949 = vst.msk [vmem:[#allocation3 + $0x98] sm:$0xff] %vm2929, %v2776
      %2950 = vst.msk [vmem:[#allocation3 + $0xa0] sm:$0xff] %vm2929, %v2778
      %2951 = vst.msk [vmem:[#allocation3 + $0xa8] sm:$0xff] %vm2929, %v2780
      %2952 = vst.msk [vmem:[#allocation3 + $0xb0] sm:$0xff] %vm2929, %v2782
      %2953 = vst.msk [vmem:[#allocation3 + $0xb8] sm:$0xff] %vm2929, %v2784
      %2954 = vst.msk [vmem:[#allocation3 + $0xc0] sm:$0xff] %vm2929, %v2786
      %2955 = vst.msk [vmem:[#allocation3 + $0xc8] sm:$0xff] %vm2929, %v2788
      %2956 = vst.msk [vmem:[#allocation3 + $0xd0] sm:$0xff] %vm2929, %v2790
      %2957 = vst.msk [vmem:[#allocation3 + $0xd8] sm:$0xff] %vm2929, %v2792
      %2958 = vst.msk [vmem:[#allocation3 + $0xe0] sm:$0xff] %vm2929, %v2794
      %2959 = vst.msk [vmem:[#allocation3 + $0xe8] sm:$0xff] %vm2929, %v2796
      %2960 = vst.msk [vmem:[#allocation3 + $0xf0] sm:$0xff] %vm2929, %v2798
      %2961 = vst.msk [vmem:[#allocation3 + $0xf8] sm:$0xff] %vm2929, %v2800
      %2962 = vst.msk [vmem:[#allocation3 + $0x100] sm:$0xff] %vm2929, %v2802
      %2963 = vst.msk [vmem:[#allocation3 + $0x108] sm:$0xff] %vm2929, %v2804
      %2964 = vst.msk [vmem:[#allocation3 + $0x110] sm:$0xff] %vm2929, %v2806
      %2965 = vst.msk [vmem:[#allocation3 + $0x118] sm:$0xff] %vm2929, %v2808
      %2966 = vst.msk [vmem:[#allocation3 + $0x120] sm:$0xff] %vm2929, %v2810
      %2967 = vst.msk [vmem:[#allocation3 + $0x128] sm:$0xff] %vm2929, %v2812
      %2968 = vst.msk [vmem:[#allocation3 + $0x130] sm:$0xff] %vm2929, %v2814
      %2969 = vst.msk [vmem:[#allocation3 + $0x138] sm:$0xff] %vm2929, %v2816
      %2970 = vst.msk [vmem:[#allocation3 + $0x140] sm:$0xff] %vm2929, %v2818
      %2971 = vst.msk [vmem:[#allocation3 + $0x148] sm:$0xff] %vm2929, %v2820
      %2972 = vst.msk [vmem:[#allocation3 + $0x150] sm:$0xff] %vm2929, %v2822
      %2973 = vst.msk [vmem:[#allocation3 + $0x158] sm:$0xff] %vm2929, %v2824
      %2974 = vst.msk [vmem:[#allocation3 + $0x160] sm:$0xff] %vm2929, %v2826
      %2975 = vst.msk [vmem:[#allocation3 + $0x168] sm:$0xff] %vm2929, %v2828
      %2976 = vst.msk [vmem:[#allocation3 + $0x170] sm:$0xff] %vm2929, %v2830
      %2977 = vst.msk [vmem:[#allocation3 + $0x178] sm:$0xff] %vm2929, %v2832
      %2978 = vst.msk [vmem:[#allocation3 + $0x180] sm:$0xff] %vm2929, %v2834
      %2979 = vst.msk [vmem:[#allocation3 + $0x188] sm:$0xff] %vm2929, %v2836
      %2980 = vst.msk [vmem:[#allocation3 + $0x190] sm:$0xff] %vm2929, %v2838
      %2981 = vst.msk [vmem:[#allocation3 + $0x198] sm:$0xff] %vm2929, %v2840
      %2982 = vst.msk [vmem:[#allocation3 + $0x1a0] sm:$0xff] %vm2929, %v2842
      %2983 = vst.msk [vmem:[#allocation3 + $0x1a8] sm:$0xff] %vm2929, %v2844
      %2984 = vst.msk [vmem:[#allocation3 + $0x1b0] sm:$0xff] %vm2929, %v2846
      %2985 = vst.msk [vmem:[#allocation3 + $0x1b8] sm:$0xff] %vm2929, %v2848
      %2986 = vst.msk [vmem:[#allocation3 + $0x1c0] sm:$0xff] %vm2929, %v2850
      %2987 = vst.msk [vmem:[#allocation3 + $0x1c8] sm:$0xff] %vm2929, %v2852
      %2988 = vst.msk [vmem:[#allocation3 + $0x1d0] sm:$0xff] %vm2929, %v2854
      %2989 = vst.msk [vmem:[#allocation3 + $0x1d8] sm:$0xff] %vm2929, %v2856
      %2990 = vst.msk [vmem:[#allocation3 + $0x1e0] sm:$0xff] %vm2929, %v2858
      %2991 = vst.msk [vmem:[#allocation3 + $0x1e8] sm:$0xff] %vm2929, %v2860
      %2992 = vst.msk [vmem:[#allocation3 + $0x1f0] sm:$0xff] %vm2929, %v2862
      %2993 = vst.msk [vmem:[#allocation3 + $0x1f8] sm:$0xff] %vm2929, %v2864
      %v2994 = vld [vmem:[%s2608 + $0x1] sm:$0xff]
      %v2995 = vld [vmem:[%s2608 + $0x9] sm:$0xff]
      %v2996 = vld [vmem:[%s2608 + $0x19] sm:$0xff]
      %v2997 = vld [vmem:[%s2608 + $0x21] sm:$0xff]
      %v2998 = vld [vmem:[%s2608 + $0x31] sm:$0xff]
      %v2999 = vld [vmem:[%s2608 + $0x39] sm:$0xff]
      %v3000 = vld [vmem:[%s2608 + $0x49] sm:$0xff]
      %v3001 = vld [vmem:[%s2608 + $0x51] sm:$0xff]
      %v3002 = vld [vmem:[%s2608 + $0x61] sm:$0xff]
      %v3003 = vld [vmem:[%s2608 + $0x69] sm:$0xff]
      %v3004 = vld [vmem:[%s2608 + $0x79] sm:$0xff]
      %v3005 = vld [vmem:[%s2608 + $0x81] sm:$0xff]
      %v3006 = vld [vmem:[%s2608 + $0x91] sm:$0xff]
      %v3007 = vld [vmem:[%s2608 + $0x99] sm:$0xff]
      %v3008 = vld [vmem:[%s2608 + $0xa9] sm:$0xff]
      %v3009 = vld [vmem:[%s2608 + $0xb1] sm:$0xff]
      %v3010 = vld [vmem:[%s2608 + $0xc1] sm:$0xff]
      %v3011 = vld [vmem:[%s2608 + $0xc9] sm:$0xff]
      %v3012 = vld [vmem:[%s2608 + $0xd9] sm:$0xff]
      %v3013 = vld [vmem:[%s2608 + $0xe1] sm:$0xff]
      %v3014 = vld [vmem:[%s2608 + $0xf1] sm:$0xff]
      %v3015 = vld [vmem:[%s2608 + $0xf9] sm:$0xff]
      %v3016 = vld [vmem:[%s2608 + $0x109] sm:$0xff]
      %v3017 = vld [vmem:[%s2608 + $0x111] sm:$0xff]
      %v3018 = vld [vmem:[%s2608 + $0x121] sm:$0xff]
      %v3019 = vld [vmem:[%s2608 + $0x129] sm:$0xff]
      %v3020 = vld [vmem:[%s2608 + $0x139] sm:$0xff]
      %v3021 = vld [vmem:[%s2608 + $0x141] sm:$0xff]
      %v3022 = vld [vmem:[%s2608 + $0x151] sm:$0xff]
      %v3023 = vld [vmem:[%s2608 + $0x159] sm:$0xff]
      %v3024 = vld [vmem:[%s2608 + $0x169] sm:$0xff]
      %v3025 = vld [vmem:[%s2608 + $0x171] sm:$0xff]
      %v3026 = vld [vmem:[%s2608 + $0x1b1] sm:$0xff]
      %v3027 = vld [vmem:[%s2608 + $0x1b9] sm:$0xff]
      %v3028 = vld [vmem:[%s2608 + $0x1c9] sm:$0xff]
      %v3029 = vld [vmem:[%s2608 + $0x1d1] sm:$0xff]
      %v3030 = vld [vmem:[%s2608 + $0x1e1] sm:$0xff]
      %v3031 = vld [vmem:[%s2608 + $0x1e9] sm:$0xff]
      %v3032 = vld [vmem:[%s2608 + $0x1f9] sm:$0xff]
      %v3033 = vld [vmem:[%s2608 + $0x201] sm:$0xff]
      %v3034 = vld [vmem:[%s2608 + $0x211] sm:$0xff]
      %v3035 = vld [vmem:[%s2608 + $0x219] sm:$0xff]
      %v3036 = vld [vmem:[%s2608 + $0x229] sm:$0xff]
      %v3037 = vld [vmem:[%s2608 + $0x231] sm:$0xff]
      %v3038 = vld [vmem:[%s2608 + $0x241] sm:$0xff]
      %v3039 = vld [vmem:[%s2608 + $0x249] sm:$0xff]
      %v3040 = vld [vmem:[%s2608 + $0x259] sm:$0xff]
      %v3041 = vld [vmem:[%s2608 + $0x261] sm:$0xff]
      %v3042 = vld [vmem:[%s2608 + $0x271] sm:$0xff]
      %v3043 = vld [vmem:[%s2608 + $0x279] sm:$0xff]
      %v3044 = vld [vmem:[%s2608 + $0x289] sm:$0xff]
      %v3045 = vld [vmem:[%s2608 + $0x291] sm:$0xff]
      %v3046 = vld [vmem:[%s2608 + $0x2a1] sm:$0xff]
      %v3047 = vld [vmem:[%s2608 + $0x2a9] sm:$0xff]
      %v3048 = vld [vmem:[%s2608 + $0x2b9] sm:$0xff]
      %v3049 = vld [vmem:[%s2608 + $0x2c1] sm:$0xff]
      %v3050 = vld [vmem:[%s2608 + $0x2d1] sm:$0xff]
      %v3051 = vld [vmem:[%s2608 + $0x2d9] sm:$0xff]
      %v3052 = vld [vmem:[%s2608 + $0x2e9] sm:$0xff]
      %v3053 = vld [vmem:[%s2608 + $0x2f1] sm:$0xff]
      %v3054 = vld [vmem:[%s2608 + $0x301] sm:$0xff]
      %v3055 = vld [vmem:[%s2608 + $0x309] sm:$0xff]
      %v3056 = vld [vmem:[%s2608 + $0x319] sm:$0xff]
      %v3057 = vld [vmem:[%s2608 + $0x321] sm:$0xff]
      %3122 = vrot.lane.b32.xlu0 %v2994, 56
      %v3123 = vpop.permute.xlu0 %3122
      %3124 = vrot.lane.b32.xlu0 %v2995, 56
      %v3125 = vpop.permute.xlu0 %3124
      %3126 = vrot.lane.b32.xlu0 %v2996, 56
      %v3127 = vpop.permute.xlu0 %3126
      %3128 = vrot.lane.b32.xlu0 %v2997, 56
      %v3129 = vpop.permute.xlu0 %3128
      %3130 = vrot.lane.b32.xlu0 %v2998, 56
      %v3131 = vpop.permute.xlu0 %3130
      %3132 = vrot.lane.b32.xlu0 %v2999, 56
      %v3133 = vpop.permute.xlu0 %3132
      %3134 = vrot.lane.b32.xlu0 %v3000, 56
      %v3135 = vpop.permute.xlu0 %3134
      %3136 = vrot.lane.b32.xlu0 %v3001, 56
      %v3137 = vpop.permute.xlu0 %3136
      %3138 = vrot.lane.b32.xlu0 %v3002, 56
      %v3139 = vpop.permute.xlu0 %3138
      %3140 = vrot.lane.b32.xlu0 %v3003, 56
      %v3141 = vpop.permute.xlu0 %3140
      %3142 = vrot.lane.b32.xlu0 %v3004, 56
      %v3143 = vpop.permute.xlu0 %3142
      %3144 = vrot.lane.b32.xlu0 %v3005, 56
      %v3145 = vpop.permute.xlu0 %3144
      %3146 = vrot.lane.b32.xlu0 %v3006, 56
      %v3147 = vpop.permute.xlu0 %3146
      %3148 = vrot.lane.b32.xlu0 %v3007, 56
      %v3149 = vpop.permute.xlu0 %3148
      %3150 = vrot.lane.b32.xlu0 %v3008, 56
      %v3151 = vpop.permute.xlu0 %3150
      %3152 = vrot.lane.b32.xlu0 %v3009, 56
      %v3153 = vpop.permute.xlu0 %3152
      %3154 = vrot.lane.b32.xlu0 %v3010, 56
      %v3155 = vpop.permute.xlu0 %3154
      %3156 = vrot.lane.b32.xlu0 %v3011, 56
      %v3157 = vpop.permute.xlu0 %3156
      %3158 = vrot.lane.b32.xlu0 %v3012, 56
      %v3159 = vpop.permute.xlu0 %3158
      %3160 = vrot.lane.b32.xlu0 %v3013, 56
      %v3161 = vpop.permute.xlu0 %3160
      %3162 = vrot.lane.b32.xlu0 %v3014, 56
      %v3163 = vpop.permute.xlu0 %3162
      %3164 = vrot.lane.b32.xlu0 %v3015, 56
      %v3165 = vpop.permute.xlu0 %3164
      %3166 = vrot.lane.b32.xlu0 %v3016, 56
      %v3167 = vpop.permute.xlu0 %3166
      %3168 = vrot.lane.b32.xlu0 %v3017, 56
      %v3169 = vpop.permute.xlu0 %3168
      %3170 = vrot.lane.b32.xlu0 %v3018, 56
      %v3171 = vpop.permute.xlu0 %3170
      %3172 = vrot.lane.b32.xlu0 %v3019, 56
      %v3173 = vpop.permute.xlu0 %3172
      %3174 = vrot.lane.b32.xlu0 %v3020, 56
      %v3175 = vpop.permute.xlu0 %3174
      %3176 = vrot.lane.b32.xlu0 %v3021, 56
      %v3177 = vpop.permute.xlu0 %3176
      %3178 = vrot.lane.b32.xlu0 %v3022, 56
      %v3179 = vpop.permute.xlu0 %3178
      %3180 = vrot.lane.b32.xlu0 %v3023, 56
      %v3181 = vpop.permute.xlu0 %3180
      %3182 = vrot.lane.b32.xlu0 %v3024, 56
      %v3183 = vpop.permute.xlu0 %3182
      %3184 = vrot.lane.b32.xlu0 %v3025, 56
      %v3185 = vpop.permute.xlu0 %3184
      %3186 = vrot.lane.b32.xlu0 %v3026, 56
      %v3187 = vpop.permute.xlu0 %3186
      %3188 = vrot.lane.b32.xlu0 %v3027, 56
      %v3189 = vpop.permute.xlu0 %3188
      %3190 = vrot.lane.b32.xlu0 %v3028, 56
      %v3191 = vpop.permute.xlu0 %3190
      %3192 = vrot.lane.b32.xlu0 %v3029, 56
      %v3193 = vpop.permute.xlu0 %3192
      %3194 = vrot.lane.b32.xlu0 %v3030, 56
      %v3195 = vpop.permute.xlu0 %3194
      %3196 = vrot.lane.b32.xlu0 %v3031, 56
      %v3197 = vpop.permute.xlu0 %3196
      %3198 = vrot.lane.b32.xlu0 %v3032, 56
      %v3199 = vpop.permute.xlu0 %3198
      %3200 = vrot.lane.b32.xlu0 %v3033, 56
      %v3201 = vpop.permute.xlu0 %3200
      %3202 = vrot.lane.b32.xlu0 %v3034, 56
      %v3203 = vpop.permute.xlu0 %3202
      %3204 = vrot.lane.b32.xlu0 %v3035, 56
      %v3205 = vpop.permute.xlu0 %3204
      %3206 = vrot.lane.b32.xlu0 %v3036, 56
      %v3207 = vpop.permute.xlu0 %3206
      %3208 = vrot.lane.b32.xlu0 %v3037, 56
      %v3209 = vpop.permute.xlu0 %3208
      %3210 = vrot.lane.b32.xlu0 %v3038, 56
      %v3211 = vpop.permute.xlu0 %3210
      %3212 = vrot.lane.b32.xlu0 %v3039, 56
      %v3213 = vpop.permute.xlu0 %3212
      %3214 = vrot.lane.b32.xlu0 %v3040, 56
      %v3215 = vpop.permute.xlu0 %3214
      %3216 = vrot.lane.b32.xlu0 %v3041, 56
      %v3217 = vpop.permute.xlu0 %3216
      %3218 = vrot.lane.b32.xlu0 %v3042, 56
      %v3219 = vpop.permute.xlu0 %3218
      %3220 = vrot.lane.b32.xlu0 %v3043, 56
      %v3221 = vpop.permute.xlu0 %3220
      %3222 = vrot.lane.b32.xlu0 %v3044, 56
      %v3223 = vpop.permute.xlu0 %3222
      %3224 = vrot.lane.b32.xlu0 %v3045, 56
      %v3225 = vpop.permute.xlu0 %3224
      %3226 = vrot.lane.b32.xlu0 %v3046, 56
      %v3227 = vpop.permute.xlu0 %3226
      %3228 = vrot.lane.b32.xlu0 %v3047, 56
      %v3229 = vpop.permute.xlu0 %3228
      %3230 = vrot.lane.b32.xlu0 %v3048, 56
      %v3231 = vpop.permute.xlu0 %3230
      %3232 = vrot.lane.b32.xlu0 %v3049, 56
      %v3233 = vpop.permute.xlu0 %3232
      %3234 = vrot.lane.b32.xlu0 %v3050, 56
      %v3235 = vpop.permute.xlu0 %3234
      %3236 = vrot.lane.b32.xlu0 %v3051, 56
      %v3237 = vpop.permute.xlu0 %3236
      %3238 = vrot.lane.b32.xlu0 %v3052, 56
      %v3239 = vpop.permute.xlu0 %3238
      %3240 = vrot.lane.b32.xlu0 %v3053, 56
      %v3241 = vpop.permute.xlu0 %3240
      %3242 = vrot.lane.b32.xlu0 %v3054, 56
      %v3243 = vpop.permute.xlu0 %3242
      %3244 = vrot.lane.b32.xlu0 %v3055, 56
      %v3245 = vpop.permute.xlu0 %3244
      %3246 = vrot.lane.b32.xlu0 %v3056, 56
      %v3247 = vpop.permute.xlu0 %3246
      %3248 = vrot.lane.b32.xlu0 %v3057, 56
      %v3249 = vpop.permute.xlu0 %3248
      %vm3314 = vcmask 523712
      %3315 = vst.msk [vmem:[#allocation3] sm:$0xff] %vm3314, %v3123
      %3316 = vst.msk [vmem:[#allocation3 + $0x8] sm:$0xff] %vm3314, %v3125
      %3317 = vst.msk [vmem:[#allocation3 + $0x10] sm:$0xff] %vm3314, %v3127
      %3318 = vst.msk [vmem:[#allocation3 + $0x18] sm:$0xff] %vm3314, %v3129
      %3319 = vst.msk [vmem:[#allocation3 + $0x20] sm:$0xff] %vm3314, %v3131
      %3320 = vst.msk [vmem:[#allocation3 + $0x28] sm:$0xff] %vm3314, %v3133
      %3321 = vst.msk [vmem:[#allocation3 + $0x30] sm:$0xff] %vm3314, %v3135
      %3322 = vst.msk [vmem:[#allocation3 + $0x38] sm:$0xff] %vm3314, %v3137
      %3323 = vst.msk [vmem:[#allocation3 + $0x40] sm:$0xff] %vm3314, %v3139
      %3324 = vst.msk [vmem:[#allocation3 + $0x48] sm:$0xff] %vm3314, %v3141
      %3325 = vst.msk [vmem:[#allocation3 + $0x50] sm:$0xff] %vm3314, %v3143
      %3326 = vst.msk [vmem:[#allocation3 + $0x58] sm:$0xff] %vm3314, %v3145
      %3327 = vst.msk [vmem:[#allocation3 + $0x60] sm:$0xff] %vm3314, %v3147
      %3328 = vst.msk [vmem:[#allocation3 + $0x68] sm:$0xff] %vm3314, %v3149
      %3329 = vst.msk [vmem:[#allocation3 + $0x70] sm:$0xff] %vm3314, %v3151
      %3330 = vst.msk [vmem:[#allocation3 + $0x78] sm:$0xff] %vm3314, %v3153
      %3331 = vst.msk [vmem:[#allocation3 + $0x80] sm:$0xff] %vm3314, %v3155
      %3332 = vst.msk [vmem:[#allocation3 + $0x88] sm:$0xff] %vm3314, %v3157
      %3333 = vst.msk [vmem:[#allocation3 + $0x90] sm:$0xff] %vm3314, %v3159
      %3334 = vst.msk [vmem:[#allocation3 + $0x98] sm:$0xff] %vm3314, %v3161
      %3335 = vst.msk [vmem:[#allocation3 + $0xa0] sm:$0xff] %vm3314, %v3163
      %3336 = vst.msk [vmem:[#allocation3 + $0xa8] sm:$0xff] %vm3314, %v3165
      %3337 = vst.msk [vmem:[#allocation3 + $0xb0] sm:$0xff] %vm3314, %v3167
      %3338 = vst.msk [vmem:[#allocation3 + $0xb8] sm:$0xff] %vm3314, %v3169
      %3339 = vst.msk [vmem:[#allocation3 + $0xc0] sm:$0xff] %vm3314, %v3171
      %3340 = vst.msk [vmem:[#allocation3 + $0xc8] sm:$0xff] %vm3314, %v3173
      %3341 = vst.msk [vmem:[#allocation3 + $0xd0] sm:$0xff] %vm3314, %v3175
      %3342 = vst.msk [vmem:[#allocation3 + $0xd8] sm:$0xff] %vm3314, %v3177
      %3343 = vst.msk [vmem:[#allocation3 + $0xe0] sm:$0xff] %vm3314, %v3179
      %3344 = vst.msk [vmem:[#allocation3 + $0xe8] sm:$0xff] %vm3314, %v3181
      %3345 = vst.msk [vmem:[#allocation3 + $0xf0] sm:$0xff] %vm3314, %v3183
      %3346 = vst.msk [vmem:[#allocation3 + $0xf8] sm:$0xff] %vm3314, %v3185
      %3347 = vst.msk [vmem:[#allocation3 + $0x100] sm:$0xff] %vm3314, %v3187
      %3348 = vst.msk [vmem:[#allocation3 + $0x108] sm:$0xff] %vm3314, %v3189
      %3349 = vst.msk [vmem:[#allocation3 + $0x110] sm:$0xff] %vm3314, %v3191
      %3350 = vst.msk [vmem:[#allocation3 + $0x118] sm:$0xff] %vm3314, %v3193
      %3351 = vst.msk [vmem:[#allocation3 + $0x120] sm:$0xff] %vm3314, %v3195
      %3352 = vst.msk [vmem:[#allocation3 + $0x128] sm:$0xff] %vm3314, %v3197
      %3353 = vst.msk [vmem:[#allocation3 + $0x130] sm:$0xff] %vm3314, %v3199
      %3354 = vst.msk [vmem:[#allocation3 + $0x138] sm:$0xff] %vm3314, %v3201
      %3355 = vst.msk [vmem:[#allocation3 + $0x140] sm:$0xff] %vm3314, %v3203
      %3356 = vst.msk [vmem:[#allocation3 + $0x148] sm:$0xff] %vm3314, %v3205
      %3357 = vst.msk [vmem:[#allocation3 + $0x150] sm:$0xff] %vm3314, %v3207
      %3358 = vst.msk [vmem:[#allocation3 + $0x158] sm:$0xff] %vm3314, %v3209
      %3359 = vst.msk [vmem:[#allocation3 + $0x160] sm:$0xff] %vm3314, %v3211
      %3360 = vst.msk [vmem:[#allocation3 + $0x168] sm:$0xff] %vm3314, %v3213
      %3361 = vst.msk [vmem:[#allocation3 + $0x170] sm:$0xff] %vm3314, %v3215
      %3362 = vst.msk [vmem:[#allocation3 + $0x178] sm:$0xff] %vm3314, %v3217
      %3363 = vst.msk [vmem:[#allocation3 + $0x180] sm:$0xff] %vm3314, %v3219
      %3364 = vst.msk [vmem:[#allocation3 + $0x188] sm:$0xff] %vm3314, %v3221
      %3365 = vst.msk [vmem:[#allocation3 + $0x190] sm:$0xff] %vm3314, %v3223
      %3366 = vst.msk [vmem:[#allocation3 + $0x198] sm:$0xff] %vm3314, %v3225
      %3367 = vst.msk [vmem:[#allocation3 + $0x1a0] sm:$0xff] %vm3314, %v3227
      %3368 = vst.msk [vmem:[#allocation3 + $0x1a8] sm:$0xff] %vm3314, %v3229
      %3369 = vst.msk [vmem:[#allocation3 + $0x1b0] sm:$0xff] %vm3314, %v3231
      %3370 = vst.msk [vmem:[#allocation3 + $0x1b8] sm:$0xff] %vm3314, %v3233
      %3371 = vst.msk [vmem:[#allocation3 + $0x1c0] sm:$0xff] %vm3314, %v3235
      %3372 = vst.msk [vmem:[#allocation3 + $0x1c8] sm:$0xff] %vm3314, %v3237
      %3373 = vst.msk [vmem:[#allocation3 + $0x1d0] sm:$0xff] %vm3314, %v3239
      %3374 = vst.msk [vmem:[#allocation3 + $0x1d8] sm:$0xff] %vm3314, %v3241
      %3375 = vst.msk [vmem:[#allocation3 + $0x1e0] sm:$0xff] %vm3314, %v3243
      %3376 = vst.msk [vmem:[#allocation3 + $0x1e8] sm:$0xff] %vm3314, %v3245
      %3377 = vst.msk [vmem:[#allocation3 + $0x1f0] sm:$0xff] %vm3314, %v3247
      %3378 = vst.msk [vmem:[#allocation3 + $0x1f8] sm:$0xff] %vm3314, %v3249
      %v3379 = vld [vmem:[%s2608 + $0x2] sm:$0xff]
      %v3380 = vld [vmem:[%s2608 + $0xa] sm:$0xff]
      %v3381 = vld [vmem:[%s2608 + $0x1a] sm:$0xff]
      %v3382 = vld [vmem:[%s2608 + $0x22] sm:$0xff]
      %v3383 = vld [vmem:[%s2608 + $0x32] sm:$0xff]
      %v3384 = vld [vmem:[%s2608 + $0x3a] sm:$0xff]
      %v3385 = vld [vmem:[%s2608 + $0x4a] sm:$0xff]
      %v3386 = vld [vmem:[%s2608 + $0x52] sm:$0xff]
      %v3387 = vld [vmem:[%s2608 + $0x62] sm:$0xff]
      %v3388 = vld [vmem:[%s2608 + $0x6a] sm:$0xff]
      %v3389 = vld [vmem:[%s2608 + $0x7a] sm:$0xff]
      %v3390 = vld [vmem:[%s2608 + $0x82] sm:$0xff]
      %v3391 = vld [vmem:[%s2608 + $0x92] sm:$0xff]
      %v3392 = vld [vmem:[%s2608 + $0x9a] sm:$0xff]
      %v3393 = vld [vmem:[%s2608 + $0xaa] sm:$0xff]
      %v3394 = vld [vmem:[%s2608 + $0xb2] sm:$0xff]
      %v3395 = vld [vmem:[%s2608 + $0xc2] sm:$0xff]
      %v3396 = vld [vmem:[%s2608 + $0xca] sm:$0xff]
      %v3397 = vld [vmem:[%s2608 + $0xda] sm:$0xff]
      %v3398 = vld [vmem:[%s2608 + $0xe2] sm:$0xff]
      %v3399 = vld [vmem:[%s2608 + $0xf2] sm:$0xff]
      %v3400 = vld [vmem:[%s2608 + $0xfa] sm:$0xff]
      %v3401 = vld [vmem:[%s2608 + $0x10a] sm:$0xff]
      %v3402 = vld [vmem:[%s2608 + $0x112] sm:$0xff]
      %v3403 = vld [vmem:[%s2608 + $0x122] sm:$0xff]
      %v3404 = vld [vmem:[%s2608 + $0x12a] sm:$0xff]
      %v3405 = vld [vmem:[%s2608 + $0x13a] sm:$0xff]
      %v3406 = vld [vmem:[%s2608 + $0x142] sm:$0xff]
      %v3407 = vld [vmem:[%s2608 + $0x152] sm:$0xff]
      %v3408 = vld [vmem:[%s2608 + $0x15a] sm:$0xff]
      %v3409 = vld [vmem:[%s2608 + $0x16a] sm:$0xff]
      %v3410 = vld [vmem:[%s2608 + $0x172] sm:$0xff]
      %v3411 = vld [vmem:[%s2608 + $0x1b2] sm:$0xff]
      %v3412 = vld [vmem:[%s2608 + $0x1ba] sm:$0xff]
      %v3413 = vld [vmem:[%s2608 + $0x1ca] sm:$0xff]
      %v3414 = vld [vmem:[%s2608 + $0x1d2] sm:$0xff]
      %v3415 = vld [vmem:[%s2608 + $0x1e2] sm:$0xff]
      %v3416 = vld [vmem:[%s2608 + $0x1ea] sm:$0xff]
      %v3417 = vld [vmem:[%s2608 + $0x1fa] sm:$0xff]
      %v3418 = vld [vmem:[%s2608 + $0x202] sm:$0xff]
      %v3419 = vld [vmem:[%s2608 + $0x212] sm:$0xff]
      %v3420 = vld [vmem:[%s2608 + $0x21a] sm:$0xff]
      %v3421 = vld [vmem:[%s2608 + $0x22a] sm:$0xff]
      %v3422 = vld [vmem:[%s2608 + $0x232] sm:$0xff]
      %v3423 = vld [vmem:[%s2608 + $0x242] sm:$0xff]
      %v3424 = vld [vmem:[%s2608 + $0x24a] sm:$0xff]
      %v3425 = vld [vmem:[%s2608 + $0x25a] sm:$0xff]
      %v3426 = vld [vmem:[%s2608 + $0x262] sm:$0xff]
      %v3427 = vld [vmem:[%s2608 + $0x272] sm:$0xff]
      %v3428 = vld [vmem:[%s2608 + $0x27a] sm:$0xff]
      %v3429 = vld [vmem:[%s2608 + $0x28a] sm:$0xff]
      %v3430 = vld [vmem:[%s2608 + $0x292] sm:$0xff]
      %v3431 = vld [vmem:[%s2608 + $0x2a2] sm:$0xff]
      %v3432 = vld [vmem:[%s2608 + $0x2aa] sm:$0xff]
      %v3433 = vld [vmem:[%s2608 + $0x2ba] sm:$0xff]
      %v3434 = vld [vmem:[%s2608 + $0x2c2] sm:$0xff]
      %v3435 = vld [vmem:[%s2608 + $0x2d2] sm:$0xff]
      %v3436 = vld [vmem:[%s2608 + $0x2da] sm:$0xff]
      %v3437 = vld [vmem:[%s2608 + $0x2ea] sm:$0xff]
      %v3438 = vld [vmem:[%s2608 + $0x2f2] sm:$0xff]
      %v3439 = vld [vmem:[%s2608 + $0x302] sm:$0xff]
      %v3440 = vld [vmem:[%s2608 + $0x30a] sm:$0xff]
      %v3441 = vld [vmem:[%s2608 + $0x31a] sm:$0xff]
      %v3442 = vld [vmem:[%s2608 + $0x322] sm:$0xff]
      %3507 = vrot.lane.b32.xlu0 %v3379, 64
      %v3508 = vpop.permute.xlu0 %3507
      %3509 = vrot.lane.b32.xlu0 %v3380, 64
      %v3510 = vpop.permute.xlu0 %3509
      %3511 = vrot.lane.b32.xlu0 %v3381, 64
      %v3512 = vpop.permute.xlu0 %3511
      %3513 = vrot.lane.b32.xlu0 %v3382, 64
      %v3514 = vpop.permute.xlu0 %3513
      %3515 = vrot.lane.b32.xlu0 %v3383, 64
      %v3516 = vpop.permute.xlu0 %3515
      %3517 = vrot.lane.b32.xlu0 %v3384, 64
      %v3518 = vpop.permute.xlu0 %3517
      %3519 = vrot.lane.b32.xlu0 %v3385, 64
      %v3520 = vpop.permute.xlu0 %3519
      %3521 = vrot.lane.b32.xlu0 %v3386, 64
      %v3522 = vpop.permute.xlu0 %3521
      %3523 = vrot.lane.b32.xlu0 %v3387, 64
      %v3524 = vpop.permute.xlu0 %3523
      %3525 = vrot.lane.b32.xlu0 %v3388, 64
      %v3526 = vpop.permute.xlu0 %3525
      %3527 = vrot.lane.b32.xlu0 %v3389, 64
      %v3528 = vpop.permute.xlu0 %3527
      %3529 = vrot.lane.b32.xlu0 %v3390, 64
      %v3530 = vpop.permute.xlu0 %3529
      %3531 = vrot.lane.b32.xlu0 %v3391, 64
      %v3532 = vpop.permute.xlu0 %3531
      %3533 = vrot.lane.b32.xlu0 %v3392, 64
      %v3534 = vpop.permute.xlu0 %3533
      %3535 = vrot.lane.b32.xlu0 %v3393, 64
      %v3536 = vpop.permute.xlu0 %3535
      %3537 = vrot.lane.b32.xlu0 %v3394, 64
      %v3538 = vpop.permute.xlu0 %3537
      %3539 = vrot.lane.b32.xlu0 %v3395, 64
      %v3540 = vpop.permute.xlu0 %3539
      %3541 = vrot.lane.b32.xlu0 %v3396, 64
      %v3542 = vpop.permute.xlu0 %3541
      %3543 = vrot.lane.b32.xlu0 %v3397, 64
      %v3544 = vpop.permute.xlu0 %3543
      %3545 = vrot.lane.b32.xlu0 %v3398, 64
      %v3546 = vpop.permute.xlu0 %3545
      %3547 = vrot.lane.b32.xlu0 %v3399, 64
      %v3548 = vpop.permute.xlu0 %3547
      %3549 = vrot.lane.b32.xlu0 %v3400, 64
      %v3550 = vpop.permute.xlu0 %3549
      %3551 = vrot.lane.b32.xlu0 %v3401, 64
      %v3552 = vpop.permute.xlu0 %3551
      %3553 = vrot.lane.b32.xlu0 %v3402, 64
      %v3554 = vpop.permute.xlu0 %3553
      %3555 = vrot.lane.b32.xlu0 %v3403, 64
      %v3556 = vpop.permute.xlu0 %3555
      %3557 = vrot.lane.b32.xlu0 %v3404, 64
      %v3558 = vpop.permute.xlu0 %3557
      %3559 = vrot.lane.b32.xlu0 %v3405, 64
      %v3560 = vpop.permute.xlu0 %3559
      %3561 = vrot.lane.b32.xlu0 %v3406, 64
      %v3562 = vpop.permute.xlu0 %3561
      %3563 = vrot.lane.b32.xlu0 %v3407, 64
      %v3564 = vpop.permute.xlu0 %3563
      %3565 = vrot.lane.b32.xlu0 %v3408, 64
      %v3566 = vpop.permute.xlu0 %3565
      %3567 = vrot.lane.b32.xlu0 %v3409, 64
      %v3568 = vpop.permute.xlu0 %3567
      %3569 = vrot.lane.b32.xlu0 %v3410, 64
      %v3570 = vpop.permute.xlu0 %3569
      %3571 = vrot.lane.b32.xlu0 %v3411, 64
      %v3572 = vpop.permute.xlu0 %3571
      %3573 = vrot.lane.b32.xlu0 %v3412, 64
      %v3574 = vpop.permute.xlu0 %3573
      %3575 = vrot.lane.b32.xlu0 %v3413, 64
      %v3576 = vpop.permute.xlu0 %3575
      %3577 = vrot.lane.b32.xlu0 %v3414, 64
      %v3578 = vpop.permute.xlu0 %3577
      %3579 = vrot.lane.b32.xlu0 %v3415, 64
      %v3580 = vpop.permute.xlu0 %3579
      %3581 = vrot.lane.b32.xlu0 %v3416, 64
      %v3582 = vpop.permute.xlu0 %3581
      %3583 = vrot.lane.b32.xlu0 %v3417, 64
      %v3584 = vpop.permute.xlu0 %3583
      %3585 = vrot.lane.b32.xlu0 %v3418, 64
      %v3586 = vpop.permute.xlu0 %3585
      %3587 = vrot.lane.b32.xlu0 %v3419, 64
      %v3588 = vpop.permute.xlu0 %3587
      %3589 = vrot.lane.b32.xlu0 %v3420, 64
      %v3590 = vpop.permute.xlu0 %3589
      %3591 = vrot.lane.b32.xlu0 %v3421, 64
      %v3592 = vpop.permute.xlu0 %3591
      %3593 = vrot.lane.b32.xlu0 %v3422, 64
      %v3594 = vpop.permute.xlu0 %3593
      %3595 = vrot.lane.b32.xlu0 %v3423, 64
      %v3596 = vpop.permute.xlu0 %3595
      %3597 = vrot.lane.b32.xlu0 %v3424, 64
      %v3598 = vpop.permute.xlu0 %3597
      %3599 = vrot.lane.b32.xlu0 %v3425, 64
      %v3600 = vpop.permute.xlu0 %3599
      %3601 = vrot.lane.b32.xlu0 %v3426, 64
      %v3602 = vpop.permute.xlu0 %3601
      %3603 = vrot.lane.b32.xlu0 %v3427, 64
      %v3604 = vpop.permute.xlu0 %3603
      %3605 = vrot.lane.b32.xlu0 %v3428, 64
      %v3606 = vpop.permute.xlu0 %3605
      %3607 = vrot.lane.b32.xlu0 %v3429, 64
      %v3608 = vpop.permute.xlu0 %3607
      %3609 = vrot.lane.b32.xlu0 %v3430, 64
      %v3610 = vpop.permute.xlu0 %3609
      %3611 = vrot.lane.b32.xlu0 %v3431, 64
      %v3612 = vpop.permute.xlu0 %3611
      %3613 = vrot.lane.b32.xlu0 %v3432, 64
      %v3614 = vpop.permute.xlu0 %3613
      %3615 = vrot.lane.b32.xlu0 %v3433, 64
      %v3616 = vpop.permute.xlu0 %3615
      %3617 = vrot.lane.b32.xlu0 %v3434, 64
      %v3618 = vpop.permute.xlu0 %3617
      %3619 = vrot.lane.b32.xlu0 %v3435, 64
      %v3620 = vpop.permute.xlu0 %3619
      %3621 = vrot.lane.b32.xlu0 %v3436, 64
      %v3622 = vpop.permute.xlu0 %3621
      %3623 = vrot.lane.b32.xlu0 %v3437, 64
      %v3624 = vpop.permute.xlu0 %3623
      %3625 = vrot.lane.b32.xlu0 %v3438, 64
      %v3626 = vpop.permute.xlu0 %3625
      %3627 = vrot.lane.b32.xlu0 %v3439, 64
      %v3628 = vpop.permute.xlu0 %3627
      %3629 = vrot.lane.b32.xlu0 %v3440, 64
      %v3630 = vpop.permute.xlu0 %3629
      %3631 = vrot.lane.b32.xlu0 %v3441, 64
      %v3632 = vpop.permute.xlu0 %3631
      %3633 = vrot.lane.b32.xlu0 %v3442, 64
      %v3634 = vpop.permute.xlu0 %3633
      %vm3699 = vcmask 589312
      %3700 = vst.msk [vmem:[#allocation3] sm:$0xff] %vm3699, %v3508
      %3701 = vst.msk [vmem:[#allocation3 + $0x8] sm:$0xff] %vm3699, %v3510
      %3702 = vst.msk [vmem:[#allocation3 + $0x10] sm:$0xff] %vm3699, %v3512
      %3703 = vst.msk [vmem:[#allocation3 + $0x18] sm:$0xff] %vm3699, %v3514
      %3704 = vst.msk [vmem:[#allocation3 + $0x20] sm:$0xff] %vm3699, %v3516
      %3705 = vst.msk [vmem:[#allocation3 + $0x28] sm:$0xff] %vm3699, %v3518
      %3706 = vst.msk [vmem:[#allocation3 + $0x30] sm:$0xff] %vm3699, %v3520
      %3707 = vst.msk [vmem:[#allocation3 + $0x38] sm:$0xff] %vm3699, %v3522
      %3708 = vst.msk [vmem:[#allocation3 + $0x40] sm:$0xff] %vm3699, %v3524
      %3709 = vst.msk [vmem:[#allocation3 + $0x48] sm:$0xff] %vm3699, %v3526
      %3710 = vst.msk [vmem:[#allocation3 + $0x50] sm:$0xff] %vm3699, %v3528
      %3711 = vst.msk [vmem:[#allocation3 + $0x58] sm:$0xff] %vm3699, %v3530
      %3712 = vst.msk [vmem:[#allocation3 + $0x60] sm:$0xff] %vm3699, %v3532
      %3713 = vst.msk [vmem:[#allocation3 + $0x68] sm:$0xff] %vm3699, %v3534
      %3714 = vst.msk [vmem:[#allocation3 + $0x70] sm:$0xff] %vm3699, %v3536
      %3715 = vst.msk [vmem:[#allocation3 + $0x78] sm:$0xff] %vm3699, %v3538
      %3716 = vst.msk [vmem:[#allocation3 + $0x80] sm:$0xff] %vm3699, %v3540
      %3717 = vst.msk [vmem:[#allocation3 + $0x88] sm:$0xff] %vm3699, %v3542
      %3718 = vst.msk [vmem:[#allocation3 + $0x90] sm:$0xff] %vm3699, %v3544
      %3719 = vst.msk [vmem:[#allocation3 + $0x98] sm:$0xff] %vm3699, %v3546
      %3720 = vst.msk [vmem:[#allocation3 + $0xa0] sm:$0xff] %vm3699, %v3548
      %3721 = vst.msk [vmem:[#allocation3 + $0xa8] sm:$0xff] %vm3699, %v3550
      %3722 = vst.msk [vmem:[#allocation3 + $0xb0] sm:$0xff] %vm3699, %v3552
      %3723 = vst.msk [vmem:[#allocation3 + $0xb8] sm:$0xff] %vm3699, %v3554
      %3724 = vst.msk [vmem:[#allocation3 + $0xc0] sm:$0xff] %vm3699, %v3556
      %3725 = vst.msk [vmem:[#allocation3 + $0xc8] sm:$0xff] %vm3699, %v3558
      %3726 = vst.msk [vmem:[#allocation3 + $0xd0] sm:$0xff] %vm3699, %v3560
      %3727 = vst.msk [vmem:[#allocation3 + $0xd8] sm:$0xff] %vm3699, %v3562
      %3728 = vst.msk [vmem:[#allocation3 + $0xe0] sm:$0xff] %vm3699, %v3564
      %3729 = vst.msk [vmem:[#allocation3 + $0xe8] sm:$0xff] %vm3699, %v3566
      %3730 = vst.msk [vmem:[#allocation3 + $0xf0] sm:$0xff] %vm3699, %v3568
      %3731 = vst.msk [vmem:[#allocation3 + $0xf8] sm:$0xff] %vm3699, %v3570
      %3732 = vst.msk [vmem:[#allocation3 + $0x100] sm:$0xff] %vm3699, %v3572
      %3733 = vst.msk [vmem:[#allocation3 + $0x108] sm:$0xff] %vm3699, %v3574
      %3734 = vst.msk [vmem:[#allocation3 + $0x110] sm:$0xff] %vm3699, %v3576
      %3735 = vst.msk [vmem:[#allocation3 + $0x118] sm:$0xff] %vm3699, %v3578
      %3736 = vst.msk [vmem:[#allocation3 + $0x120] sm:$0xff] %vm3699, %v3580
      %3737 = vst.msk [vmem:[#allocation3 + $0x128] sm:$0xff] %vm3699, %v3582
      %3738 = vst.msk [vmem:[#allocation3 + $0x130] sm:$0xff] %vm3699, %v3584
      %3739 = vst.msk [vmem:[#allocation3 + $0x138] sm:$0xff] %vm3699, %v3586
      %3740 = vst.msk [vmem:[#allocation3 + $0x140] sm:$0xff] %vm3699, %v3588
      %3741 = vst.msk [vmem:[#allocation3 + $0x148] sm:$0xff] %vm3699, %v3590
      %3742 = vst.msk [vmem:[#allocation3 + $0x150] sm:$0xff] %vm3699, %v3592
      %3743 = vst.msk [vmem:[#allocation3 + $0x158] sm:$0xff] %vm3699, %v3594
      %3744 = vst.msk [vmem:[#allocation3 + $0x160] sm:$0xff] %vm3699, %v3596
      %3745 = vst.msk [vmem:[#allocation3 + $0x168] sm:$0xff] %vm3699, %v3598
      %3746 = vst.msk [vmem:[#allocation3 + $0x170] sm:$0xff] %vm3699, %v3600
      %3747 = vst.msk [vmem:[#allocation3 + $0x178] sm:$0xff] %vm3699, %v3602
      %3748 = vst.msk [vmem:[#allocation3 + $0x180] sm:$0xff] %vm3699, %v3604
      %3749 = vst.msk [vmem:[#allocation3 + $0x188] sm:$0xff] %vm3699, %v3606
      %3750 = vst.msk [vmem:[#allocation3 + $0x190] sm:$0xff] %vm3699, %v3608
      %3751 = vst.msk [vmem:[#allocation3 + $0x198] sm:$0xff] %vm3699, %v3610
      %3752 = vst.msk [vmem:[#allocation3 + $0x1a0] sm:$0xff] %vm3699, %v3612
      %3753 = vst.msk [vmem:[#allocation3 + $0x1a8] sm:$0xff] %vm3699, %v3614
      %3754 = vst.msk [vmem:[#allocation3 + $0x1b0] sm:$0xff] %vm3699, %v3616
      %3755 = vst.msk [vmem:[#allocation3 + $0x1b8] sm:$0xff] %vm3699, %v3618
      %3756 = vst.msk [vmem:[#allocation3 + $0x1c0] sm:$0xff] %vm3699, %v3620
      %3757 = vst.msk [vmem:[#allocation3 + $0x1c8] sm:$0xff] %vm3699, %v3622
      %3758 = vst.msk [vmem:[#allocation3 + $0x1d0] sm:$0xff] %vm3699, %v3624
      %3759 = vst.msk [vmem:[#allocation3 + $0x1d8] sm:$0xff] %vm3699, %v3626
      %3760 = vst.msk [vmem:[#allocation3 + $0x1e0] sm:$0xff] %vm3699, %v3628
      %3761 = vst.msk [vmem:[#allocation3 + $0x1e8] sm:$0xff] %vm3699, %v3630
      %3762 = vst.msk [vmem:[#allocation3 + $0x1f0] sm:$0xff] %vm3699, %v3632
      %3763 = vst.msk [vmem:[#allocation3 + $0x1f8] sm:$0xff] %vm3699, %v3634
      %v3764 = vld [vmem:[#allocation3] sm:$0xff]
      %v3765 = vld [vmem:[#allocation3 + $0x8] sm:$0xff]
      %v3766 = vld [vmem:[#allocation3 + $0x10] sm:$0xff]
      %v3767 = vld [vmem:[#allocation3 + $0x18] sm:$0xff]
      %v3768 = vld [vmem:[#allocation3 + $0x20] sm:$0xff]
      %v3769 = vld [vmem:[#allocation3 + $0x28] sm:$0xff]
      %v3770 = vld [vmem:[#allocation3 + $0x30] sm:$0xff]
      %v3771 = vld [vmem:[#allocation3 + $0x38] sm:$0xff]
      %v3772 = vld [vmem:[#allocation3 + $0x40] sm:$0xff]
      %v3773 = vld [vmem:[#allocation3 + $0x48] sm:$0xff]
      %v3774 = vld [vmem:[#allocation3 + $0x50] sm:$0xff]
      %v3775 = vld [vmem:[#allocation3 + $0x58] sm:$0xff]
      %v3776 = vld [vmem:[#allocation3 + $0x60] sm:$0xff]
      %v3777 = vld [vmem:[#allocation3 + $0x68] sm:$0xff]
      %v3778 = vld [vmem:[#allocation3 + $0x70] sm:$0xff]
      %v3779 = vld [vmem:[#allocation3 + $0x78] sm:$0xff]
      %v3780 = vld [vmem:[#allocation3 + $0x80] sm:$0xff]
      %v3781 = vld [vmem:[#allocation3 + $0x88] sm:$0xff]
      %v3782 = vld [vmem:[#allocation3 + $0x90] sm:$0xff]
      %v3783 = vld [vmem:[#allocation3 + $0x98] sm:$0xff]
      %v3784 = vld [vmem:[#allocation3 + $0xa0] sm:$0xff]
      %v3785 = vld [vmem:[#allocation3 + $0xa8] sm:$0xff]
      %v3786 = vld [vmem:[#allocation3 + $0xb0] sm:$0xff]
      %v3787 = vld [vmem:[#allocation3 + $0xb8] sm:$0xff]
      %v3788 = vld [vmem:[#allocation3 + $0xc0] sm:$0xff]
      %v3789 = vld [vmem:[#allocation3 + $0xc8] sm:$0xff]
      %v3790 = vld [vmem:[#allocation3 + $0xd0] sm:$0xff]
      %v3791 = vld [vmem:[#allocation3 + $0xd8] sm:$0xff]
      %v3792 = vld [vmem:[#allocation3 + $0xe0] sm:$0xff]
      %v3793 = vld [vmem:[#allocation3 + $0xe8] sm:$0xff]
      %v3794 = vld [vmem:[#allocation3 + $0xf0] sm:$0xff]
      %v3795 = vld [vmem:[#allocation3 + $0xf8] sm:$0xff]
      %v3796 = vld [vmem:[#allocation3 + $0x100] sm:$0xff]
      %v3797 = vld [vmem:[#allocation3 + $0x108] sm:$0xff]
      %v3798 = vld [vmem:[#allocation3 + $0x110] sm:$0xff]
      %v3799 = vld [vmem:[#allocation3 + $0x118] sm:$0xff]
      %v3800 = vld [vmem:[#allocation3 + $0x120] sm:$0xff]
      %v3801 = vld [vmem:[#allocation3 + $0x128] sm:$0xff]
      %v3802 = vld [vmem:[#allocation3 + $0x130] sm:$0xff]
      %v3803 = vld [vmem:[#allocation3 + $0x138] sm:$0xff]
      %v3804 = vld [vmem:[#allocation3 + $0x140] sm:$0xff]
      %v3805 = vld [vmem:[#allocation3 + $0x148] sm:$0xff]
      %v3806 = vld [vmem:[#allocation3 + $0x150] sm:$0xff]
      %v3807 = vld [vmem:[#allocation3 + $0x158] sm:$0xff]
      %v3808 = vld [vmem:[#allocation3 + $0x160] sm:$0xff]
      %v3809 = vld [vmem:[#allocation3 + $0x168] sm:$0xff]
      %v3810 = vld [vmem:[#allocation3 + $0x170] sm:$0xff]
      %v3811 = vld [vmem:[#allocation3 + $0x178] sm:$0xff]
      %v3812 = vld [vmem:[#allocation3 + $0x180] sm:$0xff]
      %v3813 = vld [vmem:[#allocation3 + $0x188] sm:$0xff]
      %v3814 = vld [vmem:[#allocation3 + $0x190] sm:$0xff]
      %v3815 = vld [vmem:[#allocation3 + $0x198] sm:$0xff]
      %v3816 = vld [vmem:[#allocation3 + $0x1a0] sm:$0xff]
      %v3817 = vld [vmem:[#allocation3 + $0x1a8] sm:$0xff]
      %v3818 = vld [vmem:[#allocation3 + $0x1b0] sm:$0xff]
      %v3819 = vld [vmem:[#allocation3 + $0x1b8] sm:$0xff]
      %v3820 = vld [vmem:[#allocation3 + $0x1c0] sm:$0xff]
      %v3821 = vld [vmem:[#allocation3 + $0x1c8] sm:$0xff]
      %v3822 = vld [vmem:[#allocation3 + $0x1d0] sm:$0xff]
      %v3823 = vld [vmem:[#allocation3 + $0x1d8] sm:$0xff]
      %v3824 = vld [vmem:[#allocation3 + $0x1e0] sm:$0xff]
      %v3825 = vld [vmem:[#allocation3 + $0x1e8] sm:$0xff]
      %v3826 = vld [vmem:[#allocation3 + $0x1f0] sm:$0xff]
      %v3827 = vld [vmem:[#allocation3 + $0x1f8] sm:$0xff]
      %vm3828 = vcmask 588800
      %v3830 = vsel %vm3828, %v3764, 0
      %v3833 = vsel %vm3828, %v3765, 0
      %v3836 = vsel %vm3828, %v3766, 0
      %v3839 = vsel %vm3828, %v3767, 0
      %v3842 = vsel %vm3828, %v3768, 0
      %v3845 = vsel %vm3828, %v3769, 0
      %v3848 = vsel %vm3828, %v3770, 0
      %v3851 = vsel %vm3828, %v3771, 0
      %v3854 = vsel %vm3828, %v3772, 0
      %v3857 = vsel %vm3828, %v3773, 0
      %v3860 = vsel %vm3828, %v3774, 0
      %v3863 = vsel %vm3828, %v3775, 0
      %v3866 = vsel %vm3828, %v3776, 0
      %v3869 = vsel %vm3828, %v3777, 0
      %v3872 = vsel %vm3828, %v3778, 0
      %v3875 = vsel %vm3828, %v3779, 0
      %v3878 = vsel %vm3828, %v3780, 0
      %v3881 = vsel %vm3828, %v3781, 0
      %v3884 = vsel %vm3828, %v3782, 0
      %v3887 = vsel %vm3828, %v3783, 0
      %v3890 = vsel %vm3828, %v3784, 0
      %v3893 = vsel %vm3828, %v3785, 0
      %v3896 = vsel %vm3828, %v3786, 0
      %v3899 = vsel %vm3828, %v3787, 0
      %v3902 = vsel %vm3828, %v3788, 0
      %v3905 = vsel %vm3828, %v3789, 0
      %v3908 = vsel %vm3828, %v3790, 0
      %v3911 = vsel %vm3828, %v3791, 0
      %v3914 = vsel %vm3828, %v3792, 0
      %v3917 = vsel %vm3828, %v3793, 0
      %v3920 = vsel %vm3828, %v3794, 0
      %v3923 = vsel %vm3828, %v3795, 0
      %v3926 = vsel %vm3828, %v3796, 0
      %v3929 = vsel %vm3828, %v3797, 0
      %v3932 = vsel %vm3828, %v3798, 0
      %v3935 = vsel %vm3828, %v3799, 0
      %v3938 = vsel %vm3828, %v3800, 0
      %v3941 = vsel %vm3828, %v3801, 0
      %v3944 = vsel %vm3828, %v3802, 0
      %v3947 = vsel %vm3828, %v3803, 0
      %v3950 = vsel %vm3828, %v3804, 0
      %v3953 = vsel %vm3828, %v3805, 0
      %v3956 = vsel %vm3828, %v3806, 0
      %v3959 = vsel %vm3828, %v3807, 0
      %v3962 = vsel %vm3828, %v3808, 0
      %v3965 = vsel %vm3828, %v3809, 0
      %v3968 = vsel %vm3828, %v3810, 0
      %v3971 = vsel %vm3828, %v3811, 0
      %v3974 = vsel %vm3828, %v3812, 0
      %v3977 = vsel %vm3828, %v3813, 0
      %v3980 = vsel %vm3828, %v3814, 0
      %v3983 = vsel %vm3828, %v3815, 0
      %v3986 = vsel %vm3828, %v3816, 0
      %v3989 = vsel %vm3828, %v3817, 0
      %v3992 = vsel %vm3828, %v3818, 0
      %v3995 = vsel %vm3828, %v3819, 0
      %v3998 = vsel %vm3828, %v3820, 0
      %v4001 = vsel %vm3828, %v3821, 0
      %v4004 = vsel %vm3828, %v3822, 0
      %v4007 = vsel %vm3828, %v3823, 0
      %v4010 = vsel %vm3828, %v3824, 0
      %v4013 = vsel %vm3828, %v3825, 0
      %v4016 = vsel %vm3828, %v3826, 0
      %v4019 = vsel %vm3828, %v3827, 0
      %4021 = vmatprep.subr.mxu0 0.0
      %4022 = vmatpush1.msra.mxu0 0.0
      %4023 = vmatprep.subr.mxu0 0.0
      %4024 = vmatpush1.msra.mxu0 0.0
      %4025 = vmatprep.subr.mxu0 0.0
      %4026 = vmatpush1.msra.mxu0 0.0
      %4027 = vmatprep.subr.mxu0 0.0
      %4028 = vmatpush1.msra.mxu0 0.0
      %4029 = vmatprep.subr.mxu0 0.0
      %4030 = vmatpush1.msra.mxu0 0.0
      %4031 = vmatprep.subr.mxu0 0.0
      %4032 = vmatpush1.msra.mxu0 0.0
      %4033 = vmatprep.subr.mxu0 0.0
      %4034 = vmatpush1.msra.mxu0 0.0
      %4035 = vmatprep.subr.mxu0 0.0
      %4036 = vmatpush1.msra.mxu0 %v488
      %4037 = vmatprep.subr.mxu0 0.0
      %4038 = vmatpush1.msra.mxu0 %v487
      %4039 = vmatprep.subr.mxu0 0.0
      %4040 = vmatpush1.msra.mxu0 %v486
      %4041 = vmatprep.subr.mxu0 0.0
      %4042 = vmatpush1.msra.mxu0 %v485
      %4043 = vmatprep.subr.mxu0 0.0
      %4044 = vmatpush1.msra.mxu0 %v484
      %4045 = vmatprep.subr.mxu0 0.0
      %4046 = vmatpush1.msra.mxu0 %v483
      %4047 = vmatprep.subr.mxu0 0.0
      %4048 = vmatpush1.msra.mxu0 %v482
      %4049 = vmatprep.subr.mxu0 0.0
      %4050 = vmatpush1.msra.mxu0 %v481
      %4051 = vmatprep.subr.mxu0 0.0
      %4052 = vmatpush1.msra.mxu0 %v480
      %4053 = vmatprep.subr.mxu0 0.0
      %4054 = vmatpush2.msra.mxu0 0.0
      %4055 = vmatprep.subr.mxu0 0.0
      %4056 = vmatpush2.msra.mxu0 0.0
      %4057 = vmatprep.subr.mxu0 0.0
      %4058 = vmatpush2.msra.mxu0 0.0
      %4059 = vmatprep.subr.mxu0 0.0
      %4060 = vmatpush2.msra.mxu0 0.0
      %4061 = vmatprep.subr.mxu0 0.0
      %4062 = vmatpush2.msra.mxu0 0.0
      %4063 = vmatprep.subr.mxu0 0.0
      %4064 = vmatpush2.msra.mxu0 0.0
      %4065 = vmatprep.subr.mxu0 0.0
      %4066 = vmatpush2.msra.mxu0 0.0
      %4067 = vmatprep.subr.mxu0 0.0
      %4068 = vmatpush2.msra.mxu0 0.0
      %4069 = vmatprep.subr.mxu0 0.0
      %4070 = vmatpush2.msra.mxu0 0.0
      %4071 = vmatprep.subr.mxu0 0.0
      %4072 = vmatpush2.msra.mxu0 0.0
      %4073 = vmatprep.subr.mxu0 0.0
      %4074 = vmatpush2.msra.mxu0 0.0
      %4075 = vmatprep.subr.mxu0 0.0
      %4076 = vmatpush2.msra.mxu0 0.0
      %4077 = vmatprep.subr.mxu0 0.0
      %4078 = vmatpush2.msra.mxu0 0.0
      %4079 = vmatprep.subr.mxu0 0.0
      %4080 = vmatpush2.msra.mxu0 0.0
      %4081 = vmatprep.subr.mxu0 0.0
      %4082 = vmatpush2.msra.mxu0 0.0
      %4083 = vmatprep.subr.mxu0 0.0
      %4084 = vmatpush2.msra.mxu0 0.0
      %4085 = vmatprep.mubr.f32.mxu0 0.0
      %4086 = vmatmul.mubr.f32.gmra.mxu0 %v3830
      %v4087 = vpop.f32.mrf.mxu0
      %v4088 = vadd.f32 0.0, %v4087
      %v4089 = vpop.f32.mrf.mxu0
      %4090 = vmatprep.mubr.f32.mxu0 0.0
      %4091 = vmatmul.mubr.f32.gmra.mxu0 %v3833
      %v4092 = vpop.f32.mrf.mxu0
      %v4093 = vadd.f32 0.0, %v4092
      %v4094 = vpop.f32.mrf.mxu0
      %4095 = vmatprep.mubr.f32.mxu0 0.0
      %4096 = vmatmul.mubr.f32.gmra.mxu0 %v3836
      %v4097 = vpop.f32.mrf.mxu0
      %v4098 = vadd.f32 0.0, %v4097
      %v4099 = vpop.f32.mrf.mxu0
      %4100 = vmatprep.mubr.f32.mxu0 0.0
      %4101 = vmatmul.mubr.f32.gmra.mxu0 %v3839
      %v4102 = vpop.f32.mrf.mxu0
      %v4103 = vadd.f32 0.0, %v4102
      %v4104 = vpop.f32.mrf.mxu0
      %4105 = vmatprep.mubr.f32.mxu0 0.0
      %4106 = vmatmul.mubr.f32.gmra.mxu0 %v3842
      %v4107 = vpop.f32.mrf.mxu0
      %v4108 = vadd.f32 0.0, %v4107
      %v4109 = vpop.f32.mrf.mxu0
      %4110 = vmatprep.mubr.f32.mxu0 0.0
      %4111 = vmatmul.mubr.f32.gmra.mxu0 %v3845
      %v4112 = vpop.f32.mrf.mxu0
      %v4113 = vadd.f32 0.0, %v4112
      %v4114 = vpop.f32.mrf.mxu0
      %4115 = vmatprep.mubr.f32.mxu0 0.0
      %4116 = vmatmul.mubr.f32.gmra.mxu0 %v3848
      %v4117 = vpop.f32.mrf.mxu0
      %v4118 = vadd.f32 0.0, %v4117
      %v4119 = vpop.f32.mrf.mxu0
      %4120 = vmatprep.mubr.f32.mxu0 0.0
      %4121 = vmatmul.mubr.f32.gmra.mxu0 %v3851
      %v4122 = vpop.f32.mrf.mxu0
      %v4123 = vadd.f32 0.0, %v4122
      %v4124 = vpop.f32.mrf.mxu0
      %4125 = vmatprep.mubr.f32.mxu0 0.0
      %4126 = vmatmul.mubr.f32.gmra.mxu0 %v3854
      %v4127 = vpop.f32.mrf.mxu0
      %v4128 = vadd.f32 0.0, %v4127
      %v4129 = vpop.f32.mrf.mxu0
      %4130 = vmatprep.mubr.f32.mxu0 0.0
      %4131 = vmatmul.mubr.f32.gmra.mxu0 %v3857
      %v4132 = vpop.f32.mrf.mxu0
      %v4133 = vadd.f32 0.0, %v4132
      %v4134 = vpop.f32.mrf.mxu0
      %4135 = vmatprep.mubr.f32.mxu0 0.0
      %4136 = vmatmul.mubr.f32.gmra.mxu0 %v3860
      %v4137 = vpop.f32.mrf.mxu0
      %v4138 = vadd.f32 0.0, %v4137
      %v4139 = vpop.f32.mrf.mxu0
      %4140 = vmatprep.mubr.f32.mxu0 0.0
      %4141 = vmatmul.mubr.f32.gmra.mxu0 %v3863
      %v4142 = vpop.f32.mrf.mxu0
      %v4143 = vadd.f32 0.0, %v4142
      %v4144 = vpop.f32.mrf.mxu0
      %4145 = vmatprep.mubr.f32.mxu0 0.0
      %4146 = vmatmul.mubr.f32.gmra.mxu0 %v3866
      %v4147 = vpop.f32.mrf.mxu0
      %v4148 = vadd.f32 0.0, %v4147
      %v4149 = vpop.f32.mrf.mxu0
      %4150 = vmatprep.mubr.f32.mxu0 0.0
      %4151 = vmatmul.mubr.f32.gmra.mxu0 %v3869
      %v4152 = vpop.f32.mrf.mxu0
      %v4153 = vadd.f32 0.0, %v4152
      %v4154 = vpop.f32.mrf.mxu0
      %4155 = vmatprep.mubr.f32.mxu0 0.0
      %4156 = vmatmul.mubr.f32.gmra.mxu0 %v3872
      %v4157 = vpop.f32.mrf.mxu0
      %v4158 = vadd.f32 0.0, %v4157
      %v4159 = vpop.f32.mrf.mxu0
      %4160 = vmatprep.mubr.f32.mxu0 0.0
      %4161 = vmatmul.mubr.f32.gmra.mxu0 %v3875
      %v4162 = vpop.f32.mrf.mxu0
      %v4163 = vadd.f32 0.0, %v4162
      %v4164 = vpop.f32.mrf.mxu0
      %4165 = vmatprep.mubr.f32.mxu0 0.0
      %4166 = vmatmul.mubr.f32.gmra.mxu0 %v3878
      %v4167 = vpop.f32.mrf.mxu0
      %v4168 = vadd.f32 0.0, %v4167
      %v4169 = vpop.f32.mrf.mxu0
      %4170 = vmatprep.mubr.f32.mxu0 0.0
      %4171 = vmatmul.mubr.f32.gmra.mxu0 %v3881
      %v4172 = vpop.f32.mrf.mxu0
      %v4173 = vadd.f32 0.0, %v4172
      %v4174 = vpop.f32.mrf.mxu0
      %4175 = vmatprep.mubr.f32.mxu0 0.0
      %4176 = vmatmul.mubr.f32.gmra.mxu0 %v3884
      %v4177 = vpop.f32.mrf.mxu0
      %v4178 = vadd.f32 0.0, %v4177
      %v4179 = vpop.f32.mrf.mxu0
      %4180 = vmatprep.mubr.f32.mxu0 0.0
      %4181 = vmatmul.mubr.f32.gmra.mxu0 %v3887
      %v4182 = vpop.f32.mrf.mxu0
      %v4183 = vadd.f32 0.0, %v4182
      %v4184 = vpop.f32.mrf.mxu0
      %4185 = vmatprep.mubr.f32.mxu0 0.0
      %4186 = vmatmul.mubr.f32.gmra.mxu0 %v3890
      %v4187 = vpop.f32.mrf.mxu0
      %v4188 = vadd.f32 0.0, %v4187
      %v4189 = vpop.f32.mrf.mxu0
      %4190 = vmatprep.mubr.f32.mxu0 0.0
      %4191 = vmatmul.mubr.f32.gmra.mxu0 %v3893
      %v4192 = vpop.f32.mrf.mxu0
      %v4193 = vadd.f32 0.0, %v4192
      %v4194 = vpop.f32.mrf.mxu0
      %4195 = vmatprep.mubr.f32.mxu0 0.0
      %4196 = vmatmul.mubr.f32.gmra.mxu0 %v3896
      %v4197 = vpop.f32.mrf.mxu0
      %v4198 = vadd.f32 0.0, %v4197
      %v4199 = vpop.f32.mrf.mxu0
      %4200 = vmatprep.mubr.f32.mxu0 0.0
      %4201 = vmatmul.mubr.f32.gmra.mxu0 %v3899
      %v4202 = vpop.f32.mrf.mxu0
      %v4203 = vadd.f32 0.0, %v4202
      %v4204 = vpop.f32.mrf.mxu0
      %4205 = vmatprep.mubr.f32.mxu0 0.0
      %4206 = vmatmul.mubr.f32.gmra.mxu0 %v3902
      %v4207 = vpop.f32.mrf.mxu0
      %v4208 = vadd.f32 0.0, %v4207
      %v4209 = vpop.f32.mrf.mxu0
      %4210 = vmatprep.mubr.f32.mxu0 0.0
      %4211 = vmatmul.mubr.f32.gmra.mxu0 %v3905
      %v4212 = vpop.f32.mrf.mxu0
      %v4213 = vadd.f32 0.0, %v4212
      %v4214 = vpop.f32.mrf.mxu0
      %4215 = vmatprep.mubr.f32.mxu0 0.0
      %4216 = vmatmul.mubr.f32.gmra.mxu0 %v3908
      %v4217 = vpop.f32.mrf.mxu0
      %v4218 = vadd.f32 0.0, %v4217
      %v4219 = vpop.f32.mrf.mxu0
      %4220 = vmatprep.mubr.f32.mxu0 0.0
      %4221 = vmatmul.mubr.f32.gmra.mxu0 %v3911
      %v4222 = vpop.f32.mrf.mxu0
      %v4223 = vadd.f32 0.0, %v4222
      %v4224 = vpop.f32.mrf.mxu0
      %4225 = vmatprep.mubr.f32.mxu0 0.0
      %4226 = vmatmul.mubr.f32.gmra.mxu0 %v3914
      %v4227 = vpop.f32.mrf.mxu0
      %v4228 = vadd.f32 0.0, %v4227
      %v4229 = vpop.f32.mrf.mxu0
      %4230 = vmatprep.mubr.f32.mxu0 0.0
      %4231 = vmatmul.mubr.f32.gmra.mxu0 %v3917
      %v4232 = vpop.f32.mrf.mxu0
      %v4233 = vadd.f32 0.0, %v4232
      %v4234 = vpop.f32.mrf.mxu0
      %4235 = vmatprep.mubr.f32.mxu0 0.0
      %4236 = vmatmul.mubr.f32.gmra.mxu0 %v3920
      %v4237 = vpop.f32.mrf.mxu0
      %v4238 = vadd.f32 0.0, %v4237
      %v4239 = vpop.f32.mrf.mxu0
      %4240 = vmatprep.mubr.f32.mxu0 0.0
      %4241 = vmatmul.mubr.f32.gmra.mxu0 %v3923
      %v4242 = vpop.f32.mrf.mxu0
      %v4243 = vadd.f32 0.0, %v4242
      %v4244 = vpop.f32.mrf.mxu0
      %4245 = vmatprep.mubr.f32.mxu0 0.0
      %4246 = vmatmul.mubr.f32.gmra.mxu0 %v3926
      %v4247 = vpop.f32.mrf.mxu0
      %v4248 = vadd.f32 0.0, %v4247
      %v4249 = vpop.f32.mrf.mxu0
      %4250 = vmatprep.mubr.f32.mxu0 0.0
      %4251 = vmatmul.mubr.f32.gmra.mxu0 %v3929
      %v4252 = vpop.f32.mrf.mxu0
      %v4253 = vadd.f32 0.0, %v4252
      %v4254 = vpop.f32.mrf.mxu0
      %4255 = vmatprep.mubr.f32.mxu0 0.0
      %4256 = vmatmul.mubr.f32.gmra.mxu0 %v3932
      %v4257 = vpop.f32.mrf.mxu0
      %v4258 = vadd.f32 0.0, %v4257
      %v4259 = vpop.f32.mrf.mxu0
      %4260 = vmatprep.mubr.f32.mxu0 0.0
      %4261 = vmatmul.mubr.f32.gmra.mxu0 %v3935
      %v4262 = vpop.f32.mrf.mxu0
      %v4263 = vadd.f32 0.0, %v4262
      %v4264 = vpop.f32.mrf.mxu0
      %4265 = vmatprep.mubr.f32.mxu0 0.0
      %4266 = vmatmul.mubr.f32.gmra.mxu0 %v3938
      %v4267 = vpop.f32.mrf.mxu0
      %v4268 = vadd.f32 0.0, %v4267
      %v4269 = vpop.f32.mrf.mxu0
      %4270 = vmatprep.mubr.f32.mxu0 0.0
      %4271 = vmatmul.mubr.f32.gmra.mxu0 %v3941
      %v4272 = vpop.f32.mrf.mxu0
      %v4273 = vadd.f32 0.0, %v4272
      %v4274 = vpop.f32.mrf.mxu0
      %4275 = vmatprep.mubr.f32.mxu0 0.0
      %4276 = vmatmul.mubr.f32.gmra.mxu0 %v3944
      %v4277 = vpop.f32.mrf.mxu0
      %v4278 = vadd.f32 0.0, %v4277
      %v4279 = vpop.f32.mrf.mxu0
      %4280 = vmatprep.mubr.f32.mxu0 0.0
      %4281 = vmatmul.mubr.f32.gmra.mxu0 %v3947
      %v4282 = vpop.f32.mrf.mxu0
      %v4283 = vadd.f32 0.0, %v4282
      %v4284 = vpop.f32.mrf.mxu0
      %4285 = vmatprep.mubr.f32.mxu0 0.0
      %4286 = vmatmul.mubr.f32.gmra.mxu0 %v3950
      %v4287 = vpop.f32.mrf.mxu0
      %v4288 = vadd.f32 0.0, %v4287
      %v4289 = vpop.f32.mrf.mxu0
      %4290 = vmatprep.mubr.f32.mxu0 0.0
      %4291 = vmatmul.mubr.f32.gmra.mxu0 %v3953
      %v4292 = vpop.f32.mrf.mxu0
      %v4293 = vadd.f32 0.0, %v4292
      %v4294 = vpop.f32.mrf.mxu0
      %4295 = vmatprep.mubr.f32.mxu0 0.0
      %4296 = vmatmul.mubr.f32.gmra.mxu0 %v3956
      %v4297 = vpop.f32.mrf.mxu0
      %v4298 = vadd.f32 0.0, %v4297
      %v4299 = vpop.f32.mrf.mxu0
      %4300 = vmatprep.mubr.f32.mxu0 0.0
      %4301 = vmatmul.mubr.f32.gmra.mxu0 %v3959
      %v4302 = vpop.f32.mrf.mxu0
      %v4303 = vadd.f32 0.0, %v4302
      %v4304 = vpop.f32.mrf.mxu0
      %4305 = vmatprep.mubr.f32.mxu0 0.0
      %4306 = vmatmul.mubr.f32.gmra.mxu0 %v3962
      %v4307 = vpop.f32.mrf.mxu0
      %v4308 = vadd.f32 0.0, %v4307
      %v4309 = vpop.f32.mrf.mxu0
      %4310 = vmatprep.mubr.f32.mxu0 0.0
      %4311 = vmatmul.mubr.f32.gmra.mxu0 %v3965
      %v4312 = vpop.f32.mrf.mxu0
      %v4313 = vadd.f32 0.0, %v4312
      %v4314 = vpop.f32.mrf.mxu0
      %4315 = vmatprep.mubr.f32.mxu0 0.0
      %4316 = vmatmul.mubr.f32.gmra.mxu0 %v3968
      %v4317 = vpop.f32.mrf.mxu0
      %v4318 = vadd.f32 0.0, %v4317
      %v4319 = vpop.f32.mrf.mxu0
      %4320 = vmatprep.mubr.f32.mxu0 0.0
      %4321 = vmatmul.mubr.f32.gmra.mxu0 %v3971
      %v4322 = vpop.f32.mrf.mxu0
      %v4323 = vadd.f32 0.0, %v4322
      %v4324 = vpop.f32.mrf.mxu0
      %4325 = vmatprep.mubr.f32.mxu0 0.0
      %4326 = vmatmul.mubr.f32.gmra.mxu0 %v3974
      %v4327 = vpop.f32.mrf.mxu0
      %v4328 = vadd.f32 0.0, %v4327
      %v4329 = vpop.f32.mrf.mxu0
      %4330 = vmatprep.mubr.f32.mxu0 0.0
      %4331 = vmatmul.mubr.f32.gmra.mxu0 %v3977
      %v4332 = vpop.f32.mrf.mxu0
      %v4333 = vadd.f32 0.0, %v4332
      %v4334 = vpop.f32.mrf.mxu0
      %4335 = vmatprep.mubr.f32.mxu0 0.0
      %4336 = vmatmul.mubr.f32.gmra.mxu0 %v3980
      %v4337 = vpop.f32.mrf.mxu0
      %v4338 = vadd.f32 0.0, %v4337
      %v4339 = vpop.f32.mrf.mxu0
      %4340 = vmatprep.mubr.f32.mxu0 0.0
      %4341 = vmatmul.mubr.f32.gmra.mxu0 %v3983
      %v4342 = vpop.f32.mrf.mxu0
      %v4343 = vadd.f32 0.0, %v4342
      %v4344 = vpop.f32.mrf.mxu0
      %4345 = vmatprep.mubr.f32.mxu0 0.0
      %4346 = vmatmul.mubr.f32.gmra.mxu0 %v3986
      %v4347 = vpop.f32.mrf.mxu0
      %v4348 = vadd.f32 0.0, %v4347
      %v4349 = vpop.f32.mrf.mxu0
      %4350 = vmatprep.mubr.f32.mxu0 0.0
      %4351 = vmatmul.mubr.f32.gmra.mxu0 %v3989
      %v4352 = vpop.f32.mrf.mxu0
      %v4353 = vadd.f32 0.0, %v4352
      %v4354 = vpop.f32.mrf.mxu0
      %4355 = vmatprep.mubr.f32.mxu0 0.0
      %4356 = vmatmul.mubr.f32.gmra.mxu0 %v3992
      %v4357 = vpop.f32.mrf.mxu0
      %v4358 = vadd.f32 0.0, %v4357
      %v4359 = vpop.f32.mrf.mxu0
      %4360 = vmatprep.mubr.f32.mxu0 0.0
      %4361 = vmatmul.mubr.f32.gmra.mxu0 %v3995
      %v4362 = vpop.f32.mrf.mxu0
      %v4363 = vadd.f32 0.0, %v4362
      %v4364 = vpop.f32.mrf.mxu0
      %4365 = vmatprep.mubr.f32.mxu0 0.0
      %4366 = vmatmul.mubr.f32.gmra.mxu0 %v3998
      %v4367 = vpop.f32.mrf.mxu0
      %v4368 = vadd.f32 0.0, %v4367
      %v4369 = vpop.f32.mrf.mxu0
      %4370 = vmatprep.mubr.f32.mxu0 0.0
      %4371 = vmatmul.mubr.f32.gmra.mxu0 %v4001
      %v4372 = vpop.f32.mrf.mxu0
      %v4373 = vadd.f32 0.0, %v4372
      %v4374 = vpop.f32.mrf.mxu0
      %4375 = vmatprep.mubr.f32.mxu0 0.0
      %4376 = vmatmul.mubr.f32.gmra.mxu0 %v4004
      %v4377 = vpop.f32.mrf.mxu0
      %v4378 = vadd.f32 0.0, %v4377
      %v4379 = vpop.f32.mrf.mxu0
      %4380 = vmatprep.mubr.f32.mxu0 0.0
      %4381 = vmatmul.mubr.f32.gmra.mxu0 %v4007
      %v4382 = vpop.f32.mrf.mxu0
      %v4383 = vadd.f32 0.0, %v4382
      %v4384 = vpop.f32.mrf.mxu0
      %4385 = vmatprep.mubr.f32.mxu0 0.0
      %4386 = vmatmul.mubr.f32.gmra.mxu0 %v4010
      %v4387 = vpop.f32.mrf.mxu0
      %v4388 = vadd.f32 0.0, %v4387
      %v4389 = vpop.f32.mrf.mxu0
      %4390 = vmatprep.mubr.f32.mxu0 0.0
      %4391 = vmatmul.mubr.f32.gmra.mxu0 %v4013
      %v4392 = vpop.f32.mrf.mxu0
      %v4393 = vadd.f32 0.0, %v4392
      %v4394 = vpop.f32.mrf.mxu0
      %4395 = vmatprep.mubr.f32.mxu0 0.0
      %4396 = vmatmul.mubr.f32.gmra.mxu0 %v4016
      %v4397 = vpop.f32.mrf.mxu0
      %v4398 = vadd.f32 0.0, %v4397
      %v4399 = vpop.f32.mrf.mxu0
      %4400 = vmatprep.mubr.f32.mxu0 0.0
      %4401 = vmatmul.mubr.f32.gmra.mxu0 %v4019
      %v4402 = vpop.f32.mrf.mxu0
      %v4403 = vadd.f32 0.0, %v4402
      %v4404 = vpop.f32.mrf.mxu0
      %4405 = vdwg.mxu0
      %v4406 = vsel %vm490, %v4088, 0.0
      %v4407 = vsel %vm490, %v4093, 0.0
      %v4408 = vadd.f32 %v4406, %v4407
      %v4409 = vsel %vm490, %v4098, 0.0
      %v4410 = vadd.f32 %v4408, %v4409
      %v4411 = vsel %vm490, %v4103, 0.0
      %v4412 = vadd.f32 %v4410, %v4411
      %v4413 = vsel %vm490, %v4108, 0.0
      %v4414 = vadd.f32 %v4412, %v4413
      %v4415 = vsel %vm490, %v4113, 0.0
      %v4416 = vadd.f32 %v4414, %v4415
      %v4417 = vsel %vm490, %v4118, 0.0
      %v4418 = vadd.f32 %v4416, %v4417
      %v4419 = vsel %vm490, %v4123, 0.0
      %v4420 = vadd.f32 %v4418, %v4419
      %v4421 = vsel %vm490, %v4128, 0.0
      %v4422 = vadd.f32 %v4420, %v4421
      %v4423 = vsel %vm490, %v4133, 0.0
      %v4424 = vadd.f32 %v4422, %v4423
      %v4425 = vsel %vm490, %v4138, 0.0
      %v4426 = vadd.f32 %v4424, %v4425
      %v4427 = vsel %vm490, %v4143, 0.0
      %v4428 = vadd.f32 %v4426, %v4427
      %v4429 = vsel %vm490, %v4148, 0.0
      %v4430 = vadd.f32 %v4428, %v4429
      %v4431 = vsel %vm490, %v4153, 0.0
      %v4432 = vadd.f32 %v4430, %v4431
      %v4433 = vsel %vm490, %v4158, 0.0
      %v4434 = vadd.f32 %v4432, %v4433
      %v4435 = vsel %vm490, %v4163, 0.0
      %v4436 = vadd.f32 %v4434, %v4435
      %v4437 = vsel %vm490, %v4168, 0.0
      %v4438 = vadd.f32 %v4436, %v4437
      %v4439 = vsel %vm490, %v4173, 0.0
      %v4440 = vadd.f32 %v4438, %v4439
      %v4441 = vsel %vm490, %v4178, 0.0
      %v4442 = vadd.f32 %v4440, %v4441
      %v4443 = vsel %vm490, %v4183, 0.0
      %v4444 = vadd.f32 %v4442, %v4443
      %v4445 = vsel %vm490, %v4188, 0.0
      %v4446 = vadd.f32 %v4444, %v4445
      %v4447 = vsel %vm490, %v4193, 0.0
      %v4448 = vadd.f32 %v4446, %v4447
      %v4449 = vsel %vm490, %v4198, 0.0
      %v4450 = vadd.f32 %v4448, %v4449
      %v4451 = vsel %vm490, %v4203, 0.0
      %v4452 = vadd.f32 %v4450, %v4451
      %v4453 = vsel %vm490, %v4208, 0.0
      %v4454 = vadd.f32 %v4452, %v4453
      %v4455 = vsel %vm490, %v4213, 0.0
      %v4456 = vadd.f32 %v4454, %v4455
      %v4457 = vsel %vm490, %v4218, 0.0
      %v4458 = vadd.f32 %v4456, %v4457
      %v4459 = vsel %vm490, %v4223, 0.0
      %v4460 = vadd.f32 %v4458, %v4459
      %v4461 = vsel %vm490, %v4228, 0.0
      %v4462 = vadd.f32 %v4460, %v4461
      %v4463 = vsel %vm490, %v4233, 0.0
      %v4464 = vadd.f32 %v4462, %v4463
      %v4465 = vsel %vm490, %v4238, 0.0
      %v4466 = vadd.f32 %v4464, %v4465
      %v4467 = vsel %vm490, %v4243, 0.0
      %v4468 = vadd.f32 %v4466, %v4467
      %v4469 = vsel %vm490, %v4248, 0.0
      %v4470 = vadd.f32 %v4468, %v4469
      %v4471 = vsel %vm490, %v4253, 0.0
      %v4472 = vadd.f32 %v4470, %v4471
      %v4473 = vsel %vm490, %v4258, 0.0
      %v4474 = vadd.f32 %v4472, %v4473
      %v4475 = vsel %vm490, %v4263, 0.0
      %v4476 = vadd.f32 %v4474, %v4475
      %v4477 = vsel %vm490, %v4268, 0.0
      %v4478 = vadd.f32 %v4476, %v4477
      %v4479 = vsel %vm490, %v4273, 0.0
      %v4480 = vadd.f32 %v4478, %v4479
      %v4481 = vsel %vm490, %v4278, 0.0
      %v4482 = vadd.f32 %v4480, %v4481
      %v4483 = vsel %vm490, %v4283, 0.0
      %v4484 = vadd.f32 %v4482, %v4483
      %v4485 = vsel %vm490, %v4288, 0.0
      %v4486 = vadd.f32 %v4484, %v4485
      %v4487 = vsel %vm490, %v4293, 0.0
      %v4488 = vadd.f32 %v4486, %v4487
      %v4489 = vsel %vm490, %v4298, 0.0
      %v4490 = vadd.f32 %v4488, %v4489
      %v4491 = vsel %vm490, %v4303, 0.0
      %v4492 = vadd.f32 %v4490, %v4491
      %v4493 = vsel %vm490, %v4308, 0.0
      %v4494 = vadd.f32 %v4492, %v4493
      %v4495 = vsel %vm490, %v4313, 0.0
      %v4496 = vadd.f32 %v4494, %v4495
      %v4497 = vsel %vm490, %v4318, 0.0
      %v4498 = vadd.f32 %v4496, %v4497
      %v4499 = vsel %vm490, %v4323, 0.0
      %v4500 = vadd.f32 %v4498, %v4499
      %v4501 = vsel %vm490, %v4328, 0.0
      %v4502 = vadd.f32 %v4500, %v4501
      %v4503 = vsel %vm490, %v4333, 0.0
      %v4504 = vadd.f32 %v4502, %v4503
      %v4505 = vsel %vm490, %v4338, 0.0
      %v4506 = vadd.f32 %v4504, %v4505
      %v4507 = vsel %vm490, %v4343, 0.0
      %v4508 = vadd.f32 %v4506, %v4507
      %v4509 = vsel %vm490, %v4348, 0.0
      %v4510 = vadd.f32 %v4508, %v4509
      %v4511 = vsel %vm490, %v4353, 0.0
      %v4512 = vadd.f32 %v4510, %v4511
      %v4513 = vsel %vm490, %v4358, 0.0
      %v4514 = vadd.f32 %v4512, %v4513
      %v4515 = vsel %vm490, %v4363, 0.0
      %v4516 = vadd.f32 %v4514, %v4515
      %v4517 = vsel %vm490, %v4368, 0.0
      %v4518 = vadd.f32 %v4516, %v4517
      %v4519 = vsel %vm490, %v4373, 0.0
      %v4520 = vadd.f32 %v4518, %v4519
      %v4521 = vsel %vm490, %v4378, 0.0
      %v4522 = vadd.f32 %v4520, %v4521
      %v4523 = vsel %vm490, %v4383, 0.0
      %v4524 = vadd.f32 %v4522, %v4523
      %v4525 = vsel %vm490, %v4388, 0.0
      %v4526 = vadd.f32 %v4524, %v4525
      %v4527 = vsel %vm490, %v4393, 0.0
      %v4528 = vadd.f32 %v4526, %v4527
      %v4529 = vsel %vm490, %v4398, 0.0
      %v4530 = vadd.f32 %v4528, %v4529
      %v4531 = vsel %vm490, %v4403, 0.0
      %v4532 = vadd.f32 %v4530, %v4531
      %v4533 = vrot.slane %v4532, 4
      %v4534 = vadd.f32 %v4532, %v4533
      %v4535 = vrot.slane %v4534, 2
      %v4536 = vadd.f32 %v4534, %v4535
      %v4537 = vrot.slane %v4536, 1
      %v4538 = vadd.f32 %v4536, %v4537
      %v4539 = vmul.f32 %v4088, %v4088
      %v4540 = vmul.f32 %v4093, %v4093
      %v4541 = vmul.f32 %v4098, %v4098
      %v4542 = vmul.f32 %v4103, %v4103
      %v4543 = vmul.f32 %v4108, %v4108
      %v4544 = vmul.f32 %v4113, %v4113
      %v4545 = vmul.f32 %v4118, %v4118
      %v4546 = vmul.f32 %v4123, %v4123
      %v4547 = vmul.f32 %v4128, %v4128
      %v4548 = vmul.f32 %v4133, %v4133
      %v4549 = vmul.f32 %v4138, %v4138
      %v4550 = vmul.f32 %v4143, %v4143
      %v4551 = vmul.f32 %v4148, %v4148
      %v4552 = vmul.f32 %v4153, %v4153
      %v4553 = vmul.f32 %v4158, %v4158
      %v4554 = vmul.f32 %v4163, %v4163
      %v4555 = vmul.f32 %v4168, %v4168
      %v4556 = vmul.f32 %v4173, %v4173
      %v4557 = vmul.f32 %v4178, %v4178
      %v4558 = vmul.f32 %v4183, %v4183
      %v4559 = vmul.f32 %v4188, %v4188
      %v4560 = vmul.f32 %v4193, %v4193
      %v4561 = vmul.f32 %v4198, %v4198
      %v4562 = vmul.f32 %v4203, %v4203
      %v4563 = vmul.f32 %v4208, %v4208
      %v4564 = vmul.f32 %v4213, %v4213
      %v4565 = vmul.f32 %v4218, %v4218
      %v4566 = vmul.f32 %v4223, %v4223
      %v4567 = vmul.f32 %v4228, %v4228
      %v4568 = vmul.f32 %v4233, %v4233
      %v4569 = vmul.f32 %v4238, %v4238
      %v4570 = vmul.f32 %v4243, %v4243
      %v4571 = vmul.f32 %v4248, %v4248
      %v4572 = vmul.f32 %v4253, %v4253
      %v4573 = vmul.f32 %v4258, %v4258
      %v4574 = vmul.f32 %v4263, %v4263
      %v4575 = vmul.f32 %v4268, %v4268
      %v4576 = vmul.f32 %v4273, %v4273
      %v4577 = vmul.f32 %v4278, %v4278
      %v4578 = vmul.f32 %v4283, %v4283
      %v4579 = vmul.f32 %v4288, %v4288
      %v4580 = vmul.f32 %v4293, %v4293
      %v4581 = vmul.f32 %v4298, %v4298
      %v4582 = vmul.f32 %v4303, %v4303
      %v4583 = vmul.f32 %v4308, %v4308
      %v4584 = vmul.f32 %v4313, %v4313
      %v4585 = vmul.f32 %v4318, %v4318
      %v4586 = vmul.f32 %v4323, %v4323
      %v4587 = vmul.f32 %v4328, %v4328
      %v4588 = vmul.f32 %v4333, %v4333
      %v4589 = vmul.f32 %v4338, %v4338
      %v4590 = vmul.f32 %v4343, %v4343
      %v4591 = vmul.f32 %v4348, %v4348
      %v4592 = vmul.f32 %v4353, %v4353
      %v4593 = vmul.f32 %v4358, %v4358
      %v4594 = vmul.f32 %v4363, %v4363
      %v4595 = vmul.f32 %v4368, %v4368
      %v4596 = vmul.f32 %v4373, %v4373
      %v4597 = vmul.f32 %v4378, %v4378
      %v4598 = vmul.f32 %v4383, %v4383
      %v4599 = vmul.f32 %v4388, %v4388
      %v4600 = vmul.f32 %v4393, %v4393
      %v4601 = vmul.f32 %v4398, %v4398
      %v4602 = vmul.f32 %v4403, %v4403
      %v4603 = vsel %vm490, %v4539, 0.0
      %v4604 = vsel %vm490, %v4540, 0.0
      %v4605 = vadd.f32 %v4603, %v4604
      %v4606 = vsel %vm490, %v4541, 0.0
      %v4607 = vadd.f32 %v4605, %v4606
      %v4608 = vsel %vm490, %v4542, 0.0
      %v4609 = vadd.f32 %v4607, %v4608
      %v4610 = vsel %vm490, %v4543, 0.0
      %v4611 = vadd.f32 %v4609, %v4610
      %v4612 = vsel %vm490, %v4544, 0.0
      %v4613 = vadd.f32 %v4611, %v4612
      %v4614 = vsel %vm490, %v4545, 0.0
      %v4615 = vadd.f32 %v4613, %v4614
      %v4616 = vsel %vm490, %v4546, 0.0
      %v4617 = vadd.f32 %v4615, %v4616
      %v4618 = vsel %vm490, %v4547, 0.0
      %v4619 = vadd.f32 %v4617, %v4618
      %v4620 = vsel %vm490, %v4548, 0.0
      %v4621 = vadd.f32 %v4619, %v4620
      %v4622 = vsel %vm490, %v4549, 0.0
      %v4623 = vadd.f32 %v4621, %v4622
      %v4624 = vsel %vm490, %v4550, 0.0
      %v4625 = vadd.f32 %v4623, %v4624
      %v4626 = vsel %vm490, %v4551, 0.0
      %v4627 = vadd.f32 %v4625, %v4626
      %v4628 = vsel %vm490, %v4552, 0.0
      %v4629 = vadd.f32 %v4627, %v4628
      %v4630 = vsel %vm490, %v4553, 0.0
      %v4631 = vadd.f32 %v4629, %v4630
      %v4632 = vsel %vm490, %v4554, 0.0
      %v4633 = vadd.f32 %v4631, %v4632
      %v4634 = vsel %vm490, %v4555, 0.0
      %v4635 = vadd.f32 %v4633, %v4634
      %v4636 = vsel %vm490, %v4556, 0.0
      %v4637 = vadd.f32 %v4635, %v4636
      %v4638 = vsel %vm490, %v4557, 0.0
      %v4639 = vadd.f32 %v4637, %v4638
      %v4640 = vsel %vm490, %v4558, 0.0
      %v4641 = vadd.f32 %v4639, %v4640
      %v4642 = vsel %vm490, %v4559, 0.0
      %v4643 = vadd.f32 %v4641, %v4642
      %v4644 = vsel %vm490, %v4560, 0.0
      %v4645 = vadd.f32 %v4643, %v4644
      %v4646 = vsel %vm490, %v4561, 0.0
      %v4647 = vadd.f32 %v4645, %v4646
      %v4648 = vsel %vm490, %v4562, 0.0
      %v4649 = vadd.f32 %v4647, %v4648
      %v4650 = vsel %vm490, %v4563, 0.0
      %v4651 = vadd.f32 %v4649, %v4650
      %v4652 = vsel %vm490, %v4564, 0.0
      %v4653 = vadd.f32 %v4651, %v4652
      %v4654 = vsel %vm490, %v4565, 0.0
      %v4655 = vadd.f32 %v4653, %v4654
      %v4656 = vsel %vm490, %v4566, 0.0
      %v4657 = vadd.f32 %v4655, %v4656
      %v4658 = vsel %vm490, %v4567, 0.0
      %v4659 = vadd.f32 %v4657, %v4658
      %v4660 = vsel %vm490, %v4568, 0.0
      %v4661 = vadd.f32 %v4659, %v4660
      %v4662 = vsel %vm490, %v4569, 0.0
      %v4663 = vadd.f32 %v4661, %v4662
      %v4664 = vsel %vm490, %v4570, 0.0
      %v4665 = vadd.f32 %v4663, %v4664
      %v4666 = vsel %vm490, %v4571, 0.0
      %v4667 = vadd.f32 %v4665, %v4666
      %v4668 = vsel %vm490, %v4572, 0.0
      %v4669 = vadd.f32 %v4667, %v4668
      %v4670 = vsel %vm490, %v4573, 0.0
      %v4671 = vadd.f32 %v4669, %v4670
      %v4672 = vsel %vm490, %v4574, 0.0
      %v4673 = vadd.f32 %v4671, %v4672
      %v4674 = vsel %vm490, %v4575, 0.0
      %v4675 = vadd.f32 %v4673, %v4674
      %v4676 = vsel %vm490, %v4576, 0.0
      %v4677 = vadd.f32 %v4675, %v4676
      %v4678 = vsel %vm490, %v4577, 0.0
      %v4679 = vadd.f32 %v4677, %v4678
      %v4680 = vsel %vm490, %v4578, 0.0
      %v4681 = vadd.f32 %v4679, %v4680
      %v4682 = vsel %vm490, %v4579, 0.0
      %v4683 = vadd.f32 %v4681, %v4682
      %v4684 = vsel %vm490, %v4580, 0.0
      %v4685 = vadd.f32 %v4683, %v4684
      %v4686 = vsel %vm490, %v4581, 0.0
      %v4687 = vadd.f32 %v4685, %v4686
      %v4688 = vsel %vm490, %v4582, 0.0
      %v4689 = vadd.f32 %v4687, %v4688
      %v4690 = vsel %vm490, %v4583, 0.0
      %v4691 = vadd.f32 %v4689, %v4690
      %v4692 = vsel %vm490, %v4584, 0.0
      %v4693 = vadd.f32 %v4691, %v4692
      %v4694 = vsel %vm490, %v4585, 0.0
      %v4695 = vadd.f32 %v4693, %v4694
      %v4696 = vsel %vm490, %v4586, 0.0
      %v4697 = vadd.f32 %v4695, %v4696
      %v4698 = vsel %vm490, %v4587, 0.0
      %v4699 = vadd.f32 %v4697, %v4698
      %v4700 = vsel %vm490, %v4588, 0.0
      %v4701 = vadd.f32 %v4699, %v4700
      %v4702 = vsel %vm490, %v4589, 0.0
      %v4703 = vadd.f32 %v4701, %v4702
      %v4704 = vsel %vm490, %v4590, 0.0
      %v4705 = vadd.f32 %v4703, %v4704
      %v4706 = vsel %vm490, %v4591, 0.0
      %v4707 = vadd.f32 %v4705, %v4706
      %v4708 = vsel %vm490, %v4592, 0.0
      %v4709 = vadd.f32 %v4707, %v4708
      %v4710 = vsel %vm490, %v4593, 0.0
      %v4711 = vadd.f32 %v4709, %v4710
      %v4712 = vsel %vm490, %v4594, 0.0
      %v4713 = vadd.f32 %v4711, %v4712
      %v4714 = vsel %vm490, %v4595, 0.0
      %v4715 = vadd.f32 %v4713, %v4714
      %v4716 = vsel %vm490, %v4596, 0.0
      %v4717 = vadd.f32 %v4715, %v4716
      %v4718 = vsel %vm490, %v4597, 0.0
      %v4719 = vadd.f32 %v4717, %v4718
      %v4720 = vsel %vm490, %v4598, 0.0
      %v4721 = vadd.f32 %v4719, %v4720
      %v4722 = vsel %vm490, %v4599, 0.0
      %v4723 = vadd.f32 %v4721, %v4722
      %v4724 = vsel %vm490, %v4600, 0.0
      %v4725 = vadd.f32 %v4723, %v4724
      %v4726 = vsel %vm490, %v4601, 0.0
      %v4727 = vadd.f32 %v4725, %v4726
      %v4728 = vsel %vm490, %v4602, 0.0
      %v4729 = vadd.f32 %v4727, %v4728
      %v4730 = vrot.slane %v4729, 4
      %v4731 = vadd.f32 %v4729, %v4730
      %v4732 = vrot.slane %v4731, 2
      %v4733 = vadd.f32 %v4731, %v4732
      %v4734 = vrot.slane %v4733, 1
      %v4735 = vadd.f32 %v4733, %v4734
      %v4736 = vmul.f32 %v4538, 0.001953125
      %v4737 = vmul.f32 %v4735, 0.001953125
      %v4738 = vmul.f32 %v4736, %v4736
      %v4739 = vsub.f32 %v4737, %v4738
      %v4740 = vadd.f32 %v4739, 1e-05
      %v4741 = vrsqrt.pop %v4740
      %v4742 = vmul.f32 %v415, %v4741
      %v4743 = vmul.f32 %v4736, %v4742
      %v4745 = vrot.slane %v4743, 7
      %v4747 = vsub.f32 %v415, %v4745
      %v4748 = vlaneseq
      %v4749 = vshrl.u32 %v4748, 7
      %v4750 = vsub.s32 0, %v4749
      %v4751 = vrot.slane %v4742, %v4750
      %v4752 = vmul.f32 %v4088, %v4751
      %v4753 = vmul.f32 %v4093, %v4751
      %v4754 = vmul.f32 %v4098, %v4751
      %v4755 = vmul.f32 %v4103, %v4751
      %v4756 = vmul.f32 %v4108, %v4751
      %v4757 = vmul.f32 %v4113, %v4751
      %v4758 = vmul.f32 %v4118, %v4751
      %v4759 = vmul.f32 %v4123, %v4751
      %v4760 = vmul.f32 %v4128, %v4751
      %v4761 = vmul.f32 %v4133, %v4751
      %v4762 = vmul.f32 %v4138, %v4751
      %v4763 = vmul.f32 %v4143, %v4751
      %v4764 = vmul.f32 %v4148, %v4751
      %v4765 = vmul.f32 %v4153, %v4751
      %v4766 = vmul.f32 %v4158, %v4751
      %v4767 = vmul.f32 %v4163, %v4751
      %v4768 = vmul.f32 %v4168, %v4751
      %v4769 = vmul.f32 %v4173, %v4751
      %v4770 = vmul.f32 %v4178, %v4751
      %v4771 = vmul.f32 %v4183, %v4751
      %v4772 = vmul.f32 %v4188, %v4751
      %v4773 = vmul.f32 %v4193, %v4751
      %v4774 = vmul.f32 %v4198, %v4751
      %v4775 = vmul.f32 %v4203, %v4751
      %v4776 = vmul.f32 %v4208, %v4751
      %v4777 = vmul.f32 %v4213, %v4751
      %v4778 = vmul.f32 %v4218, %v4751
      %v4779 = vmul.f32 %v4223, %v4751
      %v4780 = vmul.f32 %v4228, %v4751
      %v4781 = vmul.f32 %v4233, %v4751
      %v4782 = vmul.f32 %v4238, %v4751
      %v4783 = vmul.f32 %v4243, %v4751
      %v4784 = vmul.f32 %v4248, %v4751
      %v4785 = vmul.f32 %v4253, %v4751
      %v4786 = vmul.f32 %v4258, %v4751
      %v4787 = vmul.f32 %v4263, %v4751
      %v4788 = vmul.f32 %v4268, %v4751
      %v4789 = vmul.f32 %v4273, %v4751
      %v4790 = vmul.f32 %v4278, %v4751
      %v4791 = vmul.f32 %v4283, %v4751
      %v4792 = vmul.f32 %v4288, %v4751
      %v4793 = vmul.f32 %v4293, %v4751
      %v4794 = vmul.f32 %v4298, %v4751
      %v4795 = vmul.f32 %v4303, %v4751
      %v4796 = vmul.f32 %v4308, %v4751
      %v4797 = vmul.f32 %v4313, %v4751
      %v4798 = vmul.f32 %v4318, %v4751
      %v4799 = vmul.f32 %v4323, %v4751
      %v4800 = vmul.f32 %v4328, %v4751
      %v4801 = vmul.f32 %v4333, %v4751
      %v4802 = vmul.f32 %v4338, %v4751
      %v4803 = vmul.f32 %v4343, %v4751
      %v4804 = vmul.f32 %v4348, %v4751
      %v4805 = vmul.f32 %v4353, %v4751
      %v4806 = vmul.f32 %v4358, %v4751
      %v4807 = vmul.f32 %v4363, %v4751
      %v4808 = vmul.f32 %v4368, %v4751
      %v4809 = vmul.f32 %v4373, %v4751
      %v4810 = vmul.f32 %v4378, %v4751
      %v4811 = vmul.f32 %v4383, %v4751
      %v4812 = vmul.f32 %v4388, %v4751
      %v4813 = vmul.f32 %v4393, %v4751
      %v4814 = vmul.f32 %v4398, %v4751
      %v4815 = vmul.f32 %v4403, %v4751
      %v4816 = vlaneseq
      %v4817 = vshrl.u32 %v4816, 7
      %v4818 = vsub.s32 1, %v4817
      %v4819 = vrot.slane %v4747, %v4818
      %v4820 = vadd.f32 %v4752, %v4819
      %v4821 = vadd.f32 %v4753, %v4819
      %v4822 = vadd.f32 %v4754, %v4819
      %v4823 = vadd.f32 %v4755, %v4819
      %v4824 = vadd.f32 %v4756, %v4819
      %v4825 = vadd.f32 %v4757, %v4819
      %v4826 = vadd.f32 %v4758, %v4819
      %v4827 = vadd.f32 %v4759, %v4819
      %v4828 = vadd.f32 %v4760, %v4819
      %v4829 = vadd.f32 %v4761, %v4819
      %v4830 = vadd.f32 %v4762, %v4819
      %v4831 = vadd.f32 %v4763, %v4819
      %v4832 = vadd.f32 %v4764, %v4819
      %v4833 = vadd.f32 %v4765, %v4819
      %v4834 = vadd.f32 %v4766, %v4819
      %v4835 = vadd.f32 %v4767, %v4819
      %v4836 = vadd.f32 %v4768, %v4819
      %v4837 = vadd.f32 %v4769, %v4819
      %v4838 = vadd.f32 %v4770, %v4819
      %v4839 = vadd.f32 %v4771, %v4819
      %v4840 = vadd.f32 %v4772, %v4819
      %v4841 = vadd.f32 %v4773, %v4819
      %v4842 = vadd.f32 %v4774, %v4819
      %v4843 = vadd.f32 %v4775, %v4819
      %v4844 = vadd.f32 %v4776, %v4819
      %v4845 = vadd.f32 %v4777, %v4819
      %v4846 = vadd.f32 %v4778, %v4819
      %v4847 = vadd.f32 %v4779, %v4819
      %v4848 = vadd.f32 %v4780, %v4819
      %v4849 = vadd.f32 %v4781, %v4819
      %v4850 = vadd.f32 %v4782, %v4819
      %v4851 = vadd.f32 %v4783, %v4819
      %v4852 = vadd.f32 %v4784, %v4819
      %v4853 = vadd.f32 %v4785, %v4819
      %v4854 = vadd.f32 %v4786, %v4819
      %v4855 = vadd.f32 %v4787, %v4819
      %v4856 = vadd.f32 %v4788, %v4819
      %v4857 = vadd.f32 %v4789, %v4819
      %v4858 = vadd.f32 %v4790, %v4819
      %v4859 = vadd.f32 %v4791, %v4819
      %v4860 = vadd.f32 %v4792, %v4819
      %v4861 = vadd.f32 %v4793, %v4819
      %v4862 = vadd.f32 %v4794, %v4819
      %v4863 = vadd.f32 %v4795, %v4819
      %v4864 = vadd.f32 %v4796, %v4819
      %v4865 = vadd.f32 %v4797, %v4819
      %v4866 = vadd.f32 %v4798, %v4819
      %v4867 = vadd.f32 %v4799, %v4819
      %v4868 = vadd.f32 %v4800, %v4819
      %v4869 = vadd.f32 %v4801, %v4819
      %v4870 = vadd.f32 %v4802, %v4819
      %v4871 = vadd.f32 %v4803, %v4819
      %v4872 = vadd.f32 %v4804, %v4819
      %v4873 = vadd.f32 %v4805, %v4819
      %v4874 = vadd.f32 %v4806, %v4819
      %v4875 = vadd.f32 %v4807, %v4819
      %v4876 = vadd.f32 %v4808, %v4819
      %v4877 = vadd.f32 %v4809, %v4819
      %v4878 = vadd.f32 %v4810, %v4819
      %v4879 = vadd.f32 %v4811, %v4819
      %v4880 = vadd.f32 %v4812, %v4819
      %v4881 = vadd.f32 %v4813, %v4819
      %v4882 = vadd.f32 %v4814, %v4819
      %v4883 = vadd.f32 %v4815, %v4819
      %v4884 = vmax.f32 %v4820, 0.0
      %v4885 = vmax.f32 %v4821, 0.0
      %v4886 = vmax.f32 %v4822, 0.0
      %v4887 = vmax.f32 %v4823, 0.0
      %v4888 = vmax.f32 %v4824, 0.0
      %v4889 = vmax.f32 %v4825, 0.0
      %v4890 = vmax.f32 %v4826, 0.0
      %v4891 = vmax.f32 %v4827, 0.0
      %v4892 = vmax.f32 %v4828, 0.0
      %v4893 = vmax.f32 %v4829, 0.0
      %v4894 = vmax.f32 %v4830, 0.0
      %v4895 = vmax.f32 %v4831, 0.0
      %v4896 = vmax.f32 %v4832, 0.0
      %v4897 = vmax.f32 %v4833, 0.0
      %v4898 = vmax.f32 %v4834, 0.0
      %v4899 = vmax.f32 %v4835, 0.0
      %v4900 = vmax.f32 %v4836, 0.0
      %v4901 = vmax.f32 %v4837, 0.0
      %v4902 = vmax.f32 %v4838, 0.0
      %v4903 = vmax.f32 %v4839, 0.0
      %v4904 = vmax.f32 %v4840, 0.0
      %v4905 = vmax.f32 %v4841, 0.0
      %v4906 = vmax.f32 %v4842, 0.0
      %v4907 = vmax.f32 %v4843, 0.0
      %v4908 = vmax.f32 %v4844, 0.0
      %v4909 = vmax.f32 %v4845, 0.0
      %v4910 = vmax.f32 %v4846, 0.0
      %v4911 = vmax.f32 %v4847, 0.0
      %v4912 = vmax.f32 %v4848, 0.0
      %v4913 = vmax.f32 %v4849, 0.0
      %v4914 = vmax.f32 %v4850, 0.0
      %v4915 = vmax.f32 %v4851, 0.0
      %v4916 = vmax.f32 %v4852, 0.0
      %v4917 = vmax.f32 %v4853, 0.0
      %v4918 = vmax.f32 %v4854, 0.0
      %v4919 = vmax.f32 %v4855, 0.0
      %v4920 = vmax.f32 %v4856, 0.0
      %v4921 = vmax.f32 %v4857, 0.0
      %v4922 = vmax.f32 %v4858, 0.0
      %v4923 = vmax.f32 %v4859, 0.0
      %v4924 = vmax.f32 %v4860, 0.0
      %v4925 = vmax.f32 %v4861, 0.0
      %v4926 = vmax.f32 %v4862, 0.0
      %v4927 = vmax.f32 %v4863, 0.0
      %v4928 = vmax.f32 %v4864, 0.0
      %v4929 = vmax.f32 %v4865, 0.0
      %v4930 = vmax.f32 %v4866, 0.0
      %v4931 = vmax.f32 %v4867, 0.0
      %v4932 = vmax.f32 %v4868, 0.0
      %v4933 = vmax.f32 %v4869, 0.0
      %v4934 = vmax.f32 %v4870, 0.0
      %v4935 = vmax.f32 %v4871, 0.0
      %v4936 = vmax.f32 %v4872, 0.0
      %v4937 = vmax.f32 %v4873, 0.0
      %v4938 = vmax.f32 %v4874, 0.0
      %v4939 = vmax.f32 %v4875, 0.0
      %v4940 = vmax.f32 %v4876, 0.0
      %v4941 = vmax.f32 %v4877, 0.0
      %v4942 = vmax.f32 %v4878, 0.0
      %v4943 = vmax.f32 %v4879, 0.0
      %v4944 = vmax.f32 %v4880, 0.0
      %v4945 = vmax.f32 %v4881, 0.0
      %v4946 = vmax.f32 %v4882, 0.0
      %v4947 = vmax.f32 %v4883, 0.0
      %v4948 = vand.u32 2147483647, %v4820
      %v4949 = vand.u32 2147483647, %v4821
      %v4950 = vand.u32 2147483647, %v4822
      %v4951 = vand.u32 2147483647, %v4823
      %v4952 = vand.u32 2147483647, %v4824
      %v4953 = vand.u32 2147483647, %v4825
      %v4954 = vand.u32 2147483647, %v4826
      %v4955 = vand.u32 2147483647, %v4827
      %v4956 = vand.u32 2147483647, %v4828
      %v4957 = vand.u32 2147483647, %v4829
      %v4958 = vand.u32 2147483647, %v4830
      %v4959 = vand.u32 2147483647, %v4831
      %v4960 = vand.u32 2147483647, %v4832
      %v4961 = vand.u32 2147483647, %v4833
      %v4962 = vand.u32 2147483647, %v4834
      %v4963 = vand.u32 2147483647, %v4835
      %v4964 = vand.u32 2147483647, %v4836
      %v4965 = vand.u32 2147483647, %v4837
      %v4966 = vand.u32 2147483647, %v4838
      %v4967 = vand.u32 2147483647, %v4839
      %v4968 = vand.u32 2147483647, %v4840
      %v4969 = vand.u32 2147483647, %v4841
      %v4970 = vand.u32 2147483647, %v4842
      %v4971 = vand.u32 2147483647, %v4843
      %v4972 = vand.u32 2147483647, %v4844
      %v4973 = vand.u32 2147483647, %v4845
      %v4974 = vand.u32 2147483647, %v4846
      %v4975 = vand.u32 2147483647, %v4847
      %v4976 = vand.u32 2147483647, %v4848
      %v4977 = vand.u32 2147483647, %v4849
      %v4978 = vand.u32 2147483647, %v4850
      %v4979 = vand.u32 2147483647, %v4851
      %v4980 = vand.u32 2147483647, %v4852
      %v4981 = vand.u32 2147483647, %v4853
      %v4982 = vand.u32 2147483647, %v4854
      %v4983 = vand.u32 2147483647, %v4855
      %v4984 = vand.u32 2147483647, %v4856
      %v4985 = vand.u32 2147483647, %v4857
      %v4986 = vand.u32 2147483647, %v4858
      %v4987 = vand.u32 2147483647, %v4859
      %v4988 = vand.u32 2147483647, %v4860
      %v4989 = vand.u32 2147483647, %v4861
      %v4990 = vand.u32 2147483647, %v4862
      %v4991 = vand.u32 2147483647, %v4863
      %v4992 = vand.u32 2147483647, %v4864
      %v4993 = vand.u32 2147483647, %v4865
      %v4994 = vand.u32 2147483647, %v4866
      %v4995 = vand.u32 2147483647, %v4867
      %v4996 = vand.u32 2147483647, %v4868
      %v4997 = vand.u32 2147483647, %v4869
      %v4998 = vand.u32 2147483647, %v4870
      %v4999 = vand.u32 2147483647, %v4871
      %v5000 = vand.u32 2147483647, %v4872
      %v5001 = vand.u32 2147483647, %v4873
      %v5002 = vand.u32 2147483647, %v4874
      %v5003 = vand.u32 2147483647, %v4875
      %v5004 = vand.u32 2147483647, %v4876
      %v5005 = vand.u32 2147483647, %v4877
      %v5006 = vand.u32 2147483647, %v4878
      %v5007 = vand.u32 2147483647, %v4879
      %v5008 = vand.u32 2147483647, %v4880
      %v5009 = vand.u32 2147483647, %v4881
      %v5010 = vand.u32 2147483647, %v4882
      %v5011 = vand.u32 2147483647, %v4883
      %v5012 = vsub.f32 0.0, %v4948
      %v5013 = vsub.f32 0.0, %v4949
      %v5014 = vsub.f32 0.0, %v4950
      %v5015 = vsub.f32 0.0, %v4951
      %v5016 = vsub.f32 0.0, %v4952
      %v5017 = vsub.f32 0.0, %v4953
      %v5018 = vsub.f32 0.0, %v4954
      %v5019 = vsub.f32 0.0, %v4955
      %v5020 = vsub.f32 0.0, %v4956
      %v5021 = vsub.f32 0.0, %v4957
      %v5022 = vsub.f32 0.0, %v4958
      %v5023 = vsub.f32 0.0, %v4959
      %v5024 = vsub.f32 0.0, %v4960
      %v5025 = vsub.f32 0.0, %v4961
      %v5026 = vsub.f32 0.0, %v4962
      %v5027 = vsub.f32 0.0, %v4963
      %v5028 = vsub.f32 0.0, %v4964
      %v5029 = vsub.f32 0.0, %v4965
      %v5030 = vsub.f32 0.0, %v4966
      %v5031 = vsub.f32 0.0, %v4967
      %v5032 = vsub.f32 0.0, %v4968
      %v5033 = vsub.f32 0.0, %v4969
      %v5034 = vsub.f32 0.0, %v4970
      %v5035 = vsub.f32 0.0, %v4971
      %v5036 = vsub.f32 0.0, %v4972
      %v5037 = vsub.f32 0.0, %v4973
      %v5038 = vsub.f32 0.0, %v4974
      %v5039 = vsub.f32 0.0, %v4975
      %v5040 = vsub.f32 0.0, %v4976
      %v5041 = vsub.f32 0.0, %v4977
      %v5042 = vsub.f32 0.0, %v4978
      %v5043 = vsub.f32 0.0, %v4979
      %v5044 = vsub.f32 0.0, %v4980
      %v5045 = vsub.f32 0.0, %v4981
      %v5046 = vsub.f32 0.0, %v4982
      %v5047 = vsub.f32 0.0, %v4983
      %v5048 = vsub.f32 0.0, %v4984
      %v5049 = vsub.f32 0.0, %v4985
      %v5050 = vsub.f32 0.0, %v4986
      %v5051 = vsub.f32 0.0, %v4987
      %v5052 = vsub.f32 0.0, %v4988
      %v5053 = vsub.f32 0.0, %v4989
      %v5054 = vsub.f32 0.0, %v4990
      %v5055 = vsub.f32 0.0, %v4991
      %v5056 = vsub.f32 0.0, %v4992
      %v5057 = vsub.f32 0.0, %v4993
      %v5058 = vsub.f32 0.0, %v4994
      %v5059 = vsub.f32 0.0, %v4995
      %v5060 = vsub.f32 0.0, %v4996
      %v5061 = vsub.f32 0.0, %v4997
      %v5062 = vsub.f32 0.0, %v4998
      %v5063 = vsub.f32 0.0, %v4999
      %v5064 = vsub.f32 0.0, %v5000
      %v5065 = vsub.f32 0.0, %v5001
      %v5066 = vsub.f32 0.0, %v5002
      %v5067 = vsub.f32 0.0, %v5003
      %v5068 = vsub.f32 0.0, %v5004
      %v5069 = vsub.f32 0.0, %v5005
      %v5070 = vsub.f32 0.0, %v5006
      %v5071 = vsub.f32 0.0, %v5007
      %v5072 = vsub.f32 0.0, %v5008
      %v5073 = vsub.f32 0.0, %v5009
      %v5074 = vsub.f32 0.0, %v5010
      %v5075 = vsub.f32 0.0, %v5011
      %v5076 = vmul.f32 %v5012, 1.442695
      %v5077 = vpow.pop %v5076
      %v5078 = vmul.f32 %v5013, 1.442695
      %v5079 = vpow.pop %v5078
      %v5080 = vmul.f32 %v5014, 1.442695
      %v5081 = vpow.pop %v5080
      %v5082 = vmul.f32 %v5015, 1.442695
      %v5083 = vpow.pop %v5082
      %v5084 = vmul.f32 %v5016, 1.442695
      %v5085 = vpow.pop %v5084
      %v5086 = vmul.f32 %v5017, 1.442695
      %v5087 = vpow.pop %v5086
      %v5088 = vmul.f32 %v5018, 1.442695
      %v5089 = vpow.pop %v5088
      %v5090 = vmul.f32 %v5019, 1.442695
      %v5091 = vpow.pop %v5090
      %v5092 = vmul.f32 %v5020, 1.442695
      %v5093 = vpow.pop %v5092
      %v5094 = vmul.f32 %v5021, 1.442695
      %v5095 = vpow.pop %v5094
      %v5096 = vmul.f32 %v5022, 1.442695
      %v5097 = vpow.pop %v5096
      %v5098 = vmul.f32 %v5023, 1.442695
      %v5099 = vpow.pop %v5098
      %v5100 = vmul.f32 %v5024, 1.442695
      %v5101 = vpow.pop %v5100
      %v5102 = vmul.f32 %v5025, 1.442695
      %v5103 = vpow.pop %v5102
      %v5104 = vmul.f32 %v5026, 1.442695
      %v5105 = vpow.pop %v5104
      %v5106 = vmul.f32 %v5027, 1.442695
      %v5107 = vpow.pop %v5106
      %v5108 = vmul.f32 %v5028, 1.442695
      %v5109 = vpow.pop %v5108
      %v5110 = vmul.f32 %v5029, 1.442695
      %v5111 = vpow.pop %v5110
      %v5112 = vmul.f32 %v5030, 1.442695
      %v5113 = vpow.pop %v5112
      %v5114 = vmul.f32 %v5031, 1.442695
      %v5115 = vpow.pop %v5114
      %v5116 = vmul.f32 %v5032, 1.442695
      %v5117 = vpow.pop %v5116
      %v5118 = vmul.f32 %v5033, 1.442695
      %v5119 = vpow.pop %v5118
      %v5120 = vmul.f32 %v5034, 1.442695
      %v5121 = vpow.pop %v5120
      %v5122 = vmul.f32 %v5035, 1.442695
      %v5123 = vpow.pop %v5122
      %v5124 = vmul.f32 %v5036, 1.442695
      %v5125 = vpow.pop %v5124
      %v5126 = vmul.f32 %v5037, 1.442695
      %v5127 = vpow.pop %v5126
      %v5128 = vmul.f32 %v5038, 1.442695
      %v5129 = vpow.pop %v5128
      %v5130 = vmul.f32 %v5039, 1.442695
      %v5131 = vpow.pop %v5130
      %v5132 = vmul.f32 %v5040, 1.442695
      %v5133 = vpow.pop %v5132
      %v5134 = vmul.f32 %v5041, 1.442695
      %v5135 = vpow.pop %v5134
      %v5136 = vmul.f32 %v5042, 1.442695
      %v5137 = vpow.pop %v5136
      %v5138 = vmul.f32 %v5043, 1.442695
      %v5139 = vpow.pop %v5138
      %v5140 = vmul.f32 %v5044, 1.442695
      %v5141 = vpow.pop %v5140
      %v5142 = vmul.f32 %v5045, 1.442695
      %v5143 = vpow.pop %v5142
      %v5144 = vmul.f32 %v5046, 1.442695
      %v5145 = vpow.pop %v5144
      %v5146 = vmul.f32 %v5047, 1.442695
      %v5147 = vpow.pop %v5146
      %v5148 = vmul.f32 %v5048, 1.442695
      %v5149 = vpow.pop %v5148
      %v5150 = vmul.f32 %v5049, 1.442695
      %v5151 = vpow.pop %v5150
      %v5152 = vmul.f32 %v5050, 1.442695
      %v5153 = vpow.pop %v5152
      %v5154 = vmul.f32 %v5051, 1.442695
      %v5155 = vpow.pop %v5154
      %v5156 = vmul.f32 %v5052, 1.442695
      %v5157 = vpow.pop %v5156
      %v5158 = vmul.f32 %v5053, 1.442695
      %v5159 = vpow.pop %v5158
      %v5160 = vmul.f32 %v5054, 1.442695
      %v5161 = vpow.pop %v5160
      %v5162 = vmul.f32 %v5055, 1.442695
      %v5163 = vpow.pop %v5162
      %v5164 = vmul.f32 %v5056, 1.442695
      %v5165 = vpow.pop %v5164
      %v5166 = vmul.f32 %v5057, 1.442695
      %v5167 = vpow.pop %v5166
      %v5168 = vmul.f32 %v5058, 1.442695
      %v5169 = vpow.pop %v5168
      %v5170 = vmul.f32 %v5059, 1.442695
      %v5171 = vpow.pop %v5170
      %v5172 = vmul.f32 %v5060, 1.442695
      %v5173 = vpow.pop %v5172
      %v5174 = vmul.f32 %v5061, 1.442695
      %v5175 = vpow.pop %v5174
      %v5176 = vmul.f32 %v5062, 1.442695
      %v5177 = vpow.pop %v5176
      %v5178 = vmul.f32 %v5063, 1.442695
      %v5179 = vpow.pop %v5178
      %v5180 = vmul.f32 %v5064, 1.442695
      %v5181 = vpow.pop %v5180
      %v5182 = vmul.f32 %v5065, 1.442695
      %v5183 = vpow.pop %v5182
      %v5184 = vmul.f32 %v5066, 1.442695
      %v5185 = vpow.pop %v5184
      %v5186 = vmul.f32 %v5067, 1.442695
      %v5187 = vpow.pop %v5186
      %v5188 = vmul.f32 %v5068, 1.442695
      %v5189 = vpow.pop %v5188
      %v5190 = vmul.f32 %v5069, 1.442695
      %v5191 = vpow.pop %v5190
      %v5192 = vmul.f32 %v5070, 1.442695
      %v5193 = vpow.pop %v5192
      %v5194 = vmul.f32 %v5071, 1.442695
      %v5195 = vpow.pop %v5194
      %v5196 = vmul.f32 %v5072, 1.442695
      %v5197 = vpow.pop %v5196
      %v5198 = vmul.f32 %v5073, 1.442695
      %v5199 = vpow.pop %v5198
      %v5200 = vmul.f32 %v5074, 1.442695
      %v5201 = vpow.pop %v5200
      %v5202 = vmul.f32 %v5075, 1.442695
      %v5203 = vpow.pop %v5202
      %v5204 = vadd.f32 %v5077, 1.0
      %v5205 = vlog2.pop %v5204
      %v5206 = vmul.f32 %v5205, 0.6931472
      %v5207 = vmul.f32 -0.5, %v5077
      %v5208 = vadd.f32 %v5207, 1.0
      %v5209 = vmul.f32 %v5208, %v5077
      %v5210 = vand.u32 2147483647, %v5077
      %vm5211 = vcmp.lt.f32.partialorder %v5210, 0.0004427343
      %v5212 = vsel %vm5211, %v5209, %v5206
      %v5213 = vadd.f32 %v5079, 1.0
      %v5214 = vlog2.pop %v5213
      %v5215 = vmul.f32 %v5214, 0.6931472
      %v5216 = vmul.f32 -0.5, %v5079
      %v5217 = vadd.f32 %v5216, 1.0
      %v5218 = vmul.f32 %v5217, %v5079
      %v5219 = vand.u32 2147483647, %v5079
      %vm5220 = vcmp.lt.f32.partialorder %v5219, 0.0004427343
      %v5221 = vsel %vm5220, %v5218, %v5215
      %v5222 = vadd.f32 %v5081, 1.0
      %v5223 = vlog2.pop %v5222
      %v5224 = vmul.f32 %v5223, 0.6931472
      %v5225 = vmul.f32 -0.5, %v5081
      %v5226 = vadd.f32 %v5225, 1.0
      %v5227 = vmul.f32 %v5226, %v5081
      %v5228 = vand.u32 2147483647, %v5081
      %vm5229 = vcmp.lt.f32.partialorder %v5228, 0.0004427343
      %v5230 = vsel %vm5229, %v5227, %v5224
      %v5231 = vadd.f32 %v5083, 1.0
      %v5232 = vlog2.pop %v5231
      %v5233 = vmul.f32 %v5232, 0.6931472
      %v5234 = vmul.f32 -0.5, %v5083
      %v5235 = vadd.f32 %v5234, 1.0
      %v5236 = vmul.f32 %v5235, %v5083
      %v5237 = vand.u32 2147483647, %v5083
      %vm5238 = vcmp.lt.f32.partialorder %v5237, 0.0004427343
      %v5239 = vsel %vm5238, %v5236, %v5233
      %v5240 = vadd.f32 %v5085, 1.0
      %v5241 = vlog2.pop %v5240
      %v5242 = vmul.f32 %v5241, 0.6931472
      %v5243 = vmul.f32 -0.5, %v5085
      %v5244 = vadd.f32 %v5243, 1.0
      %v5245 = vmul.f32 %v5244, %v5085
      %v5246 = vand.u32 2147483647, %v5085
      %vm5247 = vcmp.lt.f32.partialorder %v5246, 0.0004427343
      %v5248 = vsel %vm5247, %v5245, %v5242
      %v5249 = vadd.f32 %v5087, 1.0
      %v5250 = vlog2.pop %v5249
      %v5251 = vmul.f32 %v5250, 0.6931472
      %v5252 = vmul.f32 -0.5, %v5087
      %v5253 = vadd.f32 %v5252, 1.0
      %v5254 = vmul.f32 %v5253, %v5087
      %v5255 = vand.u32 2147483647, %v5087
      %vm5256 = vcmp.lt.f32.partialorder %v5255, 0.0004427343
      %v5257 = vsel %vm5256, %v5254, %v5251
      %v5258 = vadd.f32 %v5089, 1.0
      %v5259 = vlog2.pop %v5258
      %v5260 = vmul.f32 %v5259, 0.6931472
      %v5261 = vmul.f32 -0.5, %v5089
      %v5262 = vadd.f32 %v5261, 1.0
      %v5263 = vmul.f32 %v5262, %v5089
      %v5264 = vand.u32 2147483647, %v5089
      %vm5265 = vcmp.lt.f32.partialorder %v5264, 0.0004427343
      %v5266 = vsel %vm5265, %v5263, %v5260
      %v5267 = vadd.f32 %v5091, 1.0
      %v5268 = vlog2.pop %v5267
      %v5269 = vmul.f32 %v5268, 0.6931472
      %v5270 = vmul.f32 -0.5, %v5091
      %v5271 = vadd.f32 %v5270, 1.0
      %v5272 = vmul.f32 %v5271, %v5091
      %v5273 = vand.u32 2147483647, %v5091
      %vm5274 = vcmp.lt.f32.partialorder %v5273, 0.0004427343
      %v5275 = vsel %vm5274, %v5272, %v5269
      %v5276 = vadd.f32 %v5093, 1.0
      %v5277 = vlog2.pop %v5276
      %v5278 = vmul.f32 %v5277, 0.6931472
      %v5279 = vmul.f32 -0.5, %v5093
      %v5280 = vadd.f32 %v5279, 1.0
      %v5281 = vmul.f32 %v5280, %v5093
      %v5282 = vand.u32 2147483647, %v5093
      %vm5283 = vcmp.lt.f32.partialorder %v5282, 0.0004427343
      %v5284 = vsel %vm5283, %v5281, %v5278
      %v5285 = vadd.f32 %v5095, 1.0
      %v5286 = vlog2.pop %v5285
      %v5287 = vmul.f32 %v5286, 0.6931472
      %v5288 = vmul.f32 -0.5, %v5095
      %v5289 = vadd.f32 %v5288, 1.0
      %v5290 = vmul.f32 %v5289, %v5095
      %v5291 = vand.u32 2147483647, %v5095
      %vm5292 = vcmp.lt.f32.partialorder %v5291, 0.0004427343
      %v5293 = vsel %vm5292, %v5290, %v5287
      %v5294 = vadd.f32 %v5097, 1.0
      %v5295 = vlog2.pop %v5294
      %v5296 = vmul.f32 %v5295, 0.6931472
      %v5297 = vmul.f32 -0.5, %v5097
      %v5298 = vadd.f32 %v5297, 1.0
      %v5299 = vmul.f32 %v5298, %v5097
      %v5300 = vand.u32 2147483647, %v5097
      %vm5301 = vcmp.lt.f32.partialorder %v5300, 0.0004427343
      %v5302 = vsel %vm5301, %v5299, %v5296
      %v5303 = vadd.f32 %v5099, 1.0
      %v5304 = vlog2.pop %v5303
      %v5305 = vmul.f32 %v5304, 0.6931472
      %v5306 = vmul.f32 -0.5, %v5099
      %v5307 = vadd.f32 %v5306, 1.0
      %v5308 = vmul.f32 %v5307, %v5099
      %v5309 = vand.u32 2147483647, %v5099
      %vm5310 = vcmp.lt.f32.partialorder %v5309, 0.0004427343
      %v5311 = vsel %vm5310, %v5308, %v5305
      %v5312 = vadd.f32 %v5101, 1.0
      %v5313 = vlog2.pop %v5312
      %v5314 = vmul.f32 %v5313, 0.6931472
      %v5315 = vmul.f32 -0.5, %v5101
      %v5316 = vadd.f32 %v5315, 1.0
      %v5317 = vmul.f32 %v5316, %v5101
      %v5318 = vand.u32 2147483647, %v5101
      %vm5319 = vcmp.lt.f32.partialorder %v5318, 0.0004427343
      %v5320 = vsel %vm5319, %v5317, %v5314
      %v5321 = vadd.f32 %v5103, 1.0
      %v5322 = vlog2.pop %v5321
      %v5323 = vmul.f32 %v5322, 0.6931472
      %v5324 = vmul.f32 -0.5, %v5103
      %v5325 = vadd.f32 %v5324, 1.0
      %v5326 = vmul.f32 %v5325, %v5103
      %v5327 = vand.u32 2147483647, %v5103
      %vm5328 = vcmp.lt.f32.partialorder %v5327, 0.0004427343
      %v5329 = vsel %vm5328, %v5326, %v5323
      %v5330 = vadd.f32 %v5105, 1.0
      %v5331 = vlog2.pop %v5330
      %v5332 = vmul.f32 %v5331, 0.6931472
      %v5333 = vmul.f32 -0.5, %v5105
      %v5334 = vadd.f32 %v5333, 1.0
      %v5335 = vmul.f32 %v5334, %v5105
      %v5336 = vand.u32 2147483647, %v5105
      %vm5337 = vcmp.lt.f32.partialorder %v5336, 0.0004427343
      %v5338 = vsel %vm5337, %v5335, %v5332
      %v5339 = vadd.f32 %v5107, 1.0
      %v5340 = vlog2.pop %v5339
      %v5341 = vmul.f32 %v5340, 0.6931472
      %v5342 = vmul.f32 -0.5, %v5107
      %v5343 = vadd.f32 %v5342, 1.0
      %v5344 = vmul.f32 %v5343, %v5107
      %v5345 = vand.u32 2147483647, %v5107
      %vm5346 = vcmp.lt.f32.partialorder %v5345, 0.0004427343
      %v5347 = vsel %vm5346, %v5344, %v5341
      %v5348 = vadd.f32 %v5109, 1.0
      %v5349 = vlog2.pop %v5348
      %v5350 = vmul.f32 %v5349, 0.6931472
      %v5351 = vmul.f32 -0.5, %v5109
      %v5352 = vadd.f32 %v5351, 1.0
      %v5353 = vmul.f32 %v5352, %v5109
      %v5354 = vand.u32 2147483647, %v5109
      %vm5355 = vcmp.lt.f32.partialorder %v5354, 0.0004427343
      %v5356 = vsel %vm5355, %v5353, %v5350
      %v5357 = vadd.f32 %v5111, 1.0
      %v5358 = vlog2.pop %v5357
      %v5359 = vmul.f32 %v5358, 0.6931472
      %v5360 = vmul.f32 -0.5, %v5111
      %v5361 = vadd.f32 %v5360, 1.0
      %v5362 = vmul.f32 %v5361, %v5111
      %v5363 = vand.u32 2147483647, %v5111
      %vm5364 = vcmp.lt.f32.partialorder %v5363, 0.0004427343
      %v5365 = vsel %vm5364, %v5362, %v5359
      %v5366 = vadd.f32 %v5113, 1.0
      %v5367 = vlog2.pop %v5366
      %v5368 = vmul.f32 %v5367, 0.6931472
      %v5369 = vmul.f32 -0.5, %v5113
      %v5370 = vadd.f32 %v5369, 1.0
      %v5371 = vmul.f32 %v5370, %v5113
      %v5372 = vand.u32 2147483647, %v5113
      %vm5373 = vcmp.lt.f32.partialorder %v5372, 0.0004427343
      %v5374 = vsel %vm5373, %v5371, %v5368
      %v5375 = vadd.f32 %v5115, 1.0
      %v5376 = vlog2.pop %v5375
      %v5377 = vmul.f32 %v5376, 0.6931472
      %v5378 = vmul.f32 -0.5, %v5115
      %v5379 = vadd.f32 %v5378, 1.0
      %v5380 = vmul.f32 %v5379, %v5115
      %v5381 = vand.u32 2147483647, %v5115
      %vm5382 = vcmp.lt.f32.partialorder %v5381, 0.0004427343
      %v5383 = vsel %vm5382, %v5380, %v5377
      %v5384 = vadd.f32 %v5117, 1.0
      %v5385 = vlog2.pop %v5384
      %v5386 = vmul.f32 %v5385, 0.6931472
      %v5387 = vmul.f32 -0.5, %v5117
      %v5388 = vadd.f32 %v5387, 1.0
      %v5389 = vmul.f32 %v5388, %v5117
      %v5390 = vand.u32 2147483647, %v5117
      %vm5391 = vcmp.lt.f32.partialorder %v5390, 0.0004427343
      %v5392 = vsel %vm5391, %v5389, %v5386
      %v5393 = vadd.f32 %v5119, 1.0
      %v5394 = vlog2.pop %v5393
      %v5395 = vmul.f32 %v5394, 0.6931472
      %v5396 = vmul.f32 -0.5, %v5119
      %v5397 = vadd.f32 %v5396, 1.0
      %v5398 = vmul.f32 %v5397, %v5119
      %v5399 = vand.u32 2147483647, %v5119
      %vm5400 = vcmp.lt.f32.partialorder %v5399, 0.0004427343
      %v5401 = vsel %vm5400, %v5398, %v5395
      %v5402 = vadd.f32 %v5121, 1.0
      %v5403 = vlog2.pop %v5402
      %v5404 = vmul.f32 %v5403, 0.6931472
      %v5405 = vmul.f32 -0.5, %v5121
      %v5406 = vadd.f32 %v5405, 1.0
      %v5407 = vmul.f32 %v5406, %v5121
      %v5408 = vand.u32 2147483647, %v5121
      %vm5409 = vcmp.lt.f32.partialorder %v5408, 0.0004427343
      %v5410 = vsel %vm5409, %v5407, %v5404
      %v5411 = vadd.f32 %v5123, 1.0
      %v5412 = vlog2.pop %v5411
      %v5413 = vmul.f32 %v5412, 0.6931472
      %v5414 = vmul.f32 -0.5, %v5123
      %v5415 = vadd.f32 %v5414, 1.0
      %v5416 = vmul.f32 %v5415, %v5123
      %v5417 = vand.u32 2147483647, %v5123
      %vm5418 = vcmp.lt.f32.partialorder %v5417, 0.0004427343
      %v5419 = vsel %vm5418, %v5416, %v5413
      %v5420 = vadd.f32 %v5125, 1.0
      %v5421 = vlog2.pop %v5420
      %v5422 = vmul.f32 %v5421, 0.6931472
      %v5423 = vmul.f32 -0.5, %v5125
      %v5424 = vadd.f32 %v5423, 1.0
      %v5425 = vmul.f32 %v5424, %v5125
      %v5426 = vand.u32 2147483647, %v5125
      %vm5427 = vcmp.lt.f32.partialorder %v5426, 0.0004427343
      %v5428 = vsel %vm5427, %v5425, %v5422
      %v5429 = vadd.f32 %v5127, 1.0
      %v5430 = vlog2.pop %v5429
      %v5431 = vmul.f32 %v5430, 0.6931472
      %v5432 = vmul.f32 -0.5, %v5127
      %v5433 = vadd.f32 %v5432, 1.0
      %v5434 = vmul.f32 %v5433, %v5127
      %v5435 = vand.u32 2147483647, %v5127
      %vm5436 = vcmp.lt.f32.partialorder %v5435, 0.0004427343
      %v5437 = vsel %vm5436, %v5434, %v5431
      %v5438 = vadd.f32 %v5129, 1.0
      %v5439 = vlog2.pop %v5438
      %v5440 = vmul.f32 %v5439, 0.6931472
      %v5441 = vmul.f32 -0.5, %v5129
      %v5442 = vadd.f32 %v5441, 1.0
      %v5443 = vmul.f32 %v5442, %v5129
      %v5444 = vand.u32 2147483647, %v5129
      %vm5445 = vcmp.lt.f32.partialorder %v5444, 0.0004427343
      %v5446 = vsel %vm5445, %v5443, %v5440
      %v5447 = vadd.f32 %v5131, 1.0
      %v5448 = vlog2.pop %v5447
      %v5449 = vmul.f32 %v5448, 0.6931472
      %v5450 = vmul.f32 -0.5, %v5131
      %v5451 = vadd.f32 %v5450, 1.0
      %v5452 = vmul.f32 %v5451, %v5131
      %v5453 = vand.u32 2147483647, %v5131
      %vm5454 = vcmp.lt.f32.partialorder %v5453, 0.0004427343
      %v5455 = vsel %vm5454, %v5452, %v5449
      %v5456 = vadd.f32 %v5133, 1.0
      %v5457 = vlog2.pop %v5456
      %v5458 = vmul.f32 %v5457, 0.6931472
      %v5459 = vmul.f32 -0.5, %v5133
      %v5460 = vadd.f32 %v5459, 1.0
      %v5461 = vmul.f32 %v5460, %v5133
      %v5462 = vand.u32 2147483647, %v5133
      %vm5463 = vcmp.lt.f32.partialorder %v5462, 0.0004427343
      %v5464 = vsel %vm5463, %v5461, %v5458
      %v5465 = vadd.f32 %v5135, 1.0
      %v5466 = vlog2.pop %v5465
      %v5467 = vmul.f32 %v5466, 0.6931472
      %v5468 = vmul.f32 -0.5, %v5135
      %v5469 = vadd.f32 %v5468, 1.0
      %v5470 = vmul.f32 %v5469, %v5135
      %v5471 = vand.u32 2147483647, %v5135
      %vm5472 = vcmp.lt.f32.partialorder %v5471, 0.0004427343
      %v5473 = vsel %vm5472, %v5470, %v5467
      %v5474 = vadd.f32 %v5137, 1.0
      %v5475 = vlog2.pop %v5474
      %v5476 = vmul.f32 %v5475, 0.6931472
      %v5477 = vmul.f32 -0.5, %v5137
      %v5478 = vadd.f32 %v5477, 1.0
      %v5479 = vmul.f32 %v5478, %v5137
      %v5480 = vand.u32 2147483647, %v5137
      %vm5481 = vcmp.lt.f32.partialorder %v5480, 0.0004427343
      %v5482 = vsel %vm5481, %v5479, %v5476
      %v5483 = vadd.f32 %v5139, 1.0
      %v5484 = vlog2.pop %v5483
      %v5485 = vmul.f32 %v5484, 0.6931472
      %v5486 = vmul.f32 -0.5, %v5139
      %v5487 = vadd.f32 %v5486, 1.0
      %v5488 = vmul.f32 %v5487, %v5139
      %v5489 = vand.u32 2147483647, %v5139
      %vm5490 = vcmp.lt.f32.partialorder %v5489, 0.0004427343
      %v5491 = vsel %vm5490, %v5488, %v5485
      %v5492 = vadd.f32 %v5141, 1.0
      %v5493 = vlog2.pop %v5492
      %v5494 = vmul.f32 %v5493, 0.6931472
      %v5495 = vmul.f32 -0.5, %v5141
      %v5496 = vadd.f32 %v5495, 1.0
      %v5497 = vmul.f32 %v5496, %v5141
      %v5498 = vand.u32 2147483647, %v5141
      %vm5499 = vcmp.lt.f32.partialorder %v5498, 0.0004427343
      %v5500 = vsel %vm5499, %v5497, %v5494
      %v5501 = vadd.f32 %v5143, 1.0
      %v5502 = vlog2.pop %v5501
      %v5503 = vmul.f32 %v5502, 0.6931472
      %v5504 = vmul.f32 -0.5, %v5143
      %v5505 = vadd.f32 %v5504, 1.0
      %v5506 = vmul.f32 %v5505, %v5143
      %v5507 = vand.u32 2147483647, %v5143
      %vm5508 = vcmp.lt.f32.partialorder %v5507, 0.0004427343
      %v5509 = vsel %vm5508, %v5506, %v5503
      %v5510 = vadd.f32 %v5145, 1.0
      %v5511 = vlog2.pop %v5510
      %v5512 = vmul.f32 %v5511, 0.6931472
      %v5513 = vmul.f32 -0.5, %v5145
      %v5514 = vadd.f32 %v5513, 1.0
      %v5515 = vmul.f32 %v5514, %v5145
      %v5516 = vand.u32 2147483647, %v5145
      %vm5517 = vcmp.lt.f32.partialorder %v5516, 0.0004427343
      %v5518 = vsel %vm5517, %v5515, %v5512
      %v5519 = vadd.f32 %v5147, 1.0
      %v5520 = vlog2.pop %v5519
      %v5521 = vmul.f32 %v5520, 0.6931472
      %v5522 = vmul.f32 -0.5, %v5147
      %v5523 = vadd.f32 %v5522, 1.0
      %v5524 = vmul.f32 %v5523, %v5147
      %v5525 = vand.u32 2147483647, %v5147
      %vm5526 = vcmp.lt.f32.partialorder %v5525, 0.0004427343
      %v5527 = vsel %vm5526, %v5524, %v5521
      %v5528 = vadd.f32 %v5149, 1.0
      %v5529 = vlog2.pop %v5528
      %v5530 = vmul.f32 %v5529, 0.6931472
      %v5531 = vmul.f32 -0.5, %v5149
      %v5532 = vadd.f32 %v5531, 1.0
      %v5533 = vmul.f32 %v5532, %v5149
      %v5534 = vand.u32 2147483647, %v5149
      %vm5535 = vcmp.lt.f32.partialorder %v5534, 0.0004427343
      %v5536 = vsel %vm5535, %v5533, %v5530
      %v5537 = vadd.f32 %v5151, 1.0
      %v5538 = vlog2.pop %v5537
      %v5539 = vmul.f32 %v5538, 0.6931472
      %v5540 = vmul.f32 -0.5, %v5151
      %v5541 = vadd.f32 %v5540, 1.0
      %v5542 = vmul.f32 %v5541, %v5151
      %v5543 = vand.u32 2147483647, %v5151
      %vm5544 = vcmp.lt.f32.partialorder %v5543, 0.0004427343
      %v5545 = vsel %vm5544, %v5542, %v5539
      %v5546 = vadd.f32 %v5153, 1.0
      %v5547 = vlog2.pop %v5546
      %v5548 = vmul.f32 %v5547, 0.6931472
      %v5549 = vmul.f32 -0.5, %v5153
      %v5550 = vadd.f32 %v5549, 1.0
      %v5551 = vmul.f32 %v5550, %v5153
      %v5552 = vand.u32 2147483647, %v5153
      %vm5553 = vcmp.lt.f32.partialorder %v5552, 0.0004427343
      %v5554 = vsel %vm5553, %v5551, %v5548
      %v5555 = vadd.f32 %v5155, 1.0
      %v5556 = vlog2.pop %v5555
      %v5557 = vmul.f32 %v5556, 0.6931472
      %v5558 = vmul.f32 -0.5, %v5155
      %v5559 = vadd.f32 %v5558, 1.0
      %v5560 = vmul.f32 %v5559, %v5155
      %v5561 = vand.u32 2147483647, %v5155
      %vm5562 = vcmp.lt.f32.partialorder %v5561, 0.0004427343
      %v5563 = vsel %vm5562, %v5560, %v5557
      %v5564 = vadd.f32 %v5157, 1.0
      %v5565 = vlog2.pop %v5564
      %v5566 = vmul.f32 %v5565, 0.6931472
      %v5567 = vmul.f32 -0.5, %v5157
      %v5568 = vadd.f32 %v5567, 1.0
      %v5569 = vmul.f32 %v5568, %v5157
      %v5570 = vand.u32 2147483647, %v5157
      %vm5571 = vcmp.lt.f32.partialorder %v5570, 0.0004427343
      %v5572 = vsel %vm5571, %v5569, %v5566
      %v5573 = vadd.f32 %v5159, 1.0
      %v5574 = vlog2.pop %v5573
      %v5575 = vmul.f32 %v5574, 0.6931472
      %v5576 = vmul.f32 -0.5, %v5159
      %v5577 = vadd.f32 %v5576, 1.0
      %v5578 = vmul.f32 %v5577, %v5159
      %v5579 = vand.u32 2147483647, %v5159
      %vm5580 = vcmp.lt.f32.partialorder %v5579, 0.0004427343
      %v5581 = vsel %vm5580, %v5578, %v5575
      %v5582 = vadd.f32 %v5161, 1.0
      %v5583 = vlog2.pop %v5582
      %v5584 = vmul.f32 %v5583, 0.6931472
      %v5585 = vmul.f32 -0.5, %v5161
      %v5586 = vadd.f32 %v5585, 1.0
      %v5587 = vmul.f32 %v5586, %v5161
      %v5588 = vand.u32 2147483647, %v5161
      %vm5589 = vcmp.lt.f32.partialorder %v5588, 0.0004427343
      %v5590 = vsel %vm5589, %v5587, %v5584
      %v5591 = vadd.f32 %v5163, 1.0
      %v5592 = vlog2.pop %v5591
      %v5593 = vmul.f32 %v5592, 0.6931472
      %v5594 = vmul.f32 -0.5, %v5163
      %v5595 = vadd.f32 %v5594, 1.0
      %v5596 = vmul.f32 %v5595, %v5163
      %v5597 = vand.u32 2147483647, %v5163
      %vm5598 = vcmp.lt.f32.partialorder %v5597, 0.0004427343
      %v5599 = vsel %vm5598, %v5596, %v5593
      %v5600 = vadd.f32 %v5165, 1.0
      %v5601 = vlog2.pop %v5600
      %v5602 = vmul.f32 %v5601, 0.6931472
      %v5603 = vmul.f32 -0.5, %v5165
      %v5604 = vadd.f32 %v5603, 1.0
      %v5605 = vmul.f32 %v5604, %v5165
      %v5606 = vand.u32 2147483647, %v5165
      %vm5607 = vcmp.lt.f32.partialorder %v5606, 0.0004427343
      %v5608 = vsel %vm5607, %v5605, %v5602
      %v5609 = vadd.f32 %v5167, 1.0
      %v5610 = vlog2.pop %v5609
      %v5611 = vmul.f32 %v5610, 0.6931472
      %v5612 = vmul.f32 -0.5, %v5167
      %v5613 = vadd.f32 %v5612, 1.0
      %v5614 = vmul.f32 %v5613, %v5167
      %v5615 = vand.u32 2147483647, %v5167
      %vm5616 = vcmp.lt.f32.partialorder %v5615, 0.0004427343
      %v5617 = vsel %vm5616, %v5614, %v5611
      %v5618 = vadd.f32 %v5169, 1.0
      %v5619 = vlog2.pop %v5618
      %v5620 = vmul.f32 %v5619, 0.6931472
      %v5621 = vmul.f32 -0.5, %v5169
      %v5622 = vadd.f32 %v5621, 1.0
      %v5623 = vmul.f32 %v5622, %v5169
      %v5624 = vand.u32 2147483647, %v5169
      %vm5625 = vcmp.lt.f32.partialorder %v5624, 0.0004427343
      %v5626 = vsel %vm5625, %v5623, %v5620
      %v5627 = vadd.f32 %v5171, 1.0
      %v5628 = vlog2.pop %v5627
      %v5629 = vmul.f32 %v5628, 0.6931472
      %v5630 = vmul.f32 -0.5, %v5171
      %v5631 = vadd.f32 %v5630, 1.0
      %v5632 = vmul.f32 %v5631, %v5171
      %v5633 = vand.u32 2147483647, %v5171
      %vm5634 = vcmp.lt.f32.partialorder %v5633, 0.0004427343
      %v5635 = vsel %vm5634, %v5632, %v5629
      %v5636 = vadd.f32 %v5173, 1.0
      %v5637 = vlog2.pop %v5636
      %v5638 = vmul.f32 %v5637, 0.6931472
      %v5639 = vmul.f32 -0.5, %v5173
      %v5640 = vadd.f32 %v5639, 1.0
      %v5641 = vmul.f32 %v5640, %v5173
      %v5642 = vand.u32 2147483647, %v5173
      %vm5643 = vcmp.lt.f32.partialorder %v5642, 0.0004427343
      %v5644 = vsel %vm5643, %v5641, %v5638
      %v5645 = vadd.f32 %v5175, 1.0
      %v5646 = vlog2.pop %v5645
      %v5647 = vmul.f32 %v5646, 0.6931472
      %v5648 = vmul.f32 -0.5, %v5175
      %v5649 = vadd.f32 %v5648, 1.0
      %v5650 = vmul.f32 %v5649, %v5175
      %v5651 = vand.u32 2147483647, %v5175
      %vm5652 = vcmp.lt.f32.partialorder %v5651, 0.0004427343
      %v5653 = vsel %vm5652, %v5650, %v5647
      %v5654 = vadd.f32 %v5177, 1.0
      %v5655 = vlog2.pop %v5654
      %v5656 = vmul.f32 %v5655, 0.6931472
      %v5657 = vmul.f32 -0.5, %v5177
      %v5658 = vadd.f32 %v5657, 1.0
      %v5659 = vmul.f32 %v5658, %v5177
      %v5660 = vand.u32 2147483647, %v5177
      %vm5661 = vcmp.lt.f32.partialorder %v5660, 0.0004427343
      %v5662 = vsel %vm5661, %v5659, %v5656
      %v5663 = vadd.f32 %v5179, 1.0
      %v5664 = vlog2.pop %v5663
      %v5665 = vmul.f32 %v5664, 0.6931472
      %v5666 = vmul.f32 -0.5, %v5179
      %v5667 = vadd.f32 %v5666, 1.0
      %v5668 = vmul.f32 %v5667, %v5179
      %v5669 = vand.u32 2147483647, %v5179
      %vm5670 = vcmp.lt.f32.partialorder %v5669, 0.0004427343
      %v5671 = vsel %vm5670, %v5668, %v5665
      %v5672 = vadd.f32 %v5181, 1.0
      %v5673 = vlog2.pop %v5672
      %v5674 = vmul.f32 %v5673, 0.6931472
      %v5675 = vmul.f32 -0.5, %v5181
      %v5676 = vadd.f32 %v5675, 1.0
      %v5677 = vmul.f32 %v5676, %v5181
      %v5678 = vand.u32 2147483647, %v5181
      %vm5679 = vcmp.lt.f32.partialorder %v5678, 0.0004427343
      %v5680 = vsel %vm5679, %v5677, %v5674
      %v5681 = vadd.f32 %v5183, 1.0
      %v5682 = vlog2.pop %v5681
      %v5683 = vmul.f32 %v5682, 0.6931472
      %v5684 = vmul.f32 -0.5, %v5183
      %v5685 = vadd.f32 %v5684, 1.0
      %v5686 = vmul.f32 %v5685, %v5183
      %v5687 = vand.u32 2147483647, %v5183
      %vm5688 = vcmp.lt.f32.partialorder %v5687, 0.0004427343
      %v5689 = vsel %vm5688, %v5686, %v5683
      %v5690 = vadd.f32 %v5185, 1.0
      %v5691 = vlog2.pop %v5690
      %v5692 = vmul.f32 %v5691, 0.6931472
      %v5693 = vmul.f32 -0.5, %v5185
      %v5694 = vadd.f32 %v5693, 1.0
      %v5695 = vmul.f32 %v5694, %v5185
      %v5696 = vand.u32 2147483647, %v5185
      %vm5697 = vcmp.lt.f32.partialorder %v5696, 0.0004427343
      %v5698 = vsel %vm5697, %v5695, %v5692
      %v5699 = vadd.f32 %v5187, 1.0
      %v5700 = vlog2.pop %v5699
      %v5701 = vmul.f32 %v5700, 0.6931472
      %v5702 = vmul.f32 -0.5, %v5187
      %v5703 = vadd.f32 %v5702, 1.0
      %v5704 = vmul.f32 %v5703, %v5187
      %v5705 = vand.u32 2147483647, %v5187
      %vm5706 = vcmp.lt.f32.partialorder %v5705, 0.0004427343
      %v5707 = vsel %vm5706, %v5704, %v5701
      %v5708 = vadd.f32 %v5189, 1.0
      %v5709 = vlog2.pop %v5708
      %v5710 = vmul.f32 %v5709, 0.6931472
      %v5711 = vmul.f32 -0.5, %v5189
      %v5712 = vadd.f32 %v5711, 1.0
      %v5713 = vmul.f32 %v5712, %v5189
      %v5714 = vand.u32 2147483647, %v5189
      %vm5715 = vcmp.lt.f32.partialorder %v5714, 0.0004427343
      %v5716 = vsel %vm5715, %v5713, %v5710
      %v5717 = vadd.f32 %v5191, 1.0
      %v5718 = vlog2.pop %v5717
      %v5719 = vmul.f32 %v5718, 0.6931472
      %v5720 = vmul.f32 -0.5, %v5191
      %v5721 = vadd.f32 %v5720, 1.0
      %v5722 = vmul.f32 %v5721, %v5191
      %v5723 = vand.u32 2147483647, %v5191
      %vm5724 = vcmp.lt.f32.partialorder %v5723, 0.0004427343
      %v5725 = vsel %vm5724, %v5722, %v5719
      %v5726 = vadd.f32 %v5193, 1.0
      %v5727 = vlog2.pop %v5726
      %v5728 = vmul.f32 %v5727, 0.6931472
      %v5729 = vmul.f32 -0.5, %v5193
      %v5730 = vadd.f32 %v5729, 1.0
      %v5731 = vmul.f32 %v5730, %v5193
      %v5732 = vand.u32 2147483647, %v5193
      %vm5733 = vcmp.lt.f32.partialorder %v5732, 0.0004427343
      %v5734 = vsel %vm5733, %v5731, %v5728
      %v5735 = vadd.f32 %v5195, 1.0
      %v5736 = vlog2.pop %v5735
      %v5737 = vmul.f32 %v5736, 0.6931472
      %v5738 = vmul.f32 -0.5, %v5195
      %v5739 = vadd.f32 %v5738, 1.0
      %v5740 = vmul.f32 %v5739, %v5195
      %v5741 = vand.u32 2147483647, %v5195
      %vm5742 = vcmp.lt.f32.partialorder %v5741, 0.0004427343
      %v5743 = vsel %vm5742, %v5740, %v5737
      %v5744 = vadd.f32 %v5197, 1.0
      %v5745 = vlog2.pop %v5744
      %v5746 = vmul.f32 %v5745, 0.6931472
      %v5747 = vmul.f32 -0.5, %v5197
      %v5748 = vadd.f32 %v5747, 1.0
      %v5749 = vmul.f32 %v5748, %v5197
      %v5750 = vand.u32 2147483647, %v5197
      %vm5751 = vcmp.lt.f32.partialorder %v5750, 0.0004427343
      %v5752 = vsel %vm5751, %v5749, %v5746
      %v5753 = vadd.f32 %v5199, 1.0
      %v5754 = vlog2.pop %v5753
      %v5755 = vmul.f32 %v5754, 0.6931472
      %v5756 = vmul.f32 -0.5, %v5199
      %v5757 = vadd.f32 %v5756, 1.0
      %v5758 = vmul.f32 %v5757, %v5199
      %v5759 = vand.u32 2147483647, %v5199
      %vm5760 = vcmp.lt.f32.partialorder %v5759, 0.0004427343
      %v5761 = vsel %vm5760, %v5758, %v5755
      %v5762 = vadd.f32 %v5201, 1.0
      %v5763 = vlog2.pop %v5762
      %v5764 = vmul.f32 %v5763, 0.6931472
      %v5765 = vmul.f32 -0.5, %v5201
      %v5766 = vadd.f32 %v5765, 1.0
      %v5767 = vmul.f32 %v5766, %v5201
      %v5768 = vand.u32 2147483647, %v5201
      %vm5769 = vcmp.lt.f32.partialorder %v5768, 0.0004427343
      %v5770 = vsel %vm5769, %v5767, %v5764
      %v5771 = vadd.f32 %v5203, 1.0
      %v5772 = vlog2.pop %v5771
      %v5773 = vmul.f32 %v5772, 0.6931472
      %v5774 = vmul.f32 -0.5, %v5203
      %v5775 = vadd.f32 %v5774, 1.0
      %v5776 = vmul.f32 %v5775, %v5203
      %v5777 = vand.u32 2147483647, %v5203
      %vm5778 = vcmp.lt.f32.partialorder %v5777, 0.0004427343
      %v5779 = vsel %vm5778, %v5776, %v5773
      %v5780 = vadd.f32 %v4884, %v5212
      %v5781 = vadd.f32 %v4885, %v5221
      %v5782 = vadd.f32 %v4886, %v5230
      %v5783 = vadd.f32 %v4887, %v5239
      %v5784 = vadd.f32 %v4888, %v5248
      %v5785 = vadd.f32 %v4889, %v5257
      %v5786 = vadd.f32 %v4890, %v5266
      %v5787 = vadd.f32 %v4891, %v5275
      %v5788 = vadd.f32 %v4892, %v5284
      %v5789 = vadd.f32 %v4893, %v5293
      %v5790 = vadd.f32 %v4894, %v5302
      %v5791 = vadd.f32 %v4895, %v5311
      %v5792 = vadd.f32 %v4896, %v5320
      %v5793 = vadd.f32 %v4897, %v5329
      %v5794 = vadd.f32 %v4898, %v5338
      %v5795 = vadd.f32 %v4899, %v5347
      %v5796 = vadd.f32 %v4900, %v5356
      %v5797 = vadd.f32 %v4901, %v5365
      %v5798 = vadd.f32 %v4902, %v5374
      %v5799 = vadd.f32 %v4903, %v5383
      %v5800 = vadd.f32 %v4904, %v5392
      %v5801 = vadd.f32 %v4905, %v5401
      %v5802 = vadd.f32 %v4906, %v5410
      %v5803 = vadd.f32 %v4907, %v5419
      %v5804 = vadd.f32 %v4908, %v5428
      %v5805 = vadd.f32 %v4909, %v5437
      %v5806 = vadd.f32 %v4910, %v5446
      %v5807 = vadd.f32 %v4911, %v5455
      %v5808 = vadd.f32 %v4912, %v5464
      %v5809 = vadd.f32 %v4913, %v5473
      %v5810 = vadd.f32 %v4914, %v5482
      %v5811 = vadd.f32 %v4915, %v5491
      %v5812 = vadd.f32 %v4916, %v5500
      %v5813 = vadd.f32 %v4917, %v5509
      %v5814 = vadd.f32 %v4918, %v5518
      %v5815 = vadd.f32 %v4919, %v5527
      %v5816 = vadd.f32 %v4920, %v5536
      %v5817 = vadd.f32 %v4921, %v5545
      %v5818 = vadd.f32 %v4922, %v5554
      %v5819 = vadd.f32 %v4923, %v5563
      %v5820 = vadd.f32 %v4924, %v5572
      %v5821 = vadd.f32 %v4925, %v5581
      %v5822 = vadd.f32 %v4926, %v5590
      %v5823 = vadd.f32 %v4927, %v5599
      %v5824 = vadd.f32 %v4928, %v5608
      %v5825 = vadd.f32 %v4929, %v5617
      %v5826 = vadd.f32 %v4930, %v5626
      %v5827 = vadd.f32 %v4931, %v5635
      %v5828 = vadd.f32 %v4932, %v5644
      %v5829 = vadd.f32 %v4933, %v5653
      %v5830 = vadd.f32 %v4934, %v5662
      %v5831 = vadd.f32 %v4935, %v5671
      %v5832 = vadd.f32 %v4936, %v5680
      %v5833 = vadd.f32 %v4937, %v5689
      %v5834 = vadd.f32 %v4938, %v5698
      %v5835 = vadd.f32 %v4939, %v5707
      %v5836 = vadd.f32 %v4940, %v5716
      %v5837 = vadd.f32 %v4941, %v5725
      %v5838 = vadd.f32 %v4942, %v5734
      %v5839 = vadd.f32 %v4943, %v5743
      %v5840 = vadd.f32 %v4944, %v5752
      %v5841 = vadd.f32 %v4945, %v5761
      %v5842 = vadd.f32 %v4946, %v5770
      %v5843 = vadd.f32 %v4947, %v5779
      %v5844 = vtanh.pop %v5780
      %v5845 = vtanh.pop %v5781
      %v5846 = vtanh.pop %v5782
      %v5847 = vtanh.pop %v5783
      %v5848 = vtanh.pop %v5784
      %v5849 = vtanh.pop %v5785
      %v5850 = vtanh.pop %v5786
      %v5851 = vtanh.pop %v5787
      %v5852 = vtanh.pop %v5788
      %v5853 = vtanh.pop %v5789
      %v5854 = vtanh.pop %v5790
      %v5855 = vtanh.pop %v5791
      %v5856 = vtanh.pop %v5792
      %v5857 = vtanh.pop %v5793
      %v5858 = vtanh.pop %v5794
      %v5859 = vtanh.pop %v5795
      %v5860 = vtanh.pop %v5796
      %v5861 = vtanh.pop %v5797
      %v5862 = vtanh.pop %v5798
      %v5863 = vtanh.pop %v5799
      %v5864 = vtanh.pop %v5800
      %v5865 = vtanh.pop %v5801
      %v5866 = vtanh.pop %v5802
      %v5867 = vtanh.pop %v5803
      %v5868 = vtanh.pop %v5804
      %v5869 = vtanh.pop %v5805
      %v5870 = vtanh.pop %v5806
      %v5871 = vtanh.pop %v5807
      %v5872 = vtanh.pop %v5808
      %v5873 = vtanh.pop %v5809
      %v5874 = vtanh.pop %v5810
      %v5875 = vtanh.pop %v5811
      %v5876 = vtanh.pop %v5812
      %v5877 = vtanh.pop %v5813
      %v5878 = vtanh.pop %v5814
      %v5879 = vtanh.pop %v5815
      %v5880 = vtanh.pop %v5816
      %v5881 = vtanh.pop %v5817
      %v5882 = vtanh.pop %v5818
      %v5883 = vtanh.pop %v5819
      %v5884 = vtanh.pop %v5820
      %v5885 = vtanh.pop %v5821
      %v5886 = vtanh.pop %v5822
      %v5887 = vtanh.pop %v5823
      %v5888 = vtanh.pop %v5824
      %v5889 = vtanh.pop %v5825
      %v5890 = vtanh.pop %v5826
      %v5891 = vtanh.pop %v5827
      %v5892 = vtanh.pop %v5828
      %v5893 = vtanh.pop %v5829
      %v5894 = vtanh.pop %v5830
      %v5895 = vtanh.pop %v5831
      %v5896 = vtanh.pop %v5832
      %v5897 = vtanh.pop %v5833
      %v5898 = vtanh.pop %v5834
      %v5899 = vtanh.pop %v5835
      %v5900 = vtanh.pop %v5836
      %v5901 = vtanh.pop %v5837
      %v5902 = vtanh.pop %v5838
      %v5903 = vtanh.pop %v5839
      %v5904 = vtanh.pop %v5840
      %v5905 = vtanh.pop %v5841
      %v5906 = vtanh.pop %v5842
      %v5907 = vtanh.pop %v5843
      %v5908 = vmul.f32 %v4820, %v5844
      %v5909 = vmul.f32 %v4821, %v5845
      %v5910 = vmul.f32 %v4822, %v5846
      %v5911 = vmul.f32 %v4823, %v5847
      %v5912 = vmul.f32 %v4824, %v5848
      %v5913 = vmul.f32 %v4825, %v5849
      %v5914 = vmul.f32 %v4826, %v5850
      %v5915 = vmul.f32 %v4827, %v5851
      %v5916 = vmul.f32 %v4828, %v5852
      %v5917 = vmul.f32 %v4829, %v5853
      %v5918 = vmul.f32 %v4830, %v5854
      %v5919 = vmul.f32 %v4831, %v5855
      %v5920 = vmul.f32 %v4832, %v5856
      %v5921 = vmul.f32 %v4833, %v5857
      %v5922 = vmul.f32 %v4834, %v5858
      %v5923 = vmul.f32 %v4835, %v5859
      %v5924 = vmul.f32 %v4836, %v5860
      %v5925 = vmul.f32 %v4837, %v5861
      %v5926 = vmul.f32 %v4838, %v5862
      %v5927 = vmul.f32 %v4839, %v5863
      %v5928 = vmul.f32 %v4840, %v5864
      %v5929 = vmul.f32 %v4841, %v5865
      %v5930 = vmul.f32 %v4842, %v5866
      %v5931 = vmul.f32 %v4843, %v5867
      %v5932 = vmul.f32 %v4844, %v5868
      %v5933 = vmul.f32 %v4845, %v5869
      %v5934 = vmul.f32 %v4846, %v5870
      %v5935 = vmul.f32 %v4847, %v5871
      %v5936 = vmul.f32 %v4848, %v5872
      %v5937 = vmul.f32 %v4849, %v5873
      %v5938 = vmul.f32 %v4850, %v5874
      %v5939 = vmul.f32 %v4851, %v5875
      %v5940 = vmul.f32 %v4852, %v5876
      %v5941 = vmul.f32 %v4853, %v5877
      %v5942 = vmul.f32 %v4854, %v5878
      %v5943 = vmul.f32 %v4855, %v5879
      %v5944 = vmul.f32 %v4856, %v5880
      %v5945 = vmul.f32 %v4857, %v5881
      %v5946 = vmul.f32 %v4858, %v5882
      %v5947 = vmul.f32 %v4859, %v5883
      %v5948 = vmul.f32 %v4860, %v5884
      %v5949 = vmul.f32 %v4861, %v5885
      %v5950 = vmul.f32 %v4862, %v5886
      %v5951 = vmul.f32 %v4863, %v5887
      %v5952 = vmul.f32 %v4864, %v5888
      %v5953 = vmul.f32 %v4865, %v5889
      %v5954 = vmul.f32 %v4866, %v5890
      %v5955 = vmul.f32 %v4867, %v5891
      %v5956 = vmul.f32 %v4868, %v5892
      %v5957 = vmul.f32 %v4869, %v5893
      %v5958 = vmul.f32 %v4870, %v5894
      %v5959 = vmul.f32 %v4871, %v5895
      %v5960 = vmul.f32 %v4872, %v5896
      %v5961 = vmul.f32 %v4873, %v5897
      %v5962 = vmul.f32 %v4874, %v5898
      %v5963 = vmul.f32 %v4875, %v5899
      %v5964 = vmul.f32 %v4876, %v5900
      %v5965 = vmul.f32 %v4877, %v5901
      %v5966 = vmul.f32 %v4878, %v5902
      %v5967 = vmul.f32 %v4879, %v5903
      %v5968 = vmul.f32 %v4880, %v5904
      %v5969 = vmul.f32 %v4881, %v5905
      %v5970 = vmul.f32 %v4882, %v5906
      %v5971 = vmul.f32 %v4883, %v5907
      %s5972 = scalar_lea.vmem %s168, 72
      %v5973 = vld [vmem:[%s5972] sm:$0xff]
      %v5974 = vld [vmem:[%s5972 + $0x8] sm:$0xff]
      %v5975 = vld [vmem:[%s5972 + $0x10] sm:$0xff]
      %v5976 = vld [vmem:[%s5972 + $0x18] sm:$0xff]
      %v5977 = vld [vmem:[%s5972 + $0x20] sm:$0xff]
      %v5978 = vld [vmem:[%s5972 + $0x28] sm:$0xff]
      %v5979 = vld [vmem:[%s5972 + $0x30] sm:$0xff]
      %v5980 = vld [vmem:[%s5972 + $0x38] sm:$0xff]
      %v5981 = vld [vmem:[%s5972 + $0x40] sm:$0xff]
      %5982 = vst.msk [vmem:[%s489 + $0x1] sm:$0xff] %vm490, %v5908
      %5983 = vst.msk [vmem:[%s489 + $0x9] sm:$0xff] %vm490, %v5909
      %5984 = vst.msk [vmem:[%s489 + $0x19] sm:$0xff] %vm490, %v5910
      %5985 = vst.msk [vmem:[%s489 + $0x21] sm:$0xff] %vm490, %v5911
      %5986 = vst.msk [vmem:[%s489 + $0x31] sm:$0xff] %vm490, %v5912
      %5987 = vst.msk [vmem:[%s489 + $0x39] sm:$0xff] %vm490, %v5913
      %5988 = vst.msk [vmem:[%s489 + $0x49] sm:$0xff] %vm490, %v5914
      %5989 = vst.msk [vmem:[%s489 + $0x51] sm:$0xff] %vm490, %v5915
      %5990 = vst.msk [vmem:[%s489 + $0x61] sm:$0xff] %vm490, %v5916
      %5991 = vst.msk [vmem:[%s489 + $0x69] sm:$0xff] %vm490, %v5917
      %5992 = vst.msk [vmem:[%s489 + $0x79] sm:$0xff] %vm490, %v5918
      %5993 = vst.msk [vmem:[%s489 + $0x81] sm:$0xff] %vm490, %v5919
      %5994 = vst.msk [vmem:[%s489 + $0x91] sm:$0xff] %vm490, %v5920
      %5995 = vst.msk [vmem:[%s489 + $0x99] sm:$0xff] %vm490, %v5921
      %5996 = vst.msk [vmem:[%s489 + $0xa9] sm:$0xff] %vm490, %v5922
      %5997 = vst.msk [vmem:[%s489 + $0xb1] sm:$0xff] %vm490, %v5923
      %5998 = vst.msk [vmem:[%s489 + $0xc1] sm:$0xff] %vm490, %v5924
      %5999 = vst.msk [vmem:[%s489 + $0xc9] sm:$0xff] %vm490, %v5925
      %6000 = vst.msk [vmem:[%s489 + $0xd9] sm:$0xff] %vm490, %v5926
      %6001 = vst.msk [vmem:[%s489 + $0xe1] sm:$0xff] %vm490, %v5927
      %6002 = vst.msk [vmem:[%s489 + $0xf1] sm:$0xff] %vm490, %v5928
      %6003 = vst.msk [vmem:[%s489 + $0xf9] sm:$0xff] %vm490, %v5929
      %6004 = vst.msk [vmem:[%s489 + $0x109] sm:$0xff] %vm490, %v5930
      %6005 = vst.msk [vmem:[%s489 + $0x111] sm:$0xff] %vm490, %v5931
      %6006 = vst.msk [vmem:[%s489 + $0x121] sm:$0xff] %vm490, %v5932
      %6007 = vst.msk [vmem:[%s489 + $0x129] sm:$0xff] %vm490, %v5933
      %6008 = vst.msk [vmem:[%s489 + $0x139] sm:$0xff] %vm490, %v5934
      %6009 = vst.msk [vmem:[%s489 + $0x141] sm:$0xff] %vm490, %v5935
      %6010 = vst.msk [vmem:[%s489 + $0x151] sm:$0xff] %vm490, %v5936
      %6011 = vst.msk [vmem:[%s489 + $0x159] sm:$0xff] %vm490, %v5937
      %6012 = vst.msk [vmem:[%s489 + $0x169] sm:$0xff] %vm490, %v5938
      %6013 = vst.msk [vmem:[%s489 + $0x171] sm:$0xff] %vm490, %v5939
      %6014 = vst.msk [vmem:[%s489 + $0x1b1] sm:$0xff] %vm490, %v5940
      %6015 = vst.msk [vmem:[%s489 + $0x1b9] sm:$0xff] %vm490, %v5941
      %6016 = vst.msk [vmem:[%s489 + $0x1c9] sm:$0xff] %vm490, %v5942
      %6017 = vst.msk [vmem:[%s489 + $0x1d1] sm:$0xff] %vm490, %v5943
      %6018 = vst.msk [vmem:[%s489 + $0x1e1] sm:$0xff] %vm490, %v5944
      %6019 = vst.msk [vmem:[%s489 + $0x1e9] sm:$0xff] %vm490, %v5945
      %6020 = vst.msk [vmem:[%s489 + $0x1f9] sm:$0xff] %vm490, %v5946
      %6021 = vst.msk [vmem:[%s489 + $0x201] sm:$0xff] %vm490, %v5947
      %6022 = vst.msk [vmem:[%s489 + $0x211] sm:$0xff] %vm490, %v5948
      %6023 = vst.msk [vmem:[%s489 + $0x219] sm:$0xff] %vm490, %v5949
      %6024 = vst.msk [vmem:[%s489 + $0x229] sm:$0xff] %vm490, %v5950
      %6025 = vst.msk [vmem:[%s489 + $0x231] sm:$0xff] %vm490, %v5951
      %6026 = vst.msk [vmem:[%s489 + $0x241] sm:$0xff] %vm490, %v5952
      %6027 = vst.msk [vmem:[%s489 + $0x249] sm:$0xff] %vm490, %v5953
      %6028 = vst.msk [vmem:[%s489 + $0x259] sm:$0xff] %vm490, %v5954
      %6029 = vst.msk [vmem:[%s489 + $0x261] sm:$0xff] %vm490, %v5955
      %6030 = vst.msk [vmem:[%s489 + $0x271] sm:$0xff] %vm490, %v5956
      %6031 = vst.msk [vmem:[%s489 + $0x279] sm:$0xff] %vm490, %v5957
      %6032 = vst.msk [vmem:[%s489 + $0x289] sm:$0xff] %vm490, %v5958
      %6033 = vst.msk [vmem:[%s489 + $0x291] sm:$0xff] %vm490, %v5959
      %6034 = vst.msk [vmem:[%s489 + $0x2a1] sm:$0xff] %vm490, %v5960
      %6035 = vst.msk [vmem:[%s489 + $0x2a9] sm:$0xff] %vm490, %v5961
      %6036 = vst.msk [vmem:[%s489 + $0x2b9] sm:$0xff] %vm490, %v5962
      %6037 = vst.msk [vmem:[%s489 + $0x2c1] sm:$0xff] %vm490, %v5963
      %6038 = vst.msk [vmem:[%s489 + $0x2d1] sm:$0xff] %vm490, %v5964
      %6039 = vst.msk [vmem:[%s489 + $0x2d9] sm:$0xff] %vm490, %v5965
      %6040 = vst.msk [vmem:[%s489 + $0x2e9] sm:$0xff] %vm490, %v5966
      %6041 = vst.msk [vmem:[%s489 + $0x2f1] sm:$0xff] %vm490, %v5967
      %6042 = vst.msk [vmem:[%s489 + $0x301] sm:$0xff] %vm490, %v5968
      %6043 = vst.msk [vmem:[%s489 + $0x309] sm:$0xff] %vm490, %v5969
      %6044 = vst.msk [vmem:[%s489 + $0x319] sm:$0xff] %vm490, %v5970
      %6045 = vst.msk [vmem:[%s489 + $0x321] sm:$0xff] %vm490, %v5971
      %v6046 = vld [vmem:[#allocation2] sm:$0xff]
      %v6047 = vld [vmem:[#allocation2 + $0x8] sm:$0xff]
      %v6048 = vld [vmem:[#allocation2 + $0x18] sm:$0xff]
      %v6049 = vld [vmem:[#allocation2 + $0x20] sm:$0xff]
      %v6050 = vld [vmem:[#allocation2 + $0x30] sm:$0xff]
      %v6051 = vld [vmem:[#allocation2 + $0x38] sm:$0xff]
      %v6052 = vld [vmem:[#allocation2 + $0x48] sm:$0xff]
      %v6053 = vld [vmem:[#allocation2 + $0x50] sm:$0xff]
      %v6054 = vld [vmem:[#allocation2 + $0x60] sm:$0xff]
      %v6055 = vld [vmem:[#allocation2 + $0x68] sm:$0xff]
      %v6056 = vld [vmem:[#allocation2 + $0x78] sm:$0xff]
      %v6057 = vld [vmem:[#allocation2 + $0x80] sm:$0xff]
      %v6058 = vld [vmem:[#allocation2 + $0x90] sm:$0xff]
      %v6059 = vld [vmem:[#allocation2 + $0x98] sm:$0xff]
      %v6060 = vld [vmem:[#allocation2 + $0xa8] sm:$0xff]
      %v6061 = vld [vmem:[#allocation2 + $0xb0] sm:$0xff]
      %v6062 = vld [vmem:[#allocation2 + $0xc0] sm:$0xff]
      %v6063 = vld [vmem:[#allocation2 + $0xc8] sm:$0xff]
      %v6064 = vld [vmem:[#allocation2 + $0xd8] sm:$0xff]
      %v6065 = vld [vmem:[#allocation2 + $0xe0] sm:$0xff]
      %v6066 = vld [vmem:[#allocation2 + $0xf0] sm:$0xff]
      %v6067 = vld [vmem:[#allocation2 + $0xf8] sm:$0xff]
      %v6068 = vld [vmem:[#allocation2 + $0x108] sm:$0xff]
      %v6069 = vld [vmem:[#allocation2 + $0x110] sm:$0xff]
      %v6070 = vld [vmem:[#allocation2 + $0x120] sm:$0xff]
      %v6071 = vld [vmem:[#allocation2 + $0x128] sm:$0xff]
      %v6072 = vld [vmem:[#allocation2 + $0x138] sm:$0xff]
      %v6073 = vld [vmem:[#allocation2 + $0x140] sm:$0xff]
      %v6074 = vld [vmem:[#allocation2 + $0x150] sm:$0xff]
      %v6075 = vld [vmem:[#allocation2 + $0x158] sm:$0xff]
      %v6076 = vld [vmem:[#allocation2 + $0x168] sm:$0xff]
      %v6077 = vld [vmem:[#allocation2 + $0x170] sm:$0xff]
      %v6078 = vld [vmem:[#allocation2 + $0x1b0] sm:$0xff]
      %v6079 = vld [vmem:[#allocation2 + $0x1b8] sm:$0xff]
      %v6080 = vld [vmem:[#allocation2 + $0x1c8] sm:$0xff]
      %v6081 = vld [vmem:[#allocation2 + $0x1d0] sm:$0xff]
      %v6082 = vld [vmem:[#allocation2 + $0x1e0] sm:$0xff]
      %v6083 = vld [vmem:[#allocation2 + $0x1e8] sm:$0xff]
      %v6084 = vld [vmem:[#allocation2 + $0x1f8] sm:$0xff]
      %v6085 = vld [vmem:[#allocation2 + $0x200] sm:$0xff]
      %v6086 = vld [vmem:[#allocation2 + $0x210] sm:$0xff]
      %v6087 = vld [vmem:[#allocation2 + $0x218] sm:$0xff]
      %v6088 = vld [vmem:[#allocation2 + $0x228] sm:$0xff]
      %v6089 = vld [vmem:[#allocation2 + $0x230] sm:$0xff]
      %v6090 = vld [vmem:[#allocation2 + $0x240] sm:$0xff]
      %v6091 = vld [vmem:[#allocation2 + $0x248] sm:$0xff]
      %v6092 = vld [vmem:[#allocation2 + $0x258] sm:$0xff]
      %v6093 = vld [vmem:[#allocation2 + $0x260] sm:$0xff]
      %v6094 = vld [vmem:[#allocation2 + $0x270] sm:$0xff]
      %v6095 = vld [vmem:[#allocation2 + $0x278] sm:$0xff]
      %v6096 = vld [vmem:[#allocation2 + $0x288] sm:$0xff]
      %v6097 = vld [vmem:[#allocation2 + $0x290] sm:$0xff]
      %v6098 = vld [vmem:[#allocation2 + $0x2a0] sm:$0xff]
      %v6099 = vld [vmem:[#allocation2 + $0x2a8] sm:$0xff]
      %v6100 = vld [vmem:[#allocation2 + $0x2b8] sm:$0xff]
      %v6101 = vld [vmem:[#allocation2 + $0x2c0] sm:$0xff]
      %v6102 = vld [vmem:[#allocation2 + $0x2d0] sm:$0xff]
      %v6103 = vld [vmem:[#allocation2 + $0x2d8] sm:$0xff]
      %v6104 = vld [vmem:[#allocation2 + $0x2e8] sm:$0xff]
      %v6105 = vld [vmem:[#allocation2 + $0x2f0] sm:$0xff]
      %v6106 = vld [vmem:[#allocation2 + $0x300] sm:$0xff]
      %v6107 = vld [vmem:[#allocation2 + $0x308] sm:$0xff]
      %v6108 = vld [vmem:[#allocation2 + $0x318] sm:$0xff]
      %v6109 = vld [vmem:[#allocation2 + $0x320] sm:$0xff]
      %6110 = vst.msk [vmem:[#allocation3] sm:$0xff] %vm490, %v6046
      %6111 = vst.msk [vmem:[#allocation3 + $0x8] sm:$0xff] %vm490, %v6047
      %6112 = vst.msk [vmem:[#allocation3 + $0x10] sm:$0xff] %vm490, %v6048
      %6113 = vst.msk [vmem:[#allocation3 + $0x18] sm:$0xff] %vm490, %v6049
      %6114 = vst.msk [vmem:[#allocation3 + $0x20] sm:$0xff] %vm490, %v6050
      %6115 = vst.msk [vmem:[#allocation3 + $0x28] sm:$0xff] %vm490, %v6051
      %6116 = vst.msk [vmem:[#allocation3 + $0x30] sm:$0xff] %vm490, %v6052
      %6117 = vst.msk [vmem:[#allocation3 + $0x38] sm:$0xff] %vm490, %v6053
      %6118 = vst.msk [vmem:[#allocation3 + $0x40] sm:$0xff] %vm490, %v6054
      %6119 = vst.msk [vmem:[#allocation3 + $0x48] sm:$0xff] %vm490, %v6055
      %6120 = vst.msk [vmem:[#allocation3 + $0x50] sm:$0xff] %vm490, %v6056
      %6121 = vst.msk [vmem:[#allocation3 + $0x58] sm:$0xff] %vm490, %v6057
      %6122 = vst.msk [vmem:[#allocation3 + $0x60] sm:$0xff] %vm490, %v6058
      %6123 = vst.msk [vmem:[#allocation3 + $0x68] sm:$0xff] %vm490, %v6059
      %6124 = vst.msk [vmem:[#allocation3 + $0x70] sm:$0xff] %vm490, %v6060
      %6125 = vst.msk [vmem:[#allocation3 + $0x78] sm:$0xff] %vm490, %v6061
      %6126 = vst.msk [vmem:[#allocation3 + $0x80] sm:$0xff] %vm490, %v6062
      %6127 = vst.msk [vmem:[#allocation3 + $0x88] sm:$0xff] %vm490, %v6063
      %6128 = vst.msk [vmem:[#allocation3 + $0x90] sm:$0xff] %vm490, %v6064
      %6129 = vst.msk [vmem:[#allocation3 + $0x98] sm:$0xff] %vm490, %v6065
      %6130 = vst.msk [vmem:[#allocation3 + $0xa0] sm:$0xff] %vm490, %v6066
      %6131 = vst.msk [vmem:[#allocation3 + $0xa8] sm:$0xff] %vm490, %v6067
      %6132 = vst.msk [vmem:[#allocation3 + $0xb0] sm:$0xff] %vm490, %v6068
      %6133 = vst.msk [vmem:[#allocation3 + $0xb8] sm:$0xff] %vm490, %v6069
      %6134 = vst.msk [vmem:[#allocation3 + $0xc0] sm:$0xff] %vm490, %v6070
      %6135 = vst.msk [vmem:[#allocation3 + $0xc8] sm:$0xff] %vm490, %v6071
      %6136 = vst.msk [vmem:[#allocation3 + $0xd0] sm:$0xff] %vm490, %v6072
      %6137 = vst.msk [vmem:[#allocation3 + $0xd8] sm:$0xff] %vm490, %v6073
      %6138 = vst.msk [vmem:[#allocation3 + $0xe0] sm:$0xff] %vm490, %v6074
      %6139 = vst.msk [vmem:[#allocation3 + $0xe8] sm:$0xff] %vm490, %v6075
      %6140 = vst.msk [vmem:[#allocation3 + $0xf0] sm:$0xff] %vm490, %v6076
      %6141 = vst.msk [vmem:[#allocation3 + $0xf8] sm:$0xff] %vm490, %v6077
      %6142 = vst.msk [vmem:[#allocation3 + $0x100] sm:$0xff] %vm490, %v6078
      %6143 = vst.msk [vmem:[#allocation3 + $0x108] sm:$0xff] %vm490, %v6079
      %6144 = vst.msk [vmem:[#allocation3 + $0x110] sm:$0xff] %vm490, %v6080
      %6145 = vst.msk [vmem:[#allocation3 + $0x118] sm:$0xff] %vm490, %v6081
      %6146 = vst.msk [vmem:[#allocation3 + $0x120] sm:$0xff] %vm490, %v6082
      %6147 = vst.msk [vmem:[#allocation3 + $0x128] sm:$0xff] %vm490, %v6083
      %6148 = vst.msk [vmem:[#allocation3 + $0x130] sm:$0xff] %vm490, %v6084
      %6149 = vst.msk [vmem:[#allocation3 + $0x138] sm:$0xff] %vm490, %v6085
      %6150 = vst.msk [vmem:[#allocation3 + $0x140] sm:$0xff] %vm490, %v6086
      %6151 = vst.msk [vmem:[#allocation3 + $0x148] sm:$0xff] %vm490, %v6087
      %6152 = vst.msk [vmem:[#allocation3 + $0x150] sm:$0xff] %vm490, %v6088
      %6153 = vst.msk [vmem:[#allocation3 + $0x158] sm:$0xff] %vm490, %v6089
      %6154 = vst.msk [vmem:[#allocation3 + $0x160] sm:$0xff] %vm490, %v6090
      %6155 = vst.msk [vmem:[#allocation3 + $0x168] sm:$0xff] %vm490, %v6091
      %6156 = vst.msk [vmem:[#allocation3 + $0x170] sm:$0xff] %vm490, %v6092
      %6157 = vst.msk [vmem:[#allocation3 + $0x178] sm:$0xff] %vm490, %v6093
      %6158 = vst.msk [vmem:[#allocation3 + $0x180] sm:$0xff] %vm490, %v6094
      %6159 = vst.msk [vmem:[#allocation3 + $0x188] sm:$0xff] %vm490, %v6095
      %6160 = vst.msk [vmem:[#allocation3 + $0x190] sm:$0xff] %vm490, %v6096
      %6161 = vst.msk [vmem:[#allocation3 + $0x198] sm:$0xff] %vm490, %v6097
      %6162 = vst.msk [vmem:[#allocation3 + $0x1a0] sm:$0xff] %vm490, %v6098
      %6163 = vst.msk [vmem:[#allocation3 + $0x1a8] sm:$0xff] %vm490, %v6099
      %6164 = vst.msk [vmem:[#allocation3 + $0x1b0] sm:$0xff] %vm490, %v6100
      %6165 = vst.msk [vmem:[#allocation3 + $0x1b8] sm:$0xff] %vm490, %v6101
      %6166 = vst.msk [vmem:[#allocation3 + $0x1c0] sm:$0xff] %vm490, %v6102
      %6167 = vst.msk [vmem:[#allocation3 + $0x1c8] sm:$0xff] %vm490, %v6103
      %6168 = vst.msk [vmem:[#allocation3 + $0x1d0] sm:$0xff] %vm490, %v6104
      %6169 = vst.msk [vmem:[#allocation3 + $0x1d8] sm:$0xff] %vm490, %v6105
      %6170 = vst.msk [vmem:[#allocation3 + $0x1e0] sm:$0xff] %vm490, %v6106
      %6171 = vst.msk [vmem:[#allocation3 + $0x1e8] sm:$0xff] %vm490, %v6107
      %6172 = vst.msk [vmem:[#allocation3 + $0x1f0] sm:$0xff] %vm490, %v6108
      %6173 = vst.msk [vmem:[#allocation3 + $0x1f8] sm:$0xff] %vm490, %v6109
      %v6174 = vld [vmem:[#allocation2 + $0x1] sm:$0xff]
      %v6175 = vld [vmem:[#allocation2 + $0x9] sm:$0xff]
      %v6176 = vld [vmem:[#allocation2 + $0x19] sm:$0xff]
      %v6177 = vld [vmem:[#allocation2 + $0x21] sm:$0xff]
      %v6178 = vld [vmem:[#allocation2 + $0x31] sm:$0xff]
      %v6179 = vld [vmem:[#allocation2 + $0x39] sm:$0xff]
      %v6180 = vld [vmem:[#allocation2 + $0x49] sm:$0xff]
      %v6181 = vld [vmem:[#allocation2 + $0x51] sm:$0xff]
      %v6182 = vld [vmem:[#allocation2 + $0x61] sm:$0xff]
      %v6183 = vld [vmem:[#allocation2 + $0x69] sm:$0xff]
      %v6184 = vld [vmem:[#allocation2 + $0x79] sm:$0xff]
      %v6185 = vld [vmem:[#allocation2 + $0x81] sm:$0xff]
      %v6186 = vld [vmem:[#allocation2 + $0x91] sm:$0xff]
      %v6187 = vld [vmem:[#allocation2 + $0x99] sm:$0xff]
      %v6188 = vld [vmem:[#allocation2 + $0xa9] sm:$0xff]
      %v6189 = vld [vmem:[#allocation2 + $0xb1] sm:$0xff]
      %v6190 = vld [vmem:[#allocation2 + $0xc1] sm:$0xff]
      %v6191 = vld [vmem:[#allocation2 + $0xc9] sm:$0xff]
      %v6192 = vld [vmem:[#allocation2 + $0xd9] sm:$0xff]
      %v6193 = vld [vmem:[#allocation2 + $0xe1] sm:$0xff]
      %v6194 = vld [vmem:[#allocation2 + $0xf1] sm:$0xff]
      %v6195 = vld [vmem:[#allocation2 + $0xf9] sm:$0xff]
      %v6196 = vld [vmem:[#allocation2 + $0x109] sm:$0xff]
      %v6197 = vld [vmem:[#allocation2 + $0x111] sm:$0xff]
      %v6198 = vld [vmem:[#allocation2 + $0x121] sm:$0xff]
      %v6199 = vld [vmem:[#allocation2 + $0x129] sm:$0xff]
      %v6200 = vld [vmem:[#allocation2 + $0x139] sm:$0xff]
      %v6201 = vld [vmem:[#allocation2 + $0x141] sm:$0xff]
      %v6202 = vld [vmem:[#allocation2 + $0x151] sm:$0xff]
      %v6203 = vld [vmem:[#allocation2 + $0x159] sm:$0xff]
      %v6204 = vld [vmem:[#allocation2 + $0x169] sm:$0xff]
      %v6205 = vld [vmem:[#allocation2 + $0x171] sm:$0xff]
      %v6206 = vld [vmem:[#allocation2 + $0x1b1] sm:$0xff]
      %v6207 = vld [vmem:[#allocation2 + $0x1b9] sm:$0xff]
      %v6208 = vld [vmem:[#allocation2 + $0x1c9] sm:$0xff]
      %v6209 = vld [vmem:[#allocation2 + $0x1d1] sm:$0xff]
      %v6210 = vld [vmem:[#allocation2 + $0x1e1] sm:$0xff]
      %v6211 = vld [vmem:[#allocation2 + $0x1e9] sm:$0xff]
      %v6212 = vld [vmem:[#allocation2 + $0x1f9] sm:$0xff]
      %v6213 = vld [vmem:[#allocation2 + $0x201] sm:$0xff]
      %v6214 = vld [vmem:[#allocation2 + $0x211] sm:$0xff]
      %v6215 = vld [vmem:[#allocation2 + $0x219] sm:$0xff]
      %v6216 = vld [vmem:[#allocation2 + $0x229] sm:$0xff]
      %v6217 = vld [vmem:[#allocation2 + $0x231] sm:$0xff]
      %v6218 = vld [vmem:[#allocation2 + $0x241] sm:$0xff]
      %v6219 = vld [vmem:[#allocation2 + $0x249] sm:$0xff]
      %v6220 = vld [vmem:[#allocation2 + $0x259] sm:$0xff]
      %v6221 = vld [vmem:[#allocation2 + $0x261] sm:$0xff]
      %v6222 = vld [vmem:[#allocation2 + $0x271] sm:$0xff]
      %v6223 = vld [vmem:[#allocation2 + $0x279] sm:$0xff]
      %v6224 = vld [vmem:[#allocation2 + $0x289] sm:$0xff]
      %v6225 = vld [vmem:[#allocation2 + $0x291] sm:$0xff]
      %v6226 = vld [vmem:[#allocation2 + $0x2a1] sm:$0xff]
      %v6227 = vld [vmem:[#allocation2 + $0x2a9] sm:$0xff]
      %v6228 = vld [vmem:[#allocation2 + $0x2b9] sm:$0xff]
      %v6229 = vld [vmem:[#allocation2 + $0x2c1] sm:$0xff]
      %v6230 = vld [vmem:[#allocation2 + $0x2d1] sm:$0xff]
      %v6231 = vld [vmem:[#allocation2 + $0x2d9] sm:$0xff]
      %v6232 = vld [vmem:[#allocation2 + $0x2e9] sm:$0xff]
      %v6233 = vld [vmem:[#allocation2 + $0x2f1] sm:$0xff]
      %v6234 = vld [vmem:[#allocation2 + $0x301] sm:$0xff]
      %v6235 = vld [vmem:[#allocation2 + $0x309] sm:$0xff]
      %v6236 = vld [vmem:[#allocation2 + $0x319] sm:$0xff]
      %v6237 = vld [vmem:[#allocation2 + $0x321] sm:$0xff]
      %6302 = vrot.lane.b32.xlu0 %v6174, 8
      %v6303 = vpop.permute.xlu0 %6302
      %6304 = vrot.lane.b32.xlu0 %v6175, 8
      %v6305 = vpop.permute.xlu0 %6304
      %6306 = vrot.lane.b32.xlu0 %v6176, 8
      %v6307 = vpop.permute.xlu0 %6306
      %6308 = vrot.lane.b32.xlu0 %v6177, 8
      %v6309 = vpop.permute.xlu0 %6308
      %6310 = vrot.lane.b32.xlu0 %v6178, 8
      %v6311 = vpop.permute.xlu0 %6310
      %6312 = vrot.lane.b32.xlu0 %v6179, 8
      %v6313 = vpop.permute.xlu0 %6312
      %6314 = vrot.lane.b32.xlu0 %v6180, 8
      %v6315 = vpop.permute.xlu0 %6314
      %6316 = vrot.lane.b32.xlu0 %v6181, 8
      %v6317 = vpop.permute.xlu0 %6316
      %6318 = vrot.lane.b32.xlu0 %v6182, 8
      %v6319 = vpop.permute.xlu0 %6318
      %6320 = vrot.lane.b32.xlu0 %v6183, 8
      %v6321 = vpop.permute.xlu0 %6320
      %6322 = vrot.lane.b32.xlu0 %v6184, 8
      %v6323 = vpop.permute.xlu0 %6322
      %6324 = vrot.lane.b32.xlu0 %v6185, 8
      %v6325 = vpop.permute.xlu0 %6324
      %6326 = vrot.lane.b32.xlu0 %v6186, 8
      %v6327 = vpop.permute.xlu0 %6326
      %6328 = vrot.lane.b32.xlu0 %v6187, 8
      %v6329 = vpop.permute.xlu0 %6328
      %6330 = vrot.lane.b32.xlu0 %v6188, 8
      %v6331 = vpop.permute.xlu0 %6330
      %6332 = vrot.lane.b32.xlu0 %v6189, 8
      %v6333 = vpop.permute.xlu0 %6332
      %6334 = vrot.lane.b32.xlu0 %v6190, 8
      %v6335 = vpop.permute.xlu0 %6334
      %6336 = vrot.lane.b32.xlu0 %v6191, 8
      %v6337 = vpop.permute.xlu0 %6336
      %6338 = vrot.lane.b32.xlu0 %v6192, 8
      %v6339 = vpop.permute.xlu0 %6338
      %6340 = vrot.lane.b32.xlu0 %v6193, 8
      %v6341 = vpop.permute.xlu0 %6340
      %6342 = vrot.lane.b32.xlu0 %v6194, 8
      %v6343 = vpop.permute.xlu0 %6342
      %6344 = vrot.lane.b32.xlu0 %v6195, 8
      %v6345 = vpop.permute.xlu0 %6344
      %6346 = vrot.lane.b32.xlu0 %v6196, 8
      %v6347 = vpop.permute.xlu0 %6346
      %6348 = vrot.lane.b32.xlu0 %v6197, 8
      %v6349 = vpop.permute.xlu0 %6348
      %6350 = vrot.lane.b32.xlu0 %v6198, 8
      %v6351 = vpop.permute.xlu0 %6350
      %6352 = vrot.lane.b32.xlu0 %v6199, 8
      %v6353 = vpop.permute.xlu0 %6352
      %6354 = vrot.lane.b32.xlu0 %v6200, 8
      %v6355 = vpop.permute.xlu0 %6354
      %6356 = vrot.lane.b32.xlu0 %v6201, 8
      %v6357 = vpop.permute.xlu0 %6356
      %6358 = vrot.lane.b32.xlu0 %v6202, 8
      %v6359 = vpop.permute.xlu0 %6358
      %6360 = vrot.lane.b32.xlu0 %v6203, 8
      %v6361 = vpop.permute.xlu0 %6360
      %6362 = vrot.lane.b32.xlu0 %v6204, 8
      %v6363 = vpop.permute.xlu0 %6362
      %6364 = vrot.lane.b32.xlu0 %v6205, 8
      %v6365 = vpop.permute.xlu0 %6364
      %6366 = vrot.lane.b32.xlu0 %v6206, 8
      %v6367 = vpop.permute.xlu0 %6366
      %6368 = vrot.lane.b32.xlu0 %v6207, 8
      %v6369 = vpop.permute.xlu0 %6368
      %6370 = vrot.lane.b32.xlu0 %v6208, 8
      %v6371 = vpop.permute.xlu0 %6370
      %6372 = vrot.lane.b32.xlu0 %v6209, 8
      %v6373 = vpop.permute.xlu0 %6372
      %6374 = vrot.lane.b32.xlu0 %v6210, 8
      %v6375 = vpop.permute.xlu0 %6374
      %6376 = vrot.lane.b32.xlu0 %v6211, 8
      %v6377 = vpop.permute.xlu0 %6376
      %6378 = vrot.lane.b32.xlu0 %v6212, 8
      %v6379 = vpop.permute.xlu0 %6378
      %6380 = vrot.lane.b32.xlu0 %v6213, 8
      %v6381 = vpop.permute.xlu0 %6380
      %6382 = vrot.lane.b32.xlu0 %v6214, 8
      %v6383 = vpop.permute.xlu0 %6382
      %6384 = vrot.lane.b32.xlu0 %v6215, 8
      %v6385 = vpop.permute.xlu0 %6384
      %6386 = vrot.lane.b32.xlu0 %v6216, 8
      %v6387 = vpop.permute.xlu0 %6386
      %6388 = vrot.lane.b32.xlu0 %v6217, 8
      %v6389 = vpop.permute.xlu0 %6388
      %6390 = vrot.lane.b32.xlu0 %v6218, 8
      %v6391 = vpop.permute.xlu0 %6390
      %6392 = vrot.lane.b32.xlu0 %v6219, 8
      %v6393 = vpop.permute.xlu0 %6392
      %6394 = vrot.lane.b32.xlu0 %v6220, 8
      %v6395 = vpop.permute.xlu0 %6394
      %6396 = vrot.lane.b32.xlu0 %v6221, 8
      %v6397 = vpop.permute.xlu0 %6396
      %6398 = vrot.lane.b32.xlu0 %v6222, 8
      %v6399 = vpop.permute.xlu0 %6398
      %6400 = vrot.lane.b32.xlu0 %v6223, 8
      %v6401 = vpop.permute.xlu0 %6400
      %6402 = vrot.lane.b32.xlu0 %v6224, 8
      %v6403 = vpop.permute.xlu0 %6402
      %6404 = vrot.lane.b32.xlu0 %v6225, 8
      %v6405 = vpop.permute.xlu0 %6404
      %6406 = vrot.lane.b32.xlu0 %v6226, 8
      %v6407 = vpop.permute.xlu0 %6406
      %6408 = vrot.lane.b32.xlu0 %v6227, 8
      %v6409 = vpop.permute.xlu0 %6408
      %6410 = vrot.lane.b32.xlu0 %v6228, 8
      %v6411 = vpop.permute.xlu0 %6410
      %6412 = vrot.lane.b32.xlu0 %v6229, 8
      %v6413 = vpop.permute.xlu0 %6412
      %6414 = vrot.lane.b32.xlu0 %v6230, 8
      %v6415 = vpop.permute.xlu0 %6414
      %6416 = vrot.lane.b32.xlu0 %v6231, 8
      %v6417 = vpop.permute.xlu0 %6416
      %6418 = vrot.lane.b32.xlu0 %v6232, 8
      %v6419 = vpop.permute.xlu0 %6418
      %6420 = vrot.lane.b32.xlu0 %v6233, 8
      %v6421 = vpop.permute.xlu0 %6420
      %6422 = vrot.lane.b32.xlu0 %v6234, 8
      %v6423 = vpop.permute.xlu0 %6422
      %6424 = vrot.lane.b32.xlu0 %v6235, 8
      %v6425 = vpop.permute.xlu0 %6424
      %6426 = vrot.lane.b32.xlu0 %v6236, 8
      %v6427 = vpop.permute.xlu0 %6426
      %6428 = vrot.lane.b32.xlu0 %v6237, 8
      %v6429 = vpop.permute.xlu0 %6428
      %6494 = vst.msk [vmem:[#allocation3] sm:$0xff] %vm1003, %v6303
      %6495 = vst.msk [vmem:[#allocation3 + $0x8] sm:$0xff] %vm1003, %v6305
      %6496 = vst.msk [vmem:[#allocation3 + $0x10] sm:$0xff] %vm1003, %v6307
      %6497 = vst.msk [vmem:[#allocation3 + $0x18] sm:$0xff] %vm1003, %v6309
      %6498 = vst.msk [vmem:[#allocation3 + $0x20] sm:$0xff] %vm1003, %v6311
      %6499 = vst.msk [vmem:[#allocation3 + $0x28] sm:$0xff] %vm1003, %v6313
      %6500 = vst.msk [vmem:[#allocation3 + $0x30] sm:$0xff] %vm1003, %v6315
      %6501 = vst.msk [vmem:[#allocation3 + $0x38] sm:$0xff] %vm1003, %v6317
      %6502 = vst.msk [vmem:[#allocation3 + $0x40] sm:$0xff] %vm1003, %v6319
      %6503 = vst.msk [vmem:[#allocation3 + $0x48] sm:$0xff] %vm1003, %v6321
      %6504 = vst.msk [vmem:[#allocation3 + $0x50] sm:$0xff] %vm1003, %v6323
      %6505 = vst.msk [vmem:[#allocation3 + $0x58] sm:$0xff] %vm1003, %v6325
      %6506 = vst.msk [vmem:[#allocation3 + $0x60] sm:$0xff] %vm1003, %v6327
      %6507 = vst.msk [vmem:[#allocation3 + $0x68] sm:$0xff] %vm1003, %v6329
      %6508 = vst.msk [vmem:[#allocation3 + $0x70] sm:$0xff] %vm1003, %v6331
      %6509 = vst.msk [vmem:[#allocation3 + $0x78] sm:$0xff] %vm1003, %v6333
      %6510 = vst.msk [vmem:[#allocation3 + $0x80] sm:$0xff] %vm1003, %v6335
      %6511 = vst.msk [vmem:[#allocation3 + $0x88] sm:$0xff] %vm1003, %v6337
      %6512 = vst.msk [vmem:[#allocation3 + $0x90] sm:$0xff] %vm1003, %v6339
      %6513 = vst.msk [vmem:[#allocation3 + $0x98] sm:$0xff] %vm1003, %v6341
      %6514 = vst.msk [vmem:[#allocation3 + $0xa0] sm:$0xff] %vm1003, %v6343
      %6515 = vst.msk [vmem:[#allocation3 + $0xa8] sm:$0xff] %vm1003, %v6345
      %6516 = vst.msk [vmem:[#allocation3 + $0xb0] sm:$0xff] %vm1003, %v6347
      %6517 = vst.msk [vmem:[#allocation3 + $0xb8] sm:$0xff] %vm1003, %v6349
      %6518 = vst.msk [vmem:[#allocation3 + $0xc0] sm:$0xff] %vm1003, %v6351
      %6519 = vst.msk [vmem:[#allocation3 + $0xc8] sm:$0xff] %vm1003, %v6353
      %6520 = vst.msk [vmem:[#allocation3 + $0xd0] sm:$0xff] %vm1003, %v6355
      %6521 = vst.msk [vmem:[#allocation3 + $0xd8] sm:$0xff] %vm1003, %v6357
      %6522 = vst.msk [vmem:[#allocation3 + $0xe0] sm:$0xff] %vm1003, %v6359
      %6523 = vst.msk [vmem:[#allocation3 + $0xe8] sm:$0xff] %vm1003, %v6361
      %6524 = vst.msk [vmem:[#allocation3 + $0xf0] sm:$0xff] %vm1003, %v6363
      %6525 = vst.msk [vmem:[#allocation3 + $0xf8] sm:$0xff] %vm1003, %v6365
      %6526 = vst.msk [vmem:[#allocation3 + $0x100] sm:$0xff] %vm1003, %v6367
      %6527 = vst.msk [vmem:[#allocation3 + $0x108] sm:$0xff] %vm1003, %v6369
      %6528 = vst.msk [vmem:[#allocation3 + $0x110] sm:$0xff] %vm1003, %v6371
      %6529 = vst.msk [vmem:[#allocation3 + $0x118] sm:$0xff] %vm1003, %v6373
      %6530 = vst.msk [vmem:[#allocation3 + $0x120] sm:$0xff] %vm1003, %v6375
      %6531 = vst.msk [vmem:[#allocation3 + $0x128] sm:$0xff] %vm1003, %v6377
      %6532 = vst.msk [vmem:[#allocation3 + $0x130] sm:$0xff] %vm1003, %v6379
      %6533 = vst.msk [vmem:[#allocation3 + $0x138] sm:$0xff] %vm1003, %v6381
      %6534 = vst.msk [vmem:[#allocation3 + $0x140] sm:$0xff] %vm1003, %v6383
      %6535 = vst.msk [vmem:[#allocation3 + $0x148] sm:$0xff] %vm1003, %v6385
      %6536 = vst.msk [vmem:[#allocation3 + $0x150] sm:$0xff] %vm1003, %v6387
      %6537 = vst.msk [vmem:[#allocation3 + $0x158] sm:$0xff] %vm1003, %v6389
      %6538 = vst.msk [vmem:[#allocation3 + $0x160] sm:$0xff] %vm1003, %v6391
      %6539 = vst.msk [vmem:[#allocation3 + $0x168] sm:$0xff] %vm1003, %v6393
      %6540 = vst.msk [vmem:[#allocation3 + $0x170] sm:$0xff] %vm1003, %v6395
      %6541 = vst.msk [vmem:[#allocation3 + $0x178] sm:$0xff] %vm1003, %v6397
      %6542 = vst.msk [vmem:[#allocation3 + $0x180] sm:$0xff] %vm1003, %v6399
      %6543 = vst.msk [vmem:[#allocation3 + $0x188] sm:$0xff] %vm1003, %v6401
      %6544 = vst.msk [vmem:[#allocation3 + $0x190] sm:$0xff] %vm1003, %v6403
      %6545 = vst.msk [vmem:[#allocation3 + $0x198] sm:$0xff] %vm1003, %v6405
      %6546 = vst.msk [vmem:[#allocation3 + $0x1a0] sm:$0xff] %vm1003, %v6407
      %6547 = vst.msk [vmem:[#allocation3 + $0x1a8] sm:$0xff] %vm1003, %v6409
      %6548 = vst.msk [vmem:[#allocation3 + $0x1b0] sm:$0xff] %vm1003, %v6411
      %6549 = vst.msk [vmem:[#allocation3 + $0x1b8] sm:$0xff] %vm1003, %v6413
      %6550 = vst.msk [vmem:[#allocation3 + $0x1c0] sm:$0xff] %vm1003, %v6415
      %6551 = vst.msk [vmem:[#allocation3 + $0x1c8] sm:$0xff] %vm1003, %v6417
      %6552 = vst.msk [vmem:[#allocation3 + $0x1d0] sm:$0xff] %vm1003, %v6419
      %6553 = vst.msk [vmem:[#allocation3 + $0x1d8] sm:$0xff] %vm1003, %v6421
      %6554 = vst.msk [vmem:[#allocation3 + $0x1e0] sm:$0xff] %vm1003, %v6423
      %6555 = vst.msk [vmem:[#allocation3 + $0x1e8] sm:$0xff] %vm1003, %v6425
      %6556 = vst.msk [vmem:[#allocation3 + $0x1f0] sm:$0xff] %vm1003, %v6427
      %6557 = vst.msk [vmem:[#allocation3 + $0x1f8] sm:$0xff] %vm1003, %v6429
      %v6558 = vld [vmem:[#allocation2 + $0x2] sm:$0xff]
      %v6559 = vld [vmem:[#allocation2 + $0xa] sm:$0xff]
      %v6560 = vld [vmem:[#allocation2 + $0x1a] sm:$0xff]
      %v6561 = vld [vmem:[#allocation2 + $0x22] sm:$0xff]
      %v6562 = vld [vmem:[#allocation2 + $0x32] sm:$0xff]
      %v6563 = vld [vmem:[#allocation2 + $0x3a] sm:$0xff]
      %v6564 = vld [vmem:[#allocation2 + $0x4a] sm:$0xff]
      %v6565 = vld [vmem:[#allocation2 + $0x52] sm:$0xff]
      %v6566 = vld [vmem:[#allocation2 + $0x62] sm:$0xff]
      %v6567 = vld [vmem:[#allocation2 + $0x6a] sm:$0xff]
      %v6568 = vld [vmem:[#allocation2 + $0x7a] sm:$0xff]
      %v6569 = vld [vmem:[#allocation2 + $0x82] sm:$0xff]
      %v6570 = vld [vmem:[#allocation2 + $0x92] sm:$0xff]
      %v6571 = vld [vmem:[#allocation2 + $0x9a] sm:$0xff]
      %v6572 = vld [vmem:[#allocation2 + $0xaa] sm:$0xff]
      %v6573 = vld [vmem:[#allocation2 + $0xb2] sm:$0xff]
      %v6574 = vld [vmem:[#allocation2 + $0xc2] sm:$0xff]
      %v6575 = vld [vmem:[#allocation2 + $0xca] sm:$0xff]
      %v6576 = vld [vmem:[#allocation2 + $0xda] sm:$0xff]
      %v6577 = vld [vmem:[#allocation2 + $0xe2] sm:$0xff]
      %v6578 = vld [vmem:[#allocation2 + $0xf2] sm:$0xff]
      %v6579 = vld [vmem:[#allocation2 + $0xfa] sm:$0xff]
      %v6580 = vld [vmem:[#allocation2 + $0x10a] sm:$0xff]
      %v6581 = vld [vmem:[#allocation2 + $0x112] sm:$0xff]
      %v6582 = vld [vmem:[#allocation2 + $0x122] sm:$0xff]
      %v6583 = vld [vmem:[#allocation2 + $0x12a] sm:$0xff]
      %v6584 = vld [vmem:[#allocation2 + $0x13a] sm:$0xff]
      %v6585 = vld [vmem:[#allocation2 + $0x142] sm:$0xff]
      %v6586 = vld [vmem:[#allocation2 + $0x152] sm:$0xff]
      %v6587 = vld [vmem:[#allocation2 + $0x15a] sm:$0xff]
      %v6588 = vld [vmem:[#allocation2 + $0x16a] sm:$0xff]
      %v6589 = vld [vmem:[#allocation2 + $0x172] sm:$0xff]
      %v6590 = vld [vmem:[#allocation2 + $0x1b2] sm:$0xff]
      %v6591 = vld [vmem:[#allocation2 + $0x1ba] sm:$0xff]
      %v6592 = vld [vmem:[#allocation2 + $0x1ca] sm:$0xff]
      %v6593 = vld [vmem:[#allocation2 + $0x1d2] sm:$0xff]
      %v6594 = vld [vmem:[#allocation2 + $0x1e2] sm:$0xff]
      %v6595 = vld [vmem:[#allocation2 + $0x1ea] sm:$0xff]
      %v6596 = vld [vmem:[#allocation2 + $0x1fa] sm:$0xff]
      %v6597 = vld [vmem:[#allocation2 + $0x202] sm:$0xff]
      %v6598 = vld [vmem:[#allocation2 + $0x212] sm:$0xff]
      %v6599 = vld [vmem:[#allocation2 + $0x21a] sm:$0xff]
      %v6600 = vld [vmem:[#allocation2 + $0x22a] sm:$0xff]
      %v6601 = vld [vmem:[#allocation2 + $0x232] sm:$0xff]
      %v6602 = vld [vmem:[#allocation2 + $0x242] sm:$0xff]
      %v6603 = vld [vmem:[#allocation2 + $0x24a] sm:$0xff]
      %v6604 = vld [vmem:[#allocation2 + $0x25a] sm:$0xff]
      %v6605 = vld [vmem:[#allocation2 + $0x262] sm:$0xff]
      %v6606 = vld [vmem:[#allocation2 + $0x272] sm:$0xff]
      %v6607 = vld [vmem:[#allocation2 + $0x27a] sm:$0xff]
      %v6608 = vld [vmem:[#allocation2 + $0x28a] sm:$0xff]
      %v6609 = vld [vmem:[#allocation2 + $0x292] sm:$0xff]
      %v6610 = vld [vmem:[#allocation2 + $0x2a2] sm:$0xff]
      %v6611 = vld [vmem:[#allocation2 + $0x2aa] sm:$0xff]
      %v6612 = vld [vmem:[#allocation2 + $0x2ba] sm:$0xff]
      %v6613 = vld [vmem:[#allocation2 + $0x2c2] sm:$0xff]
      %v6614 = vld [vmem:[#allocation2 + $0x2d2] sm:$0xff]
      %v6615 = vld [vmem:[#allocation2 + $0x2da] sm:$0xff]
      %v6616 = vld [vmem:[#allocation2 + $0x2ea] sm:$0xff]
      %v6617 = vld [vmem:[#allocation2 + $0x2f2] sm:$0xff]
      %v6618 = vld [vmem:[#allocation2 + $0x302] sm:$0xff]
      %v6619 = vld [vmem:[#allocation2 + $0x30a] sm:$0xff]
      %v6620 = vld [vmem:[#allocation2 + $0x31a] sm:$0xff]
      %v6621 = vld [vmem:[#allocation2 + $0x322] sm:$0xff]
      %6686 = vrot.lane.b32.xlu0 %v6558, 16
      %v6687 = vpop.permute.xlu0 %6686
      %6688 = vrot.lane.b32.xlu0 %v6559, 16
      %v6689 = vpop.permute.xlu0 %6688
      %6690 = vrot.lane.b32.xlu0 %v6560, 16
      %v6691 = vpop.permute.xlu0 %6690
      %6692 = vrot.lane.b32.xlu0 %v6561, 16
      %v6693 = vpop.permute.xlu0 %6692
      %6694 = vrot.lane.b32.xlu0 %v6562, 16
      %v6695 = vpop.permute.xlu0 %6694
      %6696 = vrot.lane.b32.xlu0 %v6563, 16
      %v6697 = vpop.permute.xlu0 %6696
      %6698 = vrot.lane.b32.xlu0 %v6564, 16
      %v6699 = vpop.permute.xlu0 %6698
      %6700 = vrot.lane.b32.xlu0 %v6565, 16
      %v6701 = vpop.permute.xlu0 %6700
      %6702 = vrot.lane.b32.xlu0 %v6566, 16
      %v6703 = vpop.permute.xlu0 %6702
      %6704 = vrot.lane.b32.xlu0 %v6567, 16
      %v6705 = vpop.permute.xlu0 %6704
      %6706 = vrot.lane.b32.xlu0 %v6568, 16
      %v6707 = vpop.permute.xlu0 %6706
      %6708 = vrot.lane.b32.xlu0 %v6569, 16
      %v6709 = vpop.permute.xlu0 %6708
      %6710 = vrot.lane.b32.xlu0 %v6570, 16
      %v6711 = vpop.permute.xlu0 %6710
      %6712 = vrot.lane.b32.xlu0 %v6571, 16
      %v6713 = vpop.permute.xlu0 %6712
      %6714 = vrot.lane.b32.xlu0 %v6572, 16
      %v6715 = vpop.permute.xlu0 %6714
      %6716 = vrot.lane.b32.xlu0 %v6573, 16
      %v6717 = vpop.permute.xlu0 %6716
      %6718 = vrot.lane.b32.xlu0 %v6574, 16
      %v6719 = vpop.permute.xlu0 %6718
      %6720 = vrot.lane.b32.xlu0 %v6575, 16
      %v6721 = vpop.permute.xlu0 %6720
      %6722 = vrot.lane.b32.xlu0 %v6576, 16
      %v6723 = vpop.permute.xlu0 %6722
      %6724 = vrot.lane.b32.xlu0 %v6577, 16
      %v6725 = vpop.permute.xlu0 %6724
      %6726 = vrot.lane.b32.xlu0 %v6578, 16
      %v6727 = vpop.permute.xlu0 %6726
      %6728 = vrot.lane.b32.xlu0 %v6579, 16
      %v6729 = vpop.permute.xlu0 %6728
      %6730 = vrot.lane.b32.xlu0 %v6580, 16
      %v6731 = vpop.permute.xlu0 %6730
      %6732 = vrot.lane.b32.xlu0 %v6581, 16
      %v6733 = vpop.permute.xlu0 %6732
      %6734 = vrot.lane.b32.xlu0 %v6582, 16
      %v6735 = vpop.permute.xlu0 %6734
      %6736 = vrot.lane.b32.xlu0 %v6583, 16
      %v6737 = vpop.permute.xlu0 %6736
      %6738 = vrot.lane.b32.xlu0 %v6584, 16
      %v6739 = vpop.permute.xlu0 %6738
      %6740 = vrot.lane.b32.xlu0 %v6585, 16
      %v6741 = vpop.permute.xlu0 %6740
      %6742 = vrot.lane.b32.xlu0 %v6586, 16
      %v6743 = vpop.permute.xlu0 %6742
      %6744 = vrot.lane.b32.xlu0 %v6587, 16
      %v6745 = vpop.permute.xlu0 %6744
      %6746 = vrot.lane.b32.xlu0 %v6588, 16
      %v6747 = vpop.permute.xlu0 %6746
      %6748 = vrot.lane.b32.xlu0 %v6589, 16
      %v6749 = vpop.permute.xlu0 %6748
      %6750 = vrot.lane.b32.xlu0 %v6590, 16
      %v6751 = vpop.permute.xlu0 %6750
      %6752 = vrot.lane.b32.xlu0 %v6591, 16
      %v6753 = vpop.permute.xlu0 %6752
      %6754 = vrot.lane.b32.xlu0 %v6592, 16
      %v6755 = vpop.permute.xlu0 %6754
      %6756 = vrot.lane.b32.xlu0 %v6593, 16
      %v6757 = vpop.permute.xlu0 %6756
      %6758 = vrot.lane.b32.xlu0 %v6594, 16
      %v6759 = vpop.permute.xlu0 %6758
      %6760 = vrot.lane.b32.xlu0 %v6595, 16
      %v6761 = vpop.permute.xlu0 %6760
      %6762 = vrot.lane.b32.xlu0 %v6596, 16
      %v6763 = vpop.permute.xlu0 %6762
      %6764 = vrot.lane.b32.xlu0 %v6597, 16
      %v6765 = vpop.permute.xlu0 %6764
      %6766 = vrot.lane.b32.xlu0 %v6598, 16
      %v6767 = vpop.permute.xlu0 %6766
      %6768 = vrot.lane.b32.xlu0 %v6599, 16
      %v6769 = vpop.permute.xlu0 %6768
      %6770 = vrot.lane.b32.xlu0 %v6600, 16
      %v6771 = vpop.permute.xlu0 %6770
      %6772 = vrot.lane.b32.xlu0 %v6601, 16
      %v6773 = vpop.permute.xlu0 %6772
      %6774 = vrot.lane.b32.xlu0 %v6602, 16
      %v6775 = vpop.permute.xlu0 %6774
      %6776 = vrot.lane.b32.xlu0 %v6603, 16
      %v6777 = vpop.permute.xlu0 %6776
      %6778 = vrot.lane.b32.xlu0 %v6604, 16
      %v6779 = vpop.permute.xlu0 %6778
      %6780 = vrot.lane.b32.xlu0 %v6605, 16
      %v6781 = vpop.permute.xlu0 %6780
      %6782 = vrot.lane.b32.xlu0 %v6606, 16
      %v6783 = vpop.permute.xlu0 %6782
      %6784 = vrot.lane.b32.xlu0 %v6607, 16
      %v6785 = vpop.permute.xlu0 %6784
      %6786 = vrot.lane.b32.xlu0 %v6608, 16
      %v6787 = vpop.permute.xlu0 %6786
      %6788 = vrot.lane.b32.xlu0 %v6609, 16
      %v6789 = vpop.permute.xlu0 %6788
      %6790 = vrot.lane.b32.xlu0 %v6610, 16
      %v6791 = vpop.permute.xlu0 %6790
      %6792 = vrot.lane.b32.xlu0 %v6611, 16
      %v6793 = vpop.permute.xlu0 %6792
      %6794 = vrot.lane.b32.xlu0 %v6612, 16
      %v6795 = vpop.permute.xlu0 %6794
      %6796 = vrot.lane.b32.xlu0 %v6613, 16
      %v6797 = vpop.permute.xlu0 %6796
      %6798 = vrot.lane.b32.xlu0 %v6614, 16
      %v6799 = vpop.permute.xlu0 %6798
      %6800 = vrot.lane.b32.xlu0 %v6615, 16
      %v6801 = vpop.permute.xlu0 %6800
      %6802 = vrot.lane.b32.xlu0 %v6616, 16
      %v6803 = vpop.permute.xlu0 %6802
      %6804 = vrot.lane.b32.xlu0 %v6617, 16
      %v6805 = vpop.permute.xlu0 %6804
      %6806 = vrot.lane.b32.xlu0 %v6618, 16
      %v6807 = vpop.permute.xlu0 %6806
      %6808 = vrot.lane.b32.xlu0 %v6619, 16
      %v6809 = vpop.permute.xlu0 %6808
      %6810 = vrot.lane.b32.xlu0 %v6620, 16
      %v6811 = vpop.permute.xlu0 %6810
      %6812 = vrot.lane.b32.xlu0 %v6621, 16
      %v6813 = vpop.permute.xlu0 %6812
      %6878 = vst.msk [vmem:[#allocation3] sm:$0xff] %vm1388, %v6687
      %6879 = vst.msk [vmem:[#allocation3 + $0x8] sm:$0xff] %vm1388, %v6689
      %6880 = vst.msk [vmem:[#allocation3 + $0x10] sm:$0xff] %vm1388, %v6691
      %6881 = vst.msk [vmem:[#allocation3 + $0x18] sm:$0xff] %vm1388, %v6693
      %6882 = vst.msk [vmem:[#allocation3 + $0x20] sm:$0xff] %vm1388, %v6695
      %6883 = vst.msk [vmem:[#allocation3 + $0x28] sm:$0xff] %vm1388, %v6697
      %6884 = vst.msk [vmem:[#allocation3 + $0x30] sm:$0xff] %vm1388, %v6699
      %6885 = vst.msk [vmem:[#allocation3 + $0x38] sm:$0xff] %vm1388, %v6701
      %6886 = vst.msk [vmem:[#allocation3 + $0x40] sm:$0xff] %vm1388, %v6703
      %6887 = vst.msk [vmem:[#allocation3 + $0x48] sm:$0xff] %vm1388, %v6705
      %6888 = vst.msk [vmem:[#allocation3 + $0x50] sm:$0xff] %vm1388, %v6707
      %6889 = vst.msk [vmem:[#allocation3 + $0x58] sm:$0xff] %vm1388, %v6709
      %6890 = vst.msk [vmem:[#allocation3 + $0x60] sm:$0xff] %vm1388, %v6711
      %6891 = vst.msk [vmem:[#allocation3 + $0x68] sm:$0xff] %vm1388, %v6713
      %6892 = vst.msk [vmem:[#allocation3 + $0x70] sm:$0xff] %vm1388, %v6715
      %6893 = vst.msk [vmem:[#allocation3 + $0x78] sm:$0xff] %vm1388, %v6717
      %6894 = vst.msk [vmem:[#allocation3 + $0x80] sm:$0xff] %vm1388, %v6719
      %6895 = vst.msk [vmem:[#allocation3 + $0x88] sm:$0xff] %vm1388, %v6721
      %6896 = vst.msk [vmem:[#allocation3 + $0x90] sm:$0xff] %vm1388, %v6723
      %6897 = vst.msk [vmem:[#allocation3 + $0x98] sm:$0xff] %vm1388, %v6725
      %6898 = vst.msk [vmem:[#allocation3 + $0xa0] sm:$0xff] %vm1388, %v6727
      %6899 = vst.msk [vmem:[#allocation3 + $0xa8] sm:$0xff] %vm1388, %v6729
      %6900 = vst.msk [vmem:[#allocation3 + $0xb0] sm:$0xff] %vm1388, %v6731
      %6901 = vst.msk [vmem:[#allocation3 + $0xb8] sm:$0xff] %vm1388, %v6733
      %6902 = vst.msk [vmem:[#allocation3 + $0xc0] sm:$0xff] %vm1388, %v6735
      %6903 = vst.msk [vmem:[#allocation3 + $0xc8] sm:$0xff] %vm1388, %v6737
      %6904 = vst.msk [vmem:[#allocation3 + $0xd0] sm:$0xff] %vm1388, %v6739
      %6905 = vst.msk [vmem:[#allocation3 + $0xd8] sm:$0xff] %vm1388, %v6741
      %6906 = vst.msk [vmem:[#allocation3 + $0xe0] sm:$0xff] %vm1388, %v6743
      %6907 = vst.msk [vmem:[#allocation3 + $0xe8] sm:$0xff] %vm1388, %v6745
      %6908 = vst.msk [vmem:[#allocation3 + $0xf0] sm:$0xff] %vm1388, %v6747
      %6909 = vst.msk [vmem:[#allocation3 + $0xf8] sm:$0xff] %vm1388, %v6749
      %6910 = vst.msk [vmem:[#allocation3 + $0x100] sm:$0xff] %vm1388, %v6751
      %6911 = vst.msk [vmem:[#allocation3 + $0x108] sm:$0xff] %vm1388, %v6753
      %6912 = vst.msk [vmem:[#allocation3 + $0x110] sm:$0xff] %vm1388, %v6755
      %6913 = vst.msk [vmem:[#allocation3 + $0x118] sm:$0xff] %vm1388, %v6757
      %6914 = vst.msk [vmem:[#allocation3 + $0x120] sm:$0xff] %vm1388, %v6759
      %6915 = vst.msk [vmem:[#allocation3 + $0x128] sm:$0xff] %vm1388, %v6761
      %6916 = vst.msk [vmem:[#allocation3 + $0x130] sm:$0xff] %vm1388, %v6763
      %6917 = vst.msk [vmem:[#allocation3 + $0x138] sm:$0xff] %vm1388, %v6765
      %6918 = vst.msk [vmem:[#allocation3 + $0x140] sm:$0xff] %vm1388, %v6767
      %6919 = vst.msk [vmem:[#allocation3 + $0x148] sm:$0xff] %vm1388, %v6769
      %6920 = vst.msk [vmem:[#allocation3 + $0x150] sm:$0xff] %vm1388, %v6771
      %6921 = vst.msk [vmem:[#allocation3 + $0x158] sm:$0xff] %vm1388, %v6773
      %6922 = vst.msk [vmem:[#allocation3 + $0x160] sm:$0xff] %vm1388, %v6775
      %6923 = vst.msk [vmem:[#allocation3 + $0x168] sm:$0xff] %vm1388, %v6777
      %6924 = vst.msk [vmem:[#allocation3 + $0x170] sm:$0xff] %vm1388, %v6779
      %6925 = vst.msk [vmem:[#allocation3 + $0x178] sm:$0xff] %vm1388, %v6781
      %6926 = vst.msk [vmem:[#allocation3 + $0x180] sm:$0xff] %vm1388, %v6783
      %6927 = vst.msk [vmem:[#allocation3 + $0x188] sm:$0xff] %vm1388, %v6785
      %6928 = vst.msk [vmem:[#allocation3 + $0x190] sm:$0xff] %vm1388, %v6787
      %6929 = vst.msk [vmem:[#allocation3 + $0x198] sm:$0xff] %vm1388, %v6789
      %6930 = vst.msk [vmem:[#allocation3 + $0x1a0] sm:$0xff] %vm1388, %v6791
      %6931 = vst.msk [vmem:[#allocation3 + $0x1a8] sm:$0xff] %vm1388, %v6793
      %6932 = vst.msk [vmem:[#allocation3 + $0x1b0] sm:$0xff] %vm1388, %v6795
      %6933 = vst.msk [vmem:[#allocation3 + $0x1b8] sm:$0xff] %vm1388, %v6797
      %6934 = vst.msk [vmem:[#allocation3 + $0x1c0] sm:$0xff] %vm1388, %v6799
      %6935 = vst.msk [vmem:[#allocation3 + $0x1c8] sm:$0xff] %vm1388, %v6801
      %6936 = vst.msk [vmem:[#allocation3 + $0x1d0] sm:$0xff] %vm1388, %v6803
      %6937 = vst.msk [vmem:[#allocation3 + $0x1d8] sm:$0xff] %vm1388, %v6805
      %6938 = vst.msk [vmem:[#allocation3 + $0x1e0] sm:$0xff] %vm1388, %v6807
      %6939 = vst.msk [vmem:[#allocation3 + $0x1e8] sm:$0xff] %vm1388, %v6809
      %6940 = vst.msk [vmem:[#allocation3 + $0x1f0] sm:$0xff] %vm1388, %v6811
      %6941 = vst.msk [vmem:[#allocation3 + $0x1f8] sm:$0xff] %vm1388, %v6813
      %v6942 = vld [vmem:[%s489] sm:$0xff]
      %v6943 = vld [vmem:[%s489 + $0x8] sm:$0xff]
      %v6944 = vld [vmem:[%s489 + $0x18] sm:$0xff]
      %v6945 = vld [vmem:[%s489 + $0x20] sm:$0xff]
      %v6946 = vld [vmem:[%s489 + $0x30] sm:$0xff]
      %v6947 = vld [vmem:[%s489 + $0x38] sm:$0xff]
      %v6948 = vld [vmem:[%s489 + $0x48] sm:$0xff]
      %v6949 = vld [vmem:[%s489 + $0x50] sm:$0xff]
      %v6950 = vld [vmem:[%s489 + $0x60] sm:$0xff]
      %v6951 = vld [vmem:[%s489 + $0x68] sm:$0xff]
      %v6952 = vld [vmem:[%s489 + $0x78] sm:$0xff]
      %v6953 = vld [vmem:[%s489 + $0x80] sm:$0xff]
      %v6954 = vld [vmem:[%s489 + $0x90] sm:$0xff]
      %v6955 = vld [vmem:[%s489 + $0x98] sm:$0xff]
      %v6956 = vld [vmem:[%s489 + $0xa8] sm:$0xff]
      %v6957 = vld [vmem:[%s489 + $0xb0] sm:$0xff]
      %v6958 = vld [vmem:[%s489 + $0xc0] sm:$0xff]
      %v6959 = vld [vmem:[%s489 + $0xc8] sm:$0xff]
      %v6960 = vld [vmem:[%s489 + $0xd8] sm:$0xff]
      %v6961 = vld [vmem:[%s489 + $0xe0] sm:$0xff]
      %v6962 = vld [vmem:[%s489 + $0xf0] sm:$0xff]
      %v6963 = vld [vmem:[%s489 + $0xf8] sm:$0xff]
      %v6964 = vld [vmem:[%s489 + $0x108] sm:$0xff]
      %v6965 = vld [vmem:[%s489 + $0x110] sm:$0xff]
      %v6966 = vld [vmem:[%s489 + $0x120] sm:$0xff]
      %v6967 = vld [vmem:[%s489 + $0x128] sm:$0xff]
      %v6968 = vld [vmem:[%s489 + $0x138] sm:$0xff]
      %v6969 = vld [vmem:[%s489 + $0x140] sm:$0xff]
      %v6970 = vld [vmem:[%s489 + $0x150] sm:$0xff]
      %v6971 = vld [vmem:[%s489 + $0x158] sm:$0xff]
      %v6972 = vld [vmem:[%s489 + $0x168] sm:$0xff]
      %v6973 = vld [vmem:[%s489 + $0x170] sm:$0xff]
      %v6974 = vld [vmem:[%s489 + $0x1b0] sm:$0xff]
      %v6975 = vld [vmem:[%s489 + $0x1b8] sm:$0xff]
      %v6976 = vld [vmem:[%s489 + $0x1c8] sm:$0xff]
      %v6977 = vld [vmem:[%s489 + $0x1d0] sm:$0xff]
      %v6978 = vld [vmem:[%s489 + $0x1e0] sm:$0xff]
      %v6979 = vld [vmem:[%s489 + $0x1e8] sm:$0xff]
      %v6980 = vld [vmem:[%s489 + $0x1f8] sm:$0xff]
      %v6981 = vld [vmem:[%s489 + $0x200] sm:$0xff]
      %v6982 = vld [vmem:[%s489 + $0x210] sm:$0xff]
      %v6983 = vld [vmem:[%s489 + $0x218] sm:$0xff]
      %v6984 = vld [vmem:[%s489 + $0x228] sm:$0xff]
      %v6985 = vld [vmem:[%s489 + $0x230] sm:$0xff]
      %v6986 = vld [vmem:[%s489 + $0x240] sm:$0xff]
      %v6987 = vld [vmem:[%s489 + $0x248] sm:$0xff]
      %v6988 = vld [vmem:[%s489 + $0x258] sm:$0xff]
      %v6989 = vld [vmem:[%s489 + $0x260] sm:$0xff]
      %v6990 = vld [vmem:[%s489 + $0x270] sm:$0xff]
      %v6991 = vld [vmem:[%s489 + $0x278] sm:$0xff]
      %v6992 = vld [vmem:[%s489 + $0x288] sm:$0xff]
      %v6993 = vld [vmem:[%s489 + $0x290] sm:$0xff]
      %v6994 = vld [vmem:[%s489 + $0x2a0] sm:$0xff]
      %v6995 = vld [vmem:[%s489 + $0x2a8] sm:$0xff]
      %v6996 = vld [vmem:[%s489 + $0x2b8] sm:$0xff]
      %v6997 = vld [vmem:[%s489 + $0x2c0] sm:$0xff]
      %v6998 = vld [vmem:[%s489 + $0x2d0] sm:$0xff]
      %v6999 = vld [vmem:[%s489 + $0x2d8] sm:$0xff]
      %v7000 = vld [vmem:[%s489 + $0x2e8] sm:$0xff]
      %v7001 = vld [vmem:[%s489 + $0x2f0] sm:$0xff]
      %v7002 = vld [vmem:[%s489 + $0x300] sm:$0xff]
      %v7003 = vld [vmem:[%s489 + $0x308] sm:$0xff]
      %v7004 = vld [vmem:[%s489 + $0x318] sm:$0xff]
      %v7005 = vld [vmem:[%s489 + $0x320] sm:$0xff]
      %7070 = vrot.lane.b32.xlu0 %v6942, 24
      %v7071 = vpop.permute.xlu0 %7070
      %7072 = vrot.lane.b32.xlu0 %v6943, 24
      %v7073 = vpop.permute.xlu0 %7072
      %7074 = vrot.lane.b32.xlu0 %v6944, 24
      %v7075 = vpop.permute.xlu0 %7074
      %7076 = vrot.lane.b32.xlu0 %v6945, 24
      %v7077 = vpop.permute.xlu0 %7076
      %7078 = vrot.lane.b32.xlu0 %v6946, 24
      %v7079 = vpop.permute.xlu0 %7078
      %7080 = vrot.lane.b32.xlu0 %v6947, 24
      %v7081 = vpop.permute.xlu0 %7080
      %7082 = vrot.lane.b32.xlu0 %v6948, 24
      %v7083 = vpop.permute.xlu0 %7082
      %7084 = vrot.lane.b32.xlu0 %v6949, 24
      %v7085 = vpop.permute.xlu0 %7084
      %7086 = vrot.lane.b32.xlu0 %v6950, 24
      %v7087 = vpop.permute.xlu0 %7086
      %7088 = vrot.lane.b32.xlu0 %v6951, 24
      %v7089 = vpop.permute.xlu0 %7088
      %7090 = vrot.lane.b32.xlu0 %v6952, 24
      %v7091 = vpop.permute.xlu0 %7090
      %7092 = vrot.lane.b32.xlu0 %v6953, 24
      %v7093 = vpop.permute.xlu0 %7092
      %7094 = vrot.lane.b32.xlu0 %v6954, 24
      %v7095 = vpop.permute.xlu0 %7094
      %7096 = vrot.lane.b32.xlu0 %v6955, 24
      %v7097 = vpop.permute.xlu0 %7096
      %7098 = vrot.lane.b32.xlu0 %v6956, 24
      %v7099 = vpop.permute.xlu0 %7098
      %7100 = vrot.lane.b32.xlu0 %v6957, 24
      %v7101 = vpop.permute.xlu0 %7100
      %7102 = vrot.lane.b32.xlu0 %v6958, 24
      %v7103 = vpop.permute.xlu0 %7102
      %7104 = vrot.lane.b32.xlu0 %v6959, 24
      %v7105 = vpop.permute.xlu0 %7104
      %7106 = vrot.lane.b32.xlu0 %v6960, 24
      %v7107 = vpop.permute.xlu0 %7106
      %7108 = vrot.lane.b32.xlu0 %v6961, 24
      %v7109 = vpop.permute.xlu0 %7108
      %7110 = vrot.lane.b32.xlu0 %v6962, 24
      %v7111 = vpop.permute.xlu0 %7110
      %7112 = vrot.lane.b32.xlu0 %v6963, 24
      %v7113 = vpop.permute.xlu0 %7112
      %7114 = vrot.lane.b32.xlu0 %v6964, 24
      %v7115 = vpop.permute.xlu0 %7114
      %7116 = vrot.lane.b32.xlu0 %v6965, 24
      %v7117 = vpop.permute.xlu0 %7116
      %7118 = vrot.lane.b32.xlu0 %v6966, 24
      %v7119 = vpop.permute.xlu0 %7118
      %7120 = vrot.lane.b32.xlu0 %v6967, 24
      %v7121 = vpop.permute.xlu0 %7120
      %7122 = vrot.lane.b32.xlu0 %v6968, 24
      %v7123 = vpop.permute.xlu0 %7122
      %7124 = vrot.lane.b32.xlu0 %v6969, 24
      %v7125 = vpop.permute.xlu0 %7124
      %7126 = vrot.lane.b32.xlu0 %v6970, 24
      %v7127 = vpop.permute.xlu0 %7126
      %7128 = vrot.lane.b32.xlu0 %v6971, 24
      %v7129 = vpop.permute.xlu0 %7128
      %7130 = vrot.lane.b32.xlu0 %v6972, 24
      %v7131 = vpop.permute.xlu0 %7130
      %7132 = vrot.lane.b32.xlu0 %v6973, 24
      %v7133 = vpop.permute.xlu0 %7132
      %7134 = vrot.lane.b32.xlu0 %v6974, 24
      %v7135 = vpop.permute.xlu0 %7134
      %7136 = vrot.lane.b32.xlu0 %v6975, 24
      %v7137 = vpop.permute.xlu0 %7136
      %7138 = vrot.lane.b32.xlu0 %v6976, 24
      %v7139 = vpop.permute.xlu0 %7138
      %7140 = vrot.lane.b32.xlu0 %v6977, 24
      %v7141 = vpop.permute.xlu0 %7140
      %7142 = vrot.lane.b32.xlu0 %v6978, 24
      %v7143 = vpop.permute.xlu0 %7142
      %7144 = vrot.lane.b32.xlu0 %v6979, 24
      %v7145 = vpop.permute.xlu0 %7144
      %7146 = vrot.lane.b32.xlu0 %v6980, 24
      %v7147 = vpop.permute.xlu0 %7146
      %7148 = vrot.lane.b32.xlu0 %v6981, 24
      %v7149 = vpop.permute.xlu0 %7148
      %7150 = vrot.lane.b32.xlu0 %v6982, 24
      %v7151 = vpop.permute.xlu0 %7150
      %7152 = vrot.lane.b32.xlu0 %v6983, 24
      %v7153 = vpop.permute.xlu0 %7152
      %7154 = vrot.lane.b32.xlu0 %v6984, 24
      %v7155 = vpop.permute.xlu0 %7154
      %7156 = vrot.lane.b32.xlu0 %v6985, 24
      %v7157 = vpop.permute.xlu0 %7156
      %7158 = vrot.lane.b32.xlu0 %v6986, 24
      %v7159 = vpop.permute.xlu0 %7158
      %7160 = vrot.lane.b32.xlu0 %v6987, 24
      %v7161 = vpop.permute.xlu0 %7160
      %7162 = vrot.lane.b32.xlu0 %v6988, 24
      %v7163 = vpop.permute.xlu0 %7162
      %7164 = vrot.lane.b32.xlu0 %v6989, 24
      %v7165 = vpop.permute.xlu0 %7164
      %7166 = vrot.lane.b32.xlu0 %v6990, 24
      %v7167 = vpop.permute.xlu0 %7166
      %7168 = vrot.lane.b32.xlu0 %v6991, 24
      %v7169 = vpop.permute.xlu0 %7168
      %7170 = vrot.lane.b32.xlu0 %v6992, 24
      %v7171 = vpop.permute.xlu0 %7170
      %7172 = vrot.lane.b32.xlu0 %v6993, 24
      %v7173 = vpop.permute.xlu0 %7172
      %7174 = vrot.lane.b32.xlu0 %v6994, 24
      %v7175 = vpop.permute.xlu0 %7174
      %7176 = vrot.lane.b32.xlu0 %v6995, 24
      %v7177 = vpop.permute.xlu0 %7176
      %7178 = vrot.lane.b32.xlu0 %v6996, 24
      %v7179 = vpop.permute.xlu0 %7178
      %7180 = vrot.lane.b32.xlu0 %v6997, 24
      %v7181 = vpop.permute.xlu0 %7180
      %7182 = vrot.lane.b32.xlu0 %v6998, 24
      %v7183 = vpop.permute.xlu0 %7182
      %7184 = vrot.lane.b32.xlu0 %v6999, 24
      %v7185 = vpop.permute.xlu0 %7184
      %7186 = vrot.lane.b32.xlu0 %v7000, 24
      %v7187 = vpop.permute.xlu0 %7186
      %7188 = vrot.lane.b32.xlu0 %v7001, 24
      %v7189 = vpop.permute.xlu0 %7188
      %7190 = vrot.lane.b32.xlu0 %v7002, 24
      %v7191 = vpop.permute.xlu0 %7190
      %7192 = vrot.lane.b32.xlu0 %v7003, 24
      %v7193 = vpop.permute.xlu0 %7192
      %7194 = vrot.lane.b32.xlu0 %v7004, 24
      %v7195 = vpop.permute.xlu0 %7194
      %7196 = vrot.lane.b32.xlu0 %v7005, 24
      %v7197 = vpop.permute.xlu0 %7196
      %7262 = vst.msk [vmem:[#allocation3] sm:$0xff] %vm1773, %v7071
      %7263 = vst.msk [vmem:[#allocation3 + $0x8] sm:$0xff] %vm1773, %v7073
      %7264 = vst.msk [vmem:[#allocation3 + $0x10] sm:$0xff] %vm1773, %v7075
      %7265 = vst.msk [vmem:[#allocation3 + $0x18] sm:$0xff] %vm1773, %v7077
      %7266 = vst.msk [vmem:[#allocation3 + $0x20] sm:$0xff] %vm1773, %v7079
      %7267 = vst.msk [vmem:[#allocation3 + $0x28] sm:$0xff] %vm1773, %v7081
      %7268 = vst.msk [vmem:[#allocation3 + $0x30] sm:$0xff] %vm1773, %v7083
      %7269 = vst.msk [vmem:[#allocation3 + $0x38] sm:$0xff] %vm1773, %v7085
      %7270 = vst.msk [vmem:[#allocation3 + $0x40] sm:$0xff] %vm1773, %v7087
      %7271 = vst.msk [vmem:[#allocation3 + $0x48] sm:$0xff] %vm1773, %v7089
      %7272 = vst.msk [vmem:[#allocation3 + $0x50] sm:$0xff] %vm1773, %v7091
      %7273 = vst.msk [vmem:[#allocation3 + $0x58] sm:$0xff] %vm1773, %v7093
      %7274 = vst.msk [vmem:[#allocation3 + $0x60] sm:$0xff] %vm1773, %v7095
      %7275 = vst.msk [vmem:[#allocation3 + $0x68] sm:$0xff] %vm1773, %v7097
      %7276 = vst.msk [vmem:[#allocation3 + $0x70] sm:$0xff] %vm1773, %v7099
      %7277 = vst.msk [vmem:[#allocation3 + $0x78] sm:$0xff] %vm1773, %v7101
      %7278 = vst.msk [vmem:[#allocation3 + $0x80] sm:$0xff] %vm1773, %v7103
      %7279 = vst.msk [vmem:[#allocation3 + $0x88] sm:$0xff] %vm1773, %v7105
      %7280 = vst.msk [vmem:[#allocation3 + $0x90] sm:$0xff] %vm1773, %v7107
      %7281 = vst.msk [vmem:[#allocation3 + $0x98] sm:$0xff] %vm1773, %v7109
      %7282 = vst.msk [vmem:[#allocation3 + $0xa0] sm:$0xff] %vm1773, %v7111
      %7283 = vst.msk [vmem:[#allocation3 + $0xa8] sm:$0xff] %vm1773, %v7113
      %7284 = vst.msk [vmem:[#allocation3 + $0xb0] sm:$0xff] %vm1773, %v7115
      %7285 = vst.msk [vmem:[#allocation3 + $0xb8] sm:$0xff] %vm1773, %v7117
      %7286 = vst.msk [vmem:[#allocation3 + $0xc0] sm:$0xff] %vm1773, %v7119
      %7287 = vst.msk [vmem:[#allocation3 + $0xc8] sm:$0xff] %vm1773, %v7121
      %7288 = vst.msk [vmem:[#allocation3 + $0xd0] sm:$0xff] %vm1773, %v7123
      %7289 = vst.msk [vmem:[#allocation3 + $0xd8] sm:$0xff] %vm1773, %v7125
      %7290 = vst.msk [vmem:[#allocation3 + $0xe0] sm:$0xff] %vm1773, %v7127
      %7291 = vst.msk [vmem:[#allocation3 + $0xe8] sm:$0xff] %vm1773, %v7129
      %7292 = vst.msk [vmem:[#allocation3 + $0xf0] sm:$0xff] %vm1773, %v7131
      %7293 = vst.msk [vmem:[#allocation3 + $0xf8] sm:$0xff] %vm1773, %v7133
      %7294 = vst.msk [vmem:[#allocation3 + $0x100] sm:$0xff] %vm1773, %v7135
      %7295 = vst.msk [vmem:[#allocation3 + $0x108] sm:$0xff] %vm1773, %v7137
      %7296 = vst.msk [vmem:[#allocation3 + $0x110] sm:$0xff] %vm1773, %v7139
      %7297 = vst.msk [vmem:[#allocation3 + $0x118] sm:$0xff] %vm1773, %v7141
      %7298 = vst.msk [vmem:[#allocation3 + $0x120] sm:$0xff] %vm1773, %v7143
      %7299 = vst.msk [vmem:[#allocation3 + $0x128] sm:$0xff] %vm1773, %v7145
      %7300 = vst.msk [vmem:[#allocation3 + $0x130] sm:$0xff] %vm1773, %v7147
      %7301 = vst.msk [vmem:[#allocation3 + $0x138] sm:$0xff] %vm1773, %v7149
      %7302 = vst.msk [vmem:[#allocation3 + $0x140] sm:$0xff] %vm1773, %v7151
      %7303 = vst.msk [vmem:[#allocation3 + $0x148] sm:$0xff] %vm1773, %v7153
      %7304 = vst.msk [vmem:[#allocation3 + $0x150] sm:$0xff] %vm1773, %v7155
      %7305 = vst.msk [vmem:[#allocation3 + $0x158] sm:$0xff] %vm1773, %v7157
      %7306 = vst.msk [vmem:[#allocation3 + $0x160] sm:$0xff] %vm1773, %v7159
      %7307 = vst.msk [vmem:[#allocation3 + $0x168] sm:$0xff] %vm1773, %v7161
      %7308 = vst.msk [vmem:[#allocation3 + $0x170] sm:$0xff] %vm1773, %v7163
      %7309 = vst.msk [vmem:[#allocation3 + $0x178] sm:$0xff] %vm1773, %v7165
      %7310 = vst.msk [vmem:[#allocation3 + $0x180] sm:$0xff] %vm1773, %v7167
      %7311 = vst.msk [vmem:[#allocation3 + $0x188] sm:$0xff] %vm1773, %v7169
      %7312 = vst.msk [vmem:[#allocation3 + $0x190] sm:$0xff] %vm1773, %v7171
      %7313 = vst.msk [vmem:[#allocation3 + $0x198] sm:$0xff] %vm1773, %v7173
      %7314 = vst.msk [vmem:[#allocation3 + $0x1a0] sm:$0xff] %vm1773, %v7175
      %7315 = vst.msk [vmem:[#allocation3 + $0x1a8] sm:$0xff] %vm1773, %v7177
      %7316 = vst.msk [vmem:[#allocation3 + $0x1b0] sm:$0xff] %vm1773, %v7179
      %7317 = vst.msk [vmem:[#allocation3 + $0x1b8] sm:$0xff] %vm1773, %v7181
      %7318 = vst.msk [vmem:[#allocation3 + $0x1c0] sm:$0xff] %vm1773, %v7183
      %7319 = vst.msk [vmem:[#allocation3 + $0x1c8] sm:$0xff] %vm1773, %v7185
      %7320 = vst.msk [vmem:[#allocation3 + $0x1d0] sm:$0xff] %vm1773, %v7187
      %7321 = vst.msk [vmem:[#allocation3 + $0x1d8] sm:$0xff] %vm1773, %v7189
      %7322 = vst.msk [vmem:[#allocation3 + $0x1e0] sm:$0xff] %vm1773, %v7191
      %7323 = vst.msk [vmem:[#allocation3 + $0x1e8] sm:$0xff] %vm1773, %v7193
      %7324 = vst.msk [vmem:[#allocation3 + $0x1f0] sm:$0xff] %vm1773, %v7195
      %7325 = vst.msk [vmem:[#allocation3 + $0x1f8] sm:$0xff] %vm1773, %v7197
      %v7326 = vld [vmem:[%s489 + $0x1] sm:$0xff]
      %v7327 = vld [vmem:[%s489 + $0x9] sm:$0xff]
      %v7328 = vld [vmem:[%s489 + $0x19] sm:$0xff]
      %v7329 = vld [vmem:[%s489 + $0x21] sm:$0xff]
      %v7330 = vld [vmem:[%s489 + $0x31] sm:$0xff]
      %v7331 = vld [vmem:[%s489 + $0x39] sm:$0xff]
      %v7332 = vld [vmem:[%s489 + $0x49] sm:$0xff]
      %v7333 = vld [vmem:[%s489 + $0x51] sm:$0xff]
      %v7334 = vld [vmem:[%s489 + $0x61] sm:$0xff]
      %v7335 = vld [vmem:[%s489 + $0x69] sm:$0xff]
      %v7336 = vld [vmem:[%s489 + $0x79] sm:$0xff]
      %v7337 = vld [vmem:[%s489 + $0x81] sm:$0xff]
      %v7338 = vld [vmem:[%s489 + $0x91] sm:$0xff]
      %v7339 = vld [vmem:[%s489 + $0x99] sm:$0xff]
      %v7340 = vld [vmem:[%s489 + $0xa9] sm:$0xff]
      %v7341 = vld [vmem:[%s489 + $0xb1] sm:$0xff]
      %v7342 = vld [vmem:[%s489 + $0xc1] sm:$0xff]
      %v7343 = vld [vmem:[%s489 + $0xc9] sm:$0xff]
      %v7344 = vld [vmem:[%s489 + $0xd9] sm:$0xff]
      %v7345 = vld [vmem:[%s489 + $0xe1] sm:$0xff]
      %v7346 = vld [vmem:[%s489 + $0xf1] sm:$0xff]
      %v7347 = vld [vmem:[%s489 + $0xf9] sm:$0xff]
      %v7348 = vld [vmem:[%s489 + $0x109] sm:$0xff]
      %v7349 = vld [vmem:[%s489 + $0x111] sm:$0xff]
      %v7350 = vld [vmem:[%s489 + $0x121] sm:$0xff]
      %v7351 = vld [vmem:[%s489 + $0x129] sm:$0xff]
      %v7352 = vld [vmem:[%s489 + $0x139] sm:$0xff]
      %v7353 = vld [vmem:[%s489 + $0x141] sm:$0xff]
      %v7354 = vld [vmem:[%s489 + $0x151] sm:$0xff]
      %v7355 = vld [vmem:[%s489 + $0x159] sm:$0xff]
      %v7356 = vld [vmem:[%s489 + $0x169] sm:$0xff]
      %v7357 = vld [vmem:[%s489 + $0x171] sm:$0xff]
      %v7358 = vld [vmem:[%s489 + $0x1b1] sm:$0xff]
      %v7359 = vld [vmem:[%s489 + $0x1b9] sm:$0xff]
      %v7360 = vld [vmem:[%s489 + $0x1c9] sm:$0xff]
      %v7361 = vld [vmem:[%s489 + $0x1d1] sm:$0xff]
      %v7362 = vld [vmem:[%s489 + $0x1e1] sm:$0xff]
      %v7363 = vld [vmem:[%s489 + $0x1e9] sm:$0xff]
      %v7364 = vld [vmem:[%s489 + $0x1f9] sm:$0xff]
      %v7365 = vld [vmem:[%s489 + $0x201] sm:$0xff]
      %v7366 = vld [vmem:[%s489 + $0x211] sm:$0xff]
      %v7367 = vld [vmem:[%s489 + $0x219] sm:$0xff]
      %v7368 = vld [vmem:[%s489 + $0x229] sm:$0xff]
      %v7369 = vld [vmem:[%s489 + $0x231] sm:$0xff]
      %v7370 = vld [vmem:[%s489 + $0x241] sm:$0xff]
      %v7371 = vld [vmem:[%s489 + $0x249] sm:$0xff]
      %v7372 = vld [vmem:[%s489 + $0x259] sm:$0xff]
      %v7373 = vld [vmem:[%s489 + $0x261] sm:$0xff]
      %v7374 = vld [vmem:[%s489 + $0x271] sm:$0xff]
      %v7375 = vld [vmem:[%s489 + $0x279] sm:$0xff]
      %v7376 = vld [vmem:[%s489 + $0x289] sm:$0xff]
      %v7377 = vld [vmem:[%s489 + $0x291] sm:$0xff]
      %v7378 = vld [vmem:[%s489 + $0x2a1] sm:$0xff]
      %v7379 = vld [vmem:[%s489 + $0x2a9] sm:$0xff]
      %v7380 = vld [vmem:[%s489 + $0x2b9] sm:$0xff]
      %v7381 = vld [vmem:[%s489 + $0x2c1] sm:$0xff]
      %v7382 = vld [vmem:[%s489 + $0x2d1] sm:$0xff]
      %v7383 = vld [vmem:[%s489 + $0x2d9] sm:$0xff]
      %v7384 = vld [vmem:[%s489 + $0x2e9] sm:$0xff]
      %v7385 = vld [vmem:[%s489 + $0x2f1] sm:$0xff]
      %v7386 = vld [vmem:[%s489 + $0x301] sm:$0xff]
      %v7387 = vld [vmem:[%s489 + $0x309] sm:$0xff]
      %v7388 = vld [vmem:[%s489 + $0x319] sm:$0xff]
      %v7389 = vld [vmem:[%s489 + $0x321] sm:$0xff]
      %7454 = vrot.lane.b32.xlu0 %v7326, 32
      %v7455 = vpop.permute.xlu0 %7454
      %7456 = vrot.lane.b32.xlu0 %v7327, 32
      %v7457 = vpop.permute.xlu0 %7456
      %7458 = vrot.lane.b32.xlu0 %v7328, 32
      %v7459 = vpop.permute.xlu0 %7458
      %7460 = vrot.lane.b32.xlu0 %v7329, 32
      %v7461 = vpop.permute.xlu0 %7460
      %7462 = vrot.lane.b32.xlu0 %v7330, 32
      %v7463 = vpop.permute.xlu0 %7462
      %7464 = vrot.lane.b32.xlu0 %v7331, 32
      %v7465 = vpop.permute.xlu0 %7464
      %7466 = vrot.lane.b32.xlu0 %v7332, 32
      %v7467 = vpop.permute.xlu0 %7466
      %7468 = vrot.lane.b32.xlu0 %v7333, 32
      %v7469 = vpop.permute.xlu0 %7468
      %7470 = vrot.lane.b32.xlu0 %v7334, 32
      %v7471 = vpop.permute.xlu0 %7470
      %7472 = vrot.lane.b32.xlu0 %v7335, 32
      %v7473 = vpop.permute.xlu0 %7472
      %7474 = vrot.lane.b32.xlu0 %v7336, 32
      %v7475 = vpop.permute.xlu0 %7474
      %7476 = vrot.lane.b32.xlu0 %v7337, 32
      %v7477 = vpop.permute.xlu0 %7476
      %7478 = vrot.lane.b32.xlu0 %v7338, 32
      %v7479 = vpop.permute.xlu0 %7478
      %7480 = vrot.lane.b32.xlu0 %v7339, 32
      %v7481 = vpop.permute.xlu0 %7480
      %7482 = vrot.lane.b32.xlu0 %v7340, 32
      %v7483 = vpop.permute.xlu0 %7482
      %7484 = vrot.lane.b32.xlu0 %v7341, 32
      %v7485 = vpop.permute.xlu0 %7484
      %7486 = vrot.lane.b32.xlu0 %v7342, 32
      %v7487 = vpop.permute.xlu0 %7486
      %7488 = vrot.lane.b32.xlu0 %v7343, 32
      %v7489 = vpop.permute.xlu0 %7488
      %7490 = vrot.lane.b32.xlu0 %v7344, 32
      %v7491 = vpop.permute.xlu0 %7490
      %7492 = vrot.lane.b32.xlu0 %v7345, 32
      %v7493 = vpop.permute.xlu0 %7492
      %7494 = vrot.lane.b32.xlu0 %v7346, 32
      %v7495 = vpop.permute.xlu0 %7494
      %7496 = vrot.lane.b32.xlu0 %v7347, 32
      %v7497 = vpop.permute.xlu0 %7496
      %7498 = vrot.lane.b32.xlu0 %v7348, 32
      %v7499 = vpop.permute.xlu0 %7498
      %7500 = vrot.lane.b32.xlu0 %v7349, 32
      %v7501 = vpop.permute.xlu0 %7500
      %7502 = vrot.lane.b32.xlu0 %v7350, 32
      %v7503 = vpop.permute.xlu0 %7502
      %7504 = vrot.lane.b32.xlu0 %v7351, 32
      %v7505 = vpop.permute.xlu0 %7504
      %7506 = vrot.lane.b32.xlu0 %v7352, 32
      %v7507 = vpop.permute.xlu0 %7506
      %7508 = vrot.lane.b32.xlu0 %v7353, 32
      %v7509 = vpop.permute.xlu0 %7508
      %7510 = vrot.lane.b32.xlu0 %v7354, 32
      %v7511 = vpop.permute.xlu0 %7510
      %7512 = vrot.lane.b32.xlu0 %v7355, 32
      %v7513 = vpop.permute.xlu0 %7512
      %7514 = vrot.lane.b32.xlu0 %v7356, 32
      %v7515 = vpop.permute.xlu0 %7514
      %7516 = vrot.lane.b32.xlu0 %v7357, 32
      %v7517 = vpop.permute.xlu0 %7516
      %7518 = vrot.lane.b32.xlu0 %v7358, 32
      %v7519 = vpop.permute.xlu0 %7518
      %7520 = vrot.lane.b32.xlu0 %v7359, 32
      %v7521 = vpop.permute.xlu0 %7520
      %7522 = vrot.lane.b32.xlu0 %v7360, 32
      %v7523 = vpop.permute.xlu0 %7522
      %7524 = vrot.lane.b32.xlu0 %v7361, 32
      %v7525 = vpop.permute.xlu0 %7524
      %7526 = vrot.lane.b32.xlu0 %v7362, 32
      %v7527 = vpop.permute.xlu0 %7526
      %7528 = vrot.lane.b32.xlu0 %v7363, 32
      %v7529 = vpop.permute.xlu0 %7528
      %7530 = vrot.lane.b32.xlu0 %v7364, 32
      %v7531 = vpop.permute.xlu0 %7530
      %7532 = vrot.lane.b32.xlu0 %v7365, 32
      %v7533 = vpop.permute.xlu0 %7532
      %7534 = vrot.lane.b32.xlu0 %v7366, 32
      %v7535 = vpop.permute.xlu0 %7534
      %7536 = vrot.lane.b32.xlu0 %v7367, 32
      %v7537 = vpop.permute.xlu0 %7536
      %7538 = vrot.lane.b32.xlu0 %v7368, 32
      %v7539 = vpop.permute.xlu0 %7538
      %7540 = vrot.lane.b32.xlu0 %v7369, 32
      %v7541 = vpop.permute.xlu0 %7540
      %7542 = vrot.lane.b32.xlu0 %v7370, 32
      %v7543 = vpop.permute.xlu0 %7542
      %7544 = vrot.lane.b32.xlu0 %v7371, 32
      %v7545 = vpop.permute.xlu0 %7544
      %7546 = vrot.lane.b32.xlu0 %v7372, 32
      %v7547 = vpop.permute.xlu0 %7546
      %7548 = vrot.lane.b32.xlu0 %v7373, 32
      %v7549 = vpop.permute.xlu0 %7548
      %7550 = vrot.lane.b32.xlu0 %v7374, 32
      %v7551 = vpop.permute.xlu0 %7550
      %7552 = vrot.lane.b32.xlu0 %v7375, 32
      %v7553 = vpop.permute.xlu0 %7552
      %7554 = vrot.lane.b32.xlu0 %v7376, 32
      %v7555 = vpop.permute.xlu0 %7554
      %7556 = vrot.lane.b32.xlu0 %v7377, 32
      %v7557 = vpop.permute.xlu0 %7556
      %7558 = vrot.lane.b32.xlu0 %v7378, 32
      %v7559 = vpop.permute.xlu0 %7558
      %7560 = vrot.lane.b32.xlu0 %v7379, 32
      %v7561 = vpop.permute.xlu0 %7560
      %7562 = vrot.lane.b32.xlu0 %v7380, 32
      %v7563 = vpop.permute.xlu0 %7562
      %7564 = vrot.lane.b32.xlu0 %v7381, 32
      %v7565 = vpop.permute.xlu0 %7564
      %7566 = vrot.lane.b32.xlu0 %v7382, 32
      %v7567 = vpop.permute.xlu0 %7566
      %7568 = vrot.lane.b32.xlu0 %v7383, 32
      %v7569 = vpop.permute.xlu0 %7568
      %7570 = vrot.lane.b32.xlu0 %v7384, 32
      %v7571 = vpop.permute.xlu0 %7570
      %7572 = vrot.lane.b32.xlu0 %v7385, 32
      %v7573 = vpop.permute.xlu0 %7572
      %7574 = vrot.lane.b32.xlu0 %v7386, 32
      %v7575 = vpop.permute.xlu0 %7574
      %7576 = vrot.lane.b32.xlu0 %v7387, 32
      %v7577 = vpop.permute.xlu0 %7576
      %7578 = vrot.lane.b32.xlu0 %v7388, 32
      %v7579 = vpop.permute.xlu0 %7578
      %7580 = vrot.lane.b32.xlu0 %v7389, 32
      %v7581 = vpop.permute.xlu0 %7580
      %7646 = vst.msk [vmem:[#allocation3] sm:$0xff] %vm2158, %v7455
      %7647 = vst.msk [vmem:[#allocation3 + $0x8] sm:$0xff] %vm2158, %v7457
      %7648 = vst.msk [vmem:[#allocation3 + $0x10] sm:$0xff] %vm2158, %v7459
      %7649 = vst.msk [vmem:[#allocation3 + $0x18] sm:$0xff] %vm2158, %v7461
      %7650 = vst.msk [vmem:[#allocation3 + $0x20] sm:$0xff] %vm2158, %v7463
      %7651 = vst.msk [vmem:[#allocation3 + $0x28] sm:$0xff] %vm2158, %v7465
      %7652 = vst.msk [vmem:[#allocation3 + $0x30] sm:$0xff] %vm2158, %v7467
      %7653 = vst.msk [vmem:[#allocation3 + $0x38] sm:$0xff] %vm2158, %v7469
      %7654 = vst.msk [vmem:[#allocation3 + $0x40] sm:$0xff] %vm2158, %v7471
      %7655 = vst.msk [vmem:[#allocation3 + $0x48] sm:$0xff] %vm2158, %v7473
      %7656 = vst.msk [vmem:[#allocation3 + $0x50] sm:$0xff] %vm2158, %v7475
      %7657 = vst.msk [vmem:[#allocation3 + $0x58] sm:$0xff] %vm2158, %v7477
      %7658 = vst.msk [vmem:[#allocation3 + $0x60] sm:$0xff] %vm2158, %v7479
      %7659 = vst.msk [vmem:[#allocation3 + $0x68] sm:$0xff] %vm2158, %v7481
      %7660 = vst.msk [vmem:[#allocation3 + $0x70] sm:$0xff] %vm2158, %v7483
      %7661 = vst.msk [vmem:[#allocation3 + $0x78] sm:$0xff] %vm2158, %v7485
      %7662 = vst.msk [vmem:[#allocation3 + $0x80] sm:$0xff] %vm2158, %v7487
      %7663 = vst.msk [vmem:[#allocation3 + $0x88] sm:$0xff] %vm2158, %v7489
      %7664 = vst.msk [vmem:[#allocation3 + $0x90] sm:$0xff] %vm2158, %v7491
      %7665 = vst.msk [vmem:[#allocation3 + $0x98] sm:$0xff] %vm2158, %v7493
      %7666 = vst.msk [vmem:[#allocation3 + $0xa0] sm:$0xff] %vm2158, %v7495
      %7667 = vst.msk [vmem:[#allocation3 + $0xa8] sm:$0xff] %vm2158, %v7497
      %7668 = vst.msk [vmem:[#allocation3 + $0xb0] sm:$0xff] %vm2158, %v7499
      %7669 = vst.msk [vmem:[#allocation3 + $0xb8] sm:$0xff] %vm2158, %v7501
      %7670 = vst.msk [vmem:[#allocation3 + $0xc0] sm:$0xff] %vm2158, %v7503
      %7671 = vst.msk [vmem:[#allocation3 + $0xc8] sm:$0xff] %vm2158, %v7505
      %7672 = vst.msk [vmem:[#allocation3 + $0xd0] sm:$0xff] %vm2158, %v7507
      %7673 = vst.msk [vmem:[#allocation3 + $0xd8] sm:$0xff] %vm2158, %v7509
      %7674 = vst.msk [vmem:[#allocation3 + $0xe0] sm:$0xff] %vm2158, %v7511
      %7675 = vst.msk [vmem:[#allocation3 + $0xe8] sm:$0xff] %vm2158, %v7513
      %7676 = vst.msk [vmem:[#allocation3 + $0xf0] sm:$0xff] %vm2158, %v7515
      %7677 = vst.msk [vmem:[#allocation3 + $0xf8] sm:$0xff] %vm2158, %v7517
      %7678 = vst.msk [vmem:[#allocation3 + $0x100] sm:$0xff] %vm2158, %v7519
      %7679 = vst.msk [vmem:[#allocation3 + $0x108] sm:$0xff] %vm2158, %v7521
      %7680 = vst.msk [vmem:[#allocation3 + $0x110] sm:$0xff] %vm2158, %v7523
      %7681 = vst.msk [vmem:[#allocation3 + $0x118] sm:$0xff] %vm2158, %v7525
      %7682 = vst.msk [vmem:[#allocation3 + $0x120] sm:$0xff] %vm2158, %v7527
      %7683 = vst.msk [vmem:[#allocation3 + $0x128] sm:$0xff] %vm2158, %v7529
      %7684 = vst.msk [vmem:[#allocation3 + $0x130] sm:$0xff] %vm2158, %v7531
      %7685 = vst.msk [vmem:[#allocation3 + $0x138] sm:$0xff] %vm2158, %v7533
      %7686 = vst.msk [vmem:[#allocation3 + $0x140] sm:$0xff] %vm2158, %v7535
      %7687 = vst.msk [vmem:[#allocation3 + $0x148] sm:$0xff] %vm2158, %v7537
      %7688 = vst.msk [vmem:[#allocation3 + $0x150] sm:$0xff] %vm2158, %v7539
      %7689 = vst.msk [vmem:[#allocation3 + $0x158] sm:$0xff] %vm2158, %v7541
      %7690 = vst.msk [vmem:[#allocation3 + $0x160] sm:$0xff] %vm2158, %v7543
      %7691 = vst.msk [vmem:[#allocation3 + $0x168] sm:$0xff] %vm2158, %v7545
      %7692 = vst.msk [vmem:[#allocation3 + $0x170] sm:$0xff] %vm2158, %v7547
      %7693 = vst.msk [vmem:[#allocation3 + $0x178] sm:$0xff] %vm2158, %v7549
      %7694 = vst.msk [vmem:[#allocation3 + $0x180] sm:$0xff] %vm2158, %v7551
      %7695 = vst.msk [vmem:[#allocation3 + $0x188] sm:$0xff] %vm2158, %v7553
      %7696 = vst.msk [vmem:[#allocation3 + $0x190] sm:$0xff] %vm2158, %v7555
      %7697 = vst.msk [vmem:[#allocation3 + $0x198] sm:$0xff] %vm2158, %v7557
      %7698 = vst.msk [vmem:[#allocation3 + $0x1a0] sm:$0xff] %vm2158, %v7559
      %7699 = vst.msk [vmem:[#allocation3 + $0x1a8] sm:$0xff] %vm2158, %v7561
      %7700 = vst.msk [vmem:[#allocation3 + $0x1b0] sm:$0xff] %vm2158, %v7563
      %7701 = vst.msk [vmem:[#allocation3 + $0x1b8] sm:$0xff] %vm2158, %v7565
      %7702 = vst.msk [vmem:[#allocation3 + $0x1c0] sm:$0xff] %vm2158, %v7567
      %7703 = vst.msk [vmem:[#allocation3 + $0x1c8] sm:$0xff] %vm2158, %v7569
      %7704 = vst.msk [vmem:[#allocation3 + $0x1d0] sm:$0xff] %vm2158, %v7571
      %7705 = vst.msk [vmem:[#allocation3 + $0x1d8] sm:$0xff] %vm2158, %v7573
      %7706 = vst.msk [vmem:[#allocation3 + $0x1e0] sm:$0xff] %vm2158, %v7575
      %7707 = vst.msk [vmem:[#allocation3 + $0x1e8] sm:$0xff] %vm2158, %v7577
      %7708 = vst.msk [vmem:[#allocation3 + $0x1f0] sm:$0xff] %vm2158, %v7579
      %7709 = vst.msk [vmem:[#allocation3 + $0x1f8] sm:$0xff] %vm2158, %v7581
      %v7710 = vld [vmem:[%s489 + $0x2] sm:$0xff]
      %v7711 = vld [vmem:[%s489 + $0xa] sm:$0xff]
      %v7712 = vld [vmem:[%s489 + $0x1a] sm:$0xff]
      %v7713 = vld [vmem:[%s489 + $0x22] sm:$0xff]
      %v7714 = vld [vmem:[%s489 + $0x32] sm:$0xff]
      %v7715 = vld [vmem:[%s489 + $0x3a] sm:$0xff]
      %v7716 = vld [vmem:[%s489 + $0x4a] sm:$0xff]
      %v7717 = vld [vmem:[%s489 + $0x52] sm:$0xff]
      %v7718 = vld [vmem:[%s489 + $0x62] sm:$0xff]
      %v7719 = vld [vmem:[%s489 + $0x6a] sm:$0xff]
      %v7720 = vld [vmem:[%s489 + $0x7a] sm:$0xff]
      %v7721 = vld [vmem:[%s489 + $0x82] sm:$0xff]
      %v7722 = vld [vmem:[%s489 + $0x92] sm:$0xff]
      %v7723 = vld [vmem:[%s489 + $0x9a] sm:$0xff]
      %v7724 = vld [vmem:[%s489 + $0xaa] sm:$0xff]
      %v7725 = vld [vmem:[%s489 + $0xb2] sm:$0xff]
      %v7726 = vld [vmem:[%s489 + $0xc2] sm:$0xff]
      %v7727 = vld [vmem:[%s489 + $0xca] sm:$0xff]
      %v7728 = vld [vmem:[%s489 + $0xda] sm:$0xff]
      %v7729 = vld [vmem:[%s489 + $0xe2] sm:$0xff]
      %v7730 = vld [vmem:[%s489 + $0xf2] sm:$0xff]
      %v7731 = vld [vmem:[%s489 + $0xfa] sm:$0xff]
      %v7732 = vld [vmem:[%s489 + $0x10a] sm:$0xff]
      %v7733 = vld [vmem:[%s489 + $0x112] sm:$0xff]
      %v7734 = vld [vmem:[%s489 + $0x122] sm:$0xff]
      %v7735 = vld [vmem:[%s489 + $0x12a] sm:$0xff]
      %v7736 = vld [vmem:[%s489 + $0x13a] sm:$0xff]
      %v7737 = vld [vmem:[%s489 + $0x142] sm:$0xff]
      %v7738 = vld [vmem:[%s489 + $0x152] sm:$0xff]
      %v7739 = vld [vmem:[%s489 + $0x15a] sm:$0xff]
      %v7740 = vld [vmem:[%s489 + $0x16a] sm:$0xff]
      %v7741 = vld [vmem:[%s489 + $0x172] sm:$0xff]
      %v7742 = vld [vmem:[%s489 + $0x1b2] sm:$0xff]
      %v7743 = vld [vmem:[%s489 + $0x1ba] sm:$0xff]
      %v7744 = vld [vmem:[%s489 + $0x1ca] sm:$0xff]
      %v7745 = vld [vmem:[%s489 + $0x1d2] sm:$0xff]
      %v7746 = vld [vmem:[%s489 + $0x1e2] sm:$0xff]
      %v7747 = vld [vmem:[%s489 + $0x1ea] sm:$0xff]
      %v7748 = vld [vmem:[%s489 + $0x1fa] sm:$0xff]
      %v7749 = vld [vmem:[%s489 + $0x202] sm:$0xff]
      %v7750 = vld [vmem:[%s489 + $0x212] sm:$0xff]
      %v7751 = vld [vmem:[%s489 + $0x21a] sm:$0xff]
      %v7752 = vld [vmem:[%s489 + $0x22a] sm:$0xff]
      %v7753 = vld [vmem:[%s489 + $0x232] sm:$0xff]
      %v7754 = vld [vmem:[%s489 + $0x242] sm:$0xff]
      %v7755 = vld [vmem:[%s489 + $0x24a] sm:$0xff]
      %v7756 = vld [vmem:[%s489 + $0x25a] sm:$0xff]
      %v7757 = vld [vmem:[%s489 + $0x262] sm:$0xff]
      %v7758 = vld [vmem:[%s489 + $0x272] sm:$0xff]
      %v7759 = vld [vmem:[%s489 + $0x27a] sm:$0xff]
      %v7760 = vld [vmem:[%s489 + $0x28a] sm:$0xff]
      %v7761 = vld [vmem:[%s489 + $0x292] sm:$0xff]
      %v7762 = vld [vmem:[%s489 + $0x2a2] sm:$0xff]
      %v7763 = vld [vmem:[%s489 + $0x2aa] sm:$0xff]
      %v7764 = vld [vmem:[%s489 + $0x2ba] sm:$0xff]
      %v7765 = vld [vmem:[%s489 + $0x2c2] sm:$0xff]
      %v7766 = vld [vmem:[%s489 + $0x2d2] sm:$0xff]
      %v7767 = vld [vmem:[%s489 + $0x2da] sm:$0xff]
      %v7768 = vld [vmem:[%s489 + $0x2ea] sm:$0xff]
      %v7769 = vld [vmem:[%s489 + $0x2f2] sm:$0xff]
      %v7770 = vld [vmem:[%s489 + $0x302] sm:$0xff]
      %v7771 = vld [vmem:[%s489 + $0x30a] sm:$0xff]
      %v7772 = vld [vmem:[%s489 + $0x31a] sm:$0xff]
      %v7773 = vld [vmem:[%s489 + $0x322] sm:$0xff]
      %7838 = vrot.lane.b32.xlu0 %v7710, 40
      %v7839 = vpop.permute.xlu0 %7838
      %7840 = vrot.lane.b32.xlu0 %v7711, 40
      %v7841 = vpop.permute.xlu0 %7840
      %7842 = vrot.lane.b32.xlu0 %v7712, 40
      %v7843 = vpop.permute.xlu0 %7842
      %7844 = vrot.lane.b32.xlu0 %v7713, 40
      %v7845 = vpop.permute.xlu0 %7844
      %7846 = vrot.lane.b32.xlu0 %v7714, 40
      %v7847 = vpop.permute.xlu0 %7846
      %7848 = vrot.lane.b32.xlu0 %v7715, 40
      %v7849 = vpop.permute.xlu0 %7848
      %7850 = vrot.lane.b32.xlu0 %v7716, 40
      %v7851 = vpop.permute.xlu0 %7850
      %7852 = vrot.lane.b32.xlu0 %v7717, 40
      %v7853 = vpop.permute.xlu0 %7852
      %7854 = vrot.lane.b32.xlu0 %v7718, 40
      %v7855 = vpop.permute.xlu0 %7854
      %7856 = vrot.lane.b32.xlu0 %v7719, 40
      %v7857 = vpop.permute.xlu0 %7856
      %7858 = vrot.lane.b32.xlu0 %v7720, 40
      %v7859 = vpop.permute.xlu0 %7858
      %7860 = vrot.lane.b32.xlu0 %v7721, 40
      %v7861 = vpop.permute.xlu0 %7860
      %7862 = vrot.lane.b32.xlu0 %v7722, 40
      %v7863 = vpop.permute.xlu0 %7862
      %7864 = vrot.lane.b32.xlu0 %v7723, 40
      %v7865 = vpop.permute.xlu0 %7864
      %7866 = vrot.lane.b32.xlu0 %v7724, 40
      %v7867 = vpop.permute.xlu0 %7866
      %7868 = vrot.lane.b32.xlu0 %v7725, 40
      %v7869 = vpop.permute.xlu0 %7868
      %7870 = vrot.lane.b32.xlu0 %v7726, 40
      %v7871 = vpop.permute.xlu0 %7870
      %7872 = vrot.lane.b32.xlu0 %v7727, 40
      %v7873 = vpop.permute.xlu0 %7872
      %7874 = vrot.lane.b32.xlu0 %v7728, 40
      %v7875 = vpop.permute.xlu0 %7874
      %7876 = vrot.lane.b32.xlu0 %v7729, 40
      %v7877 = vpop.permute.xlu0 %7876
      %7878 = vrot.lane.b32.xlu0 %v7730, 40
      %v7879 = vpop.permute.xlu0 %7878
      %7880 = vrot.lane.b32.xlu0 %v7731, 40
      %v7881 = vpop.permute.xlu0 %7880
      %7882 = vrot.lane.b32.xlu0 %v7732, 40
      %v7883 = vpop.permute.xlu0 %7882
      %7884 = vrot.lane.b32.xlu0 %v7733, 40
      %v7885 = vpop.permute.xlu0 %7884
      %7886 = vrot.lane.b32.xlu0 %v7734, 40
      %v7887 = vpop.permute.xlu0 %7886
      %7888 = vrot.lane.b32.xlu0 %v7735, 40
      %v7889 = vpop.permute.xlu0 %7888
      %7890 = vrot.lane.b32.xlu0 %v7736, 40
      %v7891 = vpop.permute.xlu0 %7890
      %7892 = vrot.lane.b32.xlu0 %v7737, 40
      %v7893 = vpop.permute.xlu0 %7892
      %7894 = vrot.lane.b32.xlu0 %v7738, 40
      %v7895 = vpop.permute.xlu0 %7894
      %7896 = vrot.lane.b32.xlu0 %v7739, 40
      %v7897 = vpop.permute.xlu0 %7896
      %7898 = vrot.lane.b32.xlu0 %v7740, 40
      %v7899 = vpop.permute.xlu0 %7898
      %7900 = vrot.lane.b32.xlu0 %v7741, 40
      %v7901 = vpop.permute.xlu0 %7900
      %7902 = vrot.lane.b32.xlu0 %v7742, 40
      %v7903 = vpop.permute.xlu0 %7902
      %7904 = vrot.lane.b32.xlu0 %v7743, 40
      %v7905 = vpop.permute.xlu0 %7904
      %7906 = vrot.lane.b32.xlu0 %v7744, 40
      %v7907 = vpop.permute.xlu0 %7906
      %7908 = vrot.lane.b32.xlu0 %v7745, 40
      %v7909 = vpop.permute.xlu0 %7908
      %7910 = vrot.lane.b32.xlu0 %v7746, 40
      %v7911 = vpop.permute.xlu0 %7910
      %7912 = vrot.lane.b32.xlu0 %v7747, 40
      %v7913 = vpop.permute.xlu0 %7912
      %7914 = vrot.lane.b32.xlu0 %v7748, 40
      %v7915 = vpop.permute.xlu0 %7914
      %7916 = vrot.lane.b32.xlu0 %v7749, 40
      %v7917 = vpop.permute.xlu0 %7916
      %7918 = vrot.lane.b32.xlu0 %v7750, 40
      %v7919 = vpop.permute.xlu0 %7918
      %7920 = vrot.lane.b32.xlu0 %v7751, 40
      %v7921 = vpop.permute.xlu0 %7920
      %7922 = vrot.lane.b32.xlu0 %v7752, 40
      %v7923 = vpop.permute.xlu0 %7922
      %7924 = vrot.lane.b32.xlu0 %v7753, 40
      %v7925 = vpop.permute.xlu0 %7924
      %7926 = vrot.lane.b32.xlu0 %v7754, 40
      %v7927 = vpop.permute.xlu0 %7926
      %7928 = vrot.lane.b32.xlu0 %v7755, 40
      %v7929 = vpop.permute.xlu0 %7928
      %7930 = vrot.lane.b32.xlu0 %v7756, 40
      %v7931 = vpop.permute.xlu0 %7930
      %7932 = vrot.lane.b32.xlu0 %v7757, 40
      %v7933 = vpop.permute.xlu0 %7932
      %7934 = vrot.lane.b32.xlu0 %v7758, 40
      %v7935 = vpop.permute.xlu0 %7934
      %7936 = vrot.lane.b32.xlu0 %v7759, 40
      %v7937 = vpop.permute.xlu0 %7936
      %7938 = vrot.lane.b32.xlu0 %v7760, 40
      %v7939 = vpop.permute.xlu0 %7938
      %7940 = vrot.lane.b32.xlu0 %v7761, 40
      %v7941 = vpop.permute.xlu0 %7940
      %7942 = vrot.lane.b32.xlu0 %v7762, 40
      %v7943 = vpop.permute.xlu0 %7942
      %7944 = vrot.lane.b32.xlu0 %v7763, 40
      %v7945 = vpop.permute.xlu0 %7944
      %7946 = vrot.lane.b32.xlu0 %v7764, 40
      %v7947 = vpop.permute.xlu0 %7946
      %7948 = vrot.lane.b32.xlu0 %v7765, 40
      %v7949 = vpop.permute.xlu0 %7948
      %7950 = vrot.lane.b32.xlu0 %v7766, 40
      %v7951 = vpop.permute.xlu0 %7950
      %7952 = vrot.lane.b32.xlu0 %v7767, 40
      %v7953 = vpop.permute.xlu0 %7952
      %7954 = vrot.lane.b32.xlu0 %v7768, 40
      %v7955 = vpop.permute.xlu0 %7954
      %7956 = vrot.lane.b32.xlu0 %v7769, 40
      %v7957 = vpop.permute.xlu0 %7956
      %7958 = vrot.lane.b32.xlu0 %v7770, 40
      %v7959 = vpop.permute.xlu0 %7958
      %7960 = vrot.lane.b32.xlu0 %v7771, 40
      %v7961 = vpop.permute.xlu0 %7960
      %7962 = vrot.lane.b32.xlu0 %v7772, 40
      %v7963 = vpop.permute.xlu0 %7962
      %7964 = vrot.lane.b32.xlu0 %v7773, 40
      %v7965 = vpop.permute.xlu0 %7964
      %8030 = vst.msk [vmem:[#allocation3] sm:$0xff] %vm2543, %v7839
      %8031 = vst.msk [vmem:[#allocation3 + $0x8] sm:$0xff] %vm2543, %v7841
      %8032 = vst.msk [vmem:[#allocation3 + $0x10] sm:$0xff] %vm2543, %v7843
      %8033 = vst.msk [vmem:[#allocation3 + $0x18] sm:$0xff] %vm2543, %v7845
      %8034 = vst.msk [vmem:[#allocation3 + $0x20] sm:$0xff] %vm2543, %v7847
      %8035 = vst.msk [vmem:[#allocation3 + $0x28] sm:$0xff] %vm2543, %v7849
      %8036 = vst.msk [vmem:[#allocation3 + $0x30] sm:$0xff] %vm2543, %v7851
      %8037 = vst.msk [vmem:[#allocation3 + $0x38] sm:$0xff] %vm2543, %v7853
      %8038 = vst.msk [vmem:[#allocation3 + $0x40] sm:$0xff] %vm2543, %v7855
      %8039 = vst.msk [vmem:[#allocation3 + $0x48] sm:$0xff] %vm2543, %v7857
      %8040 = vst.msk [vmem:[#allocation3 + $0x50] sm:$0xff] %vm2543, %v7859
      %8041 = vst.msk [vmem:[#allocation3 + $0x58] sm:$0xff] %vm2543, %v7861
      %8042 = vst.msk [vmem:[#allocation3 + $0x60] sm:$0xff] %vm2543, %v7863
      %8043 = vst.msk [vmem:[#allocation3 + $0x68] sm:$0xff] %vm2543, %v7865
      %8044 = vst.msk [vmem:[#allocation3 + $0x70] sm:$0xff] %vm2543, %v7867
      %8045 = vst.msk [vmem:[#allocation3 + $0x78] sm:$0xff] %vm2543, %v7869
      %8046 = vst.msk [vmem:[#allocation3 + $0x80] sm:$0xff] %vm2543, %v7871
      %8047 = vst.msk [vmem:[#allocation3 + $0x88] sm:$0xff] %vm2543, %v7873
      %8048 = vst.msk [vmem:[#allocation3 + $0x90] sm:$0xff] %vm2543, %v7875
      %8049 = vst.msk [vmem:[#allocation3 + $0x98] sm:$0xff] %vm2543, %v7877
      %8050 = vst.msk [vmem:[#allocation3 + $0xa0] sm:$0xff] %vm2543, %v7879
      %8051 = vst.msk [vmem:[#allocation3 + $0xa8] sm:$0xff] %vm2543, %v7881
      %8052 = vst.msk [vmem:[#allocation3 + $0xb0] sm:$0xff] %vm2543, %v7883
      %8053 = vst.msk [vmem:[#allocation3 + $0xb8] sm:$0xff] %vm2543, %v7885
      %8054 = vst.msk [vmem:[#allocation3 + $0xc0] sm:$0xff] %vm2543, %v7887
      %8055 = vst.msk [vmem:[#allocation3 + $0xc8] sm:$0xff] %vm2543, %v7889
      %8056 = vst.msk [vmem:[#allocation3 + $0xd0] sm:$0xff] %vm2543, %v7891
      %8057 = vst.msk [vmem:[#allocation3 + $0xd8] sm:$0xff] %vm2543, %v7893
      %8058 = vst.msk [vmem:[#allocation3 + $0xe0] sm:$0xff] %vm2543, %v7895
      %8059 = vst.msk [vmem:[#allocation3 + $0xe8] sm:$0xff] %vm2543, %v7897
      %8060 = vst.msk [vmem:[#allocation3 + $0xf0] sm:$0xff] %vm2543, %v7899
      %8061 = vst.msk [vmem:[#allocation3 + $0xf8] sm:$0xff] %vm2543, %v7901
      %8062 = vst.msk [vmem:[#allocation3 + $0x100] sm:$0xff] %vm2543, %v7903
      %8063 = vst.msk [vmem:[#allocation3 + $0x108] sm:$0xff] %vm2543, %v7905
      %8064 = vst.msk [vmem:[#allocation3 + $0x110] sm:$0xff] %vm2543, %v7907
      %8065 = vst.msk [vmem:[#allocation3 + $0x118] sm:$0xff] %vm2543, %v7909
      %8066 = vst.msk [vmem:[#allocation3 + $0x120] sm:$0xff] %vm2543, %v7911
      %8067 = vst.msk [vmem:[#allocation3 + $0x128] sm:$0xff] %vm2543, %v7913
      %8068 = vst.msk [vmem:[#allocation3 + $0x130] sm:$0xff] %vm2543, %v7915
      %8069 = vst.msk [vmem:[#allocation3 + $0x138] sm:$0xff] %vm2543, %v7917
      %8070 = vst.msk [vmem:[#allocation3 + $0x140] sm:$0xff] %vm2543, %v7919
      %8071 = vst.msk [vmem:[#allocation3 + $0x148] sm:$0xff] %vm2543, %v7921
      %8072 = vst.msk [vmem:[#allocation3 + $0x150] sm:$0xff] %vm2543, %v7923
      %8073 = vst.msk [vmem:[#allocation3 + $0x158] sm:$0xff] %vm2543, %v7925
      %8074 = vst.msk [vmem:[#allocation3 + $0x160] sm:$0xff] %vm2543, %v7927
      %8075 = vst.msk [vmem:[#allocation3 + $0x168] sm:$0xff] %vm2543, %v7929
      %8076 = vst.msk [vmem:[#allocation3 + $0x170] sm:$0xff] %vm2543, %v7931
      %8077 = vst.msk [vmem:[#allocation3 + $0x178] sm:$0xff] %vm2543, %v7933
      %8078 = vst.msk [vmem:[#allocation3 + $0x180] sm:$0xff] %vm2543, %v7935
      %8079 = vst.msk [vmem:[#allocation3 + $0x188] sm:$0xff] %vm2543, %v7937
      %8080 = vst.msk [vmem:[#allocation3 + $0x190] sm:$0xff] %vm2543, %v7939
      %8081 = vst.msk [vmem:[#allocation3 + $0x198] sm:$0xff] %vm2543, %v7941
      %8082 = vst.msk [vmem:[#allocation3 + $0x1a0] sm:$0xff] %vm2543, %v7943
      %8083 = vst.msk [vmem:[#allocation3 + $0x1a8] sm:$0xff] %vm2543, %v7945
      %8084 = vst.msk [vmem:[#allocation3 + $0x1b0] sm:$0xff] %vm2543, %v7947
      %8085 = vst.msk [vmem:[#allocation3 + $0x1b8] sm:$0xff] %vm2543, %v7949
      %8086 = vst.msk [vmem:[#allocation3 + $0x1c0] sm:$0xff] %vm2543, %v7951
      %8087 = vst.msk [vmem:[#allocation3 + $0x1c8] sm:$0xff] %vm2543, %v7953
      %8088 = vst.msk [vmem:[#allocation3 + $0x1d0] sm:$0xff] %vm2543, %v7955
      %8089 = vst.msk [vmem:[#allocation3 + $0x1d8] sm:$0xff] %vm2543, %v7957
      %8090 = vst.msk [vmem:[#allocation3 + $0x1e0] sm:$0xff] %vm2543, %v7959
      %8091 = vst.msk [vmem:[#allocation3 + $0x1e8] sm:$0xff] %vm2543, %v7961
      %8092 = vst.msk [vmem:[#allocation3 + $0x1f0] sm:$0xff] %vm2543, %v7963
      %8093 = vst.msk [vmem:[#allocation3 + $0x1f8] sm:$0xff] %vm2543, %v7965
      %v8094 = vld [vmem:[%s2608] sm:$0xff]
      %v8095 = vld [vmem:[%s2608 + $0x8] sm:$0xff]
      %v8096 = vld [vmem:[%s2608 + $0x18] sm:$0xff]
      %v8097 = vld [vmem:[%s2608 + $0x20] sm:$0xff]
      %v8098 = vld [vmem:[%s2608 + $0x30] sm:$0xff]
      %v8099 = vld [vmem:[%s2608 + $0x38] sm:$0xff]
      %v8100 = vld [vmem:[%s2608 + $0x48] sm:$0xff]
      %v8101 = vld [vmem:[%s2608 + $0x50] sm:$0xff]
      %v8102 = vld [vmem:[%s2608 + $0x60] sm:$0xff]
      %v8103 = vld [vmem:[%s2608 + $0x68] sm:$0xff]
      %v8104 = vld [vmem:[%s2608 + $0x78] sm:$0xff]
      %v8105 = vld [vmem:[%s2608 + $0x80] sm:$0xff]
      %v8106 = vld [vmem:[%s2608 + $0x90] sm:$0xff]
      %v8107 = vld [vmem:[%s2608 + $0x98] sm:$0xff]
      %v8108 = vld [vmem:[%s2608 + $0xa8] sm:$0xff]
      %v8109 = vld [vmem:[%s2608 + $0xb0] sm:$0xff]
      %v8110 = vld [vmem:[%s2608 + $0xc0] sm:$0xff]
      %v8111 = vld [vmem:[%s2608 + $0xc8] sm:$0xff]
      %v8112 = vld [vmem:[%s2608 + $0xd8] sm:$0xff]
      %v8113 = vld [vmem:[%s2608 + $0xe0] sm:$0xff]
      %v8114 = vld [vmem:[%s2608 + $0xf0] sm:$0xff]
      %v8115 = vld [vmem:[%s2608 + $0xf8] sm:$0xff]
      %v8116 = vld [vmem:[%s2608 + $0x108] sm:$0xff]
      %v8117 = vld [vmem:[%s2608 + $0x110] sm:$0xff]
      %v8118 = vld [vmem:[%s2608 + $0x120] sm:$0xff]
      %v8119 = vld [vmem:[%s2608 + $0x128] sm:$0xff]
      %v8120 = vld [vmem:[%s2608 + $0x138] sm:$0xff]
      %v8121 = vld [vmem:[%s2608 + $0x140] sm:$0xff]
      %v8122 = vld [vmem:[%s2608 + $0x150] sm:$0xff]
      %v8123 = vld [vmem:[%s2608 + $0x158] sm:$0xff]
      %v8124 = vld [vmem:[%s2608 + $0x168] sm:$0xff]
      %v8125 = vld [vmem:[%s2608 + $0x170] sm:$0xff]
      %v8126 = vld [vmem:[%s2608 + $0x1b0] sm:$0xff]
      %v8127 = vld [vmem:[%s2608 + $0x1b8] sm:$0xff]
      %v8128 = vld [vmem:[%s2608 + $0x1c8] sm:$0xff]
      %v8129 = vld [vmem:[%s2608 + $0x1d0] sm:$0xff]
      %v8130 = vld [vmem:[%s2608 + $0x1e0] sm:$0xff]
      %v8131 = vld [vmem:[%s2608 + $0x1e8] sm:$0xff]
      %v8132 = vld [vmem:[%s2608 + $0x1f8] sm:$0xff]
      %v8133 = vld [vmem:[%s2608 + $0x200] sm:$0xff]
      %v8134 = vld [vmem:[%s2608 + $0x210] sm:$0xff]
      %v8135 = vld [vmem:[%s2608 + $0x218] sm:$0xff]
      %v8136 = vld [vmem:[%s2608 + $0x228] sm:$0xff]
      %v8137 = vld [vmem:[%s2608 + $0x230] sm:$0xff]
      %v8138 = vld [vmem:[%s2608 + $0x240] sm:$0xff]
      %v8139 = vld [vmem:[%s2608 + $0x248] sm:$0xff]
      %v8140 = vld [vmem:[%s2608 + $0x258] sm:$0xff]
      %v8141 = vld [vmem:[%s2608 + $0x260] sm:$0xff]
      %v8142 = vld [vmem:[%s2608 + $0x270] sm:$0xff]
      %v8143 = vld [vmem:[%s2608 + $0x278] sm:$0xff]
      %v8144 = vld [vmem:[%s2608 + $0x288] sm:$0xff]
      %v8145 = vld [vmem:[%s2608 + $0x290] sm:$0xff]
      %v8146 = vld [vmem:[%s2608 + $0x2a0] sm:$0xff]
      %v8147 = vld [vmem:[%s2608 + $0x2a8] sm:$0xff]
      %v8148 = vld [vmem:[%s2608 + $0x2b8] sm:$0xff]
      %v8149 = vld [vmem:[%s2608 + $0x2c0] sm:$0xff]
      %v8150 = vld [vmem:[%s2608 + $0x2d0] sm:$0xff]
      %v8151 = vld [vmem:[%s2608 + $0x2d8] sm:$0xff]
      %v8152 = vld [vmem:[%s2608 + $0x2e8] sm:$0xff]
      %v8153 = vld [vmem:[%s2608 + $0x2f0] sm:$0xff]
      %v8154 = vld [vmem:[%s2608 + $0x300] sm:$0xff]
      %v8155 = vld [vmem:[%s2608 + $0x308] sm:$0xff]
      %v8156 = vld [vmem:[%s2608 + $0x318] sm:$0xff]
      %v8157 = vld [vmem:[%s2608 + $0x320] sm:$0xff]
      %8222 = vrot.lane.b32.xlu0 %v8094, 48
      %v8223 = vpop.permute.xlu0 %8222
      %8224 = vrot.lane.b32.xlu0 %v8095, 48
      %v8225 = vpop.permute.xlu0 %8224
      %8226 = vrot.lane.b32.xlu0 %v8096, 48
      %v8227 = vpop.permute.xlu0 %8226
      %8228 = vrot.lane.b32.xlu0 %v8097, 48
      %v8229 = vpop.permute.xlu0 %8228
      %8230 = vrot.lane.b32.xlu0 %v8098, 48
      %v8231 = vpop.permute.xlu0 %8230
      %8232 = vrot.lane.b32.xlu0 %v8099, 48
      %v8233 = vpop.permute.xlu0 %8232
      %8234 = vrot.lane.b32.xlu0 %v8100, 48
      %v8235 = vpop.permute.xlu0 %8234
      %8236 = vrot.lane.b32.xlu0 %v8101, 48
      %v8237 = vpop.permute.xlu0 %8236
      %8238 = vrot.lane.b32.xlu0 %v8102, 48
      %v8239 = vpop.permute.xlu0 %8238
      %8240 = vrot.lane.b32.xlu0 %v8103, 48
      %v8241 = vpop.permute.xlu0 %8240
      %8242 = vrot.lane.b32.xlu0 %v8104, 48
      %v8243 = vpop.permute.xlu0 %8242
      %8244 = vrot.lane.b32.xlu0 %v8105, 48
      %v8245 = vpop.permute.xlu0 %8244
      %8246 = vrot.lane.b32.xlu0 %v8106, 48
      %v8247 = vpop.permute.xlu0 %8246
      %8248 = vrot.lane.b32.xlu0 %v8107, 48
      %v8249 = vpop.permute.xlu0 %8248
      %8250 = vrot.lane.b32.xlu0 %v8108, 48
      %v8251 = vpop.permute.xlu0 %8250
      %8252 = vrot.lane.b32.xlu0 %v8109, 48
      %v8253 = vpop.permute.xlu0 %8252
      %8254 = vrot.lane.b32.xlu0 %v8110, 48
      %v8255 = vpop.permute.xlu0 %8254
      %8256 = vrot.lane.b32.xlu0 %v8111, 48
      %v8257 = vpop.permute.xlu0 %8256
      %8258 = vrot.lane.b32.xlu0 %v8112, 48
      %v8259 = vpop.permute.xlu0 %8258
      %8260 = vrot.lane.b32.xlu0 %v8113, 48
      %v8261 = vpop.permute.xlu0 %8260
      %8262 = vrot.lane.b32.xlu0 %v8114, 48
      %v8263 = vpop.permute.xlu0 %8262
      %8264 = vrot.lane.b32.xlu0 %v8115, 48
      %v8265 = vpop.permute.xlu0 %8264
      %8266 = vrot.lane.b32.xlu0 %v8116, 48
      %v8267 = vpop.permute.xlu0 %8266
      %8268 = vrot.lane.b32.xlu0 %v8117, 48
      %v8269 = vpop.permute.xlu0 %8268
      %8270 = vrot.lane.b32.xlu0 %v8118, 48
      %v8271 = vpop.permute.xlu0 %8270
      %8272 = vrot.lane.b32.xlu0 %v8119, 48
      %v8273 = vpop.permute.xlu0 %8272
      %8274 = vrot.lane.b32.xlu0 %v8120, 48
      %v8275 = vpop.permute.xlu0 %8274
      %8276 = vrot.lane.b32.xlu0 %v8121, 48
      %v8277 = vpop.permute.xlu0 %8276
      %8278 = vrot.lane.b32.xlu0 %v8122, 48
      %v8279 = vpop.permute.xlu0 %8278
      %8280 = vrot.lane.b32.xlu0 %v8123, 48
      %v8281 = vpop.permute.xlu0 %8280
      %8282 = vrot.lane.b32.xlu0 %v8124, 48
      %v8283 = vpop.permute.xlu0 %8282
      %8284 = vrot.lane.b32.xlu0 %v8125, 48
      %v8285 = vpop.permute.xlu0 %8284
      %8286 = vrot.lane.b32.xlu0 %v8126, 48
      %v8287 = vpop.permute.xlu0 %8286
      %8288 = vrot.lane.b32.xlu0 %v8127, 48
      %v8289 = vpop.permute.xlu0 %8288
      %8290 = vrot.lane.b32.xlu0 %v8128, 48
      %v8291 = vpop.permute.xlu0 %8290
      %8292 = vrot.lane.b32.xlu0 %v8129, 48
      %v8293 = vpop.permute.xlu0 %8292
      %8294 = vrot.lane.b32.xlu0 %v8130, 48
      %v8295 = vpop.permute.xlu0 %8294
      %8296 = vrot.lane.b32.xlu0 %v8131, 48
      %v8297 = vpop.permute.xlu0 %8296
      %8298 = vrot.lane.b32.xlu0 %v8132, 48
      %v8299 = vpop.permute.xlu0 %8298
      %8300 = vrot.lane.b32.xlu0 %v8133, 48
      %v8301 = vpop.permute.xlu0 %8300
      %8302 = vrot.lane.b32.xlu0 %v8134, 48
      %v8303 = vpop.permute.xlu0 %8302
      %8304 = vrot.lane.b32.xlu0 %v8135, 48
      %v8305 = vpop.permute.xlu0 %8304
      %8306 = vrot.lane.b32.xlu0 %v8136, 48
      %v8307 = vpop.permute.xlu0 %8306
      %8308 = vrot.lane.b32.xlu0 %v8137, 48
      %v8309 = vpop.permute.xlu0 %8308
      %8310 = vrot.lane.b32.xlu0 %v8138, 48
      %v8311 = vpop.permute.xlu0 %8310
      %8312 = vrot.lane.b32.xlu0 %v8139, 48
      %v8313 = vpop.permute.xlu0 %8312
      %8314 = vrot.lane.b32.xlu0 %v8140, 48
      %v8315 = vpop.permute.xlu0 %8314
      %8316 = vrot.lane.b32.xlu0 %v8141, 48
      %v8317 = vpop.permute.xlu0 %8316
      %8318 = vrot.lane.b32.xlu0 %v8142, 48
      %v8319 = vpop.permute.xlu0 %8318
      %8320 = vrot.lane.b32.xlu0 %v8143, 48
      %v8321 = vpop.permute.xlu0 %8320
      %8322 = vrot.lane.b32.xlu0 %v8144, 48
      %v8323 = vpop.permute.xlu0 %8322
      %8324 = vrot.lane.b32.xlu0 %v8145, 48
      %v8325 = vpop.permute.xlu0 %8324
      %8326 = vrot.lane.b32.xlu0 %v8146, 48
      %v8327 = vpop.permute.xlu0 %8326
      %8328 = vrot.lane.b32.xlu0 %v8147, 48
      %v8329 = vpop.permute.xlu0 %8328
      %8330 = vrot.lane.b32.xlu0 %v8148, 48
      %v8331 = vpop.permute.xlu0 %8330
      %8332 = vrot.lane.b32.xlu0 %v8149, 48
      %v8333 = vpop.permute.xlu0 %8332
      %8334 = vrot.lane.b32.xlu0 %v8150, 48
      %v8335 = vpop.permute.xlu0 %8334
      %8336 = vrot.lane.b32.xlu0 %v8151, 48
      %v8337 = vpop.permute.xlu0 %8336
      %8338 = vrot.lane.b32.xlu0 %v8152, 48
      %v8339 = vpop.permute.xlu0 %8338
      %8340 = vrot.lane.b32.xlu0 %v8153, 48
      %v8341 = vpop.permute.xlu0 %8340
      %8342 = vrot.lane.b32.xlu0 %v8154, 48
      %v8343 = vpop.permute.xlu0 %8342
      %8344 = vrot.lane.b32.xlu0 %v8155, 48
      %v8345 = vpop.permute.xlu0 %8344
      %8346 = vrot.lane.b32.xlu0 %v8156, 48
      %v8347 = vpop.permute.xlu0 %8346
      %8348 = vrot.lane.b32.xlu0 %v8157, 48
      %v8349 = vpop.permute.xlu0 %8348
      %8414 = vst.msk [vmem:[#allocation3] sm:$0xff] %vm2929, %v8223
      %8415 = vst.msk [vmem:[#allocation3 + $0x8] sm:$0xff] %vm2929, %v8225
      %8416 = vst.msk [vmem:[#allocation3 + $0x10] sm:$0xff] %vm2929, %v8227
      %8417 = vst.msk [vmem:[#allocation3 + $0x18] sm:$0xff] %vm2929, %v8229
      %8418 = vst.msk [vmem:[#allocation3 + $0x20] sm:$0xff] %vm2929, %v8231
      %8419 = vst.msk [vmem:[#allocation3 + $0x28] sm:$0xff] %vm2929, %v8233
      %8420 = vst.msk [vmem:[#allocation3 + $0x30] sm:$0xff] %vm2929, %v8235
      %8421 = vst.msk [vmem:[#allocation3 + $0x38] sm:$0xff] %vm2929, %v8237
      %8422 = vst.msk [vmem:[#allocation3 + $0x40] sm:$0xff] %vm2929, %v8239
      %8423 = vst.msk [vmem:[#allocation3 + $0x48] sm:$0xff] %vm2929, %v8241
      %8424 = vst.msk [vmem:[#allocation3 + $0x50] sm:$0xff] %vm2929, %v8243
      %8425 = vst.msk [vmem:[#allocation3 + $0x58] sm:$0xff] %vm2929, %v8245
      %8426 = vst.msk [vmem:[#allocation3 + $0x60] sm:$0xff] %vm2929, %v8247
      %8427 = vst.msk [vmem:[#allocation3 + $0x68] sm:$0xff] %vm2929, %v8249
      %8428 = vst.msk [vmem:[#allocation3 + $0x70] sm:$0xff] %vm2929, %v8251
      %8429 = vst.msk [vmem:[#allocation3 + $0x78] sm:$0xff] %vm2929, %v8253
      %8430 = vst.msk [vmem:[#allocation3 + $0x80] sm:$0xff] %vm2929, %v8255
      %8431 = vst.msk [vmem:[#allocation3 + $0x88] sm:$0xff] %vm2929, %v8257
      %8432 = vst.msk [vmem:[#allocation3 + $0x90] sm:$0xff] %vm2929, %v8259
      %8433 = vst.msk [vmem:[#allocation3 + $0x98] sm:$0xff] %vm2929, %v8261
      %8434 = vst.msk [vmem:[#allocation3 + $0xa0] sm:$0xff] %vm2929, %v8263
      %8435 = vst.msk [vmem:[#allocation3 + $0xa8] sm:$0xff] %vm2929, %v8265
      %8436 = vst.msk [vmem:[#allocation3 + $0xb0] sm:$0xff] %vm2929, %v8267
      %8437 = vst.msk [vmem:[#allocation3 + $0xb8] sm:$0xff] %vm2929, %v8269
      %8438 = vst.msk [vmem:[#allocation3 + $0xc0] sm:$0xff] %vm2929, %v8271
      %8439 = vst.msk [vmem:[#allocation3 + $0xc8] sm:$0xff] %vm2929, %v8273
      %8440 = vst.msk [vmem:[#allocation3 + $0xd0] sm:$0xff] %vm2929, %v8275
      %8441 = vst.msk [vmem:[#allocation3 + $0xd8] sm:$0xff] %vm2929, %v8277
      %8442 = vst.msk [vmem:[#allocation3 + $0xe0] sm:$0xff] %vm2929, %v8279
      %8443 = vst.msk [vmem:[#allocation3 + $0xe8] sm:$0xff] %vm2929, %v8281
      %8444 = vst.msk [vmem:[#allocation3 + $0xf0] sm:$0xff] %vm2929, %v8283
      %8445 = vst.msk [vmem:[#allocation3 + $0xf8] sm:$0xff] %vm2929, %v8285
      %8446 = vst.msk [vmem:[#allocation3 + $0x100] sm:$0xff] %vm2929, %v8287
      %8447 = vst.msk [vmem:[#allocation3 + $0x108] sm:$0xff] %vm2929, %v8289
      %8448 = vst.msk [vmem:[#allocation3 + $0x110] sm:$0xff] %vm2929, %v8291
      %8449 = vst.msk [vmem:[#allocation3 + $0x118] sm:$0xff] %vm2929, %v8293
      %8450 = vst.msk [vmem:[#allocation3 + $0x120] sm:$0xff] %vm2929, %v8295
      %8451 = vst.msk [vmem:[#allocation3 + $0x128] sm:$0xff] %vm2929, %v8297
      %8452 = vst.msk [vmem:[#allocation3 + $0x130] sm:$0xff] %vm2929, %v8299
      %8453 = vst.msk [vmem:[#allocation3 + $0x138] sm:$0xff] %vm2929, %v8301
      %8454 = vst.msk [vmem:[#allocation3 + $0x140] sm:$0xff] %vm2929, %v8303
      %8455 = vst.msk [vmem:[#allocation3 + $0x148] sm:$0xff] %vm2929, %v8305
      %8456 = vst.msk [vmem:[#allocation3 + $0x150] sm:$0xff] %vm2929, %v8307
      %8457 = vst.msk [vmem:[#allocation3 + $0x158] sm:$0xff] %vm2929, %v8309
      %8458 = vst.msk [vmem:[#allocation3 + $0x160] sm:$0xff] %vm2929, %v8311
      %8459 = vst.msk [vmem:[#allocation3 + $0x168] sm:$0xff] %vm2929, %v8313
      %8460 = vst.msk [vmem:[#allocation3 + $0x170] sm:$0xff] %vm2929, %v8315
      %8461 = vst.msk [vmem:[#allocation3 + $0x178] sm:$0xff] %vm2929, %v8317
      %8462 = vst.msk [vmem:[#allocation3 + $0x180] sm:$0xff] %vm2929, %v8319
      %8463 = vst.msk [vmem:[#allocation3 + $0x188] sm:$0xff] %vm2929, %v8321
      %8464 = vst.msk [vmem:[#allocation3 + $0x190] sm:$0xff] %vm2929, %v8323
      %8465 = vst.msk [vmem:[#allocation3 + $0x198] sm:$0xff] %vm2929, %v8325
      %8466 = vst.msk [vmem:[#allocation3 + $0x1a0] sm:$0xff] %vm2929, %v8327
      %8467 = vst.msk [vmem:[#allocation3 + $0x1a8] sm:$0xff] %vm2929, %v8329
      %8468 = vst.msk [vmem:[#allocation3 + $0x1b0] sm:$0xff] %vm2929, %v8331
      %8469 = vst.msk [vmem:[#allocation3 + $0x1b8] sm:$0xff] %vm2929, %v8333
      %8470 = vst.msk [vmem:[#allocation3 + $0x1c0] sm:$0xff] %vm2929, %v8335
      %8471 = vst.msk [vmem:[#allocation3 + $0x1c8] sm:$0xff] %vm2929, %v8337
      %8472 = vst.msk [vmem:[#allocation3 + $0x1d0] sm:$0xff] %vm2929, %v8339
      %8473 = vst.msk [vmem:[#allocation3 + $0x1d8] sm:$0xff] %vm2929, %v8341
      %8474 = vst.msk [vmem:[#allocation3 + $0x1e0] sm:$0xff] %vm2929, %v8343
      %8475 = vst.msk [vmem:[#allocation3 + $0x1e8] sm:$0xff] %vm2929, %v8345
      %8476 = vst.msk [vmem:[#allocation3 + $0x1f0] sm:$0xff] %vm2929, %v8347
      %8477 = vst.msk [vmem:[#allocation3 + $0x1f8] sm:$0xff] %vm2929, %v8349
      %v8478 = vld [vmem:[%s2608 + $0x1] sm:$0xff]
      %v8479 = vld [vmem:[%s2608 + $0x9] sm:$0xff]
      %v8480 = vld [vmem:[%s2608 + $0x19] sm:$0xff]
      %v8481 = vld [vmem:[%s2608 + $0x21] sm:$0xff]
      %v8482 = vld [vmem:[%s2608 + $0x31] sm:$0xff]
      %v8483 = vld [vmem:[%s2608 + $0x39] sm:$0xff]
      %v8484 = vld [vmem:[%s2608 + $0x49] sm:$0xff]
      %v8485 = vld [vmem:[%s2608 + $0x51] sm:$0xff]
      %v8486 = vld [vmem:[%s2608 + $0x61] sm:$0xff]
      %v8487 = vld [vmem:[%s2608 + $0x69] sm:$0xff]
      %v8488 = vld [vmem:[%s2608 + $0x79] sm:$0xff]
      %v8489 = vld [vmem:[%s2608 + $0x81] sm:$0xff]
      %v8490 = vld [vmem:[%s2608 + $0x91] sm:$0xff]
      %v8491 = vld [vmem:[%s2608 + $0x99] sm:$0xff]
      %v8492 = vld [vmem:[%s2608 + $0xa9] sm:$0xff]
      %v8493 = vld [vmem:[%s2608 + $0xb1] sm:$0xff]
      %v8494 = vld [vmem:[%s2608 + $0xc1] sm:$0xff]
      %v8495 = vld [vmem:[%s2608 + $0xc9] sm:$0xff]
      %v8496 = vld [vmem:[%s2608 + $0xd9] sm:$0xff]
      %v8497 = vld [vmem:[%s2608 + $0xe1] sm:$0xff]
      %v8498 = vld [vmem:[%s2608 + $0xf1] sm:$0xff]
      %v8499 = vld [vmem:[%s2608 + $0xf9] sm:$0xff]
      %v8500 = vld [vmem:[%s2608 + $0x109] sm:$0xff]
      %v8501 = vld [vmem:[%s2608 + $0x111] sm:$0xff]
      %v8502 = vld [vmem:[%s2608 + $0x121] sm:$0xff]
      %v8503 = vld [vmem:[%s2608 + $0x129] sm:$0xff]
      %v8504 = vld [vmem:[%s2608 + $0x139] sm:$0xff]
      %v8505 = vld [vmem:[%s2608 + $0x141] sm:$0xff]
      %v8506 = vld [vmem:[%s2608 + $0x151] sm:$0xff]
      %v8507 = vld [vmem:[%s2608 + $0x159] sm:$0xff]
      %v8508 = vld [vmem:[%s2608 + $0x169] sm:$0xff]
      %v8509 = vld [vmem:[%s2608 + $0x171] sm:$0xff]
      %v8510 = vld [vmem:[%s2608 + $0x1b1] sm:$0xff]
      %v8511 = vld [vmem:[%s2608 + $0x1b9] sm:$0xff]
      %v8512 = vld [vmem:[%s2608 + $0x1c9] sm:$0xff]
      %v8513 = vld [vmem:[%s2608 + $0x1d1] sm:$0xff]
      %v8514 = vld [vmem:[%s2608 + $0x1e1] sm:$0xff]
      %v8515 = vld [vmem:[%s2608 + $0x1e9] sm:$0xff]
      %v8516 = vld [vmem:[%s2608 + $0x1f9] sm:$0xff]
      %v8517 = vld [vmem:[%s2608 + $0x201] sm:$0xff]
      %v8518 = vld [vmem:[%s2608 + $0x211] sm:$0xff]
      %v8519 = vld [vmem:[%s2608 + $0x219] sm:$0xff]
      %v8520 = vld [vmem:[%s2608 + $0x229] sm:$0xff]
      %v8521 = vld [vmem:[%s2608 + $0x231] sm:$0xff]
      %v8522 = vld [vmem:[%s2608 + $0x241] sm:$0xff]
      %v8523 = vld [vmem:[%s2608 + $0x249] sm:$0xff]
      %v8524 = vld [vmem:[%s2608 + $0x259] sm:$0xff]
      %v8525 = vld [vmem:[%s2608 + $0x261] sm:$0xff]
      %v8526 = vld [vmem:[%s2608 + $0x271] sm:$0xff]
      %v8527 = vld [vmem:[%s2608 + $0x279] sm:$0xff]
      %v8528 = vld [vmem:[%s2608 + $0x289] sm:$0xff]
      %v8529 = vld [vmem:[%s2608 + $0x291] sm:$0xff]
      %v8530 = vld [vmem:[%s2608 + $0x2a1] sm:$0xff]
      %v8531 = vld [vmem:[%s2608 + $0x2a9] sm:$0xff]
      %v8532 = vld [vmem:[%s2608 + $0x2b9] sm:$0xff]
      %v8533 = vld [vmem:[%s2608 + $0x2c1] sm:$0xff]
      %v8534 = vld [vmem:[%s2608 + $0x2d1] sm:$0xff]
      %v8535 = vld [vmem:[%s2608 + $0x2d9] sm:$0xff]
      %v8536 = vld [vmem:[%s2608 + $0x2e9] sm:$0xff]
      %v8537 = vld [vmem:[%s2608 + $0x2f1] sm:$0xff]
      %v8538 = vld [vmem:[%s2608 + $0x301] sm:$0xff]
      %v8539 = vld [vmem:[%s2608 + $0x309] sm:$0xff]
      %v8540 = vld [vmem:[%s2608 + $0x319] sm:$0xff]
      %v8541 = vld [vmem:[%s2608 + $0x321] sm:$0xff]
      %8606 = vrot.lane.b32.xlu0 %v8478, 56
      %v8607 = vpop.permute.xlu0 %8606
      %8608 = vrot.lane.b32.xlu0 %v8479, 56
      %v8609 = vpop.permute.xlu0 %8608
      %8610 = vrot.lane.b32.xlu0 %v8480, 56
      %v8611 = vpop.permute.xlu0 %8610
      %8612 = vrot.lane.b32.xlu0 %v8481, 56
      %v8613 = vpop.permute.xlu0 %8612
      %8614 = vrot.lane.b32.xlu0 %v8482, 56
      %v8615 = vpop.permute.xlu0 %8614
      %8616 = vrot.lane.b32.xlu0 %v8483, 56
      %v8617 = vpop.permute.xlu0 %8616
      %8618 = vrot.lane.b32.xlu0 %v8484, 56
      %v8619 = vpop.permute.xlu0 %8618
      %8620 = vrot.lane.b32.xlu0 %v8485, 56
      %v8621 = vpop.permute.xlu0 %8620
      %8622 = vrot.lane.b32.xlu0 %v8486, 56
      %v8623 = vpop.permute.xlu0 %8622
      %8624 = vrot.lane.b32.xlu0 %v8487, 56
      %v8625 = vpop.permute.xlu0 %8624
      %8626 = vrot.lane.b32.xlu0 %v8488, 56
      %v8627 = vpop.permute.xlu0 %8626
      %8628 = vrot.lane.b32.xlu0 %v8489, 56
      %v8629 = vpop.permute.xlu0 %8628
      %8630 = vrot.lane.b32.xlu0 %v8490, 56
      %v8631 = vpop.permute.xlu0 %8630
      %8632 = vrot.lane.b32.xlu0 %v8491, 56
      %v8633 = vpop.permute.xlu0 %8632
      %8634 = vrot.lane.b32.xlu0 %v8492, 56
      %v8635 = vpop.permute.xlu0 %8634
      %8636 = vrot.lane.b32.xlu0 %v8493, 56
      %v8637 = vpop.permute.xlu0 %8636
      %8638 = vrot.lane.b32.xlu0 %v8494, 56
      %v8639 = vpop.permute.xlu0 %8638
      %8640 = vrot.lane.b32.xlu0 %v8495, 56
      %v8641 = vpop.permute.xlu0 %8640
      %8642 = vrot.lane.b32.xlu0 %v8496, 56
      %v8643 = vpop.permute.xlu0 %8642
      %8644 = vrot.lane.b32.xlu0 %v8497, 56
      %v8645 = vpop.permute.xlu0 %8644
      %8646 = vrot.lane.b32.xlu0 %v8498, 56
      %v8647 = vpop.permute.xlu0 %8646
      %8648 = vrot.lane.b32.xlu0 %v8499, 56
      %v8649 = vpop.permute.xlu0 %8648
      %8650 = vrot.lane.b32.xlu0 %v8500, 56
      %v8651 = vpop.permute.xlu0 %8650
      %8652 = vrot.lane.b32.xlu0 %v8501, 56
      %v8653 = vpop.permute.xlu0 %8652
      %8654 = vrot.lane.b32.xlu0 %v8502, 56
      %v8655 = vpop.permute.xlu0 %8654
      %8656 = vrot.lane.b32.xlu0 %v8503, 56
      %v8657 = vpop.permute.xlu0 %8656
      %8658 = vrot.lane.b32.xlu0 %v8504, 56
      %v8659 = vpop.permute.xlu0 %8658
      %8660 = vrot.lane.b32.xlu0 %v8505, 56
      %v8661 = vpop.permute.xlu0 %8660
      %8662 = vrot.lane.b32.xlu0 %v8506, 56
      %v8663 = vpop.permute.xlu0 %8662
      %8664 = vrot.lane.b32.xlu0 %v8507, 56
      %v8665 = vpop.permute.xlu0 %8664
      %8666 = vrot.lane.b32.xlu0 %v8508, 56
      %v8667 = vpop.permute.xlu0 %8666
      %8668 = vrot.lane.b32.xlu0 %v8509, 56
      %v8669 = vpop.permute.xlu0 %8668
      %8670 = vrot.lane.b32.xlu0 %v8510, 56
      %v8671 = vpop.permute.xlu0 %8670
      %8672 = vrot.lane.b32.xlu0 %v8511, 56
      %v8673 = vpop.permute.xlu0 %8672
      %8674 = vrot.lane.b32.xlu0 %v8512, 56
      %v8675 = vpop.permute.xlu0 %8674
      %8676 = vrot.lane.b32.xlu0 %v8513, 56
      %v8677 = vpop.permute.xlu0 %8676
      %8678 = vrot.lane.b32.xlu0 %v8514, 56
      %v8679 = vpop.permute.xlu0 %8678
      %8680 = vrot.lane.b32.xlu0 %v8515, 56
      %v8681 = vpop.permute.xlu0 %8680
      %8682 = vrot.lane.b32.xlu0 %v8516, 56
      %v8683 = vpop.permute.xlu0 %8682
      %8684 = vrot.lane.b32.xlu0 %v8517, 56
      %v8685 = vpop.permute.xlu0 %8684
      %8686 = vrot.lane.b32.xlu0 %v8518, 56
      %v8687 = vpop.permute.xlu0 %8686
      %8688 = vrot.lane.b32.xlu0 %v8519, 56
      %v8689 = vpop.permute.xlu0 %8688
      %8690 = vrot.lane.b32.xlu0 %v8520, 56
      %v8691 = vpop.permute.xlu0 %8690
      %8692 = vrot.lane.b32.xlu0 %v8521, 56
      %v8693 = vpop.permute.xlu0 %8692
      %8694 = vrot.lane.b32.xlu0 %v8522, 56
      %v8695 = vpop.permute.xlu0 %8694
      %8696 = vrot.lane.b32.xlu0 %v8523, 56
      %v8697 = vpop.permute.xlu0 %8696
      %8698 = vrot.lane.b32.xlu0 %v8524, 56
      %v8699 = vpop.permute.xlu0 %8698
      %8700 = vrot.lane.b32.xlu0 %v8525, 56
      %v8701 = vpop.permute.xlu0 %8700
      %8702 = vrot.lane.b32.xlu0 %v8526, 56
      %v8703 = vpop.permute.xlu0 %8702
      %8704 = vrot.lane.b32.xlu0 %v8527, 56
      %v8705 = vpop.permute.xlu0 %8704
      %8706 = vrot.lane.b32.xlu0 %v8528, 56
      %v8707 = vpop.permute.xlu0 %8706
      %8708 = vrot.lane.b32.xlu0 %v8529, 56
      %v8709 = vpop.permute.xlu0 %8708
      %8710 = vrot.lane.b32.xlu0 %v8530, 56
      %v8711 = vpop.permute.xlu0 %8710
      %8712 = vrot.lane.b32.xlu0 %v8531, 56
      %v8713 = vpop.permute.xlu0 %8712
      %8714 = vrot.lane.b32.xlu0 %v8532, 56
      %v8715 = vpop.permute.xlu0 %8714
      %8716 = vrot.lane.b32.xlu0 %v8533, 56
      %v8717 = vpop.permute.xlu0 %8716
      %8718 = vrot.lane.b32.xlu0 %v8534, 56
      %v8719 = vpop.permute.xlu0 %8718
      %8720 = vrot.lane.b32.xlu0 %v8535, 56
      %v8721 = vpop.permute.xlu0 %8720
      %8722 = vrot.lane.b32.xlu0 %v8536, 56
      %v8723 = vpop.permute.xlu0 %8722
      %8724 = vrot.lane.b32.xlu0 %v8537, 56
      %v8725 = vpop.permute.xlu0 %8724
      %8726 = vrot.lane.b32.xlu0 %v8538, 56
      %v8727 = vpop.permute.xlu0 %8726
      %8728 = vrot.lane.b32.xlu0 %v8539, 56
      %v8729 = vpop.permute.xlu0 %8728
      %8730 = vrot.lane.b32.xlu0 %v8540, 56
      %v8731 = vpop.permute.xlu0 %8730
      %8732 = vrot.lane.b32.xlu0 %v8541, 56
      %v8733 = vpop.permute.xlu0 %8732
      %8798 = vst.msk [vmem:[#allocation3] sm:$0xff] %vm3314, %v8607
      %8799 = vst.msk [vmem:[#allocation3 + $0x8] sm:$0xff] %vm3314, %v8609
      %8800 = vst.msk [vmem:[#allocation3 + $0x10] sm:$0xff] %vm3314, %v8611
      %8801 = vst.msk [vmem:[#allocation3 + $0x18] sm:$0xff] %vm3314, %v8613
      %8802 = vst.msk [vmem:[#allocation3 + $0x20] sm:$0xff] %vm3314, %v8615
      %8803 = vst.msk [vmem:[#allocation3 + $0x28] sm:$0xff] %vm3314, %v8617
      %8804 = vst.msk [vmem:[#allocation3 + $0x30] sm:$0xff] %vm3314, %v8619
      %8805 = vst.msk [vmem:[#allocation3 + $0x38] sm:$0xff] %vm3314, %v8621
      %8806 = vst.msk [vmem:[#allocation3 + $0x40] sm:$0xff] %vm3314, %v8623
      %8807 = vst.msk [vmem:[#allocation3 + $0x48] sm:$0xff] %vm3314, %v8625
      %8808 = vst.msk [vmem:[#allocation3 + $0x50] sm:$0xff] %vm3314, %v8627
      %8809 = vst.msk [vmem:[#allocation3 + $0x58] sm:$0xff] %vm3314, %v8629
      %8810 = vst.msk [vmem:[#allocation3 + $0x60] sm:$0xff] %vm3314, %v8631
      %8811 = vst.msk [vmem:[#allocation3 + $0x68] sm:$0xff] %vm3314, %v8633
      %8812 = vst.msk [vmem:[#allocation3 + $0x70] sm:$0xff] %vm3314, %v8635
      %8813 = vst.msk [vmem:[#allocation3 + $0x78] sm:$0xff] %vm3314, %v8637
      %8814 = vst.msk [vmem:[#allocation3 + $0x80] sm:$0xff] %vm3314, %v8639
      %8815 = vst.msk [vmem:[#allocation3 + $0x88] sm:$0xff] %vm3314, %v8641
      %8816 = vst.msk [vmem:[#allocation3 + $0x90] sm:$0xff] %vm3314, %v8643
      %8817 = vst.msk [vmem:[#allocation3 + $0x98] sm:$0xff] %vm3314, %v8645
      %8818 = vst.msk [vmem:[#allocation3 + $0xa0] sm:$0xff] %vm3314, %v8647
      %8819 = vst.msk [vmem:[#allocation3 + $0xa8] sm:$0xff] %vm3314, %v8649
      %8820 = vst.msk [vmem:[#allocation3 + $0xb0] sm:$0xff] %vm3314, %v8651
      %8821 = vst.msk [vmem:[#allocation3 + $0xb8] sm:$0xff] %vm3314, %v8653
      %8822 = vst.msk [vmem:[#allocation3 + $0xc0] sm:$0xff] %vm3314, %v8655
      %8823 = vst.msk [vmem:[#allocation3 + $0xc8] sm:$0xff] %vm3314, %v8657
      %8824 = vst.msk [vmem:[#allocation3 + $0xd0] sm:$0xff] %vm3314, %v8659
      %8825 = vst.msk [vmem:[#allocation3 + $0xd8] sm:$0xff] %vm3314, %v8661
      %8826 = vst.msk [vmem:[#allocation3 + $0xe0] sm:$0xff] %vm3314, %v8663
      %8827 = vst.msk [vmem:[#allocation3 + $0xe8] sm:$0xff] %vm3314, %v8665
      %8828 = vst.msk [vmem:[#allocation3 + $0xf0] sm:$0xff] %vm3314, %v8667
      %8829 = vst.msk [vmem:[#allocation3 + $0xf8] sm:$0xff] %vm3314, %v8669
      %8830 = vst.msk [vmem:[#allocation3 + $0x100] sm:$0xff] %vm3314, %v8671
      %8831 = vst.msk [vmem:[#allocation3 + $0x108] sm:$0xff] %vm3314, %v8673
      %8832 = vst.msk [vmem:[#allocation3 + $0x110] sm:$0xff] %vm3314, %v8675
      %8833 = vst.msk [vmem:[#allocation3 + $0x118] sm:$0xff] %vm3314, %v8677
      %8834 = vst.msk [vmem:[#allocation3 + $0x120] sm:$0xff] %vm3314, %v8679
      %8835 = vst.msk [vmem:[#allocation3 + $0x128] sm:$0xff] %vm3314, %v8681
      %8836 = vst.msk [vmem:[#allocation3 + $0x130] sm:$0xff] %vm3314, %v8683
      %8837 = vst.msk [vmem:[#allocation3 + $0x138] sm:$0xff] %vm3314, %v8685
      %8838 = vst.msk [vmem:[#allocation3 + $0x140] sm:$0xff] %vm3314, %v8687
      %8839 = vst.msk [vmem:[#allocation3 + $0x148] sm:$0xff] %vm3314, %v8689
      %8840 = vst.msk [vmem:[#allocation3 + $0x150] sm:$0xff] %vm3314, %v8691
      %8841 = vst.msk [vmem:[#allocation3 + $0x158] sm:$0xff] %vm3314, %v8693
      %8842 = vst.msk [vmem:[#allocation3 + $0x160] sm:$0xff] %vm3314, %v8695
      %8843 = vst.msk [vmem:[#allocation3 + $0x168] sm:$0xff] %vm3314, %v8697
      %8844 = vst.msk [vmem:[#allocation3 + $0x170] sm:$0xff] %vm3314, %v8699
      %8845 = vst.msk [vmem:[#allocation3 + $0x178] sm:$0xff] %vm3314, %v8701
      %8846 = vst.msk [vmem:[#allocation3 + $0x180] sm:$0xff] %vm3314, %v8703
      %8847 = vst.msk [vmem:[#allocation3 + $0x188] sm:$0xff] %vm3314, %v8705
      %8848 = vst.msk [vmem:[#allocation3 + $0x190] sm:$0xff] %vm3314, %v8707
      %8849 = vst.msk [vmem:[#allocation3 + $0x198] sm:$0xff] %vm3314, %v8709
      %8850 = vst.msk [vmem:[#allocation3 + $0x1a0] sm:$0xff] %vm3314, %v8711
      %8851 = vst.msk [vmem:[#allocation3 + $0x1a8] sm:$0xff] %vm3314, %v8713
      %8852 = vst.msk [vmem:[#allocation3 + $0x1b0] sm:$0xff] %vm3314, %v8715
      %8853 = vst.msk [vmem:[#allocation3 + $0x1b8] sm:$0xff] %vm3314, %v8717
      %8854 = vst.msk [vmem:[#allocation3 + $0x1c0] sm:$0xff] %vm3314, %v8719
      %8855 = vst.msk [vmem:[#allocation3 + $0x1c8] sm:$0xff] %vm3314, %v8721
      %8856 = vst.msk [vmem:[#allocation3 + $0x1d0] sm:$0xff] %vm3314, %v8723
      %8857 = vst.msk [vmem:[#allocation3 + $0x1d8] sm:$0xff] %vm3314, %v8725
      %8858 = vst.msk [vmem:[#allocation3 + $0x1e0] sm:$0xff] %vm3314, %v8727
      %8859 = vst.msk [vmem:[#allocation3 + $0x1e8] sm:$0xff] %vm3314, %v8729
      %8860 = vst.msk [vmem:[#allocation3 + $0x1f0] sm:$0xff] %vm3314, %v8731
      %8861 = vst.msk [vmem:[#allocation3 + $0x1f8] sm:$0xff] %vm3314, %v8733
      %v8862 = vld [vmem:[%s2608 + $0x2] sm:$0xff]
      %v8863 = vld [vmem:[%s2608 + $0xa] sm:$0xff]
      %v8864 = vld [vmem:[%s2608 + $0x1a] sm:$0xff]
      %v8865 = vld [vmem:[%s2608 + $0x22] sm:$0xff]
      %v8866 = vld [vmem:[%s2608 + $0x32] sm:$0xff]
      %v8867 = vld [vmem:[%s2608 + $0x3a] sm:$0xff]
      %v8868 = vld [vmem:[%s2608 + $0x4a] sm:$0xff]
      %v8869 = vld [vmem:[%s2608 + $0x52] sm:$0xff]
      %v8870 = vld [vmem:[%s2608 + $0x62] sm:$0xff]
      %v8871 = vld [vmem:[%s2608 + $0x6a] sm:$0xff]
      %v8872 = vld [vmem:[%s2608 + $0x7a] sm:$0xff]
      %v8873 = vld [vmem:[%s2608 + $0x82] sm:$0xff]
      %v8874 = vld [vmem:[%s2608 + $0x92] sm:$0xff]
      %v8875 = vld [vmem:[%s2608 + $0x9a] sm:$0xff]
      %v8876 = vld [vmem:[%s2608 + $0xaa] sm:$0xff]
      %v8877 = vld [vmem:[%s2608 + $0xb2] sm:$0xff]
      %v8878 = vld [vmem:[%s2608 + $0xc2] sm:$0xff]
      %v8879 = vld [vmem:[%s2608 + $0xca] sm:$0xff]
      %v8880 = vld [vmem:[%s2608 + $0xda] sm:$0xff]
      %v8881 = vld [vmem:[%s2608 + $0xe2] sm:$0xff]
      %v8882 = vld [vmem:[%s2608 + $0xf2] sm:$0xff]
      %v8883 = vld [vmem:[%s2608 + $0xfa] sm:$0xff]
      %v8884 = vld [vmem:[%s2608 + $0x10a] sm:$0xff]
      %v8885 = vld [vmem:[%s2608 + $0x112] sm:$0xff]
      %v8886 = vld [vmem:[%s2608 + $0x122] sm:$0xff]
      %v8887 = vld [vmem:[%s2608 + $0x12a] sm:$0xff]
      %v8888 = vld [vmem:[%s2608 + $0x13a] sm:$0xff]
      %v8889 = vld [vmem:[%s2608 + $0x142] sm:$0xff]
      %v8890 = vld [vmem:[%s2608 + $0x152] sm:$0xff]
      %v8891 = vld [vmem:[%s2608 + $0x15a] sm:$0xff]
      %v8892 = vld [vmem:[%s2608 + $0x16a] sm:$0xff]
      %v8893 = vld [vmem:[%s2608 + $0x172] sm:$0xff]
      %v8894 = vld [vmem:[%s2608 + $0x1b2] sm:$0xff]
      %v8895 = vld [vmem:[%s2608 + $0x1ba] sm:$0xff]
      %v8896 = vld [vmem:[%s2608 + $0x1ca] sm:$0xff]
      %v8897 = vld [vmem:[%s2608 + $0x1d2] sm:$0xff]
      %v8898 = vld [vmem:[%s2608 + $0x1e2] sm:$0xff]
      %v8899 = vld [vmem:[%s2608 + $0x1ea] sm:$0xff]
      %v8900 = vld [vmem:[%s2608 + $0x1fa] sm:$0xff]
      %v8901 = vld [vmem:[%s2608 + $0x202] sm:$0xff]
      %v8902 = vld [vmem:[%s2608 + $0x212] sm:$0xff]
      %v8903 = vld [vmem:[%s2608 + $0x21a] sm:$0xff]
      %v8904 = vld [vmem:[%s2608 + $0x22a] sm:$0xff]
      %v8905 = vld [vmem:[%s2608 + $0x232] sm:$0xff]
      %v8906 = vld [vmem:[%s2608 + $0x242] sm:$0xff]
      %v8907 = vld [vmem:[%s2608 + $0x24a] sm:$0xff]
      %v8908 = vld [vmem:[%s2608 + $0x25a] sm:$0xff]
      %v8909 = vld [vmem:[%s2608 + $0x262] sm:$0xff]
      %v8910 = vld [vmem:[%s2608 + $0x272] sm:$0xff]
      %v8911 = vld [vmem:[%s2608 + $0x27a] sm:$0xff]
      %v8912 = vld [vmem:[%s2608 + $0x28a] sm:$0xff]
      %v8913 = vld [vmem:[%s2608 + $0x292] sm:$0xff]
      %v8914 = vld [vmem:[%s2608 + $0x2a2] sm:$0xff]
      %v8915 = vld [vmem:[%s2608 + $0x2aa] sm:$0xff]
      %v8916 = vld [vmem:[%s2608 + $0x2ba] sm:$0xff]
      %v8917 = vld [vmem:[%s2608 + $0x2c2] sm:$0xff]
      %v8918 = vld [vmem:[%s2608 + $0x2d2] sm:$0xff]
      %v8919 = vld [vmem:[%s2608 + $0x2da] sm:$0xff]
      %v8920 = vld [vmem:[%s2608 + $0x2ea] sm:$0xff]
      %v8921 = vld [vmem:[%s2608 + $0x2f2] sm:$0xff]
      %v8922 = vld [vmem:[%s2608 + $0x302] sm:$0xff]
      %v8923 = vld [vmem:[%s2608 + $0x30a] sm:$0xff]
      %v8924 = vld [vmem:[%s2608 + $0x31a] sm:$0xff]
      %v8925 = vld [vmem:[%s2608 + $0x322] sm:$0xff]
      %8990 = vrot.lane.b32.xlu0 %v8862, 64
      %v8991 = vpop.permute.xlu0 %8990
      %8992 = vrot.lane.b32.xlu0 %v8863, 64
      %v8993 = vpop.permute.xlu0 %8992
      %8994 = vrot.lane.b32.xlu0 %v8864, 64
      %v8995 = vpop.permute.xlu0 %8994
      %8996 = vrot.lane.b32.xlu0 %v8865, 64
      %v8997 = vpop.permute.xlu0 %8996
      %8998 = vrot.lane.b32.xlu0 %v8866, 64
      %v8999 = vpop.permute.xlu0 %8998
      %9000 = vrot.lane.b32.xlu0 %v8867, 64
      %v9001 = vpop.permute.xlu0 %9000
      %9002 = vrot.lane.b32.xlu0 %v8868, 64
      %v9003 = vpop.permute.xlu0 %9002
      %9004 = vrot.lane.b32.xlu0 %v8869, 64
      %v9005 = vpop.permute.xlu0 %9004
      %9006 = vrot.lane.b32.xlu0 %v8870, 64
      %v9007 = vpop.permute.xlu0 %9006
      %9008 = vrot.lane.b32.xlu0 %v8871, 64
      %v9009 = vpop.permute.xlu0 %9008
      %9010 = vrot.lane.b32.xlu0 %v8872, 64
      %v9011 = vpop.permute.xlu0 %9010
      %9012 = vrot.lane.b32.xlu0 %v8873, 64
      %v9013 = vpop.permute.xlu0 %9012
      %9014 = vrot.lane.b32.xlu0 %v8874, 64
      %v9015 = vpop.permute.xlu0 %9014
      %9016 = vrot.lane.b32.xlu0 %v8875, 64
      %v9017 = vpop.permute.xlu0 %9016
      %9018 = vrot.lane.b32.xlu0 %v8876, 64
      %v9019 = vpop.permute.xlu0 %9018
      %9020 = vrot.lane.b32.xlu0 %v8877, 64
      %v9021 = vpop.permute.xlu0 %9020
      %9022 = vrot.lane.b32.xlu0 %v8878, 64
      %v9023 = vpop.permute.xlu0 %9022
      %9024 = vrot.lane.b32.xlu0 %v8879, 64
      %v9025 = vpop.permute.xlu0 %9024
      %9026 = vrot.lane.b32.xlu0 %v8880, 64
      %v9027 = vpop.permute.xlu0 %9026
      %9028 = vrot.lane.b32.xlu0 %v8881, 64
      %v9029 = vpop.permute.xlu0 %9028
      %9030 = vrot.lane.b32.xlu0 %v8882, 64
      %v9031 = vpop.permute.xlu0 %9030
      %9032 = vrot.lane.b32.xlu0 %v8883, 64
      %v9033 = vpop.permute.xlu0 %9032
      %9034 = vrot.lane.b32.xlu0 %v8884, 64
      %v9035 = vpop.permute.xlu0 %9034
      %9036 = vrot.lane.b32.xlu0 %v8885, 64
      %v9037 = vpop.permute.xlu0 %9036
      %9038 = vrot.lane.b32.xlu0 %v8886, 64
      %v9039 = vpop.permute.xlu0 %9038
      %9040 = vrot.lane.b32.xlu0 %v8887, 64
      %v9041 = vpop.permute.xlu0 %9040
      %9042 = vrot.lane.b32.xlu0 %v8888, 64
      %v9043 = vpop.permute.xlu0 %9042
      %9044 = vrot.lane.b32.xlu0 %v8889, 64
      %v9045 = vpop.permute.xlu0 %9044
      %9046 = vrot.lane.b32.xlu0 %v8890, 64
      %v9047 = vpop.permute.xlu0 %9046
      %9048 = vrot.lane.b32.xlu0 %v8891, 64
      %v9049 = vpop.permute.xlu0 %9048
      %9050 = vrot.lane.b32.xlu0 %v8892, 64
      %v9051 = vpop.permute.xlu0 %9050
      %9052 = vrot.lane.b32.xlu0 %v8893, 64
      %v9053 = vpop.permute.xlu0 %9052
      %9054 = vrot.lane.b32.xlu0 %v8894, 64
      %v9055 = vpop.permute.xlu0 %9054
      %9056 = vrot.lane.b32.xlu0 %v8895, 64
      %v9057 = vpop.permute.xlu0 %9056
      %9058 = vrot.lane.b32.xlu0 %v8896, 64
      %v9059 = vpop.permute.xlu0 %9058
      %9060 = vrot.lane.b32.xlu0 %v8897, 64
      %v9061 = vpop.permute.xlu0 %9060
      %9062 = vrot.lane.b32.xlu0 %v8898, 64
      %v9063 = vpop.permute.xlu0 %9062
      %9064 = vrot.lane.b32.xlu0 %v8899, 64
      %v9065 = vpop.permute.xlu0 %9064
      %9066 = vrot.lane.b32.xlu0 %v8900, 64
      %v9067 = vpop.permute.xlu0 %9066
      %9068 = vrot.lane.b32.xlu0 %v8901, 64
      %v9069 = vpop.permute.xlu0 %9068
      %9070 = vrot.lane.b32.xlu0 %v8902, 64
      %v9071 = vpop.permute.xlu0 %9070
      %9072 = vrot.lane.b32.xlu0 %v8903, 64
      %v9073 = vpop.permute.xlu0 %9072
      %9074 = vrot.lane.b32.xlu0 %v8904, 64
      %v9075 = vpop.permute.xlu0 %9074
      %9076 = vrot.lane.b32.xlu0 %v8905, 64
      %v9077 = vpop.permute.xlu0 %9076
      %9078 = vrot.lane.b32.xlu0 %v8906, 64
      %v9079 = vpop.permute.xlu0 %9078
      %9080 = vrot.lane.b32.xlu0 %v8907, 64
      %v9081 = vpop.permute.xlu0 %9080
      %9082 = vrot.lane.b32.xlu0 %v8908, 64
      %v9083 = vpop.permute.xlu0 %9082
      %9084 = vrot.lane.b32.xlu0 %v8909, 64
      %v9085 = vpop.permute.xlu0 %9084
      %9086 = vrot.lane.b32.xlu0 %v8910, 64
      %v9087 = vpop.permute.xlu0 %9086
      %9088 = vrot.lane.b32.xlu0 %v8911, 64
      %v9089 = vpop.permute.xlu0 %9088
      %9090 = vrot.lane.b32.xlu0 %v8912, 64
      %v9091 = vpop.permute.xlu0 %9090
      %9092 = vrot.lane.b32.xlu0 %v8913, 64
      %v9093 = vpop.permute.xlu0 %9092
      %9094 = vrot.lane.b32.xlu0 %v8914, 64
      %v9095 = vpop.permute.xlu0 %9094
      %9096 = vrot.lane.b32.xlu0 %v8915, 64
      %v9097 = vpop.permute.xlu0 %9096
      %9098 = vrot.lane.b32.xlu0 %v8916, 64
      %v9099 = vpop.permute.xlu0 %9098
      %9100 = vrot.lane.b32.xlu0 %v8917, 64
      %v9101 = vpop.permute.xlu0 %9100
      %9102 = vrot.lane.b32.xlu0 %v8918, 64
      %v9103 = vpop.permute.xlu0 %9102
      %9104 = vrot.lane.b32.xlu0 %v8919, 64
      %v9105 = vpop.permute.xlu0 %9104
      %9106 = vrot.lane.b32.xlu0 %v8920, 64
      %v9107 = vpop.permute.xlu0 %9106
      %9108 = vrot.lane.b32.xlu0 %v8921, 64
      %v9109 = vpop.permute.xlu0 %9108
      %9110 = vrot.lane.b32.xlu0 %v8922, 64
      %v9111 = vpop.permute.xlu0 %9110
      %9112 = vrot.lane.b32.xlu0 %v8923, 64
      %v9113 = vpop.permute.xlu0 %9112
      %9114 = vrot.lane.b32.xlu0 %v8924, 64
      %v9115 = vpop.permute.xlu0 %9114
      %9116 = vrot.lane.b32.xlu0 %v8925, 64
      %v9117 = vpop.permute.xlu0 %9116
      %9182 = vst.msk [vmem:[#allocation3] sm:$0xff] %vm3699, %v8991
      %9183 = vst.msk [vmem:[#allocation3 + $0x8] sm:$0xff] %vm3699, %v8993
      %9184 = vst.msk [vmem:[#allocation3 + $0x10] sm:$0xff] %vm3699, %v8995
      %9185 = vst.msk [vmem:[#allocation3 + $0x18] sm:$0xff] %vm3699, %v8997
      %9186 = vst.msk [vmem:[#allocation3 + $0x20] sm:$0xff] %vm3699, %v8999
      %9187 = vst.msk [vmem:[#allocation3 + $0x28] sm:$0xff] %vm3699, %v9001
      %9188 = vst.msk [vmem:[#allocation3 + $0x30] sm:$0xff] %vm3699, %v9003
      %9189 = vst.msk [vmem:[#allocation3 + $0x38] sm:$0xff] %vm3699, %v9005
      %9190 = vst.msk [vmem:[#allocation3 + $0x40] sm:$0xff] %vm3699, %v9007
      %9191 = vst.msk [vmem:[#allocation3 + $0x48] sm:$0xff] %vm3699, %v9009
      %9192 = vst.msk [vmem:[#allocation3 + $0x50] sm:$0xff] %vm3699, %v9011
      %9193 = vst.msk [vmem:[#allocation3 + $0x58] sm:$0xff] %vm3699, %v9013
      %9194 = vst.msk [vmem:[#allocation3 + $0x60] sm:$0xff] %vm3699, %v9015
      %9195 = vst.msk [vmem:[#allocation3 + $0x68] sm:$0xff] %vm3699, %v9017
      %9196 = vst.msk [vmem:[#allocation3 + $0x70] sm:$0xff] %vm3699, %v9019
      %9197 = vst.msk [vmem:[#allocation3 + $0x78] sm:$0xff] %vm3699, %v9021
      %9198 = vst.msk [vmem:[#allocation3 + $0x80] sm:$0xff] %vm3699, %v9023
      %9199 = vst.msk [vmem:[#allocation3 + $0x88] sm:$0xff] %vm3699, %v9025
      %9200 = vst.msk [vmem:[#allocation3 + $0x90] sm:$0xff] %vm3699, %v9027
      %9201 = vst.msk [vmem:[#allocation3 + $0x98] sm:$0xff] %vm3699, %v9029
      %9202 = vst.msk [vmem:[#allocation3 + $0xa0] sm:$0xff] %vm3699, %v9031
      %9203 = vst.msk [vmem:[#allocation3 + $0xa8] sm:$0xff] %vm3699, %v9033
      %9204 = vst.msk [vmem:[#allocation3 + $0xb0] sm:$0xff] %vm3699, %v9035
      %9205 = vst.msk [vmem:[#allocation3 + $0xb8] sm:$0xff] %vm3699, %v9037
      %9206 = vst.msk [vmem:[#allocation3 + $0xc0] sm:$0xff] %vm3699, %v9039
      %9207 = vst.msk [vmem:[#allocation3 + $0xc8] sm:$0xff] %vm3699, %v9041
      %9208 = vst.msk [vmem:[#allocation3 + $0xd0] sm:$0xff] %vm3699, %v9043
      %9209 = vst.msk [vmem:[#allocation3 + $0xd8] sm:$0xff] %vm3699, %v9045
      %9210 = vst.msk [vmem:[#allocation3 + $0xe0] sm:$0xff] %vm3699, %v9047
      %9211 = vst.msk [vmem:[#allocation3 + $0xe8] sm:$0xff] %vm3699, %v9049
      %9212 = vst.msk [vmem:[#allocation3 + $0xf0] sm:$0xff] %vm3699, %v9051
      %9213 = vst.msk [vmem:[#allocation3 + $0xf8] sm:$0xff] %vm3699, %v9053
      %9214 = vst.msk [vmem:[#allocation3 + $0x100] sm:$0xff] %vm3699, %v9055
      %9215 = vst.msk [vmem:[#allocation3 + $0x108] sm:$0xff] %vm3699, %v9057
      %9216 = vst.msk [vmem:[#allocation3 + $0x110] sm:$0xff] %vm3699, %v9059
      %9217 = vst.msk [vmem:[#allocation3 + $0x118] sm:$0xff] %vm3699, %v9061
      %9218 = vst.msk [vmem:[#allocation3 + $0x120] sm:$0xff] %vm3699, %v9063
      %9219 = vst.msk [vmem:[#allocation3 + $0x128] sm:$0xff] %vm3699, %v9065
      %9220 = vst.msk [vmem:[#allocation3 + $0x130] sm:$0xff] %vm3699, %v9067
      %9221 = vst.msk [vmem:[#allocation3 + $0x138] sm:$0xff] %vm3699, %v9069
      %9222 = vst.msk [vmem:[#allocation3 + $0x140] sm:$0xff] %vm3699, %v9071
      %9223 = vst.msk [vmem:[#allocation3 + $0x148] sm:$0xff] %vm3699, %v9073
      %9224 = vst.msk [vmem:[#allocation3 + $0x150] sm:$0xff] %vm3699, %v9075
      %9225 = vst.msk [vmem:[#allocation3 + $0x158] sm:$0xff] %vm3699, %v9077
      %9226 = vst.msk [vmem:[#allocation3 + $0x160] sm:$0xff] %vm3699, %v9079
      %9227 = vst.msk [vmem:[#allocation3 + $0x168] sm:$0xff] %vm3699, %v9081
      %9228 = vst.msk [vmem:[#allocation3 + $0x170] sm:$0xff] %vm3699, %v9083
      %9229 = vst.msk [vmem:[#allocation3 + $0x178] sm:$0xff] %vm3699, %v9085
      %9230 = vst.msk [vmem:[#allocation3 + $0x180] sm:$0xff] %vm3699, %v9087
      %9231 = vst.msk [vmem:[#allocation3 + $0x188] sm:$0xff] %vm3699, %v9089
      %9232 = vst.msk [vmem:[#allocation3 + $0x190] sm:$0xff] %vm3699, %v9091
      %9233 = vst.msk [vmem:[#allocation3 + $0x198] sm:$0xff] %vm3699, %v9093
      %9234 = vst.msk [vmem:[#allocation3 + $0x1a0] sm:$0xff] %vm3699, %v9095
      %9235 = vst.msk [vmem:[#allocation3 + $0x1a8] sm:$0xff] %vm3699, %v9097
      %9236 = vst.msk [vmem:[#allocation3 + $0x1b0] sm:$0xff] %vm3699, %v9099
      %9237 = vst.msk [vmem:[#allocation3 + $0x1b8] sm:$0xff] %vm3699, %v9101
      %9238 = vst.msk [vmem:[#allocation3 + $0x1c0] sm:$0xff] %vm3699, %v9103
      %9239 = vst.msk [vmem:[#allocation3 + $0x1c8] sm:$0xff] %vm3699, %v9105
      %9240 = vst.msk [vmem:[#allocation3 + $0x1d0] sm:$0xff] %vm3699, %v9107
      %9241 = vst.msk [vmem:[#allocation3 + $0x1d8] sm:$0xff] %vm3699, %v9109
      %9242 = vst.msk [vmem:[#allocation3 + $0x1e0] sm:$0xff] %vm3699, %v9111
      %9243 = vst.msk [vmem:[#allocation3 + $0x1e8] sm:$0xff] %vm3699, %v9113
      %9244 = vst.msk [vmem:[#allocation3 + $0x1f0] sm:$0xff] %vm3699, %v9115
      %9245 = vst.msk [vmem:[#allocation3 + $0x1f8] sm:$0xff] %vm3699, %v9117
      %v9246 = vld [vmem:[#allocation3] sm:$0xff]
      %v9247 = vld [vmem:[#allocation3 + $0x8] sm:$0xff]
      %v9248 = vld [vmem:[#allocation3 + $0x10] sm:$0xff]
      %v9249 = vld [vmem:[#allocation3 + $0x18] sm:$0xff]
      %v9250 = vld [vmem:[#allocation3 + $0x20] sm:$0xff]
      %v9251 = vld [vmem:[#allocation3 + $0x28] sm:$0xff]
      %v9252 = vld [vmem:[#allocation3 + $0x30] sm:$0xff]
      %v9253 = vld [vmem:[#allocation3 + $0x38] sm:$0xff]
      %v9254 = vld [vmem:[#allocation3 + $0x40] sm:$0xff]
      %v9255 = vld [vmem:[#allocation3 + $0x48] sm:$0xff]
      %v9256 = vld [vmem:[#allocation3 + $0x50] sm:$0xff]
      %v9257 = vld [vmem:[#allocation3 + $0x58] sm:$0xff]
      %v9258 = vld [vmem:[#allocation3 + $0x60] sm:$0xff]
      %v9259 = vld [vmem:[#allocation3 + $0x68] sm:$0xff]
      %v9260 = vld [vmem:[#allocation3 + $0x70] sm:$0xff]
      %v9261 = vld [vmem:[#allocation3 + $0x78] sm:$0xff]
      %v9262 = vld [vmem:[#allocation3 + $0x80] sm:$0xff]
      %v9263 = vld [vmem:[#allocation3 + $0x88] sm:$0xff]
      %v9264 = vld [vmem:[#allocation3 + $0x90] sm:$0xff]
      %v9265 = vld [vmem:[#allocation3 + $0x98] sm:$0xff]
      %v9266 = vld [vmem:[#allocation3 + $0xa0] sm:$0xff]
      %v9267 = vld [vmem:[#allocation3 + $0xa8] sm:$0xff]
      %v9268 = vld [vmem:[#allocation3 + $0xb0] sm:$0xff]
      %v9269 = vld [vmem:[#allocation3 + $0xb8] sm:$0xff]
      %v9270 = vld [vmem:[#allocation3 + $0xc0] sm:$0xff]
      %v9271 = vld [vmem:[#allocation3 + $0xc8] sm:$0xff]
      %v9272 = vld [vmem:[#allocation3 + $0xd0] sm:$0xff]
      %v9273 = vld [vmem:[#allocation3 + $0xd8] sm:$0xff]
      %v9274 = vld [vmem:[#allocation3 + $0xe0] sm:$0xff]
      %v9275 = vld [vmem:[#allocation3 + $0xe8] sm:$0xff]
      %v9276 = vld [vmem:[#allocation3 + $0xf0] sm:$0xff]
      %v9277 = vld [vmem:[#allocation3 + $0xf8] sm:$0xff]
      %v9278 = vld [vmem:[#allocation3 + $0x100] sm:$0xff]
      %v9279 = vld [vmem:[#allocation3 + $0x108] sm:$0xff]
      %v9280 = vld [vmem:[#allocation3 + $0x110] sm:$0xff]
      %v9281 = vld [vmem:[#allocation3 + $0x118] sm:$0xff]
      %v9282 = vld [vmem:[#allocation3 + $0x120] sm:$0xff]
      %v9283 = vld [vmem:[#allocation3 + $0x128] sm:$0xff]
      %v9284 = vld [vmem:[#allocation3 + $0x130] sm:$0xff]
      %v9285 = vld [vmem:[#allocation3 + $0x138] sm:$0xff]
      %v9286 = vld [vmem:[#allocation3 + $0x140] sm:$0xff]
      %v9287 = vld [vmem:[#allocation3 + $0x148] sm:$0xff]
      %v9288 = vld [vmem:[#allocation3 + $0x150] sm:$0xff]
      %v9289 = vld [vmem:[#allocation3 + $0x158] sm:$0xff]
      %v9290 = vld [vmem:[#allocation3 + $0x160] sm:$0xff]
      %v9291 = vld [vmem:[#allocation3 + $0x168] sm:$0xff]
      %v9292 = vld [vmem:[#allocation3 + $0x170] sm:$0xff]
      %v9293 = vld [vmem:[#allocation3 + $0x178] sm:$0xff]
      %v9294 = vld [vmem:[#allocation3 + $0x180] sm:$0xff]
      %v9295 = vld [vmem:[#allocation3 + $0x188] sm:$0xff]
      %v9296 = vld [vmem:[#allocation3 + $0x190] sm:$0xff]
      %v9297 = vld [vmem:[#allocation3 + $0x198] sm:$0xff]
      %v9298 = vld [vmem:[#allocation3 + $0x1a0] sm:$0xff]
      %v9299 = vld [vmem:[#allocation3 + $0x1a8] sm:$0xff]
      %v9300 = vld [vmem:[#allocation3 + $0x1b0] sm:$0xff]
      %v9301 = vld [vmem:[#allocation3 + $0x1b8] sm:$0xff]
      %v9302 = vld [vmem:[#allocation3 + $0x1c0] sm:$0xff]
      %v9303 = vld [vmem:[#allocation3 + $0x1c8] sm:$0xff]
      %v9304 = vld [vmem:[#allocation3 + $0x1d0] sm:$0xff]
      %v9305 = vld [vmem:[#allocation3 + $0x1d8] sm:$0xff]
      %v9306 = vld [vmem:[#allocation3 + $0x1e0] sm:$0xff]
      %v9307 = vld [vmem:[#allocation3 + $0x1e8] sm:$0xff]
      %v9308 = vld [vmem:[#allocation3 + $0x1f0] sm:$0xff]
      %v9309 = vld [vmem:[#allocation3 + $0x1f8] sm:$0xff]
      %v9311 = vsel %vm3828, %v9246, 0
      %v9314 = vsel %vm3828, %v9247, 0
      %v9317 = vsel %vm3828, %v9248, 0
      %v9320 = vsel %vm3828, %v9249, 0
      %v9323 = vsel %vm3828, %v9250, 0
      %v9326 = vsel %vm3828, %v9251, 0
      %v9329 = vsel %vm3828, %v9252, 0
      %v9332 = vsel %vm3828, %v9253, 0
      %v9335 = vsel %vm3828, %v9254, 0
      %v9338 = vsel %vm3828, %v9255, 0
      %v9341 = vsel %vm3828, %v9256, 0
      %v9344 = vsel %vm3828, %v9257, 0
      %v9347 = vsel %vm3828, %v9258, 0
      %v9350 = vsel %vm3828, %v9259, 0
      %v9353 = vsel %vm3828, %v9260, 0
      %v9356 = vsel %vm3828, %v9261, 0
      %v9359 = vsel %vm3828, %v9262, 0
      %v9362 = vsel %vm3828, %v9263, 0
      %v9365 = vsel %vm3828, %v9264, 0
      %v9368 = vsel %vm3828, %v9265, 0
      %v9371 = vsel %vm3828, %v9266, 0
      %v9374 = vsel %vm3828, %v9267, 0
      %v9377 = vsel %vm3828, %v9268, 0
      %v9380 = vsel %vm3828, %v9269, 0
      %v9383 = vsel %vm3828, %v9270, 0
      %v9386 = vsel %vm3828, %v9271, 0
      %v9389 = vsel %vm3828, %v9272, 0
      %v9392 = vsel %vm3828, %v9273, 0
      %v9395 = vsel %vm3828, %v9274, 0
      %v9398 = vsel %vm3828, %v9275, 0
      %v9401 = vsel %vm3828, %v9276, 0
      %v9404 = vsel %vm3828, %v9277, 0
      %v9407 = vsel %vm3828, %v9278, 0
      %v9410 = vsel %vm3828, %v9279, 0
      %v9413 = vsel %vm3828, %v9280, 0
      %v9416 = vsel %vm3828, %v9281, 0
      %v9419 = vsel %vm3828, %v9282, 0
      %v9422 = vsel %vm3828, %v9283, 0
      %v9425 = vsel %vm3828, %v9284, 0
      %v9428 = vsel %vm3828, %v9285, 0
      %v9431 = vsel %vm3828, %v9286, 0
      %v9434 = vsel %vm3828, %v9287, 0
      %v9437 = vsel %vm3828, %v9288, 0
      %v9440 = vsel %vm3828, %v9289, 0
      %v9443 = vsel %vm3828, %v9290, 0
      %v9446 = vsel %vm3828, %v9291, 0
      %v9449 = vsel %vm3828, %v9292, 0
      %v9452 = vsel %vm3828, %v9293, 0
      %v9455 = vsel %vm3828, %v9294, 0
      %v9458 = vsel %vm3828, %v9295, 0
      %v9461 = vsel %vm3828, %v9296, 0
      %v9464 = vsel %vm3828, %v9297, 0
      %v9467 = vsel %vm3828, %v9298, 0
      %v9470 = vsel %vm3828, %v9299, 0
      %v9473 = vsel %vm3828, %v9300, 0
      %v9476 = vsel %vm3828, %v9301, 0
      %v9479 = vsel %vm3828, %v9302, 0
      %v9482 = vsel %vm3828, %v9303, 0
      %v9485 = vsel %vm3828, %v9304, 0
      %v9488 = vsel %vm3828, %v9305, 0
      %v9491 = vsel %vm3828, %v9306, 0
      %v9494 = vsel %vm3828, %v9307, 0
      %v9497 = vsel %vm3828, %v9308, 0
      %v9500 = vsel %vm3828, %v9309, 0
      %9502 = vmatprep.subr.mxu0 0.0
      %9503 = vmatpush1.msra.mxu0 0.0
      %9504 = vmatprep.subr.mxu0 0.0
      %9505 = vmatpush1.msra.mxu0 0.0
      %9506 = vmatprep.subr.mxu0 0.0
      %9507 = vmatpush1.msra.mxu0 0.0
      %9508 = vmatprep.subr.mxu0 0.0
      %9509 = vmatpush1.msra.mxu0 0.0
      %9510 = vmatprep.subr.mxu0 0.0
      %9511 = vmatpush1.msra.mxu0 0.0
      %9512 = vmatprep.subr.mxu0 0.0
      %9513 = vmatpush1.msra.mxu0 0.0
      %9514 = vmatprep.subr.mxu0 0.0
      %9515 = vmatpush1.msra.mxu0 0.0
      %9516 = vmatprep.subr.mxu0 0.0
      %9517 = vmatpush1.msra.mxu0 %v5981
      %9518 = vmatprep.subr.mxu0 0.0
      %9519 = vmatpush1.msra.mxu0 %v5980
      %9520 = vmatprep.subr.mxu0 0.0
      %9521 = vmatpush1.msra.mxu0 %v5979
      %9522 = vmatprep.subr.mxu0 0.0
      %9523 = vmatpush1.msra.mxu0 %v5978
      %9524 = vmatprep.subr.mxu0 0.0
      %9525 = vmatpush1.msra.mxu0 %v5977
      %9526 = vmatprep.subr.mxu0 0.0
      %9527 = vmatpush1.msra.mxu0 %v5976
      %9528 = vmatprep.subr.mxu0 0.0
      %9529 = vmatpush1.msra.mxu0 %v5975
      %9530 = vmatprep.subr.mxu0 0.0
      %9531 = vmatpush1.msra.mxu0 %v5974
      %9532 = vmatprep.subr.mxu0 0.0
      %9533 = vmatpush1.msra.mxu0 %v5973
      %9534 = vmatprep.subr.mxu0 0.0
      %9535 = vmatpush2.msra.mxu0 0.0
      %9536 = vmatprep.subr.mxu0 0.0
      %9537 = vmatpush2.msra.mxu0 0.0
      %9538 = vmatprep.subr.mxu0 0.0
      %9539 = vmatpush2.msra.mxu0 0.0
      %9540 = vmatprep.subr.mxu0 0.0
      %9541 = vmatpush2.msra.mxu0 0.0
      %9542 = vmatprep.subr.mxu0 0.0
      %9543 = vmatpush2.msra.mxu0 0.0
      %9544 = vmatprep.subr.mxu0 0.0
      %9545 = vmatpush2.msra.mxu0 0.0
      %9546 = vmatprep.subr.mxu0 0.0
      %9547 = vmatpush2.msra.mxu0 0.0
      %9548 = vmatprep.subr.mxu0 0.0
      %9549 = vmatpush2.msra.mxu0 0.0
      %9550 = vmatprep.subr.mxu0 0.0
      %9551 = vmatpush2.msra.mxu0 0.0
      %9552 = vmatprep.subr.mxu0 0.0
      %9553 = vmatpush2.msra.mxu0 0.0
      %9554 = vmatprep.subr.mxu0 0.0
      %9555 = vmatpush2.msra.mxu0 0.0
      %9556 = vmatprep.subr.mxu0 0.0
      %9557 = vmatpush2.msra.mxu0 0.0
      %9558 = vmatprep.subr.mxu0 0.0
      %9559 = vmatpush2.msra.mxu0 0.0
      %9560 = vmatprep.subr.mxu0 0.0
      %9561 = vmatpush2.msra.mxu0 0.0
      %9562 = vmatprep.subr.mxu0 0.0
      %9563 = vmatpush2.msra.mxu0 0.0
      %9564 = vmatprep.subr.mxu0 0.0
      %9565 = vmatpush2.msra.mxu0 0.0
      %9566 = vmatprep.mubr.f32.mxu0 0.0
      %9567 = vmatmul.mubr.f32.gmra.mxu0 %v9311
      %v9568 = vpop.f32.mrf.mxu0
      %v9569 = vadd.f32 0.0, %v9568
      %v9570 = vpop.f32.mrf.mxu0
      %9571 = vmatprep.mubr.f32.mxu0 0.0
      %9572 = vmatmul.mubr.f32.gmra.mxu0 %v9314
      %v9573 = vpop.f32.mrf.mxu0
      %v9574 = vadd.f32 0.0, %v9573
      %v9575 = vpop.f32.mrf.mxu0
      %9576 = vmatprep.mubr.f32.mxu0 0.0
      %9577 = vmatmul.mubr.f32.gmra.mxu0 %v9317
      %v9578 = vpop.f32.mrf.mxu0
      %v9579 = vadd.f32 0.0, %v9578
      %v9580 = vpop.f32.mrf.mxu0
      %9581 = vmatprep.mubr.f32.mxu0 0.0
      %9582 = vmatmul.mubr.f32.gmra.mxu0 %v9320
      %v9583 = vpop.f32.mrf.mxu0
      %v9584 = vadd.f32 0.0, %v9583
      %v9585 = vpop.f32.mrf.mxu0
      %9586 = vmatprep.mubr.f32.mxu0 0.0
      %9587 = vmatmul.mubr.f32.gmra.mxu0 %v9323
      %v9588 = vpop.f32.mrf.mxu0
      %v9589 = vadd.f32 0.0, %v9588
      %v9590 = vpop.f32.mrf.mxu0
      %9591 = vmatprep.mubr.f32.mxu0 0.0
      %9592 = vmatmul.mubr.f32.gmra.mxu0 %v9326
      %v9593 = vpop.f32.mrf.mxu0
      %v9594 = vadd.f32 0.0, %v9593
      %v9595 = vpop.f32.mrf.mxu0
      %9596 = vmatprep.mubr.f32.mxu0 0.0
      %9597 = vmatmul.mubr.f32.gmra.mxu0 %v9329
      %v9598 = vpop.f32.mrf.mxu0
      %v9599 = vadd.f32 0.0, %v9598
      %v9600 = vpop.f32.mrf.mxu0
      %9601 = vmatprep.mubr.f32.mxu0 0.0
      %9602 = vmatmul.mubr.f32.gmra.mxu0 %v9332
      %v9603 = vpop.f32.mrf.mxu0
      %v9604 = vadd.f32 0.0, %v9603
      %v9605 = vpop.f32.mrf.mxu0
      %9606 = vmatprep.mubr.f32.mxu0 0.0
      %9607 = vmatmul.mubr.f32.gmra.mxu0 %v9335
      %v9608 = vpop.f32.mrf.mxu0
      %v9609 = vadd.f32 0.0, %v9608
      %v9610 = vpop.f32.mrf.mxu0
      %9611 = vmatprep.mubr.f32.mxu0 0.0
      %9612 = vmatmul.mubr.f32.gmra.mxu0 %v9338
      %v9613 = vpop.f32.mrf.mxu0
      %v9614 = vadd.f32 0.0, %v9613
      %v9615 = vpop.f32.mrf.mxu0
      %9616 = vmatprep.mubr.f32.mxu0 0.0
      %9617 = vmatmul.mubr.f32.gmra.mxu0 %v9341
      %v9618 = vpop.f32.mrf.mxu0
      %v9619 = vadd.f32 0.0, %v9618
      %v9620 = vpop.f32.mrf.mxu0
      %9621 = vmatprep.mubr.f32.mxu0 0.0
      %9622 = vmatmul.mubr.f32.gmra.mxu0 %v9344
      %v9623 = vpop.f32.mrf.mxu0
      %v9624 = vadd.f32 0.0, %v9623
      %v9625 = vpop.f32.mrf.mxu0
      %9626 = vmatprep.mubr.f32.mxu0 0.0
      %9627 = vmatmul.mubr.f32.gmra.mxu0 %v9347
      %v9628 = vpop.f32.mrf.mxu0
      %v9629 = vadd.f32 0.0, %v9628
      %v9630 = vpop.f32.mrf.mxu0
      %9631 = vmatprep.mubr.f32.mxu0 0.0
      %9632 = vmatmul.mubr.f32.gmra.mxu0 %v9350
      %v9633 = vpop.f32.mrf.mxu0
      %v9634 = vadd.f32 0.0, %v9633
      %v9635 = vpop.f32.mrf.mxu0
      %9636 = vmatprep.mubr.f32.mxu0 0.0
      %9637 = vmatmul.mubr.f32.gmra.mxu0 %v9353
      %v9638 = vpop.f32.mrf.mxu0
      %v9639 = vadd.f32 0.0, %v9638
      %v9640 = vpop.f32.mrf.mxu0
      %9641 = vmatprep.mubr.f32.mxu0 0.0
      %9642 = vmatmul.mubr.f32.gmra.mxu0 %v9356
      %v9643 = vpop.f32.mrf.mxu0
      %v9644 = vadd.f32 0.0, %v9643
      %v9645 = vpop.f32.mrf.mxu0
      %9646 = vmatprep.mubr.f32.mxu0 0.0
      %9647 = vmatmul.mubr.f32.gmra.mxu0 %v9359
      %v9648 = vpop.f32.mrf.mxu0
      %v9649 = vadd.f32 0.0, %v9648
      %v9650 = vpop.f32.mrf.mxu0
      %9651 = vmatprep.mubr.f32.mxu0 0.0
      %9652 = vmatmul.mubr.f32.gmra.mxu0 %v9362
      %v9653 = vpop.f32.mrf.mxu0
      %v9654 = vadd.f32 0.0, %v9653
      %v9655 = vpop.f32.mrf.mxu0
      %9656 = vmatprep.mubr.f32.mxu0 0.0
      %9657 = vmatmul.mubr.f32.gmra.mxu0 %v9365
      %v9658 = vpop.f32.mrf.mxu0
      %v9659 = vadd.f32 0.0, %v9658
      %v9660 = vpop.f32.mrf.mxu0
      %9661 = vmatprep.mubr.f32.mxu0 0.0
      %9662 = vmatmul.mubr.f32.gmra.mxu0 %v9368
      %v9663 = vpop.f32.mrf.mxu0
      %v9664 = vadd.f32 0.0, %v9663
      %v9665 = vpop.f32.mrf.mxu0
      %9666 = vmatprep.mubr.f32.mxu0 0.0
      %9667 = vmatmul.mubr.f32.gmra.mxu0 %v9371
      %v9668 = vpop.f32.mrf.mxu0
      %v9669 = vadd.f32 0.0, %v9668
      %v9670 = vpop.f32.mrf.mxu0
      %9671 = vmatprep.mubr.f32.mxu0 0.0
      %9672 = vmatmul.mubr.f32.gmra.mxu0 %v9374
      %v9673 = vpop.f32.mrf.mxu0
      %v9674 = vadd.f32 0.0, %v9673
      %v9675 = vpop.f32.mrf.mxu0
      %9676 = vmatprep.mubr.f32.mxu0 0.0
      %9677 = vmatmul.mubr.f32.gmra.mxu0 %v9377
      %v9678 = vpop.f32.mrf.mxu0
      %v9679 = vadd.f32 0.0, %v9678
      %v9680 = vpop.f32.mrf.mxu0
      %9681 = vmatprep.mubr.f32.mxu0 0.0
      %9682 = vmatmul.mubr.f32.gmra.mxu0 %v9380
      %v9683 = vpop.f32.mrf.mxu0
      %v9684 = vadd.f32 0.0, %v9683
      %v9685 = vpop.f32.mrf.mxu0
      %9686 = vmatprep.mubr.f32.mxu0 0.0
      %9687 = vmatmul.mubr.f32.gmra.mxu0 %v9383
      %v9688 = vpop.f32.mrf.mxu0
      %v9689 = vadd.f32 0.0, %v9688
      %v9690 = vpop.f32.mrf.mxu0
      %9691 = vmatprep.mubr.f32.mxu0 0.0
      %9692 = vmatmul.mubr.f32.gmra.mxu0 %v9386
      %v9693 = vpop.f32.mrf.mxu0
      %v9694 = vadd.f32 0.0, %v9693
      %v9695 = vpop.f32.mrf.mxu0
      %9696 = vmatprep.mubr.f32.mxu0 0.0
      %9697 = vmatmul.mubr.f32.gmra.mxu0 %v9389
      %v9698 = vpop.f32.mrf.mxu0
      %v9699 = vadd.f32 0.0, %v9698
      %v9700 = vpop.f32.mrf.mxu0
      %9701 = vmatprep.mubr.f32.mxu0 0.0
      %9702 = vmatmul.mubr.f32.gmra.mxu0 %v9392
      %v9703 = vpop.f32.mrf.mxu0
      %v9704 = vadd.f32 0.0, %v9703
      %v9705 = vpop.f32.mrf.mxu0
      %9706 = vmatprep.mubr.f32.mxu0 0.0
      %9707 = vmatmul.mubr.f32.gmra.mxu0 %v9395
      %v9708 = vpop.f32.mrf.mxu0
      %v9709 = vadd.f32 0.0, %v9708
      %v9710 = vpop.f32.mrf.mxu0
      %9711 = vmatprep.mubr.f32.mxu0 0.0
      %9712 = vmatmul.mubr.f32.gmra.mxu0 %v9398
      %v9713 = vpop.f32.mrf.mxu0
      %v9714 = vadd.f32 0.0, %v9713
      %v9715 = vpop.f32.mrf.mxu0
      %9716 = vmatprep.mubr.f32.mxu0 0.0
      %9717 = vmatmul.mubr.f32.gmra.mxu0 %v9401
      %v9718 = vpop.f32.mrf.mxu0
      %v9719 = vadd.f32 0.0, %v9718
      %v9720 = vpop.f32.mrf.mxu0
      %9721 = vmatprep.mubr.f32.mxu0 0.0
      %9722 = vmatmul.mubr.f32.gmra.mxu0 %v9404
      %v9723 = vpop.f32.mrf.mxu0
      %v9724 = vadd.f32 0.0, %v9723
      %v9725 = vpop.f32.mrf.mxu0
      %9726 = vmatprep.mubr.f32.mxu0 0.0
      %9727 = vmatmul.mubr.f32.gmra.mxu0 %v9407
      %v9728 = vpop.f32.mrf.mxu0
      %v9729 = vadd.f32 0.0, %v9728
      %v9730 = vpop.f32.mrf.mxu0
      %9731 = vmatprep.mubr.f32.mxu0 0.0
      %9732 = vmatmul.mubr.f32.gmra.mxu0 %v9410
      %v9733 = vpop.f32.mrf.mxu0
      %v9734 = vadd.f32 0.0, %v9733
      %v9735 = vpop.f32.mrf.mxu0
      %9736 = vmatprep.mubr.f32.mxu0 0.0
      %9737 = vmatmul.mubr.f32.gmra.mxu0 %v9413
      %v9738 = vpop.f32.mrf.mxu0
      %v9739 = vadd.f32 0.0, %v9738
      %v9740 = vpop.f32.mrf.mxu0
      %9741 = vmatprep.mubr.f32.mxu0 0.0
      %9742 = vmatmul.mubr.f32.gmra.mxu0 %v9416
      %v9743 = vpop.f32.mrf.mxu0
      %v9744 = vadd.f32 0.0, %v9743
      %v9745 = vpop.f32.mrf.mxu0
      %9746 = vmatprep.mubr.f32.mxu0 0.0
      %9747 = vmatmul.mubr.f32.gmra.mxu0 %v9419
      %v9748 = vpop.f32.mrf.mxu0
      %v9749 = vadd.f32 0.0, %v9748
      %v9750 = vpop.f32.mrf.mxu0
      %9751 = vmatprep.mubr.f32.mxu0 0.0
      %9752 = vmatmul.mubr.f32.gmra.mxu0 %v9422
      %v9753 = vpop.f32.mrf.mxu0
      %v9754 = vadd.f32 0.0, %v9753
      %v9755 = vpop.f32.mrf.mxu0
      %9756 = vmatprep.mubr.f32.mxu0 0.0
      %9757 = vmatmul.mubr.f32.gmra.mxu0 %v9425
      %v9758 = vpop.f32.mrf.mxu0
      %v9759 = vadd.f32 0.0, %v9758
      %v9760 = vpop.f32.mrf.mxu0
      %9761 = vmatprep.mubr.f32.mxu0 0.0
      %9762 = vmatmul.mubr.f32.gmra.mxu0 %v9428
      %v9763 = vpop.f32.mrf.mxu0
      %v9764 = vadd.f32 0.0, %v9763
      %v9765 = vpop.f32.mrf.mxu0
      %9766 = vmatprep.mubr.f32.mxu0 0.0
      %9767 = vmatmul.mubr.f32.gmra.mxu0 %v9431
      %v9768 = vpop.f32.mrf.mxu0
      %v9769 = vadd.f32 0.0, %v9768
      %v9770 = vpop.f32.mrf.mxu0
      %9771 = vmatprep.mubr.f32.mxu0 0.0
      %9772 = vmatmul.mubr.f32.gmra.mxu0 %v9434
      %v9773 = vpop.f32.mrf.mxu0
      %v9774 = vadd.f32 0.0, %v9773
      %v9775 = vpop.f32.mrf.mxu0
      %9776 = vmatprep.mubr.f32.mxu0 0.0
      %9777 = vmatmul.mubr.f32.gmra.mxu0 %v9437
      %v9778 = vpop.f32.mrf.mxu0
      %v9779 = vadd.f32 0.0, %v9778
      %v9780 = vpop.f32.mrf.mxu0
      %9781 = vmatprep.mubr.f32.mxu0 0.0
      %9782 = vmatmul.mubr.f32.gmra.mxu0 %v9440
      %v9783 = vpop.f32.mrf.mxu0
      %v9784 = vadd.f32 0.0, %v9783
      %v9785 = vpop.f32.mrf.mxu0
      %9786 = vmatprep.mubr.f32.mxu0 0.0
      %9787 = vmatmul.mubr.f32.gmra.mxu0 %v9443
      %v9788 = vpop.f32.mrf.mxu0
      %v9789 = vadd.f32 0.0, %v9788
      %v9790 = vpop.f32.mrf.mxu0
      %9791 = vmatprep.mubr.f32.mxu0 0.0
      %9792 = vmatmul.mubr.f32.gmra.mxu0 %v9446
      %v9793 = vpop.f32.mrf.mxu0
      %v9794 = vadd.f32 0.0, %v9793
      %v9795 = vpop.f32.mrf.mxu0
      %9796 = vmatprep.mubr.f32.mxu0 0.0
      %9797 = vmatmul.mubr.f32.gmra.mxu0 %v9449
      %v9798 = vpop.f32.mrf.mxu0
      %v9799 = vadd.f32 0.0, %v9798
      %v9800 = vpop.f32.mrf.mxu0
      %9801 = vmatprep.mubr.f32.mxu0 0.0
      %9802 = vmatmul.mubr.f32.gmra.mxu0 %v9452
      %v9803 = vpop.f32.mrf.mxu0
      %v9804 = vadd.f32 0.0, %v9803
      %v9805 = vpop.f32.mrf.mxu0
      %9806 = vmatprep.mubr.f32.mxu0 0.0
      %9807 = vmatmul.mubr.f32.gmra.mxu0 %v9455
      %v9808 = vpop.f32.mrf.mxu0
      %v9809 = vadd.f32 0.0, %v9808
      %v9810 = vpop.f32.mrf.mxu0
      %9811 = vmatprep.mubr.f32.mxu0 0.0
      %9812 = vmatmul.mubr.f32.gmra.mxu0 %v9458
      %v9813 = vpop.f32.mrf.mxu0
      %v9814 = vadd.f32 0.0, %v9813
      %v9815 = vpop.f32.mrf.mxu0
      %9816 = vmatprep.mubr.f32.mxu0 0.0
      %9817 = vmatmul.mubr.f32.gmra.mxu0 %v9461
      %v9818 = vpop.f32.mrf.mxu0
      %v9819 = vadd.f32 0.0, %v9818
      %v9820 = vpop.f32.mrf.mxu0
      %9821 = vmatprep.mubr.f32.mxu0 0.0
      %9822 = vmatmul.mubr.f32.gmra.mxu0 %v9464
      %v9823 = vpop.f32.mrf.mxu0
      %v9824 = vadd.f32 0.0, %v9823
      %v9825 = vpop.f32.mrf.mxu0
      %9826 = vmatprep.mubr.f32.mxu0 0.0
      %9827 = vmatmul.mubr.f32.gmra.mxu0 %v9467
      %v9828 = vpop.f32.mrf.mxu0
      %v9829 = vadd.f32 0.0, %v9828
      %v9830 = vpop.f32.mrf.mxu0
      %9831 = vmatprep.mubr.f32.mxu0 0.0
      %9832 = vmatmul.mubr.f32.gmra.mxu0 %v9470
      %v9833 = vpop.f32.mrf.mxu0
      %v9834 = vadd.f32 0.0, %v9833
      %v9835 = vpop.f32.mrf.mxu0
      %9836 = vmatprep.mubr.f32.mxu0 0.0
      %9837 = vmatmul.mubr.f32.gmra.mxu0 %v9473
      %v9838 = vpop.f32.mrf.mxu0
      %v9839 = vadd.f32 0.0, %v9838
      %v9840 = vpop.f32.mrf.mxu0
      %9841 = vmatprep.mubr.f32.mxu0 0.0
      %9842 = vmatmul.mubr.f32.gmra.mxu0 %v9476
      %v9843 = vpop.f32.mrf.mxu0
      %v9844 = vadd.f32 0.0, %v9843
      %v9845 = vpop.f32.mrf.mxu0
      %9846 = vmatprep.mubr.f32.mxu0 0.0
      %9847 = vmatmul.mubr.f32.gmra.mxu0 %v9479
      %v9848 = vpop.f32.mrf.mxu0
      %v9849 = vadd.f32 0.0, %v9848
      %v9850 = vpop.f32.mrf.mxu0
      %9851 = vmatprep.mubr.f32.mxu0 0.0
      %9852 = vmatmul.mubr.f32.gmra.mxu0 %v9482
      %v9853 = vpop.f32.mrf.mxu0
      %v9854 = vadd.f32 0.0, %v9853
      %v9855 = vpop.f32.mrf.mxu0
      %9856 = vmatprep.mubr.f32.mxu0 0.0
      %9857 = vmatmul.mubr.f32.gmra.mxu0 %v9485
      %v9858 = vpop.f32.mrf.mxu0
      %v9859 = vadd.f32 0.0, %v9858
      %v9860 = vpop.f32.mrf.mxu0
      %9861 = vmatprep.mubr.f32.mxu0 0.0
      %9862 = vmatmul.mubr.f32.gmra.mxu0 %v9488
      %v9863 = vpop.f32.mrf.mxu0
      %v9864 = vadd.f32 0.0, %v9863
      %v9865 = vpop.f32.mrf.mxu0
      %9866 = vmatprep.mubr.f32.mxu0 0.0
      %9867 = vmatmul.mubr.f32.gmra.mxu0 %v9491
      %v9868 = vpop.f32.mrf.mxu0
      %v9869 = vadd.f32 0.0, %v9868
      %v9870 = vpop.f32.mrf.mxu0
      %9871 = vmatprep.mubr.f32.mxu0 0.0
      %9872 = vmatmul.mubr.f32.gmra.mxu0 %v9494
      %v9873 = vpop.f32.mrf.mxu0
      %v9874 = vadd.f32 0.0, %v9873
      %v9875 = vpop.f32.mrf.mxu0
      %9876 = vmatprep.mubr.f32.mxu0 0.0
      %9877 = vmatmul.mubr.f32.gmra.mxu0 %v9497
      %v9878 = vpop.f32.mrf.mxu0
      %v9879 = vadd.f32 0.0, %v9878
      %v9880 = vpop.f32.mrf.mxu0
      %9881 = vmatprep.mubr.f32.mxu0 0.0
      %9882 = vmatmul.mubr.f32.gmra.mxu0 %v9500
      %v9883 = vpop.f32.mrf.mxu0
      %v9884 = vadd.f32 0.0, %v9883
      %v9885 = vpop.f32.mrf.mxu0
      %9886 = vdwg.mxu0
      %v9887 = vsel %vm490, %v9569, 0.0
      %v9888 = vsel %vm490, %v9574, 0.0
      %v9889 = vadd.f32 %v9887, %v9888
      %v9890 = vsel %vm490, %v9579, 0.0
      %v9891 = vadd.f32 %v9889, %v9890
      %v9892 = vsel %vm490, %v9584, 0.0
      %v9893 = vadd.f32 %v9891, %v9892
      %v9894 = vsel %vm490, %v9589, 0.0
      %v9895 = vadd.f32 %v9893, %v9894
      %v9896 = vsel %vm490, %v9594, 0.0
      %v9897 = vadd.f32 %v9895, %v9896
      %v9898 = vsel %vm490, %v9599, 0.0
      %v9899 = vadd.f32 %v9897, %v9898
      %v9900 = vsel %vm490, %v9604, 0.0
      %v9901 = vadd.f32 %v9899, %v9900
      %v9902 = vsel %vm490, %v9609, 0.0
      %v9903 = vadd.f32 %v9901, %v9902
      %v9904 = vsel %vm490, %v9614, 0.0
      %v9905 = vadd.f32 %v9903, %v9904
      %v9906 = vsel %vm490, %v9619, 0.0
      %v9907 = vadd.f32 %v9905, %v9906
      %v9908 = vsel %vm490, %v9624, 0.0
      %v9909 = vadd.f32 %v9907, %v9908
      %v9910 = vsel %vm490, %v9629, 0.0
      %v9911 = vadd.f32 %v9909, %v9910
      %v9912 = vsel %vm490, %v9634, 0.0
      %v9913 = vadd.f32 %v9911, %v9912
      %v9914 = vsel %vm490, %v9639, 0.0
      %v9915 = vadd.f32 %v9913, %v9914
      %v9916 = vsel %vm490, %v9644, 0.0
      %v9917 = vadd.f32 %v9915, %v9916
      %v9918 = vsel %vm490, %v9649, 0.0
      %v9919 = vadd.f32 %v9917, %v9918
      %v9920 = vsel %vm490, %v9654, 0.0
      %v9921 = vadd.f32 %v9919, %v9920
      %v9922 = vsel %vm490, %v9659, 0.0
      %v9923 = vadd.f32 %v9921, %v9922
      %v9924 = vsel %vm490, %v9664, 0.0
      %v9925 = vadd.f32 %v9923, %v9924
      %v9926 = vsel %vm490, %v9669, 0.0
      %v9927 = vadd.f32 %v9925, %v9926
      %v9928 = vsel %vm490, %v9674, 0.0
      %v9929 = vadd.f32 %v9927, %v9928
      %v9930 = vsel %vm490, %v9679, 0.0
      %v9931 = vadd.f32 %v9929, %v9930
      %v9932 = vsel %vm490, %v9684, 0.0
      %v9933 = vadd.f32 %v9931, %v9932
      %v9934 = vsel %vm490, %v9689, 0.0
      %v9935 = vadd.f32 %v9933, %v9934
      %v9936 = vsel %vm490, %v9694, 0.0
      %v9937 = vadd.f32 %v9935, %v9936
      %v9938 = vsel %vm490, %v9699, 0.0
      %v9939 = vadd.f32 %v9937, %v9938
      %v9940 = vsel %vm490, %v9704, 0.0
      %v9941 = vadd.f32 %v9939, %v9940
      %v9942 = vsel %vm490, %v9709, 0.0
      %v9943 = vadd.f32 %v9941, %v9942
      %v9944 = vsel %vm490, %v9714, 0.0
      %v9945 = vadd.f32 %v9943, %v9944
      %v9946 = vsel %vm490, %v9719, 0.0
      %v9947 = vadd.f32 %v9945, %v9946
      %v9948 = vsel %vm490, %v9724, 0.0
      %v9949 = vadd.f32 %v9947, %v9948
      %v9950 = vsel %vm490, %v9729, 0.0
      %v9951 = vadd.f32 %v9949, %v9950
      %v9952 = vsel %vm490, %v9734, 0.0
      %v9953 = vadd.f32 %v9951, %v9952
      %v9954 = vsel %vm490, %v9739, 0.0
      %v9955 = vadd.f32 %v9953, %v9954
      %v9956 = vsel %vm490, %v9744, 0.0
      %v9957 = vadd.f32 %v9955, %v9956
      %v9958 = vsel %vm490, %v9749, 0.0
      %v9959 = vadd.f32 %v9957, %v9958
      %v9960 = vsel %vm490, %v9754, 0.0
      %v9961 = vadd.f32 %v9959, %v9960
      %v9962 = vsel %vm490, %v9759, 0.0
      %v9963 = vadd.f32 %v9961, %v9962
      %v9964 = vsel %vm490, %v9764, 0.0
      %v9965 = vadd.f32 %v9963, %v9964
      %v9966 = vsel %vm490, %v9769, 0.0
      %v9967 = vadd.f32 %v9965, %v9966
      %v9968 = vsel %vm490, %v9774, 0.0
      %v9969 = vadd.f32 %v9967, %v9968
      %v9970 = vsel %vm490, %v9779, 0.0
      %v9971 = vadd.f32 %v9969, %v9970
      %v9972 = vsel %vm490, %v9784, 0.0
      %v9973 = vadd.f32 %v9971, %v9972
      %v9974 = vsel %vm490, %v9789, 0.0
      %v9975 = vadd.f32 %v9973, %v9974
      %v9976 = vsel %vm490, %v9794, 0.0
      %v9977 = vadd.f32 %v9975, %v9976
      %v9978 = vsel %vm490, %v9799, 0.0
      %v9979 = vadd.f32 %v9977, %v9978
      %v9980 = vsel %vm490, %v9804, 0.0
      %v9981 = vadd.f32 %v9979, %v9980
      %v9982 = vsel %vm490, %v9809, 0.0
      %v9983 = vadd.f32 %v9981, %v9982
      %v9984 = vsel %vm490, %v9814, 0.0
      %v9985 = vadd.f32 %v9983, %v9984
      %v9986 = vsel %vm490, %v9819, 0.0
      %v9987 = vadd.f32 %v9985, %v9986
      %v9988 = vsel %vm490, %v9824, 0.0
      %v9989 = vadd.f32 %v9987, %v9988
      %v9990 = vsel %vm490, %v9829, 0.0
      %v9991 = vadd.f32 %v9989, %v9990
      %v9992 = vsel %vm490, %v9834, 0.0
      %v9993 = vadd.f32 %v9991, %v9992
      %v9994 = vsel %vm490, %v9839, 0.0
      %v9995 = vadd.f32 %v9993, %v9994
      %v9996 = vsel %vm490, %v9844, 0.0
      %v9997 = vadd.f32 %v9995, %v9996
      %v9998 = vsel %vm490, %v9849, 0.0
      %v9999 = vadd.f32 %v9997, %v9998
      %v10000 = vsel %vm490, %v9854, 0.0
      %v10001 = vadd.f32 %v9999, %v10000
      %v10002 = vsel %vm490, %v9859, 0.0
      %v10003 = vadd.f32 %v10001, %v10002
      %v10004 = vsel %vm490, %v9864, 0.0
      %v10005 = vadd.f32 %v10003, %v10004
      %v10006 = vsel %vm490, %v9869, 0.0
      %v10007 = vadd.f32 %v10005, %v10006
      %v10008 = vsel %vm490, %v9874, 0.0
      %v10009 = vadd.f32 %v10007, %v10008
      %v10010 = vsel %vm490, %v9879, 0.0
      %v10011 = vadd.f32 %v10009, %v10010
      %v10012 = vsel %vm490, %v9884, 0.0
      %v10013 = vadd.f32 %v10011, %v10012
      %v10014 = vrot.slane %v10013, 4
      %v10015 = vadd.f32 %v10013, %v10014
      %v10016 = vrot.slane %v10015, 2
      %v10017 = vadd.f32 %v10015, %v10016
      %v10018 = vrot.slane %v10017, 1
      %v10019 = vadd.f32 %v10017, %v10018
      %v10020 = vmul.f32 %v9569, %v9569
      %v10021 = vmul.f32 %v9574, %v9574
      %v10022 = vmul.f32 %v9579, %v9579
      %v10023 = vmul.f32 %v9584, %v9584
      %v10024 = vmul.f32 %v9589, %v9589
      %v10025 = vmul.f32 %v9594, %v9594
      %v10026 = vmul.f32 %v9599, %v9599
      %v10027 = vmul.f32 %v9604, %v9604
      %v10028 = vmul.f32 %v9609, %v9609
      %v10029 = vmul.f32 %v9614, %v9614
      %v10030 = vmul.f32 %v9619, %v9619
      %v10031 = vmul.f32 %v9624, %v9624
      %v10032 = vmul.f32 %v9629, %v9629
      %v10033 = vmul.f32 %v9634, %v9634
      %v10034 = vmul.f32 %v9639, %v9639
      %v10035 = vmul.f32 %v9644, %v9644
      %v10036 = vmul.f32 %v9649, %v9649
      %v10037 = vmul.f32 %v9654, %v9654
      %v10038 = vmul.f32 %v9659, %v9659
      %v10039 = vmul.f32 %v9664, %v9664
      %v10040 = vmul.f32 %v9669, %v9669
      %v10041 = vmul.f32 %v9674, %v9674
      %v10042 = vmul.f32 %v9679, %v9679
      %v10043 = vmul.f32 %v9684, %v9684
      %v10044 = vmul.f32 %v9689, %v9689
      %v10045 = vmul.f32 %v9694, %v9694
      %v10046 = vmul.f32 %v9699, %v9699
      %v10047 = vmul.f32 %v9704, %v9704
      %v10048 = vmul.f32 %v9709, %v9709
      %v10049 = vmul.f32 %v9714, %v9714
      %v10050 = vmul.f32 %v9719, %v9719
      %v10051 = vmul.f32 %v9724, %v9724
      %v10052 = vmul.f32 %v9729, %v9729
      %v10053 = vmul.f32 %v9734, %v9734
      %v10054 = vmul.f32 %v9739, %v9739
      %v10055 = vmul.f32 %v9744, %v9744
      %v10056 = vmul.f32 %v9749, %v9749
      %v10057 = vmul.f32 %v9754, %v9754
      %v10058 = vmul.f32 %v9759, %v9759
      %v10059 = vmul.f32 %v9764, %v9764
      %v10060 = vmul.f32 %v9769, %v9769
      %v10061 = vmul.f32 %v9774, %v9774
      %v10062 = vmul.f32 %v9779, %v9779
      %v10063 = vmul.f32 %v9784, %v9784
      %v10064 = vmul.f32 %v9789, %v9789
      %v10065 = vmul.f32 %v9794, %v9794
      %v10066 = vmul.f32 %v9799, %v9799
      %v10067 = vmul.f32 %v9804, %v9804
      %v10068 = vmul.f32 %v9809, %v9809
      %v10069 = vmul.f32 %v9814, %v9814
      %v10070 = vmul.f32 %v9819, %v9819
      %v10071 = vmul.f32 %v9824, %v9824
      %v10072 = vmul.f32 %v9829, %v9829
      %v10073 = vmul.f32 %v9834, %v9834
      %v10074 = vmul.f32 %v9839, %v9839
      %v10075 = vmul.f32 %v9844, %v9844
      %v10076 = vmul.f32 %v9849, %v9849
      %v10077 = vmul.f32 %v9854, %v9854
      %v10078 = vmul.f32 %v9859, %v9859
      %v10079 = vmul.f32 %v9864, %v9864
      %v10080 = vmul.f32 %v9869, %v9869
      %v10081 = vmul.f32 %v9874, %v9874
      %v10082 = vmul.f32 %v9879, %v9879
      %v10083 = vmul.f32 %v9884, %v9884
      %v10084 = vsel %vm490, %v10020, 0.0
      %v10085 = vsel %vm490, %v10021, 0.0
      %v10086 = vadd.f32 %v10084, %v10085
      %v10087 = vsel %vm490, %v10022, 0.0
      %v10088 = vadd.f32 %v10086, %v10087
      %v10089 = vsel %vm490, %v10023, 0.0
      %v10090 = vadd.f32 %v10088, %v10089
      %v10091 = vsel %vm490, %v10024, 0.0
      %v10092 = vadd.f32 %v10090, %v10091
      %v10093 = vsel %vm490, %v10025, 0.0
      %v10094 = vadd.f32 %v10092, %v10093
      %v10095 = vsel %vm490, %v10026, 0.0
      %v10096 = vadd.f32 %v10094, %v10095
      %v10097 = vsel %vm490, %v10027, 0.0
      %v10098 = vadd.f32 %v10096, %v10097
      %v10099 = vsel %vm490, %v10028, 0.0
      %v10100 = vadd.f32 %v10098, %v10099
      %v10101 = vsel %vm490, %v10029, 0.0
      %v10102 = vadd.f32 %v10100, %v10101
      %v10103 = vsel %vm490, %v10030, 0.0
      %v10104 = vadd.f32 %v10102, %v10103
      %v10105 = vsel %vm490, %v10031, 0.0
      %v10106 = vadd.f32 %v10104, %v10105
      %v10107 = vsel %vm490, %v10032, 0.0
      %v10108 = vadd.f32 %v10106, %v10107
      %v10109 = vsel %vm490, %v10033, 0.0
      %v10110 = vadd.f32 %v10108, %v10109
      %v10111 = vsel %vm490, %v10034, 0.0
      %v10112 = vadd.f32 %v10110, %v10111
      %v10113 = vsel %vm490, %v10035, 0.0
      %v10114 = vadd.f32 %v10112, %v10113
      %v10115 = vsel %vm490, %v10036, 0.0
      %v10116 = vadd.f32 %v10114, %v10115
      %v10117 = vsel %vm490, %v10037, 0.0
      %v10118 = vadd.f32 %v10116, %v10117
      %v10119 = vsel %vm490, %v10038, 0.0
      %v10120 = vadd.f32 %v10118, %v10119
      %v10121 = vsel %vm490, %v10039, 0.0
      %v10122 = vadd.f32 %v10120, %v10121
      %v10123 = vsel %vm490, %v10040, 0.0
      %v10124 = vadd.f32 %v10122, %v10123
      %v10125 = vsel %vm490, %v10041, 0.0
      %v10126 = vadd.f32 %v10124, %v10125
      %v10127 = vsel %vm490, %v10042, 0.0
      %v10128 = vadd.f32 %v10126, %v10127
      %v10129 = vsel %vm490, %v10043, 0.0
      %v10130 = vadd.f32 %v10128, %v10129
      %v10131 = vsel %vm490, %v10044, 0.0
      %v10132 = vadd.f32 %v10130, %v10131
      %v10133 = vsel %vm490, %v10045, 0.0
      %v10134 = vadd.f32 %v10132, %v10133
      %v10135 = vsel %vm490, %v10046, 0.0
      %v10136 = vadd.f32 %v10134, %v10135
      %v10137 = vsel %vm490, %v10047, 0.0
      %v10138 = vadd.f32 %v10136, %v10137
      %v10139 = vsel %vm490, %v10048, 0.0
      %v10140 = vadd.f32 %v10138, %v10139
      %v10141 = vsel %vm490, %v10049, 0.0
      %v10142 = vadd.f32 %v10140, %v10141
      %v10143 = vsel %vm490, %v10050, 0.0
      %v10144 = vadd.f32 %v10142, %v10143
      %v10145 = vsel %vm490, %v10051, 0.0
      %v10146 = vadd.f32 %v10144, %v10145
      %v10147 = vsel %vm490, %v10052, 0.0
      %v10148 = vadd.f32 %v10146, %v10147
      %v10149 = vsel %vm490, %v10053, 0.0
      %v10150 = vadd.f32 %v10148, %v10149
      %v10151 = vsel %vm490, %v10054, 0.0
      %v10152 = vadd.f32 %v10150, %v10151
      %v10153 = vsel %vm490, %v10055, 0.0
      %v10154 = vadd.f32 %v10152, %v10153
      %v10155 = vsel %vm490, %v10056, 0.0
      %v10156 = vadd.f32 %v10154, %v10155
      %v10157 = vsel %vm490, %v10057, 0.0
      %v10158 = vadd.f32 %v10156, %v10157
      %v10159 = vsel %vm490, %v10058, 0.0
      %v10160 = vadd.f32 %v10158, %v10159
      %v10161 = vsel %vm490, %v10059, 0.0
      %v10162 = vadd.f32 %v10160, %v10161
      %v10163 = vsel %vm490, %v10060, 0.0
      %v10164 = vadd.f32 %v10162, %v10163
      %v10165 = vsel %vm490, %v10061, 0.0
      %v10166 = vadd.f32 %v10164, %v10165
      %v10167 = vsel %vm490, %v10062, 0.0
      %v10168 = vadd.f32 %v10166, %v10167
      %v10169 = vsel %vm490, %v10063, 0.0
      %v10170 = vadd.f32 %v10168, %v10169
      %v10171 = vsel %vm490, %v10064, 0.0
      %v10172 = vadd.f32 %v10170, %v10171
      %v10173 = vsel %vm490, %v10065, 0.0
      %v10174 = vadd.f32 %v10172, %v10173
      %v10175 = vsel %vm490, %v10066, 0.0
      %v10176 = vadd.f32 %v10174, %v10175
      %v10177 = vsel %vm490, %v10067, 0.0
      %v10178 = vadd.f32 %v10176, %v10177
      %v10179 = vsel %vm490, %v10068, 0.0
      %v10180 = vadd.f32 %v10178, %v10179
      %v10181 = vsel %vm490, %v10069, 0.0
      %v10182 = vadd.f32 %v10180, %v10181
      %v10183 = vsel %vm490, %v10070, 0.0
      %v10184 = vadd.f32 %v10182, %v10183
      %v10185 = vsel %vm490, %v10071, 0.0
      %v10186 = vadd.f32 %v10184, %v10185
      %v10187 = vsel %vm490, %v10072, 0.0
      %v10188 = vadd.f32 %v10186, %v10187
      %v10189 = vsel %vm490, %v10073, 0.0
      %v10190 = vadd.f32 %v10188, %v10189
      %v10191 = vsel %vm490, %v10074, 0.0
      %v10192 = vadd.f32 %v10190, %v10191
      %v10193 = vsel %vm490, %v10075, 0.0
      %v10194 = vadd.f32 %v10192, %v10193
      %v10195 = vsel %vm490, %v10076, 0.0
      %v10196 = vadd.f32 %v10194, %v10195
      %v10197 = vsel %vm490, %v10077, 0.0
      %v10198 = vadd.f32 %v10196, %v10197
      %v10199 = vsel %vm490, %v10078, 0.0
      %v10200 = vadd.f32 %v10198, %v10199
      %v10201 = vsel %vm490, %v10079, 0.0
      %v10202 = vadd.f32 %v10200, %v10201
      %v10203 = vsel %vm490, %v10080, 0.0
      %v10204 = vadd.f32 %v10202, %v10203
      %v10205 = vsel %vm490, %v10081, 0.0
      %v10206 = vadd.f32 %v10204, %v10205
      %v10207 = vsel %vm490, %v10082, 0.0
      %v10208 = vadd.f32 %v10206, %v10207
      %v10209 = vsel %vm490, %v10083, 0.0
      %v10210 = vadd.f32 %v10208, %v10209
      %v10211 = vrot.slane %v10210, 4
      %v10212 = vadd.f32 %v10210, %v10211
      %v10213 = vrot.slane %v10212, 2
      %v10214 = vadd.f32 %v10212, %v10213
      %v10215 = vrot.slane %v10214, 1
      %v10216 = vadd.f32 %v10214, %v10215
      %v10217 = vmul.f32 %v10019, 0.001953125
      %v10218 = vmul.f32 %v10216, 0.001953125
      %v10219 = vmul.f32 %v10217, %v10217
      %v10220 = vsub.f32 %v10218, %v10219
      %v10221 = vadd.f32 %v10220, 1e-05
      %v10222 = vrsqrt.pop %v10221
      %v10223 = vmul.f32 %v415, %v10222
      %v10224 = vmul.f32 %v10217, %v10223
      %v10226 = vrot.slane %v10224, 7
      %v10228 = vsub.f32 %v415, %v10226
      %v10229 = vlaneseq
      %v10230 = vshrl.u32 %v10229, 7
      %v10231 = vsub.s32 2, %v10230
      %v10232 = vrot.slane %v10223, %v10231
      %v10233 = vmul.f32 %v9569, %v10232
      %v10234 = vmul.f32 %v9574, %v10232
      %v10235 = vmul.f32 %v9579, %v10232
      %v10236 = vmul.f32 %v9584, %v10232
      %v10237 = vmul.f32 %v9589, %v10232
      %v10238 = vmul.f32 %v9594, %v10232
      %v10239 = vmul.f32 %v9599, %v10232
      %v10240 = vmul.f32 %v9604, %v10232
      %v10241 = vmul.f32 %v9609, %v10232
      %v10242 = vmul.f32 %v9614, %v10232
      %v10243 = vmul.f32 %v9619, %v10232
      %v10244 = vmul.f32 %v9624, %v10232
      %v10245 = vmul.f32 %v9629, %v10232
      %v10246 = vmul.f32 %v9634, %v10232
      %v10247 = vmul.f32 %v9639, %v10232
      %v10248 = vmul.f32 %v9644, %v10232
      %v10249 = vmul.f32 %v9649, %v10232
      %v10250 = vmul.f32 %v9654, %v10232
      %v10251 = vmul.f32 %v9659, %v10232
      %v10252 = vmul.f32 %v9664, %v10232
      %v10253 = vmul.f32 %v9669, %v10232
      %v10254 = vmul.f32 %v9674, %v10232
      %v10255 = vmul.f32 %v9679, %v10232
      %v10256 = vmul.f32 %v9684, %v10232
      %v10257 = vmul.f32 %v9689, %v10232
      %v10258 = vmul.f32 %v9694, %v10232
      %v10259 = vmul.f32 %v9699, %v10232
      %v10260 = vmul.f32 %v9704, %v10232
      %v10261 = vmul.f32 %v9709, %v10232
      %v10262 = vmul.f32 %v9714, %v10232
      %v10263 = vmul.f32 %v9719, %v10232
      %v10264 = vmul.f32 %v9724, %v10232
      %v10265 = vmul.f32 %v9729, %v10232
      %v10266 = vmul.f32 %v9734, %v10232
      %v10267 = vmul.f32 %v9739, %v10232
      %v10268 = vmul.f32 %v9744, %v10232
      %v10269 = vmul.f32 %v9749, %v10232
      %v10270 = vmul.f32 %v9754, %v10232
      %v10271 = vmul.f32 %v9759, %v10232
      %v10272 = vmul.f32 %v9764, %v10232
      %v10273 = vmul.f32 %v9769, %v10232
      %v10274 = vmul.f32 %v9774, %v10232
      %v10275 = vmul.f32 %v9779, %v10232
      %v10276 = vmul.f32 %v9784, %v10232
      %v10277 = vmul.f32 %v9789, %v10232
      %v10278 = vmul.f32 %v9794, %v10232
      %v10279 = vmul.f32 %v9799, %v10232
      %v10280 = vmul.f32 %v9804, %v10232
      %v10281 = vmul.f32 %v9809, %v10232
      %v10282 = vmul.f32 %v9814, %v10232
      %v10283 = vmul.f32 %v9819, %v10232
      %v10284 = vmul.f32 %v9824, %v10232
      %v10285 = vmul.f32 %v9829, %v10232
      %v10286 = vmul.f32 %v9834, %v10232
      %v10287 = vmul.f32 %v9839, %v10232
      %v10288 = vmul.f32 %v9844, %v10232
      %v10289 = vmul.f32 %v9849, %v10232
      %v10290 = vmul.f32 %v9854, %v10232
      %v10291 = vmul.f32 %v9859, %v10232
      %v10292 = vmul.f32 %v9864, %v10232
      %v10293 = vmul.f32 %v9869, %v10232
      %v10294 = vmul.f32 %v9874, %v10232
      %v10295 = vmul.f32 %v9879, %v10232
      %v10296 = vmul.f32 %v9884, %v10232
      %v10297 = vlaneseq
      %v10298 = vshrl.u32 %v10297, 7
      %v10299 = vsub.s32 3, %v10298
      %v10300 = vrot.slane %v10228, %v10299
      %v10301 = vadd.f32 %v10233, %v10300
      %v10302 = vadd.f32 %v10234, %v10300
      %v10303 = vadd.f32 %v10235, %v10300
      %v10304 = vadd.f32 %v10236, %v10300
      %v10305 = vadd.f32 %v10237, %v10300
      %v10306 = vadd.f32 %v10238, %v10300
      %v10307 = vadd.f32 %v10239, %v10300
      %v10308 = vadd.f32 %v10240, %v10300
      %v10309 = vadd.f32 %v10241, %v10300
      %v10310 = vadd.f32 %v10242, %v10300
      %v10311 = vadd.f32 %v10243, %v10300
      %v10312 = vadd.f32 %v10244, %v10300
      %v10313 = vadd.f32 %v10245, %v10300
      %v10314 = vadd.f32 %v10246, %v10300
      %v10315 = vadd.f32 %v10247, %v10300
      %v10316 = vadd.f32 %v10248, %v10300
      %v10317 = vadd.f32 %v10249, %v10300
      %v10318 = vadd.f32 %v10250, %v10300
      %v10319 = vadd.f32 %v10251, %v10300
      %v10320 = vadd.f32 %v10252, %v10300
      %v10321 = vadd.f32 %v10253, %v10300
      %v10322 = vadd.f32 %v10254, %v10300
      %v10323 = vadd.f32 %v10255, %v10300
      %v10324 = vadd.f32 %v10256, %v10300
      %v10325 = vadd.f32 %v10257, %v10300
      %v10326 = vadd.f32 %v10258, %v10300
      %v10327 = vadd.f32 %v10259, %v10300
      %v10328 = vadd.f32 %v10260, %v10300
      %v10329 = vadd.f32 %v10261, %v10300
      %v10330 = vadd.f32 %v10262, %v10300
      %v10331 = vadd.f32 %v10263, %v10300
      %v10332 = vadd.f32 %v10264, %v10300
      %v10333 = vadd.f32 %v10265, %v10300
      %v10334 = vadd.f32 %v10266, %v10300
      %v10335 = vadd.f32 %v10267, %v10300
      %v10336 = vadd.f32 %v10268, %v10300
      %v10337 = vadd.f32 %v10269, %v10300
      %v10338 = vadd.f32 %v10270, %v10300
      %v10339 = vadd.f32 %v10271, %v10300
      %v10340 = vadd.f32 %v10272, %v10300
      %v10341 = vadd.f32 %v10273, %v10300
      %v10342 = vadd.f32 %v10274, %v10300
      %v10343 = vadd.f32 %v10275, %v10300
      %v10344 = vadd.f32 %v10276, %v10300
      %v10345 = vadd.f32 %v10277, %v10300
      %v10346 = vadd.f32 %v10278, %v10300
      %v10347 = vadd.f32 %v10279, %v10300
      %v10348 = vadd.f32 %v10280, %v10300
      %v10349 = vadd.f32 %v10281, %v10300
      %v10350 = vadd.f32 %v10282, %v10300
      %v10351 = vadd.f32 %v10283, %v10300
      %v10352 = vadd.f32 %v10284, %v10300
      %v10353 = vadd.f32 %v10285, %v10300
      %v10354 = vadd.f32 %v10286, %v10300
      %v10355 = vadd.f32 %v10287, %v10300
      %v10356 = vadd.f32 %v10288, %v10300
      %v10357 = vadd.f32 %v10289, %v10300
      %v10358 = vadd.f32 %v10290, %v10300
      %v10359 = vadd.f32 %v10291, %v10300
      %v10360 = vadd.f32 %v10292, %v10300
      %v10361 = vadd.f32 %v10293, %v10300
      %v10362 = vadd.f32 %v10294, %v10300
      %v10363 = vadd.f32 %v10295, %v10300
      %v10364 = vadd.f32 %v10296, %v10300
      %v10365 = vadd.f32 %v416, %v10301
      %v10366 = vadd.f32 %v417, %v10302
      %v10367 = vadd.f32 %v418, %v10303
      %v10368 = vadd.f32 %v419, %v10304
      %v10369 = vadd.f32 %v420, %v10305
      %v10370 = vadd.f32 %v421, %v10306
      %v10371 = vadd.f32 %v422, %v10307
      %v10372 = vadd.f32 %v423, %v10308
      %v10373 = vadd.f32 %v424, %v10309
      %v10374 = vadd.f32 %v425, %v10310
      %v10375 = vadd.f32 %v426, %v10311
      %v10376 = vadd.f32 %v427, %v10312
      %v10377 = vadd.f32 %v428, %v10313
      %v10378 = vadd.f32 %v429, %v10314
      %v10379 = vadd.f32 %v430, %v10315
      %v10380 = vadd.f32 %v431, %v10316
      %v10381 = vadd.f32 %v432, %v10317
      %v10382 = vadd.f32 %v433, %v10318
      %v10383 = vadd.f32 %v434, %v10319
      %v10384 = vadd.f32 %v435, %v10320
      %v10385 = vadd.f32 %v436, %v10321
      %v10386 = vadd.f32 %v437, %v10322
      %v10387 = vadd.f32 %v438, %v10323
      %v10388 = vadd.f32 %v439, %v10324
      %v10389 = vadd.f32 %v440, %v10325
      %v10390 = vadd.f32 %v441, %v10326
      %v10391 = vadd.f32 %v442, %v10327
      %v10392 = vadd.f32 %v443, %v10328
      %v10393 = vadd.f32 %v444, %v10329
      %v10394 = vadd.f32 %v445, %v10330
      %v10395 = vadd.f32 %v446, %v10331
      %v10396 = vadd.f32 %v447, %v10332
      %v10397 = vadd.f32 %v448, %v10333
      %v10398 = vadd.f32 %v449, %v10334
      %v10399 = vadd.f32 %v450, %v10335
      %v10400 = vadd.f32 %v451, %v10336
      %v10401 = vadd.f32 %v452, %v10337
      %v10402 = vadd.f32 %v453, %v10338
      %v10403 = vadd.f32 %v454, %v10339
      %v10404 = vadd.f32 %v455, %v10340
      %v10405 = vadd.f32 %v456, %v10341
      %v10406 = vadd.f32 %v457, %v10342
      %v10407 = vadd.f32 %v458, %v10343
      %v10408 = vadd.f32 %v459, %v10344
      %v10409 = vadd.f32 %v460, %v10345
      %v10410 = vadd.f32 %v461, %v10346
      %v10411 = vadd.f32 %v462, %v10347
      %v10412 = vadd.f32 %v463, %v10348
      %v10413 = vadd.f32 %v464, %v10349
      %v10414 = vadd.f32 %v465, %v10350
      %v10415 = vadd.f32 %v466, %v10351
      %v10416 = vadd.f32 %v467, %v10352
      %v10417 = vadd.f32 %v468, %v10353
      %v10418 = vadd.f32 %v469, %v10354
      %v10419 = vadd.f32 %v470, %v10355
      %v10420 = vadd.f32 %v471, %v10356
      %v10421 = vadd.f32 %v472, %v10357
      %v10422 = vadd.f32 %v473, %v10358
      %v10423 = vadd.f32 %v474, %v10359
      %v10424 = vadd.f32 %v475, %v10360
      %v10425 = vadd.f32 %v476, %v10361
      %v10426 = vadd.f32 %v477, %v10362
      %v10427 = vadd.f32 %v478, %v10363
      %v10428 = vadd.f32 %v479, %v10364
      %10429 = vst.msk [vmem:[%s3] sm:$0xff] %vm490, %v10365
      %10430 = vst.msk [vmem:[%s3 + $0x8] sm:$0xff] %vm490, %v10366
      %10431 = vst.msk [vmem:[%s3 + $0x10] sm:$0xff] %vm490, %v10367
      %10432 = vst.msk [vmem:[%s3 + $0x18] sm:$0xff] %vm490, %v10368
      %10433 = vst.msk [vmem:[%s3 + $0x20] sm:$0xff] %vm490, %v10369
      %10434 = vst.msk [vmem:[%s3 + $0x28] sm:$0xff] %vm490, %v10370
      %10435 = vst.msk [vmem:[%s3 + $0x30] sm:$0xff] %vm490, %v10371
      %10436 = vst.msk [vmem:[%s3 + $0x38] sm:$0xff] %vm490, %v10372
      %10437 = vst.msk [vmem:[%s3 + $0x40] sm:$0xff] %vm490, %v10373
      %10438 = vst.msk [vmem:[%s3 + $0x48] sm:$0xff] %vm490, %v10374
      %10439 = vst.msk [vmem:[%s3 + $0x50] sm:$0xff] %vm490, %v10375
      %10440 = vst.msk [vmem:[%s3 + $0x58] sm:$0xff] %vm490, %v10376
      %10441 = vst.msk [vmem:[%s3 + $0x60] sm:$0xff] %vm490, %v10377
      %10442 = vst.msk [vmem:[%s3 + $0x68] sm:$0xff] %vm490, %v10378
      %10443 = vst.msk [vmem:[%s3 + $0x70] sm:$0xff] %vm490, %v10379
      %10444 = vst.msk [vmem:[%s3 + $0x78] sm:$0xff] %vm490, %v10380
      %10445 = vst.msk [vmem:[%s3 + $0x80] sm:$0xff] %vm490, %v10381
      %10446 = vst.msk [vmem:[%s3 + $0x88] sm:$0xff] %vm490, %v10382
      %10447 = vst.msk [vmem:[%s3 + $0x90] sm:$0xff] %vm490, %v10383
      %10448 = vst.msk [vmem:[%s3 + $0x98] sm:$0xff] %vm490, %v10384
      %10449 = vst.msk [vmem:[%s3 + $0xa0] sm:$0xff] %vm490, %v10385
      %10450 = vst.msk [vmem:[%s3 + $0xa8] sm:$0xff] %vm490, %v10386
      %10451 = vst.msk [vmem:[%s3 + $0xb0] sm:$0xff] %vm490, %v10387
      %10452 = vst.msk [vmem:[%s3 + $0xb8] sm:$0xff] %vm490, %v10388
      %10453 = vst.msk [vmem:[%s3 + $0xc0] sm:$0xff] %vm490, %v10389
      %10454 = vst.msk [vmem:[%s3 + $0xc8] sm:$0xff] %vm490, %v10390
      %10455 = vst.msk [vmem:[%s3 + $0xd0] sm:$0xff] %vm490, %v10391
      %10456 = vst.msk [vmem:[%s3 + $0xd8] sm:$0xff] %vm490, %v10392
      %10457 = vst.msk [vmem:[%s3 + $0xe0] sm:$0xff] %vm490, %v10393
      %10458 = vst.msk [vmem:[%s3 + $0xe8] sm:$0xff] %vm490, %v10394
      %10459 = vst.msk [vmem:[%s3 + $0xf0] sm:$0xff] %vm490, %v10395
      %10460 = vst.msk [vmem:[%s3 + $0xf8] sm:$0xff] %vm490, %v10396
      %10461 = vst.msk [vmem:[%s3 + $0x100] sm:$0xff] %vm490, %v10397
      %10462 = vst.msk [vmem:[%s3 + $0x108] sm:$0xff] %vm490, %v10398
      %10463 = vst.msk [vmem:[%s3 + $0x110] sm:$0xff] %vm490, %v10399
      %10464 = vst.msk [vmem:[%s3 + $0x118] sm:$0xff] %vm490, %v10400
      %10465 = vst.msk [vmem:[%s3 + $0x120] sm:$0xff] %vm490, %v10401
      %10466 = vst.msk [vmem:[%s3 + $0x128] sm:$0xff] %vm490, %v10402
      %10467 = vst.msk [vmem:[%s3 + $0x130] sm:$0xff] %vm490, %v10403
      %10468 = vst.msk [vmem:[%s3 + $0x138] sm:$0xff] %vm490, %v10404
      %10469 = vst.msk [vmem:[%s3 + $0x140] sm:$0xff] %vm490, %v10405
      %10470 = vst.msk [vmem:[%s3 + $0x148] sm:$0xff] %vm490, %v10406
      %10471 = vst.msk [vmem:[%s3 + $0x150] sm:$0xff] %vm490, %v10407
      %10472 = vst.msk [vmem:[%s3 + $0x158] sm:$0xff] %vm490, %v10408
      %10473 = vst.msk [vmem:[%s3 + $0x160] sm:$0xff] %vm490, %v10409
      %10474 = vst.msk [vmem:[%s3 + $0x168] sm:$0xff] %vm490, %v10410
      %10475 = vst.msk [vmem:[%s3 + $0x170] sm:$0xff] %vm490, %v10411
      %10476 = vst.msk [vmem:[%s3 + $0x178] sm:$0xff] %vm490, %v10412
      %10477 = vst.msk [vmem:[%s3 + $0x180] sm:$0xff] %vm490, %v10413
      %10478 = vst.msk [vmem:[%s3 + $0x188] sm:$0xff] %vm490, %v10414
      %10479 = vst.msk [vmem:[%s3 + $0x190] sm:$0xff] %vm490, %v10415
      %10480 = vst.msk [vmem:[%s3 + $0x198] sm:$0xff] %vm490, %v10416
      %10481 = vst.msk [vmem:[%s3 + $0x1a0] sm:$0xff] %vm490, %v10417
      %10482 = vst.msk [vmem:[%s3 + $0x1a8] sm:$0xff] %vm490, %v10418
      %10483 = vst.msk [vmem:[%s3 + $0x1b0] sm:$0xff] %vm490, %v10419
      %10484 = vst.msk [vmem:[%s3 + $0x1b8] sm:$0xff] %vm490, %v10420
      %10485 = vst.msk [vmem:[%s3 + $0x1c0] sm:$0xff] %vm490, %v10421
      %10486 = vst.msk [vmem:[%s3 + $0x1c8] sm:$0xff] %vm490, %v10422
      %10487 = vst.msk [vmem:[%s3 + $0x1d0] sm:$0xff] %vm490, %v10423
      %10488 = vst.msk [vmem:[%s3 + $0x1d8] sm:$0xff] %vm490, %v10424
      %10489 = vst.msk [vmem:[%s3 + $0x1e0] sm:$0xff] %vm490, %v10425
      %10490 = vst.msk [vmem:[%s3 + $0x1e8] sm:$0xff] %vm490, %v10426
      %10491 = vst.msk [vmem:[%s3 + $0x1f0] sm:$0xff] %vm490, %v10427
      %10492 = vst.msk [vmem:[%s3 + $0x1f8] sm:$0xff] %vm490, %v10428
      // Predicated region
      $region37: #{tpu_custom_call.1} parent=31 // pred_check
        %p10493 = pneg %p100
      $region38: #{tpu_custom_call.1} parent=31 // pred_check_branch
        %10495 = sbr.rel (%p10493) target = $region40
      $region39: #{tpu_custom_call.1} parent=31 // pred_region
        _
      $region40: #{tpu_custom_call.1} parent=31 // pred_fallthru
        _
      // Predicated region
      $region41: #{tpu_custom_call.1} parent=31 // pred_check
        %p10496 = pneg %p100
      $region42: #{tpu_custom_call.1} parent=31 // pred_check_branch
        %10498 = sbr.rel (%p10496) target = $region44
      $region43: #{tpu_custom_call.1} parent=31 // pred_region
        _
      $region44: #{tpu_custom_call.1} parent=31 // pred_fallthru
        _
    $region32: #{tpu_custom_call.1} parent=5 // pred_fallthru
      _
    %p10499 = scmp.le.s32.totalorder 2, %s9
    // Predicated region
    $region45: #{tpu_custom_call.1} parent=5 // pred_check
      %p10500 = pneg %p10499
    $region46: #{tpu_custom_call.1} parent=5 // pred_check_branch
      %10502 = sbr.rel (%p10500) target = $region48
    $region47: #{tpu_custom_call.1} parent=5 // pred_region
      %s10503 = ssub.s32 %s9, 2
    $region48: #{tpu_custom_call.1} parent=5 // pred_fallthru
      _
  $region6: #{tpu_custom_call.1} parent=0 // loop_footer
    %s13 = sadd.s32 1, %s9
  $region7: #{tpu_custom_call.1} parent=0 // loop_footer_branch
    %8 = sbr.rel target = $region3
  $region8: #{tpu_custom_call.1} parent=0 // loop_exit
    _

</llo_original>
